<compile_context>
chip_gen: v7x
topology: tpu7x:2x2x1
jax: 0.10.0
libtpu: 0.0.40
codegen_flags: <defaults>
</compile_context>

<pallas_src>
import functools

import jax
import jax.numpy as jnp
from jax.experimental import pallas as pl
from jax.experimental.pallas import tpu as pltpu


LANE = 128


def _round_up(x, m):
    return ((x + m - 1) // m) * m


# ----------------------------- conv kernel ----------------------------------

def _conv_matmul_kernel(x_ref, w_ref, b_ref, o_ref):
    """One image: o = relu(patches @ w + b).

    x_ref: (M, K)   bf16  im2col patches (K possibly zero-padded)
    w_ref: (K, Co)  bf16  weight, rows ordered (kh, kw, cin)
    b_ref: (1, Co)  f32
    o_ref: (M, Co)  bf16
    """
    y = jnp.dot(x_ref[...], w_ref[...], preferred_element_type=jnp.float32)
    y = y + b_ref[...]
    o_ref[...] = jnp.maximum(y, 0.0).astype(o_ref.dtype)


def _extract_patches(x, kh, kw):
    """x: (B, H, W, C) -> (B, Ho*Wo, kh*kw*C); features ordered (kh, kw, c).

    Valid patches only (no halo junk).  This is pure data movement done in the
    wrapper; all conv FLOPs run on the MXU inside the Pallas kernel.
    """
    B, H, W, C = x.shape
    Ho, Wo = H - kh + 1, W - kw + 1
    cols = [x[:, i:i + Ho, j:j + Wo, :] for i in range(kh) for j in range(kw)]
    p = jnp.concatenate(cols, axis=-1)                  # (B, Ho, Wo, kh*kw*C)
    return p.reshape(B, Ho * Wo, kh * kw * C)


def conv2d_bias_relu(x_nhwc, w_mat, bias, *, kh=5, kw=5):
    """'valid' 5x5 conv + bias + ReLU.  x: (B,H,W,Cin) -> (B,Ho,Wo,Cout) bf16."""
    B, H, W, Cin = x_nhwc.shape
    Ho, Wo = H - kh + 1, W - kw + 1
    Kp, Cout = w_mat.shape
    M = Ho * Wo

    patches = _extract_patches(x_nhwc.astype(jnp.bfloat16), kh, kw)
    K = patches.shape[-1]
    if K != Kp:                                          # pad contraction (conv1: 75 -> 128)
        patches = jnp.pad(patches, ((0, 0), (0, 0), (0, Kp - K)))

    out = pl.pallas_call(
        _conv_matmul_kernel,
        out_shape=jax.ShapeDtypeStruct((B, M, Cout), jnp.bfloat16),
        grid=(B,),
        in_specs=[
            pl.BlockSpec((None, M, Kp), lambda b: (b, 0, 0)),
            pl.BlockSpec((Kp, Cout), lambda b: (0, 0)),
            pl.BlockSpec((1, Cout), lambda b: (0, 0)),
        ],
        out_specs=pl.BlockSpec((None, M, Cout), lambda b: (b, 0, 0)),
        compiler_params=pltpu.CompilerParams(
            dimension_semantics=("parallel",)),
    )(patches, w_mat, bias)
    return out.reshape(B, Ho, Wo, Cout)


# ---------------------------- max-pool kernel --------------------------------

def _maxpool_kernel(x_ref, o_ref, *, c):
    # x_ref: (Hi, Wi2, 2C) -- horizontal pixel pair folded into lanes.
    # o_ref: (Hi/2, Wi2, C).
    hi, wi2, c2 = x_ref.shape
    x = x_ref[...].reshape(hi // 2, 2, wi2, c2)          # free: splits leading dim
    m = jnp.maximum(x[:, 0], x[:, 1])                    # vertical pair
    o_ref[...] = jnp.maximum(m[:, :, :c], m[:, :, c:])   # horizontal pair (lane halves)


def maxpool2x2(x):
    """2x2 / stride-2 max pool on (B, Hi, Wi, C); one grid step per image."""
    B, Hi, Wi, C = x.shape
    Hi2, Wi2 = Hi // 2, Wi // 2
    xr = x.reshape(B, Hi, Wi2, 2 * C)                    # (w, w+1) -> lane halves
    return pl.pallas_call(
        functools.partial(_maxpool_kernel, c=C),
        out_shape=jax.ShapeDtypeStruct((B, Hi2, Wi2, C), x.dtype),
        grid=(B,),
        in_specs=[pl.BlockSpec((None, Hi, Wi2, 2 * C), lambda b: (b, 0, 0, 0))],
        out_specs=pl.BlockSpec((None, Hi2, Wi2, C), lambda b: (b, 0, 0, 0)),
        compiler_params=pltpu.CompilerParams(
            dimension_semantics=("parallel",)),
    )(xr)


# --------------------------- fused fc1/fc2/fc3 --------------------------------

def _mlp_kernel(x_ref, w1_ref, b1_ref, w2_ref, b2_ref, w3_ref, b3_ref, o_ref):
    h = jnp.dot(x_ref[...], w1_ref[...], preferred_element_type=jnp.float32)
    h = jnp.maximum(h + b1_ref[...], 0.0)
    h = jnp.dot(h.astype(jnp.bfloat16), w2_ref[...],
                preferred_element_type=jnp.float32)
    h = jnp.maximum(h + b2_ref[...], 0.0)
    y = jnp.dot(h.astype(jnp.bfloat16), w3_ref[...],
                preferred_element_type=jnp.float32)
    o_ref[...] = y + b3_ref[...]


def fused_mlp(x, w1, b1, w2, b2, w3, b3):
    """fc1(ReLU) -> fc2(ReLU) -> fc3 in one pallas_call (intermediates stay on
    chip).  x: (B, 1600) bf16.  Returns (B, 128) f32 (classes padded)."""
    B, K1 = x.shape
    Np = w3.shape[1]
    Bp = _round_up(B, 8)
    tile_b = min(Bp, 128)          # at larger batch this yields >=2 parallel blocks
    Bp = _round_up(Bp, tile_b)
    xp = jnp.pad(x, ((0, Bp - B), (0, 0)))
    out = pl.pallas_call(
        _mlp_kernel,
        out_shape=jax.ShapeDtypeStruct((Bp, Np), jnp.float32),
        grid=(Bp // tile_b,),
        in_specs=[
            pl.BlockSpec((tile_b, K1), lambda i: (i, 0)),
            pl.BlockSpec(w1.shape, lambda i: (0, 0)),
            pl.BlockSpec(b1.shape, lambda i: (0, 0)),
            pl.BlockSpec(w2.shape, lambda i: (0, 0)),
            pl.BlockSpec(b2.shape, lambda i: (0, 0)),
            pl.BlockSpec(w3.shape, lambda i: (0, 0)),
            pl.BlockSpec(b3.shape, lambda i: (0, 0)),
        ],
        out_specs=pl.BlockSpec((tile_b, Np), lambda i: (i, 0)),
        compiler_params=pltpu.CompilerParams(
            dimension_semantics=("parallel",)),
    )(xp, w1, b1, w2, b2, w3, b3)
    return out[:B]


# ------------------------------ parameters ------------------------------------

def init_params(num_classes, key):
    ks = jax.random.split(key, 10)

    def normal(k, shape, scale):
        return scale * jax.random.normal(k, shape, dtype=jnp.float32)

    # conv1: torch layout (64, 3, 5, 5) -> matmul rows ordered (kh, kw, cin),
    # contraction padded 75 -> 128 with zero rows (patches are zero-padded too).
    c1 = normal(ks[0], (64, 3, 5, 5), 0.05)
    c1w = jnp.pad(jnp.transpose(c1, (2, 3, 1, 0)).reshape(75, 64),
                  ((0, LANE - 75), (0, 0)))
    c1b = normal(ks[1], (1, 64), 0.05)

    # conv2: torch (64, 64, 5, 5) -> (1600, 64).
    c2 = normal(ks[2], (64, 64, 5, 5), 0.02)
    c2w = jnp.transpose(c2, (2, 3, 1, 0)).reshape(1600, 64)
    c2b = normal(ks[3], (1, 64), 0.02)

    # fc1: torch weight is (384, 1600) applied to an NCHW flatten (c*25+h*5+w).
    # Fold the NCHW->NHWC permutation into the weight rows at init so the
    # runtime feeds the NHWC pool2 output directly (row order (h*5+w)*64+c).
    f1 = normal(ks[4], (384, 64 * 5 * 5), 0.02)
    f1w = jnp.transpose(f1.T.reshape(64, 5, 5, 384), (1, 2, 0, 3)).reshape(1600, 384)
    f1b = normal(ks[5], (1, 384), 0.02)

    # fc2: 384 -> 192, output padded to 256 lanes (zero cols / zero bias).
    f2 = normal(ks[6], (192, 384), 0.05)
    f2w = jnp.pad(f2.T, ((0, 0), (0, 256 - 192)))
    f2b = jnp.pad(normal(ks[7], (1, 192), 0.05), ((0, 0), (0, 256 - 192)))

    # fc3: 192 -> num_classes; contraction padded to 256 rows (zeros, so the
    # padded fc2 channels contribute nothing), output padded to 128 lanes.
    ncp = _round_up(num_classes, LANE)
    f3 = normal(ks[8], (num_classes, 192), 0.05)
    f3w = jnp.pad(f3.T, ((0, 256 - 192), (0, ncp - num_classes)))
    f3b = jnp.pad(normal(ks[9], (1, num_classes), 0.05),
                  ((0, 0), (0, ncp - num_classes)))

    return {
        "conv1_w": c1w.astype(jnp.bfloat16), "conv1_b": c1b,
        "conv2_w": c2w.astype(jnp.bfloat16), "conv2_b": c2b,
        "fc1_w": f1w.astype(jnp.bfloat16), "fc1_b": f1b,
        "fc2_w": f2w.astype(jnp.bfloat16), "fc2_b": f2b,
        "fc3_w": f3w.astype(jnp.bfloat16), "fc3_b": f3b,
    }


# ------------------------------ model ------------------------------------------

def convnet_forward(x_nchw, params, *, num_classes):
    # x_nchw: (B, 3, 32, 32) float32, matching the PyTorch input convention.
    B = x_nchw.shape[0]
    x = jnp.transpose(x_nchw, (0, 2, 3, 1))                        # NHWC (B,32,32,3)

    y = conv2d_bias_relu(x, params["conv1_w"], params["conv1_b"])  # (B,28,28,64)
    y = maxpool2x2(y)                                              # (B,14,14,64)

    y = conv2d_bias_relu(y, params["conv2_w"], params["conv2_b"])  # (B,10,10,64)
    y = maxpool2x2(y)                                              # (B, 5, 5,64)

    # NHWC flatten (free trailing reshape); the NCHW permutation that PyTorch's
    # x.view(-1, 64*5*5) implies is already folded into fc1_w at init.
    flat = y.reshape(B, 64 * 5 * 5).astype(jnp.bfloat16)

    logits = fused_mlp(flat, params["fc1_w"], params["fc1_b"],
                       params["fc2_w"], params["fc2_b"],
                       params["fc3_w"], params["fc3_b"])
    return logits[:, :num_classes]


# ------------------------------ main -------------------------------------------

if __name__ == "__main__":
    num_classes = 10
    batch = 2

    key = jax.random.PRNGKey(0)
    k_in, k_params = jax.random.split(key)

    # (B, 3, 32, 32): the only spatial size consistent with
    # conv(5) -> pool -> conv(5) -> pool -> 64*5*5 flatten.
    x = jax.random.normal(k_in, (batch, 3, 32, 32), dtype=jnp.float32)
    params = init_params(num_classes, k_params)

    fwd = jax.jit(functools.partial(convnet_forward, num_classes=num_classes))
    logits = fwd(x, params)
    jax.block_until_ready(logits)

    assert logits.shape == (batch, num_classes)
    assert logits.dtype == jnp.float32
    assert bool(jnp.all(jnp.isfinite(logits)))
    print("KERNEL_OK")
</pallas_src>

<mosaic_0001>
module attributes {stable_mosaic.version = 11 : i64} {
  func.func @_conv_matmul_kernel(%arg0: i32, %arg1: memref<1x784x128xbf16, #tpu.memory_space<vmem>>, %arg2: memref<128x64xbf16, #tpu.memory_space<vmem>>, %arg3: memref<1x64xf32, #tpu.memory_space<vmem>>, %arg4: memref<1x784x64xbf16, #tpu.memory_space<vmem>>) attributes {dimension_semantics = [#tpu.dimension_semantics<parallel>], iteration_bounds = array<i64: 2>, scalar_prefetch = 0 : i64, scratch_operands = 0 : i64, tpu.core_type = #tpu.core_type<tc>, window_params = [{transform_indices = @transform_0, window_bounds = array<i64: 1, 784, 128>}, {pipeline_mode = #tpu.pipeline_mode<synchronous>, transform_indices = @transform_1, window_bounds = array<i64: 128, 64>}, {pipeline_mode = #tpu.pipeline_mode<synchronous>, transform_indices = @transform_2, window_bounds = array<i64: 1, 64>}, {transform_indices = @transform_3, window_bounds = array<i64: 1, 784, 64>}]} {
    %c0 = arith.constant 0 : index
    %c0_0 = arith.constant 0 : index
    %c0_1 = arith.constant 0 : index
    %0 = vector.load %arg1[%c0, %c0_0, %c0_1] : memref<1x784x128xbf16, #tpu.memory_space<vmem>>, vector<1x784x128xbf16>
    %1 = vector.shape_cast %0 : vector<1x784x128xbf16> to vector<784x128xbf16>
    %c0_2 = arith.constant 0 : index
    %c0_3 = arith.constant 0 : index
    %2 = vector.load %arg2[%c0_2, %c0_3] : memref<128x64xbf16, #tpu.memory_space<vmem>>, vector<128x64xbf16>
    %cst = arith.constant dense<0.000000e+00> : vector<784x64xf32>
    %3 = tpu.matmul %1, %2, %cst {dimension_numbers = #tpu.dot_dimension_numbers<[1], [0], [0], [1], [0, 0, 1, 1], [], []>} : vector<784x128xbf16>, vector<128x64xbf16>, vector<784x64xf32> -> vector<784x64xf32>
    %c0_4 = arith.constant 0 : index
    %c0_5 = arith.constant 0 : index
    %4 = vector.load %arg3[%c0_4, %c0_5] : memref<1x64xf32, #tpu.memory_space<vmem>>, vector<1x64xf32>
    %5 = vector.broadcast %4 : vector<1x64xf32> to vector<784x64xf32>
    %6 = arith.addf %3, %5 : vector<784x64xf32>
    %cst_6 = arith.constant 0.000000e+00 : f32
    %7 = vector.broadcast %cst_6 : f32 to vector<784x64xf32>
    %8 = arith.maximumf %6, %7 : vector<784x64xf32>
    %9 = arith.truncf %8 : vector<784x64xf32> to vector<784x64xbf16>
    %c0_7 = arith.constant 0 : index
    %c0_8 = arith.constant 0 : index
    %c0_9 = arith.constant 0 : index
    %10 = vector.load %arg4[%c0_7, %c0_8, %c0_9] : memref<1x784x64xbf16, #tpu.memory_space<vmem>>, vector<1x784x64xbf16>
    %11 = vector.shape_cast %10 : vector<1x784x64xbf16> to vector<784x64xbf16>
    %12 = vector.shape_cast %9 : vector<784x64xbf16> to vector<1x784x64xbf16>
    tpu.vector_store %arg4[%c0_7, %c0_8, %c0_9], %12 {strides = array<i32>} : memref<1x784x64xbf16, #tpu.memory_space<vmem>>, vector<1x784x64xbf16>,
    return
  }
  func.func @transform_0(%arg0: i32) -> (i32, i32, i32) {
    %c0_i32 = arith.constant 0 : i32
    %c0_i32_0 = arith.constant 0 : i32
    %c0_i32_1 = arith.constant 0 : i32
    return %arg0, %c0_i32, %c0_i32_0 : i32, i32, i32
  }
  func.func @transform_1(%arg0: i32) -> (i32, i32) {
    %c0_i32 = arith.constant 0 : i32
    %c0_i32_0 = arith.constant 0 : i32
    %c0_i32_1 = arith.constant 0 : i32
    return %c0_i32, %c0_i32_0 : i32, i32
  }
  func.func @transform_2(%arg0: i32) -> (i32, i32) {
    %c0_i32 = arith.constant 0 : i32
    %c0_i32_0 = arith.constant 0 : i32
    %c0_i32_1 = arith.constant 0 : i32
    return %c0_i32, %c0_i32_0 : i32, i32
  }
  func.func @transform_3(%arg0: i32) -> (i32, i32, i32) {
    %c0_i32 = arith.constant 0 : i32
    %c0_i32_0 = arith.constant 0 : i32
    %c0_i32_1 = arith.constant 0 : i32
    return %arg0, %c0_i32, %c0_i32_0 : i32, i32, i32
  }
}

module attributes {stable_mosaic.version = 11 : i64} {
  func.func @_maxpool_kernel(%arg0: i32, %arg1: memref<1x28x14x128xbf16, #tpu.memory_space<vmem>>, %arg2: memref<1x14x14x64xbf16, #tpu.memory_space<vmem>>) attributes {dimension_semantics = [#tpu.dimension_semantics<parallel>], iteration_bounds = array<i64: 2>, scalar_prefetch = 0 : i64, scratch_operands = 0 : i64, tpu.core_type = #tpu.core_type<tc>, window_params = [{transform_indices = @transform_0, window_bounds = array<i64: 1, 28, 14, 128>}, {transform_indices = @transform_1, window_bounds = array<i64: 1, 14, 14, 64>}]} {
    %c0 = arith.constant 0 : index
    %c0_0 = arith.constant 0 : index
    %c0_1 = arith.constant 0 : index
    %c0_2 = arith.constant 0 : index
    %0 = vector.load %arg1[%c0, %c0_0, %c0_1, %c0_2] : memref<1x28x14x128xbf16, #tpu.memory_space<vmem>>, vector<1x28x14x128xbf16>
    %1 = vector.shape_cast %0 : vector<1x28x14x128xbf16> to vector<28x14x128xbf16>
    %2 = vector.shape_cast %1 : vector<28x14x128xbf16> to vector<14x2x14x128xbf16>
    %3 = vector.extract_strided_slice %2 {offsets = [0, 0, 0, 0], sizes = [14, 1, 14, 128], strides = [1, 1, 1, 1]} : vector<14x2x14x128xbf16> to vector<14x1x14x128xbf16>
    %4 = vector.shape_cast %3 : vector<14x1x14x128xbf16> to vector<14x14x128xbf16>
    %5 = vector.extract_strided_slice %2 {offsets = [0, 1, 0, 0], sizes = [14, 1, 14, 128], strides = [1, 1, 1, 1]} : vector<14x2x14x128xbf16> to vector<14x1x14x128xbf16>
    %6 = vector.shape_cast %5 : vector<14x1x14x128xbf16> to vector<14x14x128xbf16>
    %7 = arith.maximumf %4, %6 : vector<14x14x128xbf16>
    %8 = vector.extract_strided_slice %7 {offsets = [0, 0, 0], sizes = [14, 14, 64], strides = [1, 1, 1]} : vector<14x14x128xbf16> to vector<14x14x64xbf16>
    %9 = vector.extract_strided_slice %7 {offsets = [0, 0, 64], sizes = [14, 14, 64], strides = [1, 1, 1]} : vector<14x14x128xbf16> to vector<14x14x64xbf16>
    %10 = arith.maximumf %8, %9 : vector<14x14x64xbf16>
    %c0_3 = arith.constant 0 : index
    %c0_4 = arith.constant 0 : index
    %c0_5 = arith.constant 0 : index
    %c0_6 = arith.constant 0 : index
    %11 = vector.load %arg2[%c0_3, %c0_4, %c0_5, %c0_6] : memref<1x14x14x64xbf16, #tpu.memory_space<vmem>>, vector<1x14x14x64xbf16>
    %12 = vector.shape_cast %11 : vector<1x14x14x64xbf16> to vector<14x14x64xbf16>
    %13 = vector.shape_cast %10 : vector<14x14x64xbf16> to vector<1x14x14x64xbf16>
    tpu.vector_store %arg2[%c0_3, %c0_4, %c0_5, %c0_6], %13 {strides = array<i32>} : memref<1x14x14x64xbf16, #tpu.memory_space<vmem>>, vector<1x14x14x64xbf16>,
    return
  }
  func.func @transform_0(%arg0: i32) -> (i32, i32, i32, i32) {
    %c0_i32 = arith.constant 0 : i32
    %c0_i32_0 = arith.constant 0 : i32
    %c0_i32_1 = arith.constant 0 : i32
    %c0_i32_2 = arith.constant 0 : i32
    return %arg0, %c0_i32, %c0_i32_0, %c0_i32_1 : i32, i32, i32, i32
  }
  func.func @transform_1(%arg0: i32) -> (i32, i32, i32, i32) {
    %c0_i32 = arith.constant 0 : i32
    %c0_i32_0 = arith.constant 0 : i32
    %c0_i32_1 = arith.constant 0 : i32
    %c0_i32_2 = arith.constant 0 : i32
    return %arg0, %c0_i32, %c0_i32_0, %c0_i32_1 : i32, i32, i32, i32
  }
}

module attributes {stable_mosaic.version = 11 : i64} {
  func.func @_conv_matmul_kernel(%arg0: i32, %arg1: memref<1x100x1600xbf16, #tpu.memory_space<vmem>>, %arg2: memref<1600x64xbf16, #tpu.memory_space<vmem>>, %arg3: memref<1x64xf32, #tpu.memory_space<vmem>>, %arg4: memref<1x100x64xbf16, #tpu.memory_space<vmem>>) attributes {dimension_semantics = [#tpu.dimension_semantics<parallel>], iteration_bounds = array<i64: 2>, scalar_prefetch = 0 : i64, scratch_operands = 0 : i64, tpu.core_type = #tpu.core_type<tc>, window_params = [{transform_indices = @transform_0, window_bounds = array<i64: 1, 100, 1600>}, {pipeline_mode = #tpu.pipeline_mode<synchronous>, transform_indices = @transform_1, window_bounds = array<i64: 1600, 64>}, {pipeline_mode = #tpu.pipeline_mode<synchronous>, transform_indices = @transform_2, window_bounds = array<i64: 1, 64>}, {transform_indices = @transform_3, window_bounds = array<i64: 1, 100, 64>}]} {
    %c0 = arith.constant 0 : index
    %c0_0 = arith.constant 0 : index
    %c0_1 = arith.constant 0 : index
    %0 = vector.load %arg1[%c0, %c0_0, %c0_1] : memref<1x100x1600xbf16, #tpu.memory_space<vmem>>, vector<1x100x1600xbf16>
    %1 = vector.shape_cast %0 : vector<1x100x1600xbf16> to vector<100x1600xbf16>
    %c0_2 = arith.constant 0 : index
    %c0_3 = arith.constant 0 : index
    %2 = vector.load %arg2[%c0_2, %c0_3] : memref<1600x64xbf16, #tpu.memory_space<vmem>>, vector<1600x64xbf16>
    %cst = arith.constant dense<0.000000e+00> : vector<100x64xf32>
    %3 = tpu.matmul %1, %2, %cst {dimension_numbers = #tpu.dot_dimension_numbers<[1], [0], [0], [1], [0, 0, 1, 1], [], []>} : vector<100x1600xbf16>, vector<1600x64xbf16>, vector<100x64xf32> -> vector<100x64xf32>
    %c0_4 = arith.constant 0 : index
    %c0_5 = arith.constant 0 : index
    %4 = vector.load %arg3[%c0_4, %c0_5] : memref<1x64xf32, #tpu.memory_space<vmem>>, vector<1x64xf32>
    %5 = vector.broadcast %4 : vector<1x64xf32> to vector<100x64xf32>
    %6 = arith.addf %3, %5 : vector<100x64xf32>
    %cst_6 = arith.constant 0.000000e+00 : f32
    %7 = vector.broadcast %cst_6 : f32 to vector<100x64xf32>
    %8 = arith.maximumf %6, %7 : vector<100x64xf32>
    %9 = arith.truncf %8 : vector<100x64xf32> to vector<100x64xbf16>
    %c0_7 = arith.constant 0 : index
    %c0_8 = arith.constant 0 : index
    %c0_9 = arith.constant 0 : index
    %10 = vector.load %arg4[%c0_7, %c0_8, %c0_9] : memref<1x100x64xbf16, #tpu.memory_space<vmem>>, vector<1x100x64xbf16>
    %11 = vector.shape_cast %10 : vector<1x100x64xbf16> to vector<100x64xbf16>
    %12 = vector.shape_cast %9 : vector<100x64xbf16> to vector<1x100x64xbf16>
    tpu.vector_store %arg4[%c0_7, %c0_8, %c0_9], %12 {strides = array<i32>} : memref<1x100x64xbf16, #tpu.memory_space<vmem>>, vector<1x100x64xbf16>,
    return
  }
  func.func @transform_0(%arg0: i32) -> (i32, i32, i32) {
    %c0_i32 = arith.constant 0 : i32
    %c0_i32_0 = arith.constant 0 : i32
    %c0_i32_1 = arith.constant 0 : i32
    return %arg0, %c0_i32, %c0_i32_0 : i32, i32, i32
  }
  func.func @transform_1(%arg0: i32) -> (i32, i32) {
    %c0_i32 = arith.constant 0 : i32
    %c0_i32_0 = arith.constant 0 : i32
    %c0_i32_1 = arith.constant 0 : i32
    return %c0_i32, %c0_i32_0 : i32, i32
  }
  func.func @transform_2(%arg0: i32) -> (i32, i32) {
    %c0_i32 = arith.constant 0 : i32
    %c0_i32_0 = arith.constant 0 : i32
    %c0_i32_1 = arith.constant 0 : i32
    return %c0_i32, %c0_i32_0 : i32, i32
  }
  func.func @transform_3(%arg0: i32) -> (i32, i32, i32) {
    %c0_i32 = arith.constant 0 : i32
    %c0_i32_0 = arith.constant 0 : i32
    %c0_i32_1 = arith.constant 0 : i32
    return %arg0, %c0_i32, %c0_i32_0 : i32, i32, i32
  }
}

module attributes {stable_mosaic.version = 11 : i64} {
  func.func @_maxpool_kernel(%arg0: i32, %arg1: memref<1x10x5x128xbf16, #tpu.memory_space<vmem>>, %arg2: memref<1x5x5x64xbf16, #tpu.memory_space<vmem>>) attributes {dimension_semantics = [#tpu.dimension_semantics<parallel>], iteration_bounds = array<i64: 2>, scalar_prefetch = 0 : i64, scratch_operands = 0 : i64, tpu.core_type = #tpu.core_type<tc>, window_params = [{transform_indices = @transform_0, window_bounds = array<i64: 1, 10, 5, 128>}, {transform_indices = @transform_1, window_bounds = array<i64: 1, 5, 5, 64>}]} {
    %c0 = arith.constant 0 : index
    %c0_0 = arith.constant 0 : index
    %c0_1 = arith.constant 0 : index
    %c0_2 = arith.constant 0 : index
    %0 = vector.load %arg1[%c0, %c0_0, %c0_1, %c0_2] : memref<1x10x5x128xbf16, #tpu.memory_space<vmem>>, vector<1x10x5x128xbf16>
    %1 = vector.shape_cast %0 : vector<1x10x5x128xbf16> to vector<10x5x128xbf16>
    %2 = vector.shape_cast %1 : vector<10x5x128xbf16> to vector<5x2x5x128xbf16>
    %3 = vector.extract_strided_slice %2 {offsets = [0, 0, 0, 0], sizes = [5, 1, 5, 128], strides = [1, 1, 1, 1]} : vector<5x2x5x128xbf16> to vector<5x1x5x128xbf16>
    %4 = vector.shape_cast %3 : vector<5x1x5x128xbf16> to vector<5x5x128xbf16>
    %5 = vector.extract_strided_slice %2 {offsets = [0, 1, 0, 0], sizes = [5, 1, 5, 128], strides = [1, 1, 1, 1]} : vector<5x2x5x128xbf16> to vector<5x1x5x128xbf16>
    %6 = vector.shape_cast %5 : vector<5x1x5x128xbf16> to vector<5x5x128xbf16>
    %7 = arith.maximumf %4, %6 : vector<5x5x128xbf16>
    %8 = vector.extract_strided_slice %7 {offsets = [0, 0, 0], sizes = [5, 5, 64], strides = [1, 1, 1]} : vector<5x5x128xbf16> to vector<5x5x64xbf16>
    %9 = vector.extract_strided_slice %7 {offsets = [0, 0, 64], sizes = [5, 5, 64], strides = [1, 1, 1]} : vector<5x5x128xbf16> to vector<5x5x64xbf16>
    %10 = arith.maximumf %8, %9 : vector<5x5x64xbf16>
    %c0_3 = arith.constant 0 : index
    %c0_4 = arith.constant 0 : index
    %c0_5 = arith.constant 0 : index
    %c0_6 = arith.constant 0 : index
    %11 = vector.load %arg2[%c0_3, %c0_4, %c0_5, %c0_6] : memref<1x5x5x64xbf16, #tpu.memory_space<vmem>>, vector<1x5x5x64xbf16>
    %12 = vector.shape_cast %11 : vector<1x5x5x64xbf16> to vector<5x5x64xbf16>
    %13 = vector.shape_cast %10 : vector<5x5x64xbf16> to vector<1x5x5x64xbf16>
    tpu.vector_store %arg2[%c0_3, %c0_4, %c0_5, %c0_6], %13 {strides = array<i32>} : memref<1x5x5x64xbf16, #tpu.memory_space<vmem>>, vector<1x5x5x64xbf16>,
    return
  }
  func.func @transform_0(%arg0: i32) -> (i32, i32, i32, i32) {
    %c0_i32 = arith.constant 0 : i32
    %c0_i32_0 = arith.constant 0 : i32
    %c0_i32_1 = arith.constant 0 : i32
    %c0_i32_2 = arith.constant 0 : i32
    return %arg0, %c0_i32, %c0_i32_0, %c0_i32_1 : i32, i32, i32, i32
  }
  func.func @transform_1(%arg0: i32) -> (i32, i32, i32, i32) {
    %c0_i32 = arith.constant 0 : i32
    %c0_i32_0 = arith.constant 0 : i32
    %c0_i32_1 = arith.constant 0 : i32
    %c0_i32_2 = arith.constant 0 : i32
    return %arg0, %c0_i32, %c0_i32_0, %c0_i32_1 : i32, i32, i32, i32
  }
}

module attributes {stable_mosaic.version = 11 : i64} {
  func.func @_mlp_kernel(%arg0: i32, %arg1: memref<8x1600xbf16, #tpu.memory_space<vmem>>, %arg2: memref<1600x384xbf16, #tpu.memory_space<vmem>>, %arg3: memref<1x384xf32, #tpu.memory_space<vmem>>, %arg4: memref<384x256xbf16, #tpu.memory_space<vmem>>, %arg5: memref<1x256xf32, #tpu.memory_space<vmem>>, %arg6: memref<256x128xbf16, #tpu.memory_space<vmem>>, %arg7: memref<1x128xf32, #tpu.memory_space<vmem>>, %arg8: memref<8x128xf32, #tpu.memory_space<vmem>>) attributes {dimension_semantics = [#tpu.dimension_semantics<parallel>], iteration_bounds = array<i64: 1>, scalar_prefetch = 0 : i64, scratch_operands = 0 : i64, tpu.core_type = #tpu.core_type<tc>, window_params = [{transform_indices = @transform_0, window_bounds = array<i64: 8, 1600>}, {pipeline_mode = #tpu.pipeline_mode<synchronous>, transform_indices = @transform_1, window_bounds = array<i64: 1600, 384>}, {pipeline_mode = #tpu.pipeline_mode<synchronous>, transform_indices = @transform_2, window_bounds = array<i64: 1, 384>}, {pipeline_mode = #tpu.pipeline_mode<synchronous>, transform_indices = @transform_3, window_bounds = array<i64: 384, 256>}, {pipeline_mode = #tpu.pipeline_mode<synchronous>, transform_indices = @transform_4, window_bounds = array<i64: 1, 256>}, {pipeline_mode = #tpu.pipeline_mode<synchronous>, transform_indices = @transform_5, window_bounds = array<i64: 256, 128>}, {pipeline_mode = #tpu.pipeline_mode<synchronous>, transform_indices = @transform_6, window_bounds = array<i64: 1, 128>}, {transform_indices = @transform_7, window_bounds = array<i64: 8, 128>}]} {
    %c0 = arith.constant 0 : index
    %c0_0 = arith.constant 0 : index
    %0 = vector.load %arg1[%c0, %c0_0] : memref<8x1600xbf16, #tpu.memory_space<vmem>>, vector<8x1600xbf16>
    %c0_1 = arith.constant 0 : index
    %c0_2 = arith.constant 0 : index
    %1 = vector.load %arg2[%c0_1, %c0_2] : memref<1600x384xbf16, #tpu.memory_space<vmem>>, vector<1600x384xbf16>
    %cst = arith.constant dense<0.000000e+00> : vector<8x384xf32>
    %2 = tpu.matmul %0, %1, %cst {dimension_numbers = #tpu.dot_dimension_numbers<[1], [0], [0], [1], [0, 0, 1, 1], [], []>} : vector<8x1600xbf16>, vector<1600x384xbf16>, vector<8x384xf32> -> vector<8x384xf32>
    %c0_3 = arith.constant 0 : index
    %c0_4 = arith.constant 0 : index
    %3 = vector.load %arg3[%c0_3, %c0_4] : memref<1x384xf32, #tpu.memory_space<vmem>>, vector<1x384xf32>
    %4 = vector.broadcast %3 : vector<1x384xf32> to vector<8x384xf32>
    %5 = arith.addf %2, %4 : vector<8x384xf32>
    %cst_5 = arith.constant 0.000000e+00 : f32
    %6 = vector.broadcast %cst_5 : f32 to vector<8x384xf32>
    %7 = arith.maximumf %5, %6 : vector<8x384xf32>
    %8 = arith.truncf %7 : vector<8x384xf32> to vector<8x384xbf16>
    %c0_6 = arith.constant 0 : index
    %c0_7 = arith.constant 0 : index
    %9 = vector.load %arg4[%c0_6, %c0_7] : memref<384x256xbf16, #tpu.memory_space<vmem>>, vector<384x256xbf16>
    %cst_8 = arith.constant dense<0.000000e+00> : vector<8x256xf32>
    %10 = tpu.matmul %8, %9, %cst_8 {dimension_numbers = #tpu.dot_dimension_numbers<[1], [0], [0], [1], [0, 0, 1, 1], [], []>} : vector<8x384xbf16>, vector<384x256xbf16>, vector<8x256xf32> -> vector<8x256xf32>
    %c0_9 = arith.constant 0 : index
    %c0_10 = arith.constant 0 : index
    %11 = vector.load %arg5[%c0_9, %c0_10] : memref<1x256xf32, #tpu.memory_space<vmem>>, vector<1x256xf32>
    %12 = vector.broadcast %11 : vector<1x256xf32> to vector<8x256xf32>
    %13 = arith.addf %10, %12 : vector<8x256xf32>
    %cst_11 = arith.constant 0.000000e+00 : f32
    %14 = vector.broadcast %cst_11 : f32 to vector<8x256xf32>
    %15 = arith.maximumf %13, %14 : vector<8x256xf32>
    %16 = arith.truncf %15 : vector<8x256xf32> to vector<8x256xbf16>
    %c0_12 = arith.constant 0 : index
    %c0_13 = arith.constant 0 : index
    %17 = vector.load %arg6[%c0_12, %c0_13] : memref<256x128xbf16, #tpu.memory_space<vmem>>, vector<256x128xbf16>
    %cst_14 = arith.constant dense<0.000000e+00> : vector<8x128xf32>
    %18 = tpu.matmul %16, %17, %cst_14 {dimension_numbers = #tpu.dot_dimension_numbers<[1], [0], [0], [1], [0, 0, 1, 1], [], []>} : vector<8x256xbf16>, vector<256x128xbf16>, vector<8x128xf32> -> vector<8x128xf32>
    %c0_15 = arith.constant 0 : index
    %c0_16 = arith.constant 0 : index
    %19 = vector.load %arg7[%c0_15, %c0_16] : memref<1x128xf32, #tpu.memory_space<vmem>>, vector<1x128xf32>
    %20 = vector.broadcast %19 : vector<1x128xf32> to vector<8x128xf32>
    %21 = arith.addf %18, %20 : vector<8x128xf32>
    %c0_17 = arith.constant 0 : index
    %c0_18 = arith.constant 0 : index
    %22 = vector.load %arg8[%c0_17, %c0_18] : memref<8x128xf32, #tpu.memory_space<vmem>>, vector<8x128xf32>
    tpu.vector_store %arg8[%c0_17, %c0_18], %21 {strides = array<i32>} : memref<8x128xf32, #tpu.memory_space<vmem>>, vector<8x128xf32>,
    return
  }
  func.func @transform_0(%arg0: i32) -> (i32, i32) {
    %c0_i32 = arith.constant 0 : i32
    %c0_i32_0 = arith.constant 0 : i32
    return %arg0, %c0_i32 : i32, i32
  }
  func.func @transform_1(%arg0: i32) -> (i32, i32) {
    %c0_i32 = arith.constant 0 : i32
    %c0_i32_0 = arith.constant 0 : i32
    %c0_i32_1 = arith.constant 0 : i32
    return %c0_i32, %c0_i32_0 : i32, i32
  }
  func.func @transform_2(%arg0: i32) -> (i32, i32) {
    %c0_i32 = arith.constant 0 : i32
    %c0_i32_0 = arith.constant 0 : i32
    %c0_i32_1 = arith.constant 0 : i32
    return %c0_i32, %c0_i32_0 : i32, i32
  }
  func.func @transform_3(%arg0: i32) -> (i32, i32) {
    %c0_i32 = arith.constant 0 : i32
    %c0_i32_0 = arith.constant 0 : i32
    %c0_i32_1 = arith.constant 0 : i32
    return %c0_i32, %c0_i32_0 : i32, i32
  }
  func.func @transform_4(%arg0: i32) -> (i32, i32) {
    %c0_i32 = arith.constant 0 : i32
    %c0_i32_0 = arith.constant 0 : i32
    %c0_i32_1 = arith.constant 0 : i32
    return %c0_i32, %c0_i32_0 : i32, i32
  }
  func.func @transform_5(%arg0: i32) -> (i32, i32) {
    %c0_i32 = arith.constant 0 : i32
    %c0_i32_0 = arith.constant 0 : i32
    %c0_i32_1 = arith.constant 0 : i32
    return %c0_i32, %c0_i32_0 : i32, i32
  }
  func.func @transform_6(%arg0: i32) -> (i32, i32) {
    %c0_i32 = arith.constant 0 : i32
    %c0_i32_0 = arith.constant 0 : i32
    %c0_i32_1 = arith.constant 0 : i32
    return %c0_i32, %c0_i32_0 : i32, i32
  }
  func.func @transform_7(%arg0: i32) -> (i32, i32) {
    %c0_i32 = arith.constant 0 : i32
    %c0_i32_0 = arith.constant 0 : i32
    return %arg0, %c0_i32 : i32, i32
  }
}

</mosaic_0001>

<llo_original>
// kernel: convnet_forward.5
$region0: #{convnet_forward.5}
  #allocation0 [shape = 'u32[]', space=smem, size = 0x4, offset = 0x4, fixed_abs, tag = 'smem constant byte address 0x4 - core index']
  #allocation1 [shape = 'u32[144,128]{1,0:T(1,128)}', space=vmem, size = 0x12000, scoped, tag = 'internal scratch']
  %s0 = inlined_call_operand.vmem [shape: bf16[2,784,128], index: 0, kind: input, shape index: {}]
  %s1 = inlined_call_operand.vmem [shape: bf16[128,64], index: 1, kind: input, shape index: {}]
  %s2 = inlined_call_operand.vmem [shape: f32[1,64], index: 2, kind: input, shape index: {}]
  %s3 = inlined_call_operand.vmem [shape: bf16[2,784,64], index: 3, kind: output, shape index: {}]
  %s4 = sld [smem:[#allocation0]]
  $region45: #{convnet_forward.5} parent=0
    _
  %s6 = ssub.s32 1, %s4
  %s7 = scalar_select 0, %s6, %s4
  loop: start=0, step=1, limit=4
  $region2: #{convnet_forward.5} parent=0 // loop_pre_header
    _
  $region3: #{convnet_forward.5} parent=0 // loop_header
    %s9 = sphi 0, %s13
    %p10 = scmp.ge.s32.totalorder %s9, 4
    %s19 = sphi 0, %s21
    %s22 = sphi 0, %s19
    %s23 = sphi 0, %s22
    %s39 = sphi 0, %s23
    %s43 = sphi 0, %s43
    %s45 = sphi 0, %s43
    %s46 = sphi 0, %s45
    %s60 = sphi 0, %s46
    %s64 = sphi 0, %s64
    %s66 = sphi 0, %s64
    %s67 = sphi 0, %s66
    %s81 = sphi 0, %s67
    %s87 = sphi 0, %s89
    %s90 = sphi 0, %s87
    %s91 = sphi 0, %s90
    %s107 = sphi 0, %s91
  $region4: #{convnet_forward.5} parent=0 // loop_header_branch
    %12 = sbr.rel (%p10) target = $region8
  $region5: #{convnet_forward.5} parent=0 // loop_body
    %s14 = ssub.s32 %s9, 1
    %s15 = ssub.s32 %s9, 2
    %s16 = sadd.s32 %s9, 1
    %s17 = ssub.s32 %s9, %s16
    %p18 = scmp.eq.s32.totalorder %s17, 0
    %s20 = sadd.s32 %s19, 1
    %s21 = scalar_select %p18, %s19, %s20
    %p24 = pneg %p18
    %p25 = scmp.eq.s32.totalorder %s9, 1
    %p26 = por %p24, %p25
    %p27 = scmp.ne.s32.totalorder %s19, %s22
    %p28 = scmp.eq.s32.totalorder %s9, 0
    %p29 = por %p27, %p28
    %p30 = scmp.ne.s32.totalorder %s19, %s22
    %p31 = scmp.eq.s32.totalorder %s14, 1
    %p32 = por %p30, %p31
    %p33 = scmp.ne.s32.totalorder %s22, %s23
    %p34 = scmp.eq.s32.totalorder %s14, 0
    %p35 = por %p33, %p34
    %p36 = scmp.ne.s32.totalorder %s22, %s23
    %p37 = scmp.eq.s32.totalorder %s15, 1
    %p38 = por %p36, %p37
    %p40 = scmp.ne.s32.totalorder %s23, %s39
    %p41 = scmp.eq.s32.totalorder %s15, 0
    %p42 = por %p40, %p41
    %s44 = sadd.s32 %s43, 1
    %p47 = scmp.eq.s32.totalorder %s9, 1
    %p48 = scmp.ne.s32.totalorder %s43, %s45
    %p49 = scmp.eq.s32.totalorder %s9, 0
    %p50 = por %p48, %p49
    %p51 = scmp.ne.s32.totalorder %s43, %s45
    %p52 = scmp.eq.s32.totalorder %s14, 1
    %p53 = por %p51, %p52
    %p54 = scmp.ne.s32.totalorder %s45, %s46
    %p55 = scmp.eq.s32.totalorder %s14, 0
    %p56 = por %p54, %p55
    %p57 = scmp.ne.s32.totalorder %s45, %s46
    %p58 = scmp.eq.s32.totalorder %s15, 1
    %p59 = por %p57, %p58
    %p61 = scmp.ne.s32.totalorder %s46, %s60
    %p62 = scmp.eq.s32.totalorder %s15, 0
    %p63 = por %p61, %p62
    %s65 = sadd.s32 %s64, 1
    %p68 = scmp.eq.s32.totalorder %s9, 1
    %p69 = scmp.ne.s32.totalorder %s64, %s66
    %p70 = scmp.eq.s32.totalorder %s9, 0
    %p71 = por %p69, %p70
    %p72 = scmp.ne.s32.totalorder %s64, %s66
    %p73 = scmp.eq.s32.totalorder %s14, 1
    %p74 = por %p72, %p73
    %p75 = scmp.ne.s32.totalorder %s66, %s67
    %p76 = scmp.eq.s32.totalorder %s14, 0
    %p77 = por %p75, %p76
    %p78 = scmp.ne.s32.totalorder %s66, %s67
    %p79 = scmp.eq.s32.totalorder %s15, 1
    %p80 = por %p78, %p79
    %p82 = scmp.ne.s32.totalorder %s67, %s81
    %p83 = scmp.eq.s32.totalorder %s15, 0
    %p84 = por %p82, %p83
    %s85 = ssub.s32 %s9, %s16
    %p86 = scmp.eq.s32.totalorder %s85, 0
    %s88 = sadd.s32 %s87, 1
    %s89 = scalar_select %p86, %s87, %s88
    %p92 = pneg %p86
    %p93 = scmp.eq.s32.totalorder %s9, 1
    %p94 = por %p92, %p93
    %p95 = scmp.ne.s32.totalorder %s87, %s90
    %p96 = scmp.eq.s32.totalorder %s9, 0
    %p97 = por %p95, %p96
    %p98 = scmp.ne.s32.totalorder %s87, %s90
    %p99 = scmp.eq.s32.totalorder %s14, 1
    %p100 = por %p98, %p99
    %p101 = scmp.ne.s32.totalorder %s90, %s91
    %p102 = scmp.eq.s32.totalorder %s14, 0
    %p103 = por %p101, %p102
    %p104 = scmp.ne.s32.totalorder %s90, %s91
    %p105 = scmp.eq.s32.totalorder %s15, 1
    %p106 = por %p104, %p105
    %p108 = scmp.ne.s32.totalorder %s91, %s107
    %p109 = scmp.eq.s32.totalorder %s15, 0
    %p110 = por %p108, %p109
    %p111 = scmp.le.s32.totalorder 1, %s9
    %p112 = scmp.lt.s32.totalorder %s9, 3
    %p113 = pnand %p111, %p112
    %p114 = pneg %p113
    // Predicated region
    $region9: #{convnet_forward.5} parent=5 // pred_check
      _
    $region10: #{convnet_forward.5} parent=5 // pred_check_branch
      %116 = sbr.rel (%p113) target = $region12
    $region11: #{convnet_forward.5} parent=5 // pred_region
      %s117 = ssub.s32 %s9, 1
      // Predicated region
      $region13: #{convnet_forward.5} parent=11 // pred_check
        %p118 = pneg %p56
      $region14: #{convnet_forward.5} parent=11 // pred_check_branch
        %120 = sbr.rel (%p118) target = $region16
      $region15: #{convnet_forward.5} parent=11 // pred_region
        _
      $region16: #{convnet_forward.5} parent=11 // pred_fallthru
        _
      // Predicated region
      $region17: #{convnet_forward.5} parent=11 // pred_check
        %p121 = pneg %p77
      $region18: #{convnet_forward.5} parent=11 // pred_check_branch
        %123 = sbr.rel (%p121) target = $region20
      $region19: #{convnet_forward.5} parent=11 // pred_region
        _
      $region20: #{convnet_forward.5} parent=11 // pred_fallthru
        _
    $region12: #{convnet_forward.5} parent=5 // pred_fallthru
      _
    %p124 = scmp.lt.s32.totalorder %s9, 2
    // Predicated region
    $region21: #{convnet_forward.5} parent=5 // pred_check
      %p125 = pneg %p124
    $region22: #{convnet_forward.5} parent=5 // pred_check_branch
      %127 = sbr.rel (%p125) target = $region24
    $region23: #{convnet_forward.5} parent=5 // pred_region
      // Predicated region
      $region25: #{convnet_forward.5} parent=23 // pred_check
        %p128 = pneg %p29
      $region26: #{convnet_forward.5} parent=23 // pred_check_branch
        %130 = sbr.rel (%p128) target = $region28
      $region27: #{convnet_forward.5} parent=23 // pred_region
        %p131 = scmp.lt.s32.totalorder %s9, 1
        %s132 = scalar_select %p131, %s9, 1
        %s133 = smul.addr %s132, 98
        %s134 = smul.addr %s133, 4
        %s135 = scalar_lea.vmem %s0, %s134
      $region28: #{convnet_forward.5} parent=23 // pred_fallthru
        _
    $region24: #{convnet_forward.5} parent=5 // pred_fallthru
      _
    %p136 = scmp.le.s32.totalorder 1, %s9
    %p137 = scmp.lt.s32.totalorder %s9, 3
    %p138 = pnand %p136, %p137
    %p139 = pneg %p138
    // Predicated region
    $region29: #{convnet_forward.5} parent=5 // pred_check
      _
    $region30: #{convnet_forward.5} parent=5 // pred_check_branch
      %141 = sbr.rel (%p138) target = $region32
    $region31: #{convnet_forward.5} parent=5 // pred_region
      %s142 = ssub.s32 %s9, 1
      %p143 = scmp.lt.s32.totalorder %s14, 1
      %s144 = scalar_select %p143, %s14, 1
      %s145 = smul.addr %s144, 98
      %s146 = smul.addr %s145, 4
      %s147 = scalar_lea.vmem %s0, %s146
      %p148 = pneg %p35
      %p149 = pneg %p32
      %p150 = pneg %p56
      %p151 = pneg %p53
      %p152 = pneg %p77
      %p153 = pneg %p74
      %p154 = pneg %p103
      %p155 = pneg %p100
      %p156 = scmp.lt.s32.totalorder %s14, 1
      %s157 = scalar_select %p156, %s14, 1
      %s158 = smul.addr %s157, 98
      %s159 = smul.addr %s158, 4
      %s160 = scalar_lea.vmem %s3, %s159
      %p161 = scmp.lt.s32.totalorder %s14, 1
      %s162 = scalar_select %p161, %s14, 1
      %s163 = smul.addr %s162, 98
      %s164 = smul.addr %s163, 4
      %s165 = scalar_lea.vmem %s0, %s164
      %p166 = scmp.lt.s32.totalorder %s14, 1
      %s167 = scalar_select %p166, %s14, 1
      %s168 = smul.addr %s167, 98
      %s169 = smul.addr %s168, 4
      %s170 = scalar_lea.vmem %s3, %s169
      %v172 = vld [vmem:[%s165] sm:$0xf]
      %v173 = vld [vmem:[%s165 + $0x4] sm:$0xf]
      %v174 = vld [vmem:[%s165 + $0x8] sm:$0xf]
      %v175 = vld [vmem:[%s165 + $0xc] sm:$0xf]
      %v176 = vld [vmem:[%s165 + $0x10] sm:$0xf]
      %v177 = vld [vmem:[%s165 + $0x14] sm:$0xf]
      %v178 = vld [vmem:[%s165 + $0x18] sm:$0xf]
      %v179 = vld [vmem:[%s165 + $0x1c] sm:$0xf]
      %v180 = vld [vmem:[%s165 + $0x20] sm:$0xf]
      %v181 = vld [vmem:[%s165 + $0x24] sm:$0xf]
      %v182 = vld [vmem:[%s165 + $0x28] sm:$0xf]
      %v183 = vld [vmem:[%s165 + $0x2c] sm:$0xf]
      %v184 = vld [vmem:[%s165 + $0x30] sm:$0xf]
      %v185 = vld [vmem:[%s165 + $0x34] sm:$0xf]
      %v186 = vld [vmem:[%s165 + $0x38] sm:$0xf]
      %v187 = vld [vmem:[%s165 + $0x3c] sm:$0xf]
      %v188 = vld [vmem:[%s165 + $0x40] sm:$0xf]
      %v189 = vld [vmem:[%s165 + $0x44] sm:$0xf]
      %v190 = vld [vmem:[%s165 + $0x48] sm:$0xf]
      %v191 = vld [vmem:[%s165 + $0x4c] sm:$0xf]
      %v192 = vld [vmem:[%s165 + $0x50] sm:$0xf]
      %v193 = vld [vmem:[%s165 + $0x54] sm:$0xf]
      %v194 = vld [vmem:[%s165 + $0x58] sm:$0xf]
      %v195 = vld [vmem:[%s165 + $0x5c] sm:$0xf]
      %v196 = vld [vmem:[%s165 + $0x60] sm:$0xf]
      %v197 = vld [vmem:[%s165 + $0x64] sm:$0xf]
      %v198 = vld [vmem:[%s165 + $0x68] sm:$0xf]
      %v199 = vld [vmem:[%s165 + $0x6c] sm:$0xf]
      %v200 = vld [vmem:[%s165 + $0x70] sm:$0xf]
      %v201 = vld [vmem:[%s165 + $0x74] sm:$0xf]
      %v202 = vld [vmem:[%s165 + $0x78] sm:$0xf]
      %v203 = vld [vmem:[%s165 + $0x7c] sm:$0xf]
      %v204 = vld [vmem:[%s165 + $0x80] sm:$0xf]
      %v205 = vld [vmem:[%s165 + $0x84] sm:$0xf]
      %v206 = vld [vmem:[%s165 + $0x88] sm:$0xf]
      %v207 = vld [vmem:[%s165 + $0x8c] sm:$0xf]
      %v208 = vld [vmem:[%s165 + $0x90] sm:$0xf]
      %v209 = vld [vmem:[%s165 + $0x94] sm:$0xf]
      %v210 = vld [vmem:[%s165 + $0x98] sm:$0xf]
      %v211 = vld [vmem:[%s165 + $0x9c] sm:$0xf]
      %v212 = vld [vmem:[%s165 + $0xa0] sm:$0xf]
      %v213 = vld [vmem:[%s165 + $0xa4] sm:$0xf]
      %v214 = vld [vmem:[%s165 + $0xa8] sm:$0xf]
      %v215 = vld [vmem:[%s165 + $0xac] sm:$0xf]
      %v216 = vld [vmem:[%s165 + $0xb0] sm:$0xf]
      %v217 = vld [vmem:[%s165 + $0xb4] sm:$0xf]
      %v218 = vld [vmem:[%s165 + $0xb8] sm:$0xf]
      %v219 = vld [vmem:[%s165 + $0xbc] sm:$0xf]
      %v220 = vld [vmem:[%s165 + $0xc0] sm:$0xf]
      %v221 = vld [vmem:[%s165 + $0xc4] sm:$0xf]
      %v222 = vld [vmem:[%s165 + $0xc8] sm:$0xf]
      %v223 = vld [vmem:[%s165 + $0xcc] sm:$0xf]
      %v224 = vld [vmem:[%s165 + $0xd0] sm:$0xf]
      %v225 = vld [vmem:[%s165 + $0xd4] sm:$0xf]
      %v226 = vld [vmem:[%s165 + $0xd8] sm:$0xf]
      %v227 = vld [vmem:[%s165 + $0xdc] sm:$0xf]
      %v228 = vld [vmem:[%s165 + $0xe0] sm:$0xf]
      %v229 = vld [vmem:[%s165 + $0xe4] sm:$0xf]
      %v230 = vld [vmem:[%s165 + $0xe8] sm:$0xf]
      %v231 = vld [vmem:[%s165 + $0xec] sm:$0xf]
      %v232 = vld [vmem:[%s165 + $0xf0] sm:$0xf]
      %v233 = vld [vmem:[%s165 + $0xf4] sm:$0xf]
      %v234 = vld [vmem:[%s165 + $0xf8] sm:$0xf]
      %v235 = vld [vmem:[%s165 + $0xfc] sm:$0xf]
      %v236 = vld [vmem:[%s165 + $0x100] sm:$0xf]
      %v237 = vld [vmem:[%s165 + $0x104] sm:$0xf]
      %v238 = vld [vmem:[%s165 + $0x108] sm:$0xf]
      %v239 = vld [vmem:[%s165 + $0x10c] sm:$0xf]
      %v240 = vld [vmem:[%s165 + $0x110] sm:$0xf]
      %v241 = vld [vmem:[%s165 + $0x114] sm:$0xf]
      %v242 = vld [vmem:[%s165 + $0x118] sm:$0xf]
      %v243 = vld [vmem:[%s165 + $0x11c] sm:$0xf]
      %v244 = vld [vmem:[%s165 + $0x120] sm:$0xf]
      %v245 = vld [vmem:[%s165 + $0x124] sm:$0xf]
      %v246 = vld [vmem:[%s165 + $0x128] sm:$0xf]
      %v247 = vld [vmem:[%s165 + $0x12c] sm:$0xf]
      %v248 = vld [vmem:[%s165 + $0x130] sm:$0xf]
      %v249 = vld [vmem:[%s165 + $0x134] sm:$0xf]
      %v250 = vld [vmem:[%s165 + $0x138] sm:$0xf]
      %v251 = vld [vmem:[%s165 + $0x13c] sm:$0xf]
      %v252 = vld [vmem:[%s165 + $0x140] sm:$0xf]
      %v253 = vld [vmem:[%s165 + $0x144] sm:$0xf]
      %v254 = vld [vmem:[%s165 + $0x148] sm:$0xf]
      %v255 = vld [vmem:[%s165 + $0x14c] sm:$0xf]
      %v256 = vld [vmem:[%s165 + $0x150] sm:$0xf]
      %v257 = vld [vmem:[%s165 + $0x154] sm:$0xf]
      %v258 = vld [vmem:[%s165 + $0x158] sm:$0xf]
      %v259 = vld [vmem:[%s165 + $0x15c] sm:$0xf]
      %v260 = vld [vmem:[%s165 + $0x160] sm:$0xf]
      %v261 = vld [vmem:[%s165 + $0x164] sm:$0xf]
      %v262 = vld [vmem:[%s165 + $0x168] sm:$0xf]
      %v263 = vld [vmem:[%s165 + $0x16c] sm:$0xf]
      %v264 = vld [vmem:[%s165 + $0x170] sm:$0xf]
      %v265 = vld [vmem:[%s165 + $0x174] sm:$0xf]
      %v266 = vld [vmem:[%s165 + $0x178] sm:$0xf]
      %v267 = vld [vmem:[%s165 + $0x17c] sm:$0xf]
      %v268 = vld [vmem:[%s165 + $0x180] sm:$0xf]
      %v269 = vld [vmem:[%s165 + $0x184] sm:$0xf]
      %v270 = vld [vmem:[%s1] sm:$0xf]
      %v271 = vld [vmem:[%s1 + $0x4] sm:$0xf]
      %v272 = vld [vmem:[%s1 + $0x8] sm:$0xf]
      %v273 = vld [vmem:[%s1 + $0xc] sm:$0xf]
      %v274 = vld [vmem:[%s1 + $0x10] sm:$0xf]
      %v275 = vld [vmem:[%s1 + $0x14] sm:$0xf]
      %v276 = vld [vmem:[%s1 + $0x18] sm:$0xf]
      %v277 = vld [vmem:[%s1 + $0x1c] sm:$0xf]
      %v278 = vld [vmem:[%s1 + $0x20] sm:$0xf]
      %v279 = vld [vmem:[%s1 + $0x24] sm:$0xf]
      %v280 = vld [vmem:[%s1 + $0x28] sm:$0xf]
      %v281 = vld [vmem:[%s1 + $0x2c] sm:$0xf]
      %v282 = vld [vmem:[%s1 + $0x30] sm:$0xf]
      %v283 = vld [vmem:[%s1 + $0x34] sm:$0xf]
      %v284 = vld [vmem:[%s1 + $0x38] sm:$0xf]
      %v285 = vld [vmem:[%s1 + $0x3c] sm:$0xf]
      %v286 = vld [vmem:[%s2] sm:$0x1]
      %v288 = vlaneseq
      %v289 = vshrl.u32 %v288, 7
      %v290 = vsub.s32 0, %v289
      %v291 = vrot.slane %v286, %v290
      %v391 = vunpack.c.l.b16 %v172
      %v392 = vunpack.c.l.b16 %v173
      %v393 = vunpack.c.l.b16 %v174
      %v394 = vunpack.c.l.b16 %v175
      %v395 = vunpack.c.l.b16 %v176
      %v396 = vunpack.c.l.b16 %v177
      %v397 = vunpack.c.l.b16 %v178
      %v398 = vunpack.c.l.b16 %v179
      %v399 = vunpack.c.l.b16 %v180
      %v400 = vunpack.c.l.b16 %v181
      %v401 = vunpack.c.l.b16 %v182
      %v402 = vunpack.c.l.b16 %v183
      %v403 = vunpack.c.l.b16 %v184
      %v404 = vunpack.c.l.b16 %v185
      %v405 = vunpack.c.l.b16 %v186
      %v406 = vunpack.c.l.b16 %v187
      %v407 = vunpack.c.l.b16 %v188
      %v408 = vunpack.c.l.b16 %v189
      %v409 = vunpack.c.l.b16 %v190
      %v410 = vunpack.c.l.b16 %v191
      %v411 = vunpack.c.l.b16 %v192
      %v412 = vunpack.c.l.b16 %v193
      %v413 = vunpack.c.l.b16 %v194
      %v414 = vunpack.c.l.b16 %v195
      %v415 = vunpack.c.l.b16 %v196
      %v416 = vunpack.c.l.b16 %v197
      %v417 = vunpack.c.l.b16 %v198
      %v418 = vunpack.c.l.b16 %v199
      %v419 = vunpack.c.l.b16 %v200
      %v420 = vunpack.c.l.b16 %v201
      %v421 = vunpack.c.l.b16 %v202
      %v422 = vunpack.c.l.b16 %v203
      %v423 = vunpack.c.l.b16 %v204
      %v424 = vunpack.c.l.b16 %v205
      %v425 = vunpack.c.l.b16 %v206
      %v426 = vunpack.c.l.b16 %v207
      %v427 = vunpack.c.l.b16 %v208
      %v428 = vunpack.c.l.b16 %v209
      %v429 = vunpack.c.l.b16 %v210
      %v430 = vunpack.c.l.b16 %v211
      %v431 = vunpack.c.l.b16 %v212
      %v432 = vunpack.c.l.b16 %v213
      %v433 = vunpack.c.l.b16 %v214
      %v434 = vunpack.c.l.b16 %v215
      %v435 = vunpack.c.l.b16 %v216
      %v436 = vunpack.c.l.b16 %v217
      %v437 = vunpack.c.l.b16 %v218
      %v438 = vunpack.c.l.b16 %v219
      %v439 = vunpack.c.l.b16 %v220
      %v440 = vunpack.c.l.b16 %v221
      %v441 = vunpack.c.l.b16 %v222
      %v442 = vunpack.c.l.b16 %v223
      %v443 = vunpack.c.l.b16 %v224
      %v444 = vunpack.c.l.b16 %v225
      %v445 = vunpack.c.l.b16 %v226
      %v446 = vunpack.c.l.b16 %v227
      %v447 = vunpack.c.l.b16 %v228
      %v448 = vunpack.c.l.b16 %v229
      %v449 = vunpack.c.l.b16 %v230
      %v450 = vunpack.c.l.b16 %v231
      %v451 = vunpack.c.l.b16 %v232
      %v452 = vunpack.c.l.b16 %v233
      %v453 = vunpack.c.l.b16 %v234
      %v454 = vunpack.c.l.b16 %v235
      %v455 = vunpack.c.l.b16 %v236
      %v456 = vunpack.c.l.b16 %v237
      %v457 = vunpack.c.l.b16 %v238
      %v458 = vunpack.c.l.b16 %v239
      %v459 = vunpack.c.l.b16 %v240
      %v460 = vunpack.c.l.b16 %v241
      %v461 = vunpack.c.l.b16 %v242
      %v462 = vunpack.c.l.b16 %v243
      %v463 = vunpack.c.l.b16 %v244
      %v464 = vunpack.c.l.b16 %v245
      %v465 = vunpack.c.l.b16 %v246
      %v466 = vunpack.c.l.b16 %v247
      %v467 = vunpack.c.l.b16 %v248
      %v468 = vunpack.c.l.b16 %v249
      %v469 = vunpack.c.l.b16 %v250
      %v470 = vunpack.c.l.b16 %v251
      %v471 = vunpack.c.l.b16 %v252
      %v472 = vunpack.c.l.b16 %v253
      %v473 = vunpack.c.l.b16 %v254
      %v474 = vunpack.c.l.b16 %v255
      %v475 = vunpack.c.l.b16 %v256
      %v476 = vunpack.c.l.b16 %v257
      %v477 = vunpack.c.l.b16 %v258
      %v478 = vunpack.c.l.b16 %v259
      %v479 = vunpack.c.l.b16 %v260
      %v480 = vunpack.c.l.b16 %v261
      %v481 = vunpack.c.l.b16 %v262
      %v482 = vunpack.c.l.b16 %v263
      %v483 = vunpack.c.l.b16 %v264
      %v484 = vunpack.c.l.b16 %v265
      %v485 = vunpack.c.l.b16 %v266
      %v486 = vunpack.c.l.b16 %v267
      %v487 = vunpack.c.l.b16 %v268
      %v488 = vunpack.c.l.b16 %v269
      %v489 = vpack.c.b16 %v392, %v391
      %v490 = vpack.c.b16 %v394, %v393
      %v491 = vpack.c.b16 %v396, %v395
      %v492 = vpack.c.b16 %v398, %v397
      %v493 = vpack.c.b16 %v400, %v399
      %v494 = vpack.c.b16 %v402, %v401
      %v495 = vpack.c.b16 %v404, %v403
      %v496 = vpack.c.b16 %v406, %v405
      %v497 = vpack.c.b16 %v408, %v407
      %v498 = vpack.c.b16 %v410, %v409
      %v499 = vpack.c.b16 %v412, %v411
      %v500 = vpack.c.b16 %v414, %v413
      %v501 = vpack.c.b16 %v416, %v415
      %v502 = vpack.c.b16 %v418, %v417
      %v503 = vpack.c.b16 %v420, %v419
      %v504 = vpack.c.b16 %v422, %v421
      %v505 = vpack.c.b16 %v424, %v423
      %v506 = vpack.c.b16 %v426, %v425
      %v507 = vpack.c.b16 %v428, %v427
      %v508 = vpack.c.b16 %v430, %v429
      %v509 = vpack.c.b16 %v432, %v431
      %v510 = vpack.c.b16 %v434, %v433
      %v511 = vpack.c.b16 %v436, %v435
      %v512 = vpack.c.b16 %v438, %v437
      %v513 = vpack.c.b16 %v440, %v439
      %v514 = vpack.c.b16 %v442, %v441
      %v515 = vpack.c.b16 %v444, %v443
      %v516 = vpack.c.b16 %v446, %v445
      %v517 = vpack.c.b16 %v448, %v447
      %v518 = vpack.c.b16 %v450, %v449
      %v519 = vpack.c.b16 %v452, %v451
      %v520 = vpack.c.b16 %v454, %v453
      %v521 = vpack.c.b16 %v456, %v455
      %v522 = vpack.c.b16 %v458, %v457
      %v523 = vpack.c.b16 %v460, %v459
      %v524 = vpack.c.b16 %v462, %v461
      %v525 = vpack.c.b16 %v464, %v463
      %v526 = vpack.c.b16 %v466, %v465
      %v527 = vpack.c.b16 %v468, %v467
      %v528 = vpack.c.b16 %v470, %v469
      %v529 = vpack.c.b16 %v472, %v471
      %v530 = vpack.c.b16 %v474, %v473
      %v531 = vpack.c.b16 %v476, %v475
      %v532 = vpack.c.b16 %v478, %v477
      %v533 = vpack.c.b16 %v480, %v479
      %v534 = vpack.c.b16 %v482, %v481
      %v535 = vpack.c.b16 %v484, %v483
      %v536 = vpack.c.b16 %v486, %v485
      %v537 = vpack.c.b16 %v488, %v487
      %v603 = vunpack.c.l.b16 %v270
      %v604 = vunpack.c.l.b16 %v271
      %v605 = vunpack.c.l.b16 %v272
      %v606 = vunpack.c.l.b16 %v273
      %v607 = vunpack.c.l.b16 %v274
      %v608 = vunpack.c.l.b16 %v275
      %v609 = vunpack.c.l.b16 %v276
      %v610 = vunpack.c.l.b16 %v277
      %v611 = vunpack.c.l.b16 %v278
      %v612 = vunpack.c.l.b16 %v279
      %v613 = vunpack.c.l.b16 %v280
      %v614 = vunpack.c.l.b16 %v281
      %v615 = vunpack.c.l.b16 %v282
      %v616 = vunpack.c.l.b16 %v283
      %v617 = vunpack.c.l.b16 %v284
      %v618 = vunpack.c.l.b16 %v285
      %v619 = vpack.c.b16 %v604, %v603
      %v620 = vpack.c.b16 %v606, %v605
      %v621 = vpack.c.b16 %v608, %v607
      %v622 = vpack.c.b16 %v610, %v609
      %v623 = vpack.c.b16 %v612, %v611
      %v624 = vpack.c.b16 %v614, %v613
      %v625 = vpack.c.b16 %v616, %v615
      %v626 = vpack.c.b16 %v618, %v617
      %635 = vmatprep.subr.bf16.mxu0 0
      %636 = vmatpush1.bf16.msra.mxu0 %v619
      %637 = vmatprep.subr.bf16.mxu0 0
      %638 = vmatpush1.bf16.msra.mxu0 %v620
      %639 = vmatprep.subr.bf16.mxu0 0
      %640 = vmatpush1.bf16.msra.mxu0 %v621
      %641 = vmatprep.subr.bf16.mxu0 0
      %642 = vmatpush1.bf16.msra.mxu0 %v622
      %643 = vmatprep.subr.bf16.mxu0 0
      %644 = vmatpush1.bf16.msra.mxu0 %v623
      %645 = vmatprep.subr.bf16.mxu0 0
      %646 = vmatpush1.bf16.msra.mxu0 %v624
      %647 = vmatprep.subr.bf16.mxu0 0
      %648 = vmatpush1.bf16.msra.mxu0 %v625
      %649 = vmatprep.subr.bf16.mxu0 0
      %650 = vmatpush1.bf16.msra.mxu0 %v626
      %651 = vmatprep.subr.bf16.mxu0 0
      %652 = vmatpush1.bf16.msra.mxu0 0
      %653 = vmatprep.subr.bf16.mxu0 0
      %654 = vmatpush1.bf16.msra.mxu0 0
      %655 = vmatprep.subr.bf16.mxu0 0
      %656 = vmatpush1.bf16.msra.mxu0 0
      %657 = vmatprep.subr.bf16.mxu0 0
      %658 = vmatpush1.bf16.msra.mxu0 0
      %659 = vmatprep.subr.bf16.mxu0 0
      %660 = vmatpush1.bf16.msra.mxu0 0
      %661 = vmatprep.subr.bf16.mxu0 0
      %662 = vmatpush1.bf16.msra.mxu0 0
      %663 = vmatprep.subr.bf16.mxu0 0
      %664 = vmatpush1.bf16.msra.mxu0 0
      %665 = vmatprep.subr.bf16.mxu0 0
      %666 = vmatpush1.bf16.msra.mxu0 0
      %667 = vmatprep.mubr.bf16.mxu0 0
      %668 = vmatmul.mubr.bf16.gmra.mrb[0].mxu0 %v489
      %v669 = vpop.f32.mrb[0].mxu0
      %v670 = vadd.f32 %v291, %v669
      %v671 = vpop.f32.mrb[0].mxu0
      %v672 = vpop.f32.mrb[0].mxu0
      %v673 = vadd.f32 %v291, %v672
      %v674 = vpop.f32.mrb[0].mxu0
      %675 = vmatprep.mubr.bf16.mxu0 0
      %676 = vmatmul.mubr.bf16.gmra.mrb[0].mxu0 %v490
      %v677 = vpop.f32.mrb[0].mxu0
      %v678 = vadd.f32 %v291, %v677
      %v679 = vpop.f32.mrb[0].mxu0
      %v680 = vpop.f32.mrb[0].mxu0
      %v681 = vadd.f32 %v291, %v680
      %v682 = vpop.f32.mrb[0].mxu0
      %683 = vmatprep.mubr.bf16.mxu0 0
      %684 = vmatmul.mubr.bf16.gmra.mrb[0].mxu0 %v491
      %v685 = vpop.f32.mrb[0].mxu0
      %v686 = vadd.f32 %v291, %v685
      %v687 = vpop.f32.mrb[0].mxu0
      %v688 = vpop.f32.mrb[0].mxu0
      %v689 = vadd.f32 %v291, %v688
      %v690 = vpop.f32.mrb[0].mxu0
      %691 = vmatprep.mubr.bf16.mxu0 0
      %692 = vmatmul.mubr.bf16.gmra.mrb[0].mxu0 %v492
      %v693 = vpop.f32.mrb[0].mxu0
      %v694 = vadd.f32 %v291, %v693
      %v695 = vpop.f32.mrb[0].mxu0
      %v696 = vpop.f32.mrb[0].mxu0
      %v697 = vadd.f32 %v291, %v696
      %v698 = vpop.f32.mrb[0].mxu0
      %699 = vmatprep.mubr.bf16.mxu0 0
      %700 = vmatmul.mubr.bf16.gmra.mrb[0].mxu0 %v493
      %v701 = vpop.f32.mrb[0].mxu0
      %v702 = vadd.f32 %v291, %v701
      %v703 = vpop.f32.mrb[0].mxu0
      %v704 = vpop.f32.mrb[0].mxu0
      %v705 = vadd.f32 %v291, %v704
      %v706 = vpop.f32.mrb[0].mxu0
      %707 = vmatprep.mubr.bf16.mxu0 0
      %708 = vmatmul.mubr.bf16.gmra.mrb[0].mxu0 %v494
      %v709 = vpop.f32.mrb[0].mxu0
      %v710 = vadd.f32 %v291, %v709
      %v711 = vpop.f32.mrb[0].mxu0
      %v712 = vpop.f32.mrb[0].mxu0
      %v713 = vadd.f32 %v291, %v712
      %v714 = vpop.f32.mrb[0].mxu0
      %715 = vmatprep.mubr.bf16.mxu0 0
      %716 = vmatmul.mubr.bf16.gmra.mrb[0].mxu0 %v495
      %v717 = vpop.f32.mrb[0].mxu0
      %v718 = vadd.f32 %v291, %v717
      %v719 = vpop.f32.mrb[0].mxu0
      %v720 = vpop.f32.mrb[0].mxu0
      %v721 = vadd.f32 %v291, %v720
      %v722 = vpop.f32.mrb[0].mxu0
      %723 = vmatprep.mubr.bf16.mxu0 0
      %724 = vmatmul.mubr.bf16.gmra.mrb[0].mxu0 %v496
      %v725 = vpop.f32.mrb[0].mxu0
      %v726 = vadd.f32 %v291, %v725
      %v727 = vpop.f32.mrb[0].mxu0
      %v728 = vpop.f32.mrb[0].mxu0
      %v729 = vadd.f32 %v291, %v728
      %v730 = vpop.f32.mrb[0].mxu0
      %731 = vmatprep.mubr.bf16.mxu0 0
      %732 = vmatmul.mubr.bf16.gmra.mrb[0].mxu0 %v497
      %v733 = vpop.f32.mrb[0].mxu0
      %v734 = vadd.f32 %v291, %v733
      %v735 = vpop.f32.mrb[0].mxu0
      %v736 = vpop.f32.mrb[0].mxu0
      %v737 = vadd.f32 %v291, %v736
      %v738 = vpop.f32.mrb[0].mxu0
      %739 = vmatprep.mubr.bf16.mxu0 0
      %740 = vmatmul.mubr.bf16.gmra.mrb[0].mxu0 %v498
      %v741 = vpop.f32.mrb[0].mxu0
      %v742 = vadd.f32 %v291, %v741
      %v743 = vpop.f32.mrb[0].mxu0
      %v744 = vpop.f32.mrb[0].mxu0
      %v745 = vadd.f32 %v291, %v744
      %v746 = vpop.f32.mrb[0].mxu0
      %747 = vmatprep.mubr.bf16.mxu0 0
      %748 = vmatmul.mubr.bf16.gmra.mrb[0].mxu0 %v499
      %v749 = vpop.f32.mrb[0].mxu0
      %v750 = vadd.f32 %v291, %v749
      %v751 = vpop.f32.mrb[0].mxu0
      %v752 = vpop.f32.mrb[0].mxu0
      %v753 = vadd.f32 %v291, %v752
      %v754 = vpop.f32.mrb[0].mxu0
      %755 = vmatprep.mubr.bf16.mxu0 0
      %756 = vmatmul.mubr.bf16.gmra.mrb[0].mxu0 %v500
      %v757 = vpop.f32.mrb[0].mxu0
      %v758 = vadd.f32 %v291, %v757
      %v759 = vpop.f32.mrb[0].mxu0
      %v760 = vpop.f32.mrb[0].mxu0
      %v761 = vadd.f32 %v291, %v760
      %v762 = vpop.f32.mrb[0].mxu0
      %763 = vmatprep.mubr.bf16.mxu0 0
      %764 = vmatmul.mubr.bf16.gmra.mrb[0].mxu0 %v501
      %v765 = vpop.f32.mrb[0].mxu0
      %v766 = vadd.f32 %v291, %v765
      %v767 = vpop.f32.mrb[0].mxu0
      %v768 = vpop.f32.mrb[0].mxu0
      %v769 = vadd.f32 %v291, %v768
      %v770 = vpop.f32.mrb[0].mxu0
      %771 = vmatprep.mubr.bf16.mxu0 0
      %772 = vmatmul.mubr.bf16.gmra.mrb[0].mxu0 %v502
      %v773 = vpop.f32.mrb[0].mxu0
      %v774 = vadd.f32 %v291, %v773
      %v775 = vpop.f32.mrb[0].mxu0
      %v776 = vpop.f32.mrb[0].mxu0
      %v777 = vadd.f32 %v291, %v776
      %v778 = vpop.f32.mrb[0].mxu0
      %779 = vmatprep.mubr.bf16.mxu0 0
      %780 = vmatmul.mubr.bf16.gmra.mrb[0].mxu0 %v503
      %v781 = vpop.f32.mrb[0].mxu0
      %v782 = vadd.f32 %v291, %v781
      %v783 = vpop.f32.mrb[0].mxu0
      %v784 = vpop.f32.mrb[0].mxu0
      %v785 = vadd.f32 %v291, %v784
      %v786 = vpop.f32.mrb[0].mxu0
      %787 = vmatprep.mubr.bf16.mxu0 0
      %788 = vmatmul.mubr.bf16.gmra.mrb[0].mxu0 %v504
      %v789 = vpop.f32.mrb[0].mxu0
      %v790 = vadd.f32 %v291, %v789
      %v791 = vpop.f32.mrb[0].mxu0
      %v792 = vpop.f32.mrb[0].mxu0
      %v793 = vadd.f32 %v291, %v792
      %v794 = vpop.f32.mrb[0].mxu0
      %795 = vmatprep.mubr.bf16.mxu0 0
      %796 = vmatmul.mubr.bf16.gmra.mrb[0].mxu0 %v505
      %v797 = vpop.f32.mrb[0].mxu0
      %v798 = vadd.f32 %v291, %v797
      %v799 = vpop.f32.mrb[0].mxu0
      %v800 = vpop.f32.mrb[0].mxu0
      %v801 = vadd.f32 %v291, %v800
      %v802 = vpop.f32.mrb[0].mxu0
      %803 = vmatprep.mubr.bf16.mxu0 0
      %804 = vmatmul.mubr.bf16.gmra.mrb[0].mxu0 %v506
      %v805 = vpop.f32.mrb[0].mxu0
      %v806 = vadd.f32 %v291, %v805
      %v807 = vpop.f32.mrb[0].mxu0
      %v808 = vpop.f32.mrb[0].mxu0
      %v809 = vadd.f32 %v291, %v808
      %v810 = vpop.f32.mrb[0].mxu0
      %811 = vmatprep.mubr.bf16.mxu0 0
      %812 = vmatmul.mubr.bf16.gmra.mrb[0].mxu0 %v507
      %v813 = vpop.f32.mrb[0].mxu0
      %v814 = vadd.f32 %v291, %v813
      %v815 = vpop.f32.mrb[0].mxu0
      %v816 = vpop.f32.mrb[0].mxu0
      %v817 = vadd.f32 %v291, %v816
      %v818 = vpop.f32.mrb[0].mxu0
      %819 = vmatprep.mubr.bf16.mxu0 0
      %820 = vmatmul.mubr.bf16.gmra.mrb[0].mxu0 %v508
      %v821 = vpop.f32.mrb[0].mxu0
      %v822 = vadd.f32 %v291, %v821
      %v823 = vpop.f32.mrb[0].mxu0
      %v824 = vpop.f32.mrb[0].mxu0
      %v825 = vadd.f32 %v291, %v824
      %v826 = vpop.f32.mrb[0].mxu0
      %827 = vmatprep.mubr.bf16.mxu0 0
      %828 = vmatmul.mubr.bf16.gmra.mrb[0].mxu0 %v509
      %v829 = vpop.f32.mrb[0].mxu0
      %v830 = vadd.f32 %v291, %v829
      %v831 = vpop.f32.mrb[0].mxu0
      %v832 = vpop.f32.mrb[0].mxu0
      %v833 = vadd.f32 %v291, %v832
      %v834 = vpop.f32.mrb[0].mxu0
      %835 = vmatprep.mubr.bf16.mxu0 0
      %836 = vmatmul.mubr.bf16.gmra.mrb[0].mxu0 %v510
      %v837 = vpop.f32.mrb[0].mxu0
      %v838 = vadd.f32 %v291, %v837
      %v839 = vpop.f32.mrb[0].mxu0
      %v840 = vpop.f32.mrb[0].mxu0
      %v841 = vadd.f32 %v291, %v840
      %v842 = vpop.f32.mrb[0].mxu0
      %843 = vmatprep.mubr.bf16.mxu0 0
      %844 = vmatmul.mubr.bf16.gmra.mrb[0].mxu0 %v511
      %v845 = vpop.f32.mrb[0].mxu0
      %v846 = vadd.f32 %v291, %v845
      %v847 = vpop.f32.mrb[0].mxu0
      %v848 = vpop.f32.mrb[0].mxu0
      %v849 = vadd.f32 %v291, %v848
      %v850 = vpop.f32.mrb[0].mxu0
      %851 = vmatprep.mubr.bf16.mxu0 0
      %852 = vmatmul.mubr.bf16.gmra.mrb[0].mxu0 %v512
      %v853 = vpop.f32.mrb[0].mxu0
      %v854 = vadd.f32 %v291, %v853
      %v855 = vpop.f32.mrb[0].mxu0
      %v856 = vpop.f32.mrb[0].mxu0
      %v857 = vadd.f32 %v291, %v856
      %v858 = vpop.f32.mrb[0].mxu0
      %859 = vmatprep.mubr.bf16.mxu0 0
      %860 = vmatmul.mubr.bf16.gmra.mrb[0].mxu0 %v513
      %v861 = vpop.f32.mrb[0].mxu0
      %v862 = vadd.f32 %v291, %v861
      %v863 = vpop.f32.mrb[0].mxu0
      %v864 = vpop.f32.mrb[0].mxu0
      %v865 = vadd.f32 %v291, %v864
      %v866 = vpop.f32.mrb[0].mxu0
      %867 = vmatprep.mubr.bf16.mxu0 0
      %868 = vmatmul.mubr.bf16.gmra.mrb[0].mxu0 %v514
      %v869 = vpop.f32.mrb[0].mxu0
      %v870 = vadd.f32 %v291, %v869
      %v871 = vpop.f32.mrb[0].mxu0
      %v872 = vpop.f32.mrb[0].mxu0
      %v873 = vadd.f32 %v291, %v872
      %v874 = vpop.f32.mrb[0].mxu0
      %875 = vmatprep.mubr.bf16.mxu0 0
      %876 = vmatmul.mubr.bf16.gmra.mrb[0].mxu0 %v515
      %v877 = vpop.f32.mrb[0].mxu0
      %v878 = vadd.f32 %v291, %v877
      %v879 = vpop.f32.mrb[0].mxu0
      %v880 = vpop.f32.mrb[0].mxu0
      %v881 = vadd.f32 %v291, %v880
      %v882 = vpop.f32.mrb[0].mxu0
      %883 = vmatprep.mubr.bf16.mxu0 0
      %884 = vmatmul.mubr.bf16.gmra.mrb[0].mxu0 %v516
      %v885 = vpop.f32.mrb[0].mxu0
      %v886 = vadd.f32 %v291, %v885
      %v887 = vpop.f32.mrb[0].mxu0
      %v888 = vpop.f32.mrb[0].mxu0
      %v889 = vadd.f32 %v291, %v888
      %v890 = vpop.f32.mrb[0].mxu0
      %891 = vmatprep.mubr.bf16.mxu0 0
      %892 = vmatmul.mubr.bf16.gmra.mrb[0].mxu0 %v517
      %v893 = vpop.f32.mrb[0].mxu0
      %v894 = vadd.f32 %v291, %v893
      %v895 = vpop.f32.mrb[0].mxu0
      %v896 = vpop.f32.mrb[0].mxu0
      %v897 = vadd.f32 %v291, %v896
      %v898 = vpop.f32.mrb[0].mxu0
      %899 = vmatprep.mubr.bf16.mxu0 0
      %900 = vmatmul.mubr.bf16.gmra.mrb[0].mxu0 %v518
      %v901 = vpop.f32.mrb[0].mxu0
      %v902 = vadd.f32 %v291, %v901
      %v903 = vpop.f32.mrb[0].mxu0
      %v904 = vpop.f32.mrb[0].mxu0
      %v905 = vadd.f32 %v291, %v904
      %v906 = vpop.f32.mrb[0].mxu0
      %907 = vmatprep.mubr.bf16.mxu0 0
      %908 = vmatmul.mubr.bf16.gmra.mrb[0].mxu0 %v519
      %v909 = vpop.f32.mrb[0].mxu0
      %v910 = vadd.f32 %v291, %v909
      %v911 = vpop.f32.mrb[0].mxu0
      %v912 = vpop.f32.mrb[0].mxu0
      %v913 = vadd.f32 %v291, %v912
      %v914 = vpop.f32.mrb[0].mxu0
      %915 = vmatprep.mubr.bf16.mxu0 0
      %916 = vmatmul.mubr.bf16.gmra.mrb[0].mxu0 %v520
      %v917 = vpop.f32.mrb[0].mxu0
      %v918 = vadd.f32 %v291, %v917
      %v919 = vpop.f32.mrb[0].mxu0
      %v920 = vpop.f32.mrb[0].mxu0
      %v921 = vadd.f32 %v291, %v920
      %v922 = vpop.f32.mrb[0].mxu0
      %923 = vmatprep.mubr.bf16.mxu0 0
      %924 = vmatmul.mubr.bf16.gmra.mrb[0].mxu0 %v521
      %v925 = vpop.f32.mrb[0].mxu0
      %v926 = vadd.f32 %v291, %v925
      %v927 = vpop.f32.mrb[0].mxu0
      %v928 = vpop.f32.mrb[0].mxu0
      %v929 = vadd.f32 %v291, %v928
      %v930 = vpop.f32.mrb[0].mxu0
      %931 = vmatprep.mubr.bf16.mxu0 0
      %932 = vmatmul.mubr.bf16.gmra.mrb[0].mxu0 %v522
      %v933 = vpop.f32.mrb[0].mxu0
      %v934 = vadd.f32 %v291, %v933
      %v935 = vpop.f32.mrb[0].mxu0
      %v936 = vpop.f32.mrb[0].mxu0
      %v937 = vadd.f32 %v291, %v936
      %v938 = vpop.f32.mrb[0].mxu0
      %939 = vmatprep.mubr.bf16.mxu0 0
      %940 = vmatmul.mubr.bf16.gmra.mrb[0].mxu0 %v523
      %v941 = vpop.f32.mrb[0].mxu0
      %v942 = vadd.f32 %v291, %v941
      %v943 = vpop.f32.mrb[0].mxu0
      %v944 = vpop.f32.mrb[0].mxu0
      %v945 = vadd.f32 %v291, %v944
      %v946 = vpop.f32.mrb[0].mxu0
      %947 = vmatprep.mubr.bf16.mxu0 0
      %948 = vmatmul.mubr.bf16.gmra.mrb[0].mxu0 %v524
      %v949 = vpop.f32.mrb[0].mxu0
      %v950 = vadd.f32 %v291, %v949
      %v951 = vpop.f32.mrb[0].mxu0
      %v952 = vpop.f32.mrb[0].mxu0
      %v953 = vadd.f32 %v291, %v952
      %v954 = vpop.f32.mrb[0].mxu0
      %955 = vmatprep.mubr.bf16.mxu0 0
      %956 = vmatmul.mubr.bf16.gmra.mrb[0].mxu0 %v525
      %v957 = vpop.f32.mrb[0].mxu0
      %v958 = vadd.f32 %v291, %v957
      %v959 = vpop.f32.mrb[0].mxu0
      %v960 = vpop.f32.mrb[0].mxu0
      %v961 = vadd.f32 %v291, %v960
      %v962 = vpop.f32.mrb[0].mxu0
      %963 = vmatprep.mubr.bf16.mxu0 0
      %964 = vmatmul.mubr.bf16.gmra.mrb[0].mxu0 %v526
      %v965 = vpop.f32.mrb[0].mxu0
      %v966 = vadd.f32 %v291, %v965
      %v967 = vpop.f32.mrb[0].mxu0
      %v968 = vpop.f32.mrb[0].mxu0
      %v969 = vadd.f32 %v291, %v968
      %v970 = vpop.f32.mrb[0].mxu0
      %971 = vmatprep.mubr.bf16.mxu0 0
      %972 = vmatmul.mubr.bf16.gmra.mrb[0].mxu0 %v527
      %v973 = vpop.f32.mrb[0].mxu0
      %v974 = vadd.f32 %v291, %v973
      %v975 = vpop.f32.mrb[0].mxu0
      %v976 = vpop.f32.mrb[0].mxu0
      %v977 = vadd.f32 %v291, %v976
      %v978 = vpop.f32.mrb[0].mxu0
      %979 = vmatprep.mubr.bf16.mxu0 0
      %980 = vmatmul.mubr.bf16.gmra.mrb[0].mxu0 %v528
      %v981 = vpop.f32.mrb[0].mxu0
      %v982 = vadd.f32 %v291, %v981
      %v983 = vpop.f32.mrb[0].mxu0
      %v984 = vpop.f32.mrb[0].mxu0
      %v985 = vadd.f32 %v291, %v984
      %v986 = vpop.f32.mrb[0].mxu0
      %987 = vmatprep.mubr.bf16.mxu0 0
      %988 = vmatmul.mubr.bf16.gmra.mrb[0].mxu0 %v529
      %v989 = vpop.f32.mrb[0].mxu0
      %v990 = vadd.f32 %v291, %v989
      %v991 = vpop.f32.mrb[0].mxu0
      %v992 = vpop.f32.mrb[0].mxu0
      %v993 = vadd.f32 %v291, %v992
      %v994 = vpop.f32.mrb[0].mxu0
      %995 = vmatprep.mubr.bf16.mxu0 0
      %996 = vmatmul.mubr.bf16.gmra.mrb[0].mxu0 %v530
      %v997 = vpop.f32.mrb[0].mxu0
      %v998 = vadd.f32 %v291, %v997
      %v999 = vpop.f32.mrb[0].mxu0
      %v1000 = vpop.f32.mrb[0].mxu0
      %v1001 = vadd.f32 %v291, %v1000
      %v1002 = vpop.f32.mrb[0].mxu0
      %1003 = vmatprep.mubr.bf16.mxu0 0
      %1004 = vmatmul.mubr.bf16.gmra.mrb[0].mxu0 %v531
      %v1005 = vpop.f32.mrb[0].mxu0
      %v1006 = vadd.f32 %v291, %v1005
      %v1007 = vpop.f32.mrb[0].mxu0
      %v1008 = vpop.f32.mrb[0].mxu0
      %v1009 = vadd.f32 %v291, %v1008
      %v1010 = vpop.f32.mrb[0].mxu0
      %1011 = vmatprep.mubr.bf16.mxu0 0
      %1012 = vmatmul.mubr.bf16.gmra.mrb[0].mxu0 %v532
      %v1013 = vpop.f32.mrb[0].mxu0
      %v1014 = vadd.f32 %v291, %v1013
      %v1015 = vpop.f32.mrb[0].mxu0
      %v1016 = vpop.f32.mrb[0].mxu0
      %v1017 = vadd.f32 %v291, %v1016
      %v1018 = vpop.f32.mrb[0].mxu0
      %1019 = vmatprep.mubr.bf16.mxu0 0
      %1020 = vmatmul.mubr.bf16.gmra.mrb[0].mxu0 %v533
      %v1021 = vpop.f32.mrb[0].mxu0
      %v1022 = vadd.f32 %v291, %v1021
      %v1023 = vpop.f32.mrb[0].mxu0
      %v1024 = vpop.f32.mrb[0].mxu0
      %v1025 = vadd.f32 %v291, %v1024
      %v1026 = vpop.f32.mrb[0].mxu0
      %1027 = vmatprep.mubr.bf16.mxu0 0
      %1028 = vmatmul.mubr.bf16.gmra.mrb[0].mxu0 %v534
      %v1029 = vpop.f32.mrb[0].mxu0
      %v1030 = vadd.f32 %v291, %v1029
      %v1031 = vpop.f32.mrb[0].mxu0
      %v1032 = vpop.f32.mrb[0].mxu0
      %v1033 = vadd.f32 %v291, %v1032
      %v1034 = vpop.f32.mrb[0].mxu0
      %1035 = vmatprep.mubr.bf16.mxu0 0
      %1036 = vmatmul.mubr.bf16.gmra.mrb[0].mxu0 %v535
      %v1037 = vpop.f32.mrb[0].mxu0
      %v1038 = vadd.f32 %v291, %v1037
      %v1039 = vpop.f32.mrb[0].mxu0
      %v1040 = vpop.f32.mrb[0].mxu0
      %v1041 = vadd.f32 %v291, %v1040
      %v1042 = vpop.f32.mrb[0].mxu0
      %1043 = vmatprep.mubr.bf16.mxu0 0
      %1044 = vmatmul.mubr.bf16.gmra.mrb[0].mxu0 %v536
      %v1045 = vpop.f32.mrb[0].mxu0
      %v1046 = vadd.f32 %v291, %v1045
      %v1047 = vpop.f32.mrb[0].mxu0
      %v1048 = vpop.f32.mrb[0].mxu0
      %v1049 = vadd.f32 %v291, %v1048
      %v1050 = vpop.f32.mrb[0].mxu0
      %1051 = vmatprep.mubr.bf16.mxu0 0
      %1052 = vmatmul.mubr.bf16.gmra.mrb[0].mxu0 %v537
      %v1053 = vpop.f32.mrb[0].mxu0
      %v1054 = vadd.f32 %v291, %v1053
      %v1055 = vpop.f32.mrb[0].mxu0
      %v1056 = vpop.f32.mrb[0].mxu0
      %v1057 = vadd.f32 %v291, %v1056
      %v1058 = vpop.f32.mrb[0].mxu0
      %1059 = vdwg.mxu0
      %v1060 = vmax.f32 %v670, 0.0
      %v1061 = vmax.f32 %v673, 0.0
      %v1062 = vmax.f32 %v678, 0.0
      %v1063 = vmax.f32 %v681, 0.0
      %v1064 = vmax.f32 %v686, 0.0
      %v1065 = vmax.f32 %v689, 0.0
      %v1066 = vmax.f32 %v694, 0.0
      %v1067 = vmax.f32 %v697, 0.0
      %v1068 = vmax.f32 %v702, 0.0
      %v1069 = vmax.f32 %v705, 0.0
      %v1070 = vmax.f32 %v710, 0.0
      %v1071 = vmax.f32 %v713, 0.0
      %v1072 = vmax.f32 %v718, 0.0
      %v1073 = vmax.f32 %v721, 0.0
      %v1074 = vmax.f32 %v726, 0.0
      %v1075 = vmax.f32 %v729, 0.0
      %v1076 = vmax.f32 %v734, 0.0
      %v1077 = vmax.f32 %v737, 0.0
      %v1078 = vmax.f32 %v742, 0.0
      %v1079 = vmax.f32 %v745, 0.0
      %v1080 = vmax.f32 %v750, 0.0
      %v1081 = vmax.f32 %v753, 0.0
      %v1082 = vmax.f32 %v758, 0.0
      %v1083 = vmax.f32 %v761, 0.0
      %v1084 = vmax.f32 %v766, 0.0
      %v1085 = vmax.f32 %v769, 0.0
      %v1086 = vmax.f32 %v774, 0.0
      %v1087 = vmax.f32 %v777, 0.0
      %v1088 = vmax.f32 %v782, 0.0
      %v1089 = vmax.f32 %v785, 0.0
      %v1090 = vmax.f32 %v790, 0.0
      %v1091 = vmax.f32 %v793, 0.0
      %v1092 = vmax.f32 %v798, 0.0
      %v1093 = vmax.f32 %v801, 0.0
      %v1094 = vmax.f32 %v806, 0.0
      %v1095 = vmax.f32 %v809, 0.0
      %v1096 = vmax.f32 %v814, 0.0
      %v1097 = vmax.f32 %v817, 0.0
      %v1098 = vmax.f32 %v822, 0.0
      %v1099 = vmax.f32 %v825, 0.0
      %v1100 = vmax.f32 %v830, 0.0
      %v1101 = vmax.f32 %v833, 0.0
      %v1102 = vmax.f32 %v838, 0.0
      %v1103 = vmax.f32 %v841, 0.0
      %v1104 = vmax.f32 %v846, 0.0
      %v1105 = vmax.f32 %v849, 0.0
      %v1106 = vmax.f32 %v854, 0.0
      %v1107 = vmax.f32 %v857, 0.0
      %v1108 = vmax.f32 %v862, 0.0
      %v1109 = vmax.f32 %v865, 0.0
      %v1110 = vmax.f32 %v870, 0.0
      %v1111 = vmax.f32 %v873, 0.0
      %v1112 = vmax.f32 %v878, 0.0
      %v1113 = vmax.f32 %v881, 0.0
      %v1114 = vmax.f32 %v886, 0.0
      %v1115 = vmax.f32 %v889, 0.0
      %v1116 = vmax.f32 %v894, 0.0
      %v1117 = vmax.f32 %v897, 0.0
      %v1118 = vmax.f32 %v902, 0.0
      %v1119 = vmax.f32 %v905, 0.0
      %v1120 = vmax.f32 %v910, 0.0
      %v1121 = vmax.f32 %v913, 0.0
      %v1122 = vmax.f32 %v918, 0.0
      %v1123 = vmax.f32 %v921, 0.0
      %v1124 = vmax.f32 %v926, 0.0
      %v1125 = vmax.f32 %v929, 0.0
      %v1126 = vmax.f32 %v934, 0.0
      %v1127 = vmax.f32 %v937, 0.0
      %v1128 = vmax.f32 %v942, 0.0
      %v1129 = vmax.f32 %v945, 0.0
      %v1130 = vmax.f32 %v950, 0.0
      %v1131 = vmax.f32 %v953, 0.0
      %v1132 = vmax.f32 %v958, 0.0
      %v1133 = vmax.f32 %v961, 0.0
      %v1134 = vmax.f32 %v966, 0.0
      %v1135 = vmax.f32 %v969, 0.0
      %v1136 = vmax.f32 %v974, 0.0
      %v1137 = vmax.f32 %v977, 0.0
      %v1138 = vmax.f32 %v982, 0.0
      %v1139 = vmax.f32 %v985, 0.0
      %v1140 = vmax.f32 %v990, 0.0
      %v1141 = vmax.f32 %v993, 0.0
      %v1142 = vmax.f32 %v998, 0.0
      %v1143 = vmax.f32 %v1001, 0.0
      %v1144 = vmax.f32 %v1006, 0.0
      %v1145 = vmax.f32 %v1009, 0.0
      %v1146 = vmax.f32 %v1014, 0.0
      %v1147 = vmax.f32 %v1017, 0.0
      %v1148 = vmax.f32 %v1022, 0.0
      %v1149 = vmax.f32 %v1025, 0.0
      %v1150 = vmax.f32 %v1030, 0.0
      %v1151 = vmax.f32 %v1033, 0.0
      %v1152 = vmax.f32 %v1038, 0.0
      %v1153 = vmax.f32 %v1041, 0.0
      %v1154 = vmax.f32 %v1046, 0.0
      %v1155 = vmax.f32 %v1049, 0.0
      %v1156 = vmax.f32 %v1054, 0.0
      %v1157 = vmax.f32 %v1057, 0.0
      %v1158 = vpack.c.bf16 %v1061, %v1060
      %v1159 = vpack.c.bf16 %v1063, %v1062
      %v1160 = vpack.c.bf16 %v1065, %v1064
      %v1161 = vpack.c.bf16 %v1067, %v1066
      %v1162 = vpack.c.bf16 %v1069, %v1068
      %v1163 = vpack.c.bf16 %v1071, %v1070
      %v1164 = vpack.c.bf16 %v1073, %v1072
      %v1165 = vpack.c.bf16 %v1075, %v1074
      %v1166 = vpack.c.bf16 %v1077, %v1076
      %v1167 = vpack.c.bf16 %v1079, %v1078
      %v1168 = vpack.c.bf16 %v1081, %v1080
      %v1169 = vpack.c.bf16 %v1083, %v1082
      %v1170 = vpack.c.bf16 %v1085, %v1084
      %v1171 = vpack.c.bf16 %v1087, %v1086
      %v1172 = vpack.c.bf16 %v1089, %v1088
      %v1173 = vpack.c.bf16 %v1091, %v1090
      %v1174 = vpack.c.bf16 %v1093, %v1092
      %v1175 = vpack.c.bf16 %v1095, %v1094
      %v1176 = vpack.c.bf16 %v1097, %v1096
      %v1177 = vpack.c.bf16 %v1099, %v1098
      %v1178 = vpack.c.bf16 %v1101, %v1100
      %v1179 = vpack.c.bf16 %v1103, %v1102
      %v1180 = vpack.c.bf16 %v1105, %v1104
      %v1181 = vpack.c.bf16 %v1107, %v1106
      %v1182 = vpack.c.bf16 %v1109, %v1108
      %v1183 = vpack.c.bf16 %v1111, %v1110
      %v1184 = vpack.c.bf16 %v1113, %v1112
      %v1185 = vpack.c.bf16 %v1115, %v1114
      %v1186 = vpack.c.bf16 %v1117, %v1116
      %v1187 = vpack.c.bf16 %v1119, %v1118
      %v1188 = vpack.c.bf16 %v1121, %v1120
      %v1189 = vpack.c.bf16 %v1123, %v1122
      %v1190 = vpack.c.bf16 %v1125, %v1124
      %v1191 = vpack.c.bf16 %v1127, %v1126
      %v1192 = vpack.c.bf16 %v1129, %v1128
      %v1193 = vpack.c.bf16 %v1131, %v1130
      %v1194 = vpack.c.bf16 %v1133, %v1132
      %v1195 = vpack.c.bf16 %v1135, %v1134
      %v1196 = vpack.c.bf16 %v1137, %v1136
      %v1197 = vpack.c.bf16 %v1139, %v1138
      %v1198 = vpack.c.bf16 %v1141, %v1140
      %v1199 = vpack.c.bf16 %v1143, %v1142
      %v1200 = vpack.c.bf16 %v1145, %v1144
      %v1201 = vpack.c.bf16 %v1147, %v1146
      %v1202 = vpack.c.bf16 %v1149, %v1148
      %v1203 = vpack.c.bf16 %v1151, %v1150
      %v1204 = vpack.c.bf16 %v1153, %v1152
      %v1205 = vpack.c.bf16 %v1155, %v1154
      %v1206 = vpack.c.bf16 %v1157, %v1156
      %v1256 = vunpack.c.l.b16 %v1158
      %v1257 = vunpack.c.h.b16 %v1158
      %v1258 = vunpack.c.l.b16 %v1159
      %v1259 = vunpack.c.h.b16 %v1159
      %v1260 = vunpack.c.l.b16 %v1160
      %v1261 = vunpack.c.h.b16 %v1160
      %v1262 = vunpack.c.l.b16 %v1161
      %v1263 = vunpack.c.h.b16 %v1161
      %v1264 = vunpack.c.l.b16 %v1162
      %v1265 = vunpack.c.h.b16 %v1162
      %v1266 = vunpack.c.l.b16 %v1163
      %v1267 = vunpack.c.h.b16 %v1163
      %v1268 = vunpack.c.l.b16 %v1164
      %v1269 = vunpack.c.h.b16 %v1164
      %v1270 = vunpack.c.l.b16 %v1165
      %v1271 = vunpack.c.h.b16 %v1165
      %v1272 = vunpack.c.l.b16 %v1166
      %v1273 = vunpack.c.h.b16 %v1166
      %v1274 = vunpack.c.l.b16 %v1167
      %v1275 = vunpack.c.h.b16 %v1167
      %v1276 = vunpack.c.l.b16 %v1168
      %v1277 = vunpack.c.h.b16 %v1168
      %v1278 = vunpack.c.l.b16 %v1169
      %v1279 = vunpack.c.h.b16 %v1169
      %v1280 = vunpack.c.l.b16 %v1170
      %v1281 = vunpack.c.h.b16 %v1170
      %v1282 = vunpack.c.l.b16 %v1171
      %v1283 = vunpack.c.h.b16 %v1171
      %v1284 = vunpack.c.l.b16 %v1172
      %v1285 = vunpack.c.h.b16 %v1172
      %v1286 = vunpack.c.l.b16 %v1173
      %v1287 = vunpack.c.h.b16 %v1173
      %v1288 = vunpack.c.l.b16 %v1174
      %v1289 = vunpack.c.h.b16 %v1174
      %v1290 = vunpack.c.l.b16 %v1175
      %v1291 = vunpack.c.h.b16 %v1175
      %v1292 = vunpack.c.l.b16 %v1176
      %v1293 = vunpack.c.h.b16 %v1176
      %v1294 = vunpack.c.l.b16 %v1177
      %v1295 = vunpack.c.h.b16 %v1177
      %v1296 = vunpack.c.l.b16 %v1178
      %v1297 = vunpack.c.h.b16 %v1178
      %v1298 = vunpack.c.l.b16 %v1179
      %v1299 = vunpack.c.h.b16 %v1179
      %v1300 = vunpack.c.l.b16 %v1180
      %v1301 = vunpack.c.h.b16 %v1180
      %v1302 = vunpack.c.l.b16 %v1181
      %v1303 = vunpack.c.h.b16 %v1181
      %v1304 = vunpack.c.l.b16 %v1182
      %v1305 = vunpack.c.h.b16 %v1182
      %v1306 = vunpack.c.l.b16 %v1183
      %v1307 = vunpack.c.h.b16 %v1183
      %v1308 = vunpack.c.l.b16 %v1184
      %v1309 = vunpack.c.h.b16 %v1184
      %v1310 = vunpack.c.l.b16 %v1185
      %v1311 = vunpack.c.h.b16 %v1185
      %v1312 = vunpack.c.l.b16 %v1186
      %v1313 = vunpack.c.h.b16 %v1186
      %v1314 = vunpack.c.l.b16 %v1187
      %v1315 = vunpack.c.h.b16 %v1187
      %v1316 = vunpack.c.l.b16 %v1188
      %v1317 = vunpack.c.h.b16 %v1188
      %v1318 = vunpack.c.l.b16 %v1189
      %v1319 = vunpack.c.h.b16 %v1189
      %v1320 = vunpack.c.l.b16 %v1190
      %v1321 = vunpack.c.h.b16 %v1190
      %v1322 = vunpack.c.l.b16 %v1191
      %v1323 = vunpack.c.h.b16 %v1191
      %v1324 = vunpack.c.l.b16 %v1192
      %v1325 = vunpack.c.h.b16 %v1192
      %v1326 = vunpack.c.l.b16 %v1193
      %v1327 = vunpack.c.h.b16 %v1193
      %v1328 = vunpack.c.l.b16 %v1194
      %v1329 = vunpack.c.h.b16 %v1194
      %v1330 = vunpack.c.l.b16 %v1195
      %v1331 = vunpack.c.h.b16 %v1195
      %v1332 = vunpack.c.l.b16 %v1196
      %v1333 = vunpack.c.h.b16 %v1196
      %v1334 = vunpack.c.l.b16 %v1197
      %v1335 = vunpack.c.h.b16 %v1197
      %v1336 = vunpack.c.l.b16 %v1198
      %v1337 = vunpack.c.h.b16 %v1198
      %v1338 = vunpack.c.l.b16 %v1199
      %v1339 = vunpack.c.h.b16 %v1199
      %v1340 = vunpack.c.l.b16 %v1200
      %v1341 = vunpack.c.h.b16 %v1200
      %v1342 = vunpack.c.l.b16 %v1201
      %v1343 = vunpack.c.h.b16 %v1201
      %v1344 = vunpack.c.l.b16 %v1202
      %v1345 = vunpack.c.h.b16 %v1202
      %v1346 = vunpack.c.l.b16 %v1203
      %v1347 = vunpack.c.h.b16 %v1203
      %v1348 = vunpack.c.l.b16 %v1204
      %v1349 = vunpack.c.h.b16 %v1204
      %v1350 = vunpack.c.l.b16 %v1205
      %v1351 = vunpack.c.h.b16 %v1205
      %v1352 = vunpack.c.l.b16 %v1206
      %v1353 = vunpack.c.h.b16 %v1206
      %v1354 = vpack.c.b16 %v1256, %v1256
      %v1355 = vpack.c.b16 %v1257, %v1257
      %v1356 = vpack.c.b16 %v1258, %v1258
      %v1357 = vpack.c.b16 %v1259, %v1259
      %v1358 = vpack.c.b16 %v1260, %v1260
      %v1359 = vpack.c.b16 %v1261, %v1261
      %v1360 = vpack.c.b16 %v1262, %v1262
      %v1361 = vpack.c.b16 %v1263, %v1263
      %v1362 = vpack.c.b16 %v1264, %v1264
      %v1363 = vpack.c.b16 %v1265, %v1265
      %v1364 = vpack.c.b16 %v1266, %v1266
      %v1365 = vpack.c.b16 %v1267, %v1267
      %v1366 = vpack.c.b16 %v1268, %v1268
      %v1367 = vpack.c.b16 %v1269, %v1269
      %v1368 = vpack.c.b16 %v1270, %v1270
      %v1369 = vpack.c.b16 %v1271, %v1271
      %v1370 = vpack.c.b16 %v1272, %v1272
      %v1371 = vpack.c.b16 %v1273, %v1273
      %v1372 = vpack.c.b16 %v1274, %v1274
      %v1373 = vpack.c.b16 %v1275, %v1275
      %v1374 = vpack.c.b16 %v1276, %v1276
      %v1375 = vpack.c.b16 %v1277, %v1277
      %v1376 = vpack.c.b16 %v1278, %v1278
      %v1377 = vpack.c.b16 %v1279, %v1279
      %v1378 = vpack.c.b16 %v1280, %v1280
      %v1379 = vpack.c.b16 %v1281, %v1281
      %v1380 = vpack.c.b16 %v1282, %v1282
      %v1381 = vpack.c.b16 %v1283, %v1283
      %v1382 = vpack.c.b16 %v1284, %v1284
      %v1383 = vpack.c.b16 %v1285, %v1285
      %v1384 = vpack.c.b16 %v1286, %v1286
      %v1385 = vpack.c.b16 %v1287, %v1287
      %v1386 = vpack.c.b16 %v1288, %v1288
      %v1387 = vpack.c.b16 %v1289, %v1289
      %v1388 = vpack.c.b16 %v1290, %v1290
      %v1389 = vpack.c.b16 %v1291, %v1291
      %v1390 = vpack.c.b16 %v1292, %v1292
      %v1391 = vpack.c.b16 %v1293, %v1293
      %v1392 = vpack.c.b16 %v1294, %v1294
      %v1393 = vpack.c.b16 %v1295, %v1295
      %v1394 = vpack.c.b16 %v1296, %v1296
      %v1395 = vpack.c.b16 %v1297, %v1297
      %v1396 = vpack.c.b16 %v1298, %v1298
      %v1397 = vpack.c.b16 %v1299, %v1299
      %v1398 = vpack.c.b16 %v1300, %v1300
      %v1399 = vpack.c.b16 %v1301, %v1301
      %v1400 = vpack.c.b16 %v1302, %v1302
      %v1401 = vpack.c.b16 %v1303, %v1303
      %v1402 = vpack.c.b16 %v1304, %v1304
      %v1403 = vpack.c.b16 %v1305, %v1305
      %v1404 = vpack.c.b16 %v1306, %v1306
      %v1405 = vpack.c.b16 %v1307, %v1307
      %v1406 = vpack.c.b16 %v1308, %v1308
      %v1407 = vpack.c.b16 %v1309, %v1309
      %v1408 = vpack.c.b16 %v1310, %v1310
      %v1409 = vpack.c.b16 %v1311, %v1311
      %v1410 = vpack.c.b16 %v1312, %v1312
      %v1411 = vpack.c.b16 %v1313, %v1313
      %v1412 = vpack.c.b16 %v1314, %v1314
      %v1413 = vpack.c.b16 %v1315, %v1315
      %v1414 = vpack.c.b16 %v1316, %v1316
      %v1415 = vpack.c.b16 %v1317, %v1317
      %v1416 = vpack.c.b16 %v1318, %v1318
      %v1417 = vpack.c.b16 %v1319, %v1319
      %v1418 = vpack.c.b16 %v1320, %v1320
      %v1419 = vpack.c.b16 %v1321, %v1321
      %v1420 = vpack.c.b16 %v1322, %v1322
      %v1421 = vpack.c.b16 %v1323, %v1323
      %v1422 = vpack.c.b16 %v1324, %v1324
      %v1423 = vpack.c.b16 %v1325, %v1325
      %v1424 = vpack.c.b16 %v1326, %v1326
      %v1425 = vpack.c.b16 %v1327, %v1327
      %v1426 = vpack.c.b16 %v1328, %v1328
      %v1427 = vpack.c.b16 %v1329, %v1329
      %v1428 = vpack.c.b16 %v1330, %v1330
      %v1429 = vpack.c.b16 %v1331, %v1331
      %v1430 = vpack.c.b16 %v1332, %v1332
      %v1431 = vpack.c.b16 %v1333, %v1333
      %v1432 = vpack.c.b16 %v1334, %v1334
      %v1433 = vpack.c.b16 %v1335, %v1335
      %v1434 = vpack.c.b16 %v1336, %v1336
      %v1435 = vpack.c.b16 %v1337, %v1337
      %v1436 = vpack.c.b16 %v1338, %v1338
      %v1437 = vpack.c.b16 %v1339, %v1339
      %v1438 = vpack.c.b16 %v1340, %v1340
      %v1439 = vpack.c.b16 %v1341, %v1341
      %v1440 = vpack.c.b16 %v1342, %v1342
      %v1441 = vpack.c.b16 %v1343, %v1343
      %v1442 = vpack.c.b16 %v1344, %v1344
      %v1443 = vpack.c.b16 %v1345, %v1345
      %v1444 = vpack.c.b16 %v1346, %v1346
      %v1445 = vpack.c.b16 %v1347, %v1347
      %v1446 = vpack.c.b16 %v1348, %v1348
      %v1447 = vpack.c.b16 %v1349, %v1349
      %v1448 = vpack.c.b16 %v1350, %v1350
      %v1449 = vpack.c.b16 %v1351, %v1351
      %v1450 = vpack.c.b16 %v1352, %v1352
      %v1451 = vpack.c.b16 %v1353, %v1353
      %vm1550 = vcmask 519168
      %1551 = vst.msk [vmem:[%s170] sm:$0xf] %vm1550, %v1354
      %1552 = vst.msk [vmem:[%s170 + $0x4] sm:$0xf] %vm1550, %v1355
      %1553 = vst.msk [vmem:[%s170 + $0x8] sm:$0xf] %vm1550, %v1356
      %1554 = vst.msk [vmem:[%s170 + $0xc] sm:$0xf] %vm1550, %v1357
      %1555 = vst.msk [vmem:[%s170 + $0x10] sm:$0xf] %vm1550, %v1358
      %1556 = vst.msk [vmem:[%s170 + $0x14] sm:$0xf] %vm1550, %v1359
      %1557 = vst.msk [vmem:[%s170 + $0x18] sm:$0xf] %vm1550, %v1360
      %1558 = vst.msk [vmem:[%s170 + $0x1c] sm:$0xf] %vm1550, %v1361
      %1559 = vst.msk [vmem:[%s170 + $0x20] sm:$0xf] %vm1550, %v1362
      %1560 = vst.msk [vmem:[%s170 + $0x24] sm:$0xf] %vm1550, %v1363
      %1561 = vst.msk [vmem:[%s170 + $0x28] sm:$0xf] %vm1550, %v1364
      %1562 = vst.msk [vmem:[%s170 + $0x2c] sm:$0xf] %vm1550, %v1365
      %1563 = vst.msk [vmem:[%s170 + $0x30] sm:$0xf] %vm1550, %v1366
      %1564 = vst.msk [vmem:[%s170 + $0x34] sm:$0xf] %vm1550, %v1367
      %1565 = vst.msk [vmem:[%s170 + $0x38] sm:$0xf] %vm1550, %v1368
      %1566 = vst.msk [vmem:[%s170 + $0x3c] sm:$0xf] %vm1550, %v1369
      %1567 = vst.msk [vmem:[%s170 + $0x40] sm:$0xf] %vm1550, %v1370
      %1568 = vst.msk [vmem:[%s170 + $0x44] sm:$0xf] %vm1550, %v1371
      %1569 = vst.msk [vmem:[%s170 + $0x48] sm:$0xf] %vm1550, %v1372
      %1570 = vst.msk [vmem:[%s170 + $0x4c] sm:$0xf] %vm1550, %v1373
      %1571 = vst.msk [vmem:[%s170 + $0x50] sm:$0xf] %vm1550, %v1374
      %1572 = vst.msk [vmem:[%s170 + $0x54] sm:$0xf] %vm1550, %v1375
      %1573 = vst.msk [vmem:[%s170 + $0x58] sm:$0xf] %vm1550, %v1376
      %1574 = vst.msk [vmem:[%s170 + $0x5c] sm:$0xf] %vm1550, %v1377
      %1575 = vst.msk [vmem:[%s170 + $0x60] sm:$0xf] %vm1550, %v1378
      %1576 = vst.msk [vmem:[%s170 + $0x64] sm:$0xf] %vm1550, %v1379
      %1577 = vst.msk [vmem:[%s170 + $0x68] sm:$0xf] %vm1550, %v1380
      %1578 = vst.msk [vmem:[%s170 + $0x6c] sm:$0xf] %vm1550, %v1381
      %1579 = vst.msk [vmem:[%s170 + $0x70] sm:$0xf] %vm1550, %v1382
      %1580 = vst.msk [vmem:[%s170 + $0x74] sm:$0xf] %vm1550, %v1383
      %1581 = vst.msk [vmem:[%s170 + $0x78] sm:$0xf] %vm1550, %v1384
      %1582 = vst.msk [vmem:[%s170 + $0x7c] sm:$0xf] %vm1550, %v1385
      %1583 = vst.msk [vmem:[%s170 + $0x80] sm:$0xf] %vm1550, %v1386
      %1584 = vst.msk [vmem:[%s170 + $0x84] sm:$0xf] %vm1550, %v1387
      %1585 = vst.msk [vmem:[%s170 + $0x88] sm:$0xf] %vm1550, %v1388
      %1586 = vst.msk [vmem:[%s170 + $0x8c] sm:$0xf] %vm1550, %v1389
      %1587 = vst.msk [vmem:[%s170 + $0x90] sm:$0xf] %vm1550, %v1390
      %1588 = vst.msk [vmem:[%s170 + $0x94] sm:$0xf] %vm1550, %v1391
      %1589 = vst.msk [vmem:[%s170 + $0x98] sm:$0xf] %vm1550, %v1392
      %1590 = vst.msk [vmem:[%s170 + $0x9c] sm:$0xf] %vm1550, %v1393
      %1591 = vst.msk [vmem:[%s170 + $0xa0] sm:$0xf] %vm1550, %v1394
      %1592 = vst.msk [vmem:[%s170 + $0xa4] sm:$0xf] %vm1550, %v1395
      %1593 = vst.msk [vmem:[%s170 + $0xa8] sm:$0xf] %vm1550, %v1396
      %1594 = vst.msk [vmem:[%s170 + $0xac] sm:$0xf] %vm1550, %v1397
      %1595 = vst.msk [vmem:[%s170 + $0xb0] sm:$0xf] %vm1550, %v1398
      %1596 = vst.msk [vmem:[%s170 + $0xb4] sm:$0xf] %vm1550, %v1399
      %1597 = vst.msk [vmem:[%s170 + $0xb8] sm:$0xf] %vm1550, %v1400
      %1598 = vst.msk [vmem:[%s170 + $0xbc] sm:$0xf] %vm1550, %v1401
      %1599 = vst.msk [vmem:[%s170 + $0xc0] sm:$0xf] %vm1550, %v1402
      %1600 = vst.msk [vmem:[%s170 + $0xc4] sm:$0xf] %vm1550, %v1403
      %1601 = vst.msk [vmem:[%s170 + $0xc8] sm:$0xf] %vm1550, %v1404
      %1602 = vst.msk [vmem:[%s170 + $0xcc] sm:$0xf] %vm1550, %v1405
      %1603 = vst.msk [vmem:[%s170 + $0xd0] sm:$0xf] %vm1550, %v1406
      %1604 = vst.msk [vmem:[%s170 + $0xd4] sm:$0xf] %vm1550, %v1407
      %1605 = vst.msk [vmem:[%s170 + $0xd8] sm:$0xf] %vm1550, %v1408
      %1606 = vst.msk [vmem:[%s170 + $0xdc] sm:$0xf] %vm1550, %v1409
      %1607 = vst.msk [vmem:[%s170 + $0xe0] sm:$0xf] %vm1550, %v1410
      %1608 = vst.msk [vmem:[%s170 + $0xe4] sm:$0xf] %vm1550, %v1411
      %1609 = vst.msk [vmem:[%s170 + $0xe8] sm:$0xf] %vm1550, %v1412
      %1610 = vst.msk [vmem:[%s170 + $0xec] sm:$0xf] %vm1550, %v1413
      %1611 = vst.msk [vmem:[%s170 + $0xf0] sm:$0xf] %vm1550, %v1414
      %1612 = vst.msk [vmem:[%s170 + $0xf4] sm:$0xf] %vm1550, %v1415
      %1613 = vst.msk [vmem:[%s170 + $0xf8] sm:$0xf] %vm1550, %v1416
      %1614 = vst.msk [vmem:[%s170 + $0xfc] sm:$0xf] %vm1550, %v1417
      %1615 = vst.msk [vmem:[%s170 + $0x100] sm:$0xf] %vm1550, %v1418
      %1616 = vst.msk [vmem:[%s170 + $0x104] sm:$0xf] %vm1550, %v1419
      %1617 = vst.msk [vmem:[%s170 + $0x108] sm:$0xf] %vm1550, %v1420
      %1618 = vst.msk [vmem:[%s170 + $0x10c] sm:$0xf] %vm1550, %v1421
      %1619 = vst.msk [vmem:[%s170 + $0x110] sm:$0xf] %vm1550, %v1422
      %1620 = vst.msk [vmem:[%s170 + $0x114] sm:$0xf] %vm1550, %v1423
      %1621 = vst.msk [vmem:[%s170 + $0x118] sm:$0xf] %vm1550, %v1424
      %1622 = vst.msk [vmem:[%s170 + $0x11c] sm:$0xf] %vm1550, %v1425
      %1623 = vst.msk [vmem:[%s170 + $0x120] sm:$0xf] %vm1550, %v1426
      %1624 = vst.msk [vmem:[%s170 + $0x124] sm:$0xf] %vm1550, %v1427
      %1625 = vst.msk [vmem:[%s170 + $0x128] sm:$0xf] %vm1550, %v1428
      %1626 = vst.msk [vmem:[%s170 + $0x12c] sm:$0xf] %vm1550, %v1429
      %1627 = vst.msk [vmem:[%s170 + $0x130] sm:$0xf] %vm1550, %v1430
      %1628 = vst.msk [vmem:[%s170 + $0x134] sm:$0xf] %vm1550, %v1431
      %1629 = vst.msk [vmem:[%s170 + $0x138] sm:$0xf] %vm1550, %v1432
      %1630 = vst.msk [vmem:[%s170 + $0x13c] sm:$0xf] %vm1550, %v1433
      %1631 = vst.msk [vmem:[%s170 + $0x140] sm:$0xf] %vm1550, %v1434
      %1632 = vst.msk [vmem:[%s170 + $0x144] sm:$0xf] %vm1550, %v1435
      %1633 = vst.msk [vmem:[%s170 + $0x148] sm:$0xf] %vm1550, %v1436
      %1634 = vst.msk [vmem:[%s170 + $0x14c] sm:$0xf] %vm1550, %v1437
      %1635 = vst.msk [vmem:[%s170 + $0x150] sm:$0xf] %vm1550, %v1438
      %1636 = vst.msk [vmem:[%s170 + $0x154] sm:$0xf] %vm1550, %v1439
      %1637 = vst.msk [vmem:[%s170 + $0x158] sm:$0xf] %vm1550, %v1440
      %1638 = vst.msk [vmem:[%s170 + $0x15c] sm:$0xf] %vm1550, %v1441
      %1639 = vst.msk [vmem:[%s170 + $0x160] sm:$0xf] %vm1550, %v1442
      %1640 = vst.msk [vmem:[%s170 + $0x164] sm:$0xf] %vm1550, %v1443
      %1641 = vst.msk [vmem:[%s170 + $0x168] sm:$0xf] %vm1550, %v1444
      %1642 = vst.msk [vmem:[%s170 + $0x16c] sm:$0xf] %vm1550, %v1445
      %1643 = vst.msk [vmem:[%s170 + $0x170] sm:$0xf] %vm1550, %v1446
      %1644 = vst.msk [vmem:[%s170 + $0x174] sm:$0xf] %vm1550, %v1447
      %1645 = vst.msk [vmem:[%s170 + $0x178] sm:$0xf] %vm1550, %v1448
      %1646 = vst.msk [vmem:[%s170 + $0x17c] sm:$0xf] %vm1550, %v1449
      %1647 = vst.msk [vmem:[%s170 + $0x180] sm:$0xf] %vm1550, %v1450
      %1648 = vst.msk [vmem:[%s170 + $0x184] sm:$0xf] %vm1550, %v1451
      %p1649 = scmp.lt.s32.totalorder %s14, 1
      %s1650 = scalar_select %p1649, %s14, 1
      %s1651 = smul.addr %s1650, 98
      %s1652 = smul.addr %s1651, 4
      %s1653 = scalar_lea.vmem %s3, %s1652
      // Predicated region
      $region33: #{convnet_forward.5} parent=31 // pred_check
        %p1654 = pneg %p100
      $region34: #{convnet_forward.5} parent=31 // pred_check_branch
        %1656 = sbr.rel (%p1654) target = $region36
      $region35: #{convnet_forward.5} parent=31 // pred_region
        _
      $region36: #{convnet_forward.5} parent=31 // pred_fallthru
        _
    $region32: #{convnet_forward.5} parent=5 // pred_fallthru
      _
    %p1657 = scmp.le.s32.totalorder 2, %s9
    // Predicated region
    $region37: #{convnet_forward.5} parent=5 // pred_check
      %p1658 = pneg %p1657
    $region38: #{convnet_forward.5} parent=5 // pred_check_branch
      %1660 = sbr.rel (%p1658) target = $region40
    $region39: #{convnet_forward.5} parent=5 // pred_region
      %s1661 = ssub.s32 %s9, 2
      // Predicated region
      $region41: #{convnet_forward.5} parent=39 // pred_check
        %p1662 = pneg %p106
      $region42: #{convnet_forward.5} parent=39 // pred_check_branch
        %1664 = sbr.rel (%p1662) target = $region44
      $region43: #{convnet_forward.5} parent=39 // pred_region
        %p1665 = scmp.lt.s32.totalorder %s15, 1
        %s1666 = scalar_select %p1665, %s15, 1
        %s1667 = smul.addr %s1666, 98
        %s1668 = smul.addr %s1667, 4
        %s1669 = scalar_lea.vmem %s3, %s1668
      $region44: #{convnet_forward.5} parent=39 // pred_fallthru
        _
    $region40: #{convnet_forward.5} parent=5 // pred_fallthru
      _
  $region6: #{convnet_forward.5} parent=0 // loop_footer
    %s13 = sadd.s32 1, %s9
  $region7: #{convnet_forward.5} parent=0 // loop_footer_branch
    %8 = sbr.rel target = $region3
  $region8: #{convnet_forward.5} parent=0 // loop_exit
    _

// kernel: convnet_forward.6
$region0: #{convnet_forward.6}
  #allocation0 [shape = 'u32[]', space=smem, size = 0x4, offset = 0x4, fixed_abs, tag = 'smem constant byte address 0x4 - core index']
  #allocation1 [shape = 'u32[144,128]{1,0:T(1,128)}', space=vmem, size = 0x12000, scoped, tag = 'internal scratch']
  %s0 = inlined_call_operand.vmem [shape: bf16[2,28,14,128], index: 0, kind: input, shape index: {}]
  %s1 = inlined_call_operand.vmem [shape: bf16[2,14,14,64], index: 1, kind: output, shape index: {}]
  %s2 = sld [smem:[#allocation0]]
  $region37: #{convnet_forward.6} parent=0
    _
  %s4 = ssub.s32 1, %s2
  %s5 = scalar_select 0, %s4, %s2
  loop: start=0, step=1, limit=4
  $region2: #{convnet_forward.6} parent=0 // loop_pre_header
    _
  $region3: #{convnet_forward.6} parent=0 // loop_header
    %s7 = sphi 0, %s11
    %p8 = scmp.ge.s32.totalorder %s7, 4
    %s17 = sphi 0, %s19
    %s20 = sphi 0, %s17
    %s21 = sphi 0, %s20
    %s37 = sphi 0, %s21
    %s43 = sphi 0, %s45
    %s46 = sphi 0, %s43
    %s47 = sphi 0, %s46
    %s63 = sphi 0, %s47
  $region4: #{convnet_forward.6} parent=0 // loop_header_branch
    %10 = sbr.rel (%p8) target = $region8
  $region5: #{convnet_forward.6} parent=0 // loop_body
    %s12 = ssub.s32 %s7, 1
    %s13 = ssub.s32 %s7, 2
    %s14 = sadd.s32 %s7, 1
    %s15 = ssub.s32 %s7, %s14
    %p16 = scmp.eq.s32.totalorder %s15, 0
    %s18 = sadd.s32 %s17, 1
    %s19 = scalar_select %p16, %s17, %s18
    %p22 = pneg %p16
    %p23 = scmp.eq.s32.totalorder %s7, 1
    %p24 = por %p22, %p23
    %p25 = scmp.ne.s32.totalorder %s17, %s20
    %p26 = scmp.eq.s32.totalorder %s7, 0
    %p27 = por %p25, %p26
    %p28 = scmp.ne.s32.totalorder %s17, %s20
    %p29 = scmp.eq.s32.totalorder %s12, 1
    %p30 = por %p28, %p29
    %p31 = scmp.ne.s32.totalorder %s20, %s21
    %p32 = scmp.eq.s32.totalorder %s12, 0
    %p33 = por %p31, %p32
    %p34 = scmp.ne.s32.totalorder %s20, %s21
    %p35 = scmp.eq.s32.totalorder %s13, 1
    %p36 = por %p34, %p35
    %p38 = scmp.ne.s32.totalorder %s21, %s37
    %p39 = scmp.eq.s32.totalorder %s13, 0
    %p40 = por %p38, %p39
    %s41 = ssub.s32 %s7, %s14
    %p42 = scmp.eq.s32.totalorder %s41, 0
    %s44 = sadd.s32 %s43, 1
    %s45 = scalar_select %p42, %s43, %s44
    %p48 = pneg %p42
    %p49 = scmp.eq.s32.totalorder %s7, 1
    %p50 = por %p48, %p49
    %p51 = scmp.ne.s32.totalorder %s43, %s46
    %p52 = scmp.eq.s32.totalorder %s7, 0
    %p53 = por %p51, %p52
    %p54 = scmp.ne.s32.totalorder %s43, %s46
    %p55 = scmp.eq.s32.totalorder %s12, 1
    %p56 = por %p54, %p55
    %p57 = scmp.ne.s32.totalorder %s46, %s47
    %p58 = scmp.eq.s32.totalorder %s12, 0
    %p59 = por %p57, %p58
    %p60 = scmp.ne.s32.totalorder %s46, %s47
    %p61 = scmp.eq.s32.totalorder %s13, 1
    %p62 = por %p60, %p61
    %p64 = scmp.ne.s32.totalorder %s47, %s63
    %p65 = scmp.eq.s32.totalorder %s13, 0
    %p66 = por %p64, %p65
    %p67 = scmp.le.s32.totalorder 1, %s7
    %p68 = scmp.lt.s32.totalorder %s7, 3
    %p69 = pnand %p67, %p68
    %p70 = pneg %p69
    // Predicated region
    $region9: #{convnet_forward.6} parent=5 // pred_check
      _
    $region10: #{convnet_forward.6} parent=5 // pred_check_branch
      %72 = sbr.rel (%p69) target = $region12
    $region11: #{convnet_forward.6} parent=5 // pred_region
      %s73 = ssub.s32 %s7, 1
    $region12: #{convnet_forward.6} parent=5 // pred_fallthru
      _
    %p74 = scmp.lt.s32.totalorder %s7, 2
    // Predicated region
    $region13: #{convnet_forward.6} parent=5 // pred_check
      %p75 = pneg %p74
    $region14: #{convnet_forward.6} parent=5 // pred_check_branch
      %77 = sbr.rel (%p75) target = $region16
    $region15: #{convnet_forward.6} parent=5 // pred_region
      // Predicated region
      $region17: #{convnet_forward.6} parent=15 // pred_check
        %p78 = pneg %p27
      $region18: #{convnet_forward.6} parent=15 // pred_check_branch
        %80 = sbr.rel (%p78) target = $region20
      $region19: #{convnet_forward.6} parent=15 // pred_region
        %p81 = scmp.lt.s32.totalorder %s7, 1
        %s82 = scalar_select %p81, %s7, 1
        %s83 = smul.addr %s82, 56
        %s84 = smul.addr %s83, 4
        %s85 = scalar_lea.vmem %s0, %s84
      $region20: #{convnet_forward.6} parent=15 // pred_fallthru
        _
    $region16: #{convnet_forward.6} parent=5 // pred_fallthru
      _
    %p86 = scmp.le.s32.totalorder 1, %s7
    %p87 = scmp.lt.s32.totalorder %s7, 3
    %p88 = pnand %p86, %p87
    %p89 = pneg %p88
    // Predicated region
    $region21: #{convnet_forward.6} parent=5 // pred_check
      _
    $region22: #{convnet_forward.6} parent=5 // pred_check_branch
      %91 = sbr.rel (%p88) target = $region24
    $region23: #{convnet_forward.6} parent=5 // pred_region
      %s92 = ssub.s32 %s7, 1
      %p93 = scmp.lt.s32.totalorder %s12, 1
      %s94 = scalar_select %p93, %s12, 1
      %s95 = smul.addr %s94, 56
      %s96 = smul.addr %s95, 4
      %s97 = scalar_lea.vmem %s0, %s96
      %p98 = pneg %p33
      %p99 = pneg %p30
      %p100 = pneg %p59
      %p101 = pneg %p56
      %p102 = scmp.lt.s32.totalorder %s12, 1
      %s103 = scalar_select %p102, %s12, 1
      %s104 = smul.addr %s103, 28
      %s105 = smul.addr %s104, 4
      %s106 = scalar_lea.vmem %s1, %s105
      %p107 = scmp.lt.s32.totalorder %s12, 1
      %s108 = scalar_select %p107, %s12, 1
      %s109 = smul.addr %s108, 56
      %s110 = smul.addr %s109, 4
      %s111 = scalar_lea.vmem %s0, %s110
      %p112 = scmp.lt.s32.totalorder %s12, 1
      %s113 = scalar_select %p112, %s12, 1
      %s114 = smul.addr %s113, 28
      %s115 = smul.addr %s114, 4
      %s116 = scalar_lea.vmem %s1, %s115
      %v117 = vld [vmem:[%s111] sm:$0xf]
      %v118 = vld [vmem:[%s111 + $0x4] sm:$0x7]
      %v119 = vld [vmem:[%s111 + $0x8] sm:$0xf]
      %v120 = vld [vmem:[%s111 + $0xc] sm:$0x7]
      %v121 = vld [vmem:[%s111 + $0x10] sm:$0xf]
      %v122 = vld [vmem:[%s111 + $0x14] sm:$0x7]
      %v123 = vld [vmem:[%s111 + $0x18] sm:$0xf]
      %v124 = vld [vmem:[%s111 + $0x1c] sm:$0x7]
      %v125 = vld [vmem:[%s111 + $0x20] sm:$0xf]
      %v126 = vld [vmem:[%s111 + $0x24] sm:$0x7]
      %v127 = vld [vmem:[%s111 + $0x28] sm:$0xf]
      %v128 = vld [vmem:[%s111 + $0x2c] sm:$0x7]
      %v129 = vld [vmem:[%s111 + $0x30] sm:$0xf]
      %v130 = vld [vmem:[%s111 + $0x34] sm:$0x7]
      %v131 = vld [vmem:[%s111 + $0x38] sm:$0xf]
      %v132 = vld [vmem:[%s111 + $0x3c] sm:$0x7]
      %v133 = vld [vmem:[%s111 + $0x40] sm:$0xf]
      %v134 = vld [vmem:[%s111 + $0x44] sm:$0x7]
      %v135 = vld [vmem:[%s111 + $0x48] sm:$0xf]
      %v136 = vld [vmem:[%s111 + $0x4c] sm:$0x7]
      %v137 = vld [vmem:[%s111 + $0x50] sm:$0xf]
      %v138 = vld [vmem:[%s111 + $0x54] sm:$0x7]
      %v139 = vld [vmem:[%s111 + $0x58] sm:$0xf]
      %v140 = vld [vmem:[%s111 + $0x5c] sm:$0x7]
      %v141 = vld [vmem:[%s111 + $0x60] sm:$0xf]
      %v142 = vld [vmem:[%s111 + $0x64] sm:$0x7]
      %v143 = vld [vmem:[%s111 + $0x68] sm:$0xf]
      %v144 = vld [vmem:[%s111 + $0x6c] sm:$0x7]
      %v145 = vld [vmem:[%s111 + $0x70] sm:$0xf]
      %v146 = vld [vmem:[%s111 + $0x74] sm:$0x7]
      %v147 = vld [vmem:[%s111 + $0x78] sm:$0xf]
      %v148 = vld [vmem:[%s111 + $0x7c] sm:$0x7]
      %v149 = vld [vmem:[%s111 + $0x80] sm:$0xf]
      %v150 = vld [vmem:[%s111 + $0x84] sm:$0x7]
      %v151 = vld [vmem:[%s111 + $0x88] sm:$0xf]
      %v152 = vld [vmem:[%s111 + $0x8c] sm:$0x7]
      %v153 = vld [vmem:[%s111 + $0x90] sm:$0xf]
      %v154 = vld [vmem:[%s111 + $0x94] sm:$0x7]
      %v155 = vld [vmem:[%s111 + $0x98] sm:$0xf]
      %v156 = vld [vmem:[%s111 + $0x9c] sm:$0x7]
      %v157 = vld [vmem:[%s111 + $0xa0] sm:$0xf]
      %v158 = vld [vmem:[%s111 + $0xa4] sm:$0x7]
      %v159 = vld [vmem:[%s111 + $0xa8] sm:$0xf]
      %v160 = vld [vmem:[%s111 + $0xac] sm:$0x7]
      %v161 = vld [vmem:[%s111 + $0xb0] sm:$0xf]
      %v162 = vld [vmem:[%s111 + $0xb4] sm:$0x7]
      %v163 = vld [vmem:[%s111 + $0xb8] sm:$0xf]
      %v164 = vld [vmem:[%s111 + $0xbc] sm:$0x7]
      %v165 = vld [vmem:[%s111 + $0xc0] sm:$0xf]
      %v166 = vld [vmem:[%s111 + $0xc4] sm:$0x7]
      %v167 = vld [vmem:[%s111 + $0xc8] sm:$0xf]
      %v168 = vld [vmem:[%s111 + $0xcc] sm:$0x7]
      %v169 = vld [vmem:[%s111 + $0xd0] sm:$0xf]
      %v170 = vld [vmem:[%s111 + $0xd4] sm:$0x7]
      %v171 = vld [vmem:[%s111 + $0xd8] sm:$0xf]
      %v172 = vld [vmem:[%s111 + $0xdc] sm:$0x7]
      %v173 = vmax.bf16 %v117, %v119
      %v174 = vmax.bf16 %v118, %v120
      %v175 = vmax.bf16 %v121, %v123
      %v176 = vmax.bf16 %v122, %v124
      %v177 = vmax.bf16 %v125, %v127
      %v178 = vmax.bf16 %v126, %v128
      %v179 = vmax.bf16 %v129, %v131
      %v180 = vmax.bf16 %v130, %v132
      %v181 = vmax.bf16 %v133, %v135
      %v182 = vmax.bf16 %v134, %v136
      %v183 = vmax.bf16 %v137, %v139
      %v184 = vmax.bf16 %v138, %v140
      %v185 = vmax.bf16 %v141, %v143
      %v186 = vmax.bf16 %v142, %v144
      %v187 = vmax.bf16 %v145, %v147
      %v188 = vmax.bf16 %v146, %v148
      %v189 = vmax.bf16 %v149, %v151
      %v190 = vmax.bf16 %v150, %v152
      %v191 = vmax.bf16 %v153, %v155
      %v192 = vmax.bf16 %v154, %v156
      %v193 = vmax.bf16 %v157, %v159
      %v194 = vmax.bf16 %v158, %v160
      %v195 = vmax.bf16 %v161, %v163
      %v196 = vmax.bf16 %v162, %v164
      %v197 = vmax.bf16 %v165, %v167
      %v198 = vmax.bf16 %v166, %v168
      %v199 = vmax.bf16 %v169, %v171
      %v200 = vmax.bf16 %v170, %v172
      %229 = vrot.lane.b32.xlu0 %v173, 64
      %v230 = vpop.permute.xlu0 %229
      %231 = vrot.lane.b32.xlu0 %v174, 64
      %v232 = vpop.permute.xlu0 %231
      %233 = vrot.lane.b32.xlu0 %v175, 64
      %v234 = vpop.permute.xlu0 %233
      %235 = vrot.lane.b32.xlu0 %v176, 64
      %v236 = vpop.permute.xlu0 %235
      %237 = vrot.lane.b32.xlu0 %v177, 64
      %v238 = vpop.permute.xlu0 %237
      %239 = vrot.lane.b32.xlu0 %v178, 64
      %v240 = vpop.permute.xlu0 %239
      %241 = vrot.lane.b32.xlu0 %v179, 64
      %v242 = vpop.permute.xlu0 %241
      %243 = vrot.lane.b32.xlu0 %v180, 64
      %v244 = vpop.permute.xlu0 %243
      %245 = vrot.lane.b32.xlu0 %v181, 64
      %v246 = vpop.permute.xlu0 %245
      %247 = vrot.lane.b32.xlu0 %v182, 64
      %v248 = vpop.permute.xlu0 %247
      %249 = vrot.lane.b32.xlu0 %v183, 64
      %v250 = vpop.permute.xlu0 %249
      %251 = vrot.lane.b32.xlu0 %v184, 64
      %v252 = vpop.permute.xlu0 %251
      %253 = vrot.lane.b32.xlu0 %v185, 64
      %v254 = vpop.permute.xlu0 %253
      %255 = vrot.lane.b32.xlu0 %v186, 64
      %v256 = vpop.permute.xlu0 %255
      %257 = vrot.lane.b32.xlu0 %v187, 64
      %v258 = vpop.permute.xlu0 %257
      %259 = vrot.lane.b32.xlu0 %v188, 64
      %v260 = vpop.permute.xlu0 %259
      %261 = vrot.lane.b32.xlu0 %v189, 64
      %v262 = vpop.permute.xlu0 %261
      %263 = vrot.lane.b32.xlu0 %v190, 64
      %v264 = vpop.permute.xlu0 %263
      %265 = vrot.lane.b32.xlu0 %v191, 64
      %v266 = vpop.permute.xlu0 %265
      %267 = vrot.lane.b32.xlu0 %v192, 64
      %v268 = vpop.permute.xlu0 %267
      %269 = vrot.lane.b32.xlu0 %v193, 64
      %v270 = vpop.permute.xlu0 %269
      %271 = vrot.lane.b32.xlu0 %v194, 64
      %v272 = vpop.permute.xlu0 %271
      %273 = vrot.lane.b32.xlu0 %v195, 64
      %v274 = vpop.permute.xlu0 %273
      %275 = vrot.lane.b32.xlu0 %v196, 64
      %v276 = vpop.permute.xlu0 %275
      %277 = vrot.lane.b32.xlu0 %v197, 64
      %v278 = vpop.permute.xlu0 %277
      %279 = vrot.lane.b32.xlu0 %v198, 64
      %v280 = vpop.permute.xlu0 %279
      %281 = vrot.lane.b32.xlu0 %v199, 64
      %v282 = vpop.permute.xlu0 %281
      %283 = vrot.lane.b32.xlu0 %v200, 64
      %v284 = vpop.permute.xlu0 %283
      %v313 = vmax.bf16 %v173, %v230
      %v314 = vmax.bf16 %v174, %v232
      %v315 = vmax.bf16 %v175, %v234
      %v316 = vmax.bf16 %v176, %v236
      %v317 = vmax.bf16 %v177, %v238
      %v318 = vmax.bf16 %v178, %v240
      %v319 = vmax.bf16 %v179, %v242
      %v320 = vmax.bf16 %v180, %v244
      %v321 = vmax.bf16 %v181, %v246
      %v322 = vmax.bf16 %v182, %v248
      %v323 = vmax.bf16 %v183, %v250
      %v324 = vmax.bf16 %v184, %v252
      %v325 = vmax.bf16 %v185, %v254
      %v326 = vmax.bf16 %v186, %v256
      %v327 = vmax.bf16 %v187, %v258
      %v328 = vmax.bf16 %v188, %v260
      %v329 = vmax.bf16 %v189, %v262
      %v330 = vmax.bf16 %v190, %v264
      %v331 = vmax.bf16 %v191, %v266
      %v332 = vmax.bf16 %v192, %v268
      %v333 = vmax.bf16 %v193, %v270
      %v334 = vmax.bf16 %v194, %v272
      %v335 = vmax.bf16 %v195, %v274
      %v336 = vmax.bf16 %v196, %v276
      %v337 = vmax.bf16 %v197, %v278
      %v338 = vmax.bf16 %v198, %v280
      %v339 = vmax.bf16 %v199, %v282
      %v340 = vmax.bf16 %v200, %v284
      %vm341 = vcmask 519168
      %342 = vst.msk [vmem:[%s116] sm:$0xf] %vm341, %v313
      %vm343 = vcmask 518144
      %344 = vst.msk [vmem:[%s116 + $0x4] sm:$0x7] %vm343, %v314
      %345 = vst.msk [vmem:[%s116 + $0x8] sm:$0xf] %vm341, %v315
      %346 = vst.msk [vmem:[%s116 + $0xc] sm:$0x7] %vm343, %v316
      %347 = vst.msk [vmem:[%s116 + $0x10] sm:$0xf] %vm341, %v317
      %348 = vst.msk [vmem:[%s116 + $0x14] sm:$0x7] %vm343, %v318
      %349 = vst.msk [vmem:[%s116 + $0x18] sm:$0xf] %vm341, %v319
      %350 = vst.msk [vmem:[%s116 + $0x1c] sm:$0x7] %vm343, %v320
      %351 = vst.msk [vmem:[%s116 + $0x20] sm:$0xf] %vm341, %v321
      %352 = vst.msk [vmem:[%s116 + $0x24] sm:$0x7] %vm343, %v322
      %353 = vst.msk [vmem:[%s116 + $0x28] sm:$0xf] %vm341, %v323
      %354 = vst.msk [vmem:[%s116 + $0x2c] sm:$0x7] %vm343, %v324
      %355 = vst.msk [vmem:[%s116 + $0x30] sm:$0xf] %vm341, %v325
      %356 = vst.msk [vmem:[%s116 + $0x34] sm:$0x7] %vm343, %v326
      %357 = vst.msk [vmem:[%s116 + $0x38] sm:$0xf] %vm341, %v327
      %358 = vst.msk [vmem:[%s116 + $0x3c] sm:$0x7] %vm343, %v328
      %359 = vst.msk [vmem:[%s116 + $0x40] sm:$0xf] %vm341, %v329
      %360 = vst.msk [vmem:[%s116 + $0x44] sm:$0x7] %vm343, %v330
      %361 = vst.msk [vmem:[%s116 + $0x48] sm:$0xf] %vm341, %v331
      %362 = vst.msk [vmem:[%s116 + $0x4c] sm:$0x7] %vm343, %v332
      %363 = vst.msk [vmem:[%s116 + $0x50] sm:$0xf] %vm341, %v333
      %364 = vst.msk [vmem:[%s116 + $0x54] sm:$0x7] %vm343, %v334
      %365 = vst.msk [vmem:[%s116 + $0x58] sm:$0xf] %vm341, %v335
      %366 = vst.msk [vmem:[%s116 + $0x5c] sm:$0x7] %vm343, %v336
      %367 = vst.msk [vmem:[%s116 + $0x60] sm:$0xf] %vm341, %v337
      %368 = vst.msk [vmem:[%s116 + $0x64] sm:$0x7] %vm343, %v338
      %369 = vst.msk [vmem:[%s116 + $0x68] sm:$0xf] %vm341, %v339
      %370 = vst.msk [vmem:[%s116 + $0x6c] sm:$0x7] %vm343, %v340
      %p371 = scmp.lt.s32.totalorder %s12, 1
      %s372 = scalar_select %p371, %s12, 1
      %s373 = smul.addr %s372, 28
      %s374 = smul.addr %s373, 4
      %s375 = scalar_lea.vmem %s1, %s374
      // Predicated region
      $region25: #{convnet_forward.6} parent=23 // pred_check
        %p376 = pneg %p56
      $region26: #{convnet_forward.6} parent=23 // pred_check_branch
        %378 = sbr.rel (%p376) target = $region28
      $region27: #{convnet_forward.6} parent=23 // pred_region
        _
      $region28: #{convnet_forward.6} parent=23 // pred_fallthru
        _
    $region24: #{convnet_forward.6} parent=5 // pred_fallthru
      _
    %p379 = scmp.le.s32.totalorder 2, %s7
    // Predicated region
    $region29: #{convnet_forward.6} parent=5 // pred_check
      %p380 = pneg %p379
    $region30: #{convnet_forward.6} parent=5 // pred_check_branch
      %382 = sbr.rel (%p380) target = $region32
    $region31: #{convnet_forward.6} parent=5 // pred_region
      %s383 = ssub.s32 %s7, 2
      // Predicated region
      $region33: #{convnet_forward.6} parent=31 // pred_check
        %p384 = pneg %p62
      $region34: #{convnet_forward.6} parent=31 // pred_check_branch
        %386 = sbr.rel (%p384) target = $region36
      $region35: #{convnet_forward.6} parent=31 // pred_region
        %p387 = scmp.lt.s32.totalorder %s13, 1
        %s388 = scalar_select %p387, %s13, 1
        %s389 = smul.addr %s388, 28
        %s390 = smul.addr %s389, 4
        %s391 = scalar_lea.vmem %s1, %s390
      $region36: #{convnet_forward.6} parent=31 // pred_fallthru
        _
    $region32: #{convnet_forward.6} parent=5 // pred_fallthru
      _
  $region6: #{convnet_forward.6} parent=0 // loop_footer
    %s11 = sadd.s32 1, %s7
  $region7: #{convnet_forward.6} parent=0 // loop_footer_branch
    %6 = sbr.rel target = $region3
  $region8: #{convnet_forward.6} parent=0 // loop_exit
    _

// kernel: convnet_forward.7
$region0: #{convnet_forward.7}
  #allocation0 [shape = 'u32[]', space=smem, size = 0x4, offset = 0x4, fixed_abs, tag = 'smem constant byte address 0x4 - core index']
  #allocation1 [shape = 'u32[144,128]{1,0:T(1,128)}', space=vmem, size = 0x12000, scoped, tag = 'internal scratch']
  %s0 = inlined_call_operand.vmem [shape: bf16[2,100,1600], index: 0, kind: input, shape index: {}]
  %s1 = inlined_call_operand.vmem [shape: bf16[1600,64], index: 1, kind: input, shape index: {}]
  %s2 = inlined_call_operand.vmem [shape: f32[1,64], index: 2, kind: input, shape index: {}]
  %s3 = inlined_call_operand.vmem [shape: bf16[2,100,64], index: 3, kind: output, shape index: {}]
  %s4 = sld [smem:[#allocation0]]
  $region45: #{convnet_forward.7} parent=0
    _
  %s6 = ssub.s32 1, %s4
  %s7 = scalar_select 0, %s6, %s4
  loop: start=0, step=1, limit=4
  $region2: #{convnet_forward.7} parent=0 // loop_pre_header
    _
  $region3: #{convnet_forward.7} parent=0 // loop_header
    %s9 = sphi 0, %s13
    %p10 = scmp.ge.s32.totalorder %s9, 4
    %s19 = sphi 0, %s21
    %s22 = sphi 0, %s19
    %s23 = sphi 0, %s22
    %s39 = sphi 0, %s23
    %s43 = sphi 0, %s43
    %s45 = sphi 0, %s43
    %s46 = sphi 0, %s45
    %s60 = sphi 0, %s46
    %s64 = sphi 0, %s64
    %s66 = sphi 0, %s64
    %s67 = sphi 0, %s66
    %s81 = sphi 0, %s67
    %s87 = sphi 0, %s89
    %s90 = sphi 0, %s87
    %s91 = sphi 0, %s90
    %s107 = sphi 0, %s91
  $region4: #{convnet_forward.7} parent=0 // loop_header_branch
    %12 = sbr.rel (%p10) target = $region8
  $region5: #{convnet_forward.7} parent=0 // loop_body
    %s14 = ssub.s32 %s9, 1
    %s15 = ssub.s32 %s9, 2
    %s16 = sadd.s32 %s9, 1
    %s17 = ssub.s32 %s9, %s16
    %p18 = scmp.eq.s32.totalorder %s17, 0
    %s20 = sadd.s32 %s19, 1
    %s21 = scalar_select %p18, %s19, %s20
    %p24 = pneg %p18
    %p25 = scmp.eq.s32.totalorder %s9, 1
    %p26 = por %p24, %p25
    %p27 = scmp.ne.s32.totalorder %s19, %s22
    %p28 = scmp.eq.s32.totalorder %s9, 0
    %p29 = por %p27, %p28
    %p30 = scmp.ne.s32.totalorder %s19, %s22
    %p31 = scmp.eq.s32.totalorder %s14, 1
    %p32 = por %p30, %p31
    %p33 = scmp.ne.s32.totalorder %s22, %s23
    %p34 = scmp.eq.s32.totalorder %s14, 0
    %p35 = por %p33, %p34
    %p36 = scmp.ne.s32.totalorder %s22, %s23
    %p37 = scmp.eq.s32.totalorder %s15, 1
    %p38 = por %p36, %p37
    %p40 = scmp.ne.s32.totalorder %s23, %s39
    %p41 = scmp.eq.s32.totalorder %s15, 0
    %p42 = por %p40, %p41
    %s44 = sadd.s32 %s43, 1
    %p47 = scmp.eq.s32.totalorder %s9, 1
    %p48 = scmp.ne.s32.totalorder %s43, %s45
    %p49 = scmp.eq.s32.totalorder %s9, 0
    %p50 = por %p48, %p49
    %p51 = scmp.ne.s32.totalorder %s43, %s45
    %p52 = scmp.eq.s32.totalorder %s14, 1
    %p53 = por %p51, %p52
    %p54 = scmp.ne.s32.totalorder %s45, %s46
    %p55 = scmp.eq.s32.totalorder %s14, 0
    %p56 = por %p54, %p55
    %p57 = scmp.ne.s32.totalorder %s45, %s46
    %p58 = scmp.eq.s32.totalorder %s15, 1
    %p59 = por %p57, %p58
    %p61 = scmp.ne.s32.totalorder %s46, %s60
    %p62 = scmp.eq.s32.totalorder %s15, 0
    %p63 = por %p61, %p62
    %s65 = sadd.s32 %s64, 1
    %p68 = scmp.eq.s32.totalorder %s9, 1
    %p69 = scmp.ne.s32.totalorder %s64, %s66
    %p70 = scmp.eq.s32.totalorder %s9, 0
    %p71 = por %p69, %p70
    %p72 = scmp.ne.s32.totalorder %s64, %s66
    %p73 = scmp.eq.s32.totalorder %s14, 1
    %p74 = por %p72, %p73
    %p75 = scmp.ne.s32.totalorder %s66, %s67
    %p76 = scmp.eq.s32.totalorder %s14, 0
    %p77 = por %p75, %p76
    %p78 = scmp.ne.s32.totalorder %s66, %s67
    %p79 = scmp.eq.s32.totalorder %s15, 1
    %p80 = por %p78, %p79
    %p82 = scmp.ne.s32.totalorder %s67, %s81
    %p83 = scmp.eq.s32.totalorder %s15, 0
    %p84 = por %p82, %p83
    %s85 = ssub.s32 %s9, %s16
    %p86 = scmp.eq.s32.totalorder %s85, 0
    %s88 = sadd.s32 %s87, 1
    %s89 = scalar_select %p86, %s87, %s88
    %p92 = pneg %p86
    %p93 = scmp.eq.s32.totalorder %s9, 1
    %p94 = por %p92, %p93
    %p95 = scmp.ne.s32.totalorder %s87, %s90
    %p96 = scmp.eq.s32.totalorder %s9, 0
    %p97 = por %p95, %p96
    %p98 = scmp.ne.s32.totalorder %s87, %s90
    %p99 = scmp.eq.s32.totalorder %s14, 1
    %p100 = por %p98, %p99
    %p101 = scmp.ne.s32.totalorder %s90, %s91
    %p102 = scmp.eq.s32.totalorder %s14, 0
    %p103 = por %p101, %p102
    %p104 = scmp.ne.s32.totalorder %s90, %s91
    %p105 = scmp.eq.s32.totalorder %s15, 1
    %p106 = por %p104, %p105
    %p108 = scmp.ne.s32.totalorder %s91, %s107
    %p109 = scmp.eq.s32.totalorder %s15, 0
    %p110 = por %p108, %p109
    %p111 = scmp.le.s32.totalorder 1, %s9
    %p112 = scmp.lt.s32.totalorder %s9, 3
    %p113 = pnand %p111, %p112
    %p114 = pneg %p113
    // Predicated region
    $region9: #{convnet_forward.7} parent=5 // pred_check
      _
    $region10: #{convnet_forward.7} parent=5 // pred_check_branch
      %116 = sbr.rel (%p113) target = $region12
    $region11: #{convnet_forward.7} parent=5 // pred_region
      %s117 = ssub.s32 %s9, 1
      // Predicated region
      $region13: #{convnet_forward.7} parent=11 // pred_check
        %p118 = pneg %p56
      $region14: #{convnet_forward.7} parent=11 // pred_check_branch
        %120 = sbr.rel (%p118) target = $region16
      $region15: #{convnet_forward.7} parent=11 // pred_region
        _
      $region16: #{convnet_forward.7} parent=11 // pred_fallthru
        _
      // Predicated region
      $region17: #{convnet_forward.7} parent=11 // pred_check
        %p121 = pneg %p77
      $region18: #{convnet_forward.7} parent=11 // pred_check_branch
        %123 = sbr.rel (%p121) target = $region20
      $region19: #{convnet_forward.7} parent=11 // pred_region
        _
      $region20: #{convnet_forward.7} parent=11 // pred_fallthru
        _
    $region12: #{convnet_forward.7} parent=5 // pred_fallthru
      _
    %p124 = scmp.lt.s32.totalorder %s9, 2
    // Predicated region
    $region21: #{convnet_forward.7} parent=5 // pred_check
      %p125 = pneg %p124
    $region22: #{convnet_forward.7} parent=5 // pred_check_branch
      %127 = sbr.rel (%p125) target = $region24
    $region23: #{convnet_forward.7} parent=5 // pred_region
      // Predicated region
      $region25: #{convnet_forward.7} parent=23 // pred_check
        %p128 = pneg %p29
      $region26: #{convnet_forward.7} parent=23 // pred_check_branch
        %130 = sbr.rel (%p128) target = $region28
      $region27: #{convnet_forward.7} parent=23 // pred_region
        %p131 = scmp.lt.s32.totalorder %s9, 1
        %s132 = scalar_select %p131, %s9, 1
        %s133 = smul.addr %s132, 169
        %s134 = smul.addr %s133, 4
        %s135 = scalar_lea.vmem %s0, %s134
      $region28: #{convnet_forward.7} parent=23 // pred_fallthru
        _
    $region24: #{convnet_forward.7} parent=5 // pred_fallthru
      _
    %p136 = scmp.le.s32.totalorder 1, %s9
    %p137 = scmp.lt.s32.totalorder %s9, 3
    %p138 = pnand %p136, %p137
    %p139 = pneg %p138
    // Predicated region
    $region29: #{convnet_forward.7} parent=5 // pred_check
      _
    $region30: #{convnet_forward.7} parent=5 // pred_check_branch
      %141 = sbr.rel (%p138) target = $region32
    $region31: #{convnet_forward.7} parent=5 // pred_region
      %s142 = ssub.s32 %s9, 1
      %p143 = scmp.lt.s32.totalorder %s14, 1
      %s144 = scalar_select %p143, %s14, 1
      %s145 = smul.addr %s144, 169
      %s146 = smul.addr %s145, 4
      %s147 = scalar_lea.vmem %s0, %s146
      %p148 = pneg %p35
      %p149 = pneg %p32
      %p150 = pneg %p56
      %p151 = pneg %p53
      %p152 = pneg %p77
      %p153 = pneg %p74
      %p154 = pneg %p103
      %p155 = pneg %p100
      %p156 = scmp.lt.s32.totalorder %s14, 1
      %s157 = scalar_select %p156, %s14, 1
      %s158 = smul.addr %s157, 13
      %s159 = smul.addr %s158, 4
      %s160 = scalar_lea.vmem %s3, %s159
      %p161 = scmp.lt.s32.totalorder %s14, 1
      %s162 = scalar_select %p161, %s14, 1
      %s163 = smul.addr %s162, 169
      %s164 = smul.addr %s163, 4
      %s165 = scalar_lea.vmem %s0, %s164
      %p166 = scmp.lt.s32.totalorder %s14, 1
      %s167 = scalar_select %p166, %s14, 1
      %s168 = smul.addr %s167, 13
      %s169 = smul.addr %s168, 4
      %s170 = scalar_lea.vmem %s3, %s169
      %v172 = vld [vmem:[%s165] sm:$0xff]
      %v173 = vld [vmem:[%s165 + $0x8] sm:$0xff]
      %v174 = vld [vmem:[%s165 + $0x10] sm:$0xff]
      %v175 = vld [vmem:[%s165 + $0x18] sm:$0xff]
      %v176 = vld [vmem:[%s165 + $0x20] sm:$0xff]
      %v177 = vld [vmem:[%s165 + $0x28] sm:$0xff]
      %v178 = vld [vmem:[%s165 + $0x30] sm:$0xf]
      %v179 = vld [vmem:[%s165 + $0x34] sm:$0xff]
      %v180 = vld [vmem:[%s165 + $0x3c] sm:$0xff]
      %v181 = vld [vmem:[%s165 + $0x44] sm:$0xff]
      %v182 = vld [vmem:[%s165 + $0x4c] sm:$0xff]
      %v183 = vld [vmem:[%s165 + $0x54] sm:$0xff]
      %v184 = vld [vmem:[%s165 + $0x5c] sm:$0xff]
      %v185 = vld [vmem:[%s165 + $0x64] sm:$0xf]
      %v186 = vld [vmem:[%s165 + $0x68] sm:$0xff]
      %v187 = vld [vmem:[%s165 + $0x70] sm:$0xff]
      %v188 = vld [vmem:[%s165 + $0x78] sm:$0xff]
      %v189 = vld [vmem:[%s165 + $0x80] sm:$0xff]
      %v190 = vld [vmem:[%s165 + $0x88] sm:$0xff]
      %v191 = vld [vmem:[%s165 + $0x90] sm:$0xff]
      %v192 = vld [vmem:[%s165 + $0x98] sm:$0xf]
      %v193 = vld [vmem:[%s165 + $0x9c] sm:$0xff]
      %v194 = vld [vmem:[%s165 + $0xa4] sm:$0xff]
      %v195 = vld [vmem:[%s165 + $0xac] sm:$0xff]
      %v196 = vld [vmem:[%s165 + $0xb4] sm:$0xff]
      %v197 = vld [vmem:[%s165 + $0xbc] sm:$0xff]
      %v198 = vld [vmem:[%s165 + $0xc4] sm:$0xff]
      %v199 = vld [vmem:[%s165 + $0xcc] sm:$0xf]
      %v200 = vld [vmem:[%s165 + $0xd0] sm:$0xff]
      %v201 = vld [vmem:[%s165 + $0xd8] sm:$0xff]
      %v202 = vld [vmem:[%s165 + $0xe0] sm:$0xff]
      %v203 = vld [vmem:[%s165 + $0xe8] sm:$0xff]
      %v204 = vld [vmem:[%s165 + $0xf0] sm:$0xff]
      %v205 = vld [vmem:[%s165 + $0xf8] sm:$0xff]
      %v206 = vld [vmem:[%s165 + $0x100] sm:$0xf]
      %v207 = vld [vmem:[%s165 + $0x104] sm:$0xff]
      %v208 = vld [vmem:[%s165 + $0x10c] sm:$0xff]
      %v209 = vld [vmem:[%s165 + $0x114] sm:$0xff]
      %v210 = vld [vmem:[%s165 + $0x11c] sm:$0xff]
      %v211 = vld [vmem:[%s165 + $0x124] sm:$0xff]
      %v212 = vld [vmem:[%s165 + $0x12c] sm:$0xff]
      %v213 = vld [vmem:[%s165 + $0x134] sm:$0xf]
      %v214 = vld [vmem:[%s165 + $0x138] sm:$0xff]
      %v215 = vld [vmem:[%s165 + $0x140] sm:$0xff]
      %v216 = vld [vmem:[%s165 + $0x148] sm:$0xff]
      %v217 = vld [vmem:[%s165 + $0x150] sm:$0xff]
      %v218 = vld [vmem:[%s165 + $0x158] sm:$0xff]
      %v219 = vld [vmem:[%s165 + $0x160] sm:$0xff]
      %v220 = vld [vmem:[%s165 + $0x168] sm:$0xf]
      %v221 = vld [vmem:[%s165 + $0x16c] sm:$0xff]
      %v222 = vld [vmem:[%s165 + $0x174] sm:$0xff]
      %v223 = vld [vmem:[%s165 + $0x17c] sm:$0xff]
      %v224 = vld [vmem:[%s165 + $0x184] sm:$0xff]
      %v225 = vld [vmem:[%s165 + $0x18c] sm:$0xff]
      %v226 = vld [vmem:[%s165 + $0x194] sm:$0xff]
      %v227 = vld [vmem:[%s165 + $0x19c] sm:$0xf]
      %v228 = vld [vmem:[%s165 + $0x1a0] sm:$0xff]
      %v229 = vld [vmem:[%s165 + $0x1a8] sm:$0xff]
      %v230 = vld [vmem:[%s165 + $0x1b0] sm:$0xff]
      %v231 = vld [vmem:[%s165 + $0x1b8] sm:$0xff]
      %v232 = vld [vmem:[%s165 + $0x1c0] sm:$0xff]
      %v233 = vld [vmem:[%s165 + $0x1c8] sm:$0xff]
      %v234 = vld [vmem:[%s165 + $0x1d0] sm:$0xf]
      %v235 = vld [vmem:[%s165 + $0x1d4] sm:$0xff]
      %v236 = vld [vmem:[%s165 + $0x1dc] sm:$0xff]
      %v237 = vld [vmem:[%s165 + $0x1e4] sm:$0xff]
      %v238 = vld [vmem:[%s165 + $0x1ec] sm:$0xff]
      %v239 = vld [vmem:[%s165 + $0x1f4] sm:$0xff]
      %v240 = vld [vmem:[%s165 + $0x1fc] sm:$0xff]
      %v241 = vld [vmem:[%s165 + $0x204] sm:$0xf]
      %v242 = vld [vmem:[%s165 + $0x208] sm:$0xff]
      %v243 = vld [vmem:[%s165 + $0x210] sm:$0xff]
      %v244 = vld [vmem:[%s165 + $0x218] sm:$0xff]
      %v245 = vld [vmem:[%s165 + $0x220] sm:$0xff]
      %v246 = vld [vmem:[%s165 + $0x228] sm:$0xff]
      %v247 = vld [vmem:[%s165 + $0x230] sm:$0xff]
      %v248 = vld [vmem:[%s165 + $0x238] sm:$0xf]
      %v249 = vld [vmem:[%s165 + $0x23c] sm:$0xff]
      %v250 = vld [vmem:[%s165 + $0x244] sm:$0xff]
      %v251 = vld [vmem:[%s165 + $0x24c] sm:$0xff]
      %v252 = vld [vmem:[%s165 + $0x254] sm:$0xff]
      %v253 = vld [vmem:[%s165 + $0x25c] sm:$0xff]
      %v254 = vld [vmem:[%s165 + $0x264] sm:$0xff]
      %v255 = vld [vmem:[%s165 + $0x26c] sm:$0xf]
      %v256 = vld [vmem:[%s165 + $0x270] sm:$0x33]
      %v257 = vld [vmem:[%s165 + $0x278] sm:$0x33]
      %v258 = vld [vmem:[%s165 + $0x280] sm:$0x33]
      %v259 = vld [vmem:[%s165 + $0x288] sm:$0x33]
      %v260 = vld [vmem:[%s165 + $0x290] sm:$0x33]
      %v261 = vld [vmem:[%s165 + $0x298] sm:$0x33]
      %v262 = vld [vmem:[%s165 + $0x2a0] sm:$0x3]
      %v263 = vld [vmem:[%s1] sm:$0xf]
      %v264 = vld [vmem:[%s1 + $0x4] sm:$0xf]
      %v265 = vld [vmem:[%s1 + $0x8] sm:$0xf]
      %v266 = vld [vmem:[%s1 + $0xc] sm:$0xf]
      %v267 = vld [vmem:[%s1 + $0x10] sm:$0xf]
      %v268 = vld [vmem:[%s1 + $0x14] sm:$0xf]
      %v269 = vld [vmem:[%s1 + $0x18] sm:$0xf]
      %v270 = vld [vmem:[%s1 + $0x1c] sm:$0xf]
      %v271 = vld [vmem:[%s1 + $0x20] sm:$0xf]
      %v272 = vld [vmem:[%s1 + $0x24] sm:$0xf]
      %v273 = vld [vmem:[%s1 + $0x28] sm:$0xf]
      %v274 = vld [vmem:[%s1 + $0x2c] sm:$0xf]
      %v275 = vld [vmem:[%s1 + $0x30] sm:$0xf]
      %v276 = vld [vmem:[%s1 + $0x34] sm:$0xf]
      %v277 = vld [vmem:[%s1 + $0x38] sm:$0xf]
      %v278 = vld [vmem:[%s1 + $0x3c] sm:$0xf]
      %v279 = vld [vmem:[%s1 + $0x40] sm:$0xf]
      %v280 = vld [vmem:[%s1 + $0x44] sm:$0xf]
      %v281 = vld [vmem:[%s1 + $0x48] sm:$0xf]
      %v282 = vld [vmem:[%s1 + $0x4c] sm:$0xf]
      %v283 = vld [vmem:[%s1 + $0x50] sm:$0xf]
      %v284 = vld [vmem:[%s1 + $0x54] sm:$0xf]
      %v285 = vld [vmem:[%s1 + $0x58] sm:$0xf]
      %v286 = vld [vmem:[%s1 + $0x5c] sm:$0xf]
      %v287 = vld [vmem:[%s1 + $0x60] sm:$0xf]
      %v288 = vld [vmem:[%s1 + $0x64] sm:$0xf]
      %v289 = vld [vmem:[%s1 + $0x68] sm:$0xf]
      %v290 = vld [vmem:[%s1 + $0x6c] sm:$0xf]
      %v291 = vld [vmem:[%s1 + $0x70] sm:$0xf]
      %v292 = vld [vmem:[%s1 + $0x74] sm:$0xf]
      %v293 = vld [vmem:[%s1 + $0x78] sm:$0xf]
      %v294 = vld [vmem:[%s1 + $0x7c] sm:$0xf]
      %v295 = vld [vmem:[%s1 + $0x80] sm:$0xf]
      %v296 = vld [vmem:[%s1 + $0x84] sm:$0xf]
      %v297 = vld [vmem:[%s1 + $0x88] sm:$0xf]
      %v298 = vld [vmem:[%s1 + $0x8c] sm:$0xf]
      %v299 = vld [vmem:[%s1 + $0x90] sm:$0xf]
      %v300 = vld [vmem:[%s1 + $0x94] sm:$0xf]
      %v301 = vld [vmem:[%s1 + $0x98] sm:$0xf]
      %v302 = vld [vmem:[%s1 + $0x9c] sm:$0xf]
      %v303 = vld [vmem:[%s1 + $0xa0] sm:$0xf]
      %v304 = vld [vmem:[%s1 + $0xa4] sm:$0xf]
      %v305 = vld [vmem:[%s1 + $0xa8] sm:$0xf]
      %v306 = vld [vmem:[%s1 + $0xac] sm:$0xf]
      %v307 = vld [vmem:[%s1 + $0xb0] sm:$0xf]
      %v308 = vld [vmem:[%s1 + $0xb4] sm:$0xf]
      %v309 = vld [vmem:[%s1 + $0xb8] sm:$0xf]
      %v310 = vld [vmem:[%s1 + $0xbc] sm:$0xf]
      %v311 = vld [vmem:[%s1 + $0xc0] sm:$0xf]
      %v312 = vld [vmem:[%s1 + $0xc4] sm:$0xf]
      %v313 = vld [vmem:[%s1 + $0xc8] sm:$0xf]
      %v314 = vld [vmem:[%s1 + $0xcc] sm:$0xf]
      %v315 = vld [vmem:[%s1 + $0xd0] sm:$0xf]
      %v316 = vld [vmem:[%s1 + $0xd4] sm:$0xf]
      %v317 = vld [vmem:[%s1 + $0xd8] sm:$0xf]
      %v318 = vld [vmem:[%s1 + $0xdc] sm:$0xf]
      %v319 = vld [vmem:[%s1 + $0xe0] sm:$0xf]
      %v320 = vld [vmem:[%s1 + $0xe4] sm:$0xf]
      %v321 = vld [vmem:[%s1 + $0xe8] sm:$0xf]
      %v322 = vld [vmem:[%s1 + $0xec] sm:$0xf]
      %v323 = vld [vmem:[%s1 + $0xf0] sm:$0xf]
      %v324 = vld [vmem:[%s1 + $0xf4] sm:$0xf]
      %v325 = vld [vmem:[%s1 + $0xf8] sm:$0xf]
      %v326 = vld [vmem:[%s1 + $0xfc] sm:$0xf]
      %v327 = vld [vmem:[%s1 + $0x100] sm:$0xf]
      %v328 = vld [vmem:[%s1 + $0x104] sm:$0xf]
      %v329 = vld [vmem:[%s1 + $0x108] sm:$0xf]
      %v330 = vld [vmem:[%s1 + $0x10c] sm:$0xf]
      %v331 = vld [vmem:[%s1 + $0x110] sm:$0xf]
      %v332 = vld [vmem:[%s1 + $0x114] sm:$0xf]
      %v333 = vld [vmem:[%s1 + $0x118] sm:$0xf]
      %v334 = vld [vmem:[%s1 + $0x11c] sm:$0xf]
      %v335 = vld [vmem:[%s1 + $0x120] sm:$0xf]
      %v336 = vld [vmem:[%s1 + $0x124] sm:$0xf]
      %v337 = vld [vmem:[%s1 + $0x128] sm:$0xf]
      %v338 = vld [vmem:[%s1 + $0x12c] sm:$0xf]
      %v339 = vld [vmem:[%s1 + $0x130] sm:$0xf]
      %v340 = vld [vmem:[%s1 + $0x134] sm:$0xf]
      %v341 = vld [vmem:[%s1 + $0x138] sm:$0xf]
      %v342 = vld [vmem:[%s1 + $0x13c] sm:$0xf]
      %v343 = vld [vmem:[%s1 + $0x140] sm:$0xf]
      %v344 = vld [vmem:[%s1 + $0x144] sm:$0xf]
      %v345 = vld [vmem:[%s1 + $0x148] sm:$0xf]
      %v346 = vld [vmem:[%s1 + $0x14c] sm:$0xf]
      %v347 = vld [vmem:[%s1 + $0x150] sm:$0xf]
      %v348 = vld [vmem:[%s1 + $0x154] sm:$0xf]
      %v349 = vld [vmem:[%s1 + $0x158] sm:$0xf]
      %v350 = vld [vmem:[%s1 + $0x15c] sm:$0xf]
      %v351 = vld [vmem:[%s1 + $0x160] sm:$0xf]
      %v352 = vld [vmem:[%s1 + $0x164] sm:$0xf]
      %v353 = vld [vmem:[%s1 + $0x168] sm:$0xf]
      %v354 = vld [vmem:[%s1 + $0x16c] sm:$0xf]
      %v355 = vld [vmem:[%s1 + $0x170] sm:$0xf]
      %v356 = vld [vmem:[%s1 + $0x174] sm:$0xf]
      %v357 = vld [vmem:[%s1 + $0x178] sm:$0xf]
      %v358 = vld [vmem:[%s1 + $0x17c] sm:$0xf]
      %v359 = vld [vmem:[%s1 + $0x180] sm:$0xf]
      %v360 = vld [vmem:[%s1 + $0x184] sm:$0xf]
      %v361 = vld [vmem:[%s1 + $0x188] sm:$0xf]
      %v362 = vld [vmem:[%s1 + $0x18c] sm:$0xf]
      %v363 = vld [vmem:[%s1 + $0x190] sm:$0xf]
      %v364 = vld [vmem:[%s1 + $0x194] sm:$0xf]
      %v365 = vld [vmem:[%s1 + $0x198] sm:$0xf]
      %v366 = vld [vmem:[%s1 + $0x19c] sm:$0xf]
      %v367 = vld [vmem:[%s1 + $0x1a0] sm:$0xf]
      %v368 = vld [vmem:[%s1 + $0x1a4] sm:$0xf]
      %v369 = vld [vmem:[%s1 + $0x1a8] sm:$0xf]
      %v370 = vld [vmem:[%s1 + $0x1ac] sm:$0xf]
      %v371 = vld [vmem:[%s1 + $0x1b0] sm:$0xf]
      %v372 = vld [vmem:[%s1 + $0x1b4] sm:$0xf]
      %v373 = vld [vmem:[%s1 + $0x1b8] sm:$0xf]
      %v374 = vld [vmem:[%s1 + $0x1bc] sm:$0xf]
      %v375 = vld [vmem:[%s1 + $0x1c0] sm:$0xf]
      %v376 = vld [vmem:[%s1 + $0x1c4] sm:$0xf]
      %v377 = vld [vmem:[%s1 + $0x1c8] sm:$0xf]
      %v378 = vld [vmem:[%s1 + $0x1cc] sm:$0xf]
      %v379 = vld [vmem:[%s1 + $0x1d0] sm:$0xf]
      %v380 = vld [vmem:[%s1 + $0x1d4] sm:$0xf]
      %v381 = vld [vmem:[%s1 + $0x1d8] sm:$0xf]
      %v382 = vld [vmem:[%s1 + $0x1dc] sm:$0xf]
      %v383 = vld [vmem:[%s1 + $0x1e0] sm:$0xf]
      %v384 = vld [vmem:[%s1 + $0x1e4] sm:$0xf]
      %v385 = vld [vmem:[%s1 + $0x1e8] sm:$0xf]
      %v386 = vld [vmem:[%s1 + $0x1ec] sm:$0xf]
      %v387 = vld [vmem:[%s1 + $0x1f0] sm:$0xf]
      %v388 = vld [vmem:[%s1 + $0x1f4] sm:$0xf]
      %v389 = vld [vmem:[%s1 + $0x1f8] sm:$0xf]
      %v390 = vld [vmem:[%s1 + $0x1fc] sm:$0xf]
      %v391 = vld [vmem:[%s1 + $0x200] sm:$0xf]
      %v392 = vld [vmem:[%s1 + $0x204] sm:$0xf]
      %v393 = vld [vmem:[%s1 + $0x208] sm:$0xf]
      %v394 = vld [vmem:[%s1 + $0x20c] sm:$0xf]
      %v395 = vld [vmem:[%s1 + $0x210] sm:$0xf]
      %v396 = vld [vmem:[%s1 + $0x214] sm:$0xf]
      %v397 = vld [vmem:[%s1 + $0x218] sm:$0xf]
      %v398 = vld [vmem:[%s1 + $0x21c] sm:$0xf]
      %v399 = vld [vmem:[%s1 + $0x220] sm:$0xf]
      %v400 = vld [vmem:[%s1 + $0x224] sm:$0xf]
      %v401 = vld [vmem:[%s1 + $0x228] sm:$0xf]
      %v402 = vld [vmem:[%s1 + $0x22c] sm:$0xf]
      %v403 = vld [vmem:[%s1 + $0x230] sm:$0xf]
      %v404 = vld [vmem:[%s1 + $0x234] sm:$0xf]
      %v405 = vld [vmem:[%s1 + $0x238] sm:$0xf]
      %v406 = vld [vmem:[%s1 + $0x23c] sm:$0xf]
      %v407 = vld [vmem:[%s1 + $0x240] sm:$0xf]
      %v408 = vld [vmem:[%s1 + $0x244] sm:$0xf]
      %v409 = vld [vmem:[%s1 + $0x248] sm:$0xf]
      %v410 = vld [vmem:[%s1 + $0x24c] sm:$0xf]
      %v411 = vld [vmem:[%s1 + $0x250] sm:$0xf]
      %v412 = vld [vmem:[%s1 + $0x254] sm:$0xf]
      %v413 = vld [vmem:[%s1 + $0x258] sm:$0xf]
      %v414 = vld [vmem:[%s1 + $0x25c] sm:$0xf]
      %v415 = vld [vmem:[%s1 + $0x260] sm:$0xf]
      %v416 = vld [vmem:[%s1 + $0x264] sm:$0xf]
      %v417 = vld [vmem:[%s1 + $0x268] sm:$0xf]
      %v418 = vld [vmem:[%s1 + $0x26c] sm:$0xf]
      %v419 = vld [vmem:[%s1 + $0x270] sm:$0xf]
      %v420 = vld [vmem:[%s1 + $0x274] sm:$0xf]
      %v421 = vld [vmem:[%s1 + $0x278] sm:$0xf]
      %v422 = vld [vmem:[%s1 + $0x27c] sm:$0xf]
      %v423 = vld [vmem:[%s1 + $0x280] sm:$0xf]
      %v424 = vld [vmem:[%s1 + $0x284] sm:$0xf]
      %v425 = vld [vmem:[%s1 + $0x288] sm:$0xf]
      %v426 = vld [vmem:[%s1 + $0x28c] sm:$0xf]
      %v427 = vld [vmem:[%s1 + $0x290] sm:$0xf]
      %v428 = vld [vmem:[%s1 + $0x294] sm:$0xf]
      %v429 = vld [vmem:[%s1 + $0x298] sm:$0xf]
      %v430 = vld [vmem:[%s1 + $0x29c] sm:$0xf]
      %v431 = vld [vmem:[%s1 + $0x2a0] sm:$0xf]
      %v432 = vld [vmem:[%s1 + $0x2a4] sm:$0xf]
      %v433 = vld [vmem:[%s1 + $0x2a8] sm:$0xf]
      %v434 = vld [vmem:[%s1 + $0x2ac] sm:$0xf]
      %v435 = vld [vmem:[%s1 + $0x2b0] sm:$0xf]
      %v436 = vld [vmem:[%s1 + $0x2b4] sm:$0xf]
      %v437 = vld [vmem:[%s1 + $0x2b8] sm:$0xf]
      %v438 = vld [vmem:[%s1 + $0x2bc] sm:$0xf]
      %v439 = vld [vmem:[%s1 + $0x2c0] sm:$0xf]
      %v440 = vld [vmem:[%s1 + $0x2c4] sm:$0xf]
      %v441 = vld [vmem:[%s1 + $0x2c8] sm:$0xf]
      %v442 = vld [vmem:[%s1 + $0x2cc] sm:$0xf]
      %v443 = vld [vmem:[%s1 + $0x2d0] sm:$0xf]
      %v444 = vld [vmem:[%s1 + $0x2d4] sm:$0xf]
      %v445 = vld [vmem:[%s1 + $0x2d8] sm:$0xf]
      %v446 = vld [vmem:[%s1 + $0x2dc] sm:$0xf]
      %v447 = vld [vmem:[%s1 + $0x2e0] sm:$0xf]
      %v448 = vld [vmem:[%s1 + $0x2e4] sm:$0xf]
      %v449 = vld [vmem:[%s1 + $0x2e8] sm:$0xf]
      %v450 = vld [vmem:[%s1 + $0x2ec] sm:$0xf]
      %v451 = vld [vmem:[%s1 + $0x2f0] sm:$0xf]
      %v452 = vld [vmem:[%s1 + $0x2f4] sm:$0xf]
      %v453 = vld [vmem:[%s1 + $0x2f8] sm:$0xf]
      %v454 = vld [vmem:[%s1 + $0x2fc] sm:$0xf]
      %v455 = vld [vmem:[%s1 + $0x300] sm:$0xf]
      %v456 = vld [vmem:[%s1 + $0x304] sm:$0xf]
      %v457 = vld [vmem:[%s1 + $0x308] sm:$0xf]
      %v458 = vld [vmem:[%s1 + $0x30c] sm:$0xf]
      %v459 = vld [vmem:[%s1 + $0x310] sm:$0xf]
      %v460 = vld [vmem:[%s1 + $0x314] sm:$0xf]
      %v461 = vld [vmem:[%s1 + $0x318] sm:$0xf]
      %v462 = vld [vmem:[%s1 + $0x31c] sm:$0xf]
      %v463 = vld [vmem:[%s2] sm:$0x1]
      %v465 = vlaneseq
      %v466 = vshrl.u32 %v465, 7
      %v467 = vsub.s32 0, %v466
      %v468 = vrot.slane %v463, %v467
      %v561 = vunpack.c.l.b16 %v172
      %v562 = vunpack.c.h.b16 %v172
      %v563 = vunpack.c.l.b16 %v173
      %v564 = vunpack.c.h.b16 %v173
      %v565 = vunpack.c.l.b16 %v174
      %v566 = vunpack.c.h.b16 %v174
      %v567 = vunpack.c.l.b16 %v175
      %v568 = vunpack.c.h.b16 %v175
      %v569 = vunpack.c.l.b16 %v176
      %v570 = vunpack.c.h.b16 %v176
      %v571 = vunpack.c.l.b16 %v177
      %v572 = vunpack.c.h.b16 %v177
      %v573 = vunpack.c.l.b16 %v178
      %v574 = vunpack.c.l.b16 %v179
      %v575 = vunpack.c.h.b16 %v179
      %v576 = vunpack.c.l.b16 %v180
      %v577 = vunpack.c.h.b16 %v180
      %v578 = vunpack.c.l.b16 %v181
      %v579 = vunpack.c.h.b16 %v181
      %v580 = vunpack.c.l.b16 %v182
      %v581 = vunpack.c.h.b16 %v182
      %v582 = vunpack.c.l.b16 %v183
      %v583 = vunpack.c.h.b16 %v183
      %v584 = vunpack.c.l.b16 %v184
      %v585 = vunpack.c.h.b16 %v184
      %v586 = vunpack.c.l.b16 %v185
      %v587 = vunpack.c.l.b16 %v186
      %v588 = vunpack.c.h.b16 %v186
      %v589 = vunpack.c.l.b16 %v187
      %v590 = vunpack.c.h.b16 %v187
      %v591 = vunpack.c.l.b16 %v188
      %v592 = vunpack.c.h.b16 %v188
      %v593 = vunpack.c.l.b16 %v189
      %v594 = vunpack.c.h.b16 %v189
      %v595 = vunpack.c.l.b16 %v190
      %v596 = vunpack.c.h.b16 %v190
      %v597 = vunpack.c.l.b16 %v191
      %v598 = vunpack.c.h.b16 %v191
      %v599 = vunpack.c.l.b16 %v192
      %v600 = vunpack.c.l.b16 %v193
      %v601 = vunpack.c.h.b16 %v193
      %v602 = vunpack.c.l.b16 %v194
      %v603 = vunpack.c.h.b16 %v194
      %v604 = vunpack.c.l.b16 %v195
      %v605 = vunpack.c.h.b16 %v195
      %v606 = vunpack.c.l.b16 %v196
      %v607 = vunpack.c.h.b16 %v196
      %v608 = vunpack.c.l.b16 %v197
      %v609 = vunpack.c.h.b16 %v197
      %v610 = vunpack.c.l.b16 %v198
      %v611 = vunpack.c.h.b16 %v198
      %v612 = vunpack.c.l.b16 %v199
      %v613 = vunpack.c.l.b16 %v200
      %v614 = vunpack.c.h.b16 %v200
      %v615 = vunpack.c.l.b16 %v201
      %v616 = vunpack.c.h.b16 %v201
      %v617 = vunpack.c.l.b16 %v202
      %v618 = vunpack.c.h.b16 %v202
      %v619 = vunpack.c.l.b16 %v203
      %v620 = vunpack.c.h.b16 %v203
      %v621 = vunpack.c.l.b16 %v204
      %v622 = vunpack.c.h.b16 %v204
      %v623 = vunpack.c.l.b16 %v205
      %v624 = vunpack.c.h.b16 %v205
      %v625 = vunpack.c.l.b16 %v206
      %v626 = vunpack.c.l.b16 %v207
      %v627 = vunpack.c.h.b16 %v207
      %v628 = vunpack.c.l.b16 %v208
      %v629 = vunpack.c.h.b16 %v208
      %v630 = vunpack.c.l.b16 %v209
      %v631 = vunpack.c.h.b16 %v209
      %v632 = vunpack.c.l.b16 %v210
      %v633 = vunpack.c.h.b16 %v210
      %v634 = vunpack.c.l.b16 %v211
      %v635 = vunpack.c.h.b16 %v211
      %v636 = vunpack.c.l.b16 %v212
      %v637 = vunpack.c.h.b16 %v212
      %v638 = vunpack.c.l.b16 %v213
      %v639 = vunpack.c.l.b16 %v214
      %v640 = vunpack.c.h.b16 %v214
      %v641 = vunpack.c.l.b16 %v215
      %v642 = vunpack.c.h.b16 %v215
      %v643 = vunpack.c.l.b16 %v216
      %v644 = vunpack.c.h.b16 %v216
      %v645 = vunpack.c.l.b16 %v217
      %v646 = vunpack.c.h.b16 %v217
      %v647 = vunpack.c.l.b16 %v218
      %v648 = vunpack.c.h.b16 %v218
      %v649 = vunpack.c.l.b16 %v219
      %v650 = vunpack.c.h.b16 %v219
      %v651 = vunpack.c.l.b16 %v220
      %v652 = vunpack.c.l.b16 %v221
      %v653 = vunpack.c.h.b16 %v221
      %v654 = vunpack.c.l.b16 %v222
      %v655 = vunpack.c.h.b16 %v222
      %v656 = vunpack.c.l.b16 %v223
      %v657 = vunpack.c.h.b16 %v223
      %v658 = vunpack.c.l.b16 %v224
      %v659 = vunpack.c.h.b16 %v224
      %v660 = vunpack.c.l.b16 %v225
      %v661 = vunpack.c.h.b16 %v225
      %v662 = vunpack.c.l.b16 %v226
      %v663 = vunpack.c.h.b16 %v226
      %v664 = vunpack.c.l.b16 %v227
      %v665 = vunpack.c.l.b16 %v228
      %v666 = vunpack.c.h.b16 %v228
      %v667 = vunpack.c.l.b16 %v229
      %v668 = vunpack.c.h.b16 %v229
      %v669 = vunpack.c.l.b16 %v230
      %v670 = vunpack.c.h.b16 %v230
      %v671 = vunpack.c.l.b16 %v231
      %v672 = vunpack.c.h.b16 %v231
      %v673 = vunpack.c.l.b16 %v232
      %v674 = vunpack.c.h.b16 %v232
      %v675 = vunpack.c.l.b16 %v233
      %v676 = vunpack.c.h.b16 %v233
      %v677 = vunpack.c.l.b16 %v234
      %v678 = vunpack.c.l.b16 %v235
      %v679 = vunpack.c.h.b16 %v235
      %v680 = vunpack.c.l.b16 %v236
      %v681 = vunpack.c.h.b16 %v236
      %v682 = vunpack.c.l.b16 %v237
      %v683 = vunpack.c.h.b16 %v237
      %v684 = vunpack.c.l.b16 %v238
      %v685 = vunpack.c.h.b16 %v238
      %v686 = vunpack.c.l.b16 %v239
      %v687 = vunpack.c.h.b16 %v239
      %v688 = vunpack.c.l.b16 %v240
      %v689 = vunpack.c.h.b16 %v240
      %v690 = vunpack.c.l.b16 %v241
      %v691 = vunpack.c.l.b16 %v242
      %v692 = vunpack.c.h.b16 %v242
      %v693 = vunpack.c.l.b16 %v243
      %v694 = vunpack.c.h.b16 %v243
      %v695 = vunpack.c.l.b16 %v244
      %v696 = vunpack.c.h.b16 %v244
      %v697 = vunpack.c.l.b16 %v245
      %v698 = vunpack.c.h.b16 %v245
      %v699 = vunpack.c.l.b16 %v246
      %v700 = vunpack.c.h.b16 %v246
      %v701 = vunpack.c.l.b16 %v247
      %v702 = vunpack.c.h.b16 %v247
      %v703 = vunpack.c.l.b16 %v248
      %v704 = vunpack.c.l.b16 %v249
      %v705 = vunpack.c.h.b16 %v249
      %v706 = vunpack.c.l.b16 %v250
      %v707 = vunpack.c.h.b16 %v250
      %v708 = vunpack.c.l.b16 %v251
      %v709 = vunpack.c.h.b16 %v251
      %v710 = vunpack.c.l.b16 %v252
      %v711 = vunpack.c.h.b16 %v252
      %v712 = vunpack.c.l.b16 %v253
      %v713 = vunpack.c.h.b16 %v253
      %v714 = vunpack.c.l.b16 %v254
      %v715 = vunpack.c.h.b16 %v254
      %v716 = vunpack.c.l.b16 %v255
      %v717 = vunpack.c.l.b16 %v256
      %v718 = vunpack.c.h.b16 %v256
      %v719 = vunpack.c.l.b16 %v257
      %v720 = vunpack.c.h.b16 %v257
      %v721 = vunpack.c.l.b16 %v258
      %v722 = vunpack.c.h.b16 %v258
      %v723 = vunpack.c.l.b16 %v259
      %v724 = vunpack.c.h.b16 %v259
      %v725 = vunpack.c.l.b16 %v260
      %v726 = vunpack.c.h.b16 %v260
      %v727 = vunpack.c.l.b16 %v261
      %v728 = vunpack.c.h.b16 %v261
      %v729 = vunpack.c.l.b16 %v262
      %v730 = vpack.c.b16 %v574, %v561
      %v731 = vpack.c.b16 %v575, %v562
      %v732 = vpack.c.b16 %v576, %v563
      %v733 = vpack.c.b16 %v577, %v564
      %v734 = vpack.c.b16 %v578, %v565
      %v735 = vpack.c.b16 %v579, %v566
      %v736 = vpack.c.b16 %v580, %v567
      %v737 = vpack.c.b16 %v581, %v568
      %v738 = vpack.c.b16 %v582, %v569
      %v739 = vpack.c.b16 %v583, %v570
      %v740 = vpack.c.b16 %v584, %v571
      %v741 = vpack.c.b16 %v585, %v572
      %v742 = vpack.c.b16 %v586, %v573
      %v743 = vpack.c.b16 %v600, %v587
      %v744 = vpack.c.b16 %v601, %v588
      %v745 = vpack.c.b16 %v602, %v589
      %v746 = vpack.c.b16 %v603, %v590
      %v747 = vpack.c.b16 %v604, %v591
      %v748 = vpack.c.b16 %v605, %v592
      %v749 = vpack.c.b16 %v606, %v593
      %v750 = vpack.c.b16 %v607, %v594
      %v751 = vpack.c.b16 %v608, %v595
      %v752 = vpack.c.b16 %v609, %v596
      %v753 = vpack.c.b16 %v610, %v597
      %v754 = vpack.c.b16 %v611, %v598
      %v755 = vpack.c.b16 %v612, %v599
      %v756 = vpack.c.b16 %v626, %v613
      %v757 = vpack.c.b16 %v627, %v614
      %v758 = vpack.c.b16 %v628, %v615
      %v759 = vpack.c.b16 %v629, %v616
      %v760 = vpack.c.b16 %v630, %v617
      %v761 = vpack.c.b16 %v631, %v618
      %v762 = vpack.c.b16 %v632, %v619
      %v763 = vpack.c.b16 %v633, %v620
      %v764 = vpack.c.b16 %v634, %v621
      %v765 = vpack.c.b16 %v635, %v622
      %v766 = vpack.c.b16 %v636, %v623
      %v767 = vpack.c.b16 %v637, %v624
      %v768 = vpack.c.b16 %v638, %v625
      %v769 = vpack.c.b16 %v652, %v639
      %v770 = vpack.c.b16 %v653, %v640
      %v771 = vpack.c.b16 %v654, %v641
      %v772 = vpack.c.b16 %v655, %v642
      %v773 = vpack.c.b16 %v656, %v643
      %v774 = vpack.c.b16 %v657, %v644
      %v775 = vpack.c.b16 %v658, %v645
      %v776 = vpack.c.b16 %v659, %v646
      %v777 = vpack.c.b16 %v660, %v647
      %v778 = vpack.c.b16 %v661, %v648
      %v779 = vpack.c.b16 %v662, %v649
      %v780 = vpack.c.b16 %v663, %v650
      %v781 = vpack.c.b16 %v664, %v651
      %v782 = vpack.c.b16 %v678, %v665
      %v783 = vpack.c.b16 %v679, %v666
      %v784 = vpack.c.b16 %v680, %v667
      %v785 = vpack.c.b16 %v681, %v668
      %v786 = vpack.c.b16 %v682, %v669
      %v787 = vpack.c.b16 %v683, %v670
      %v788 = vpack.c.b16 %v684, %v671
      %v789 = vpack.c.b16 %v685, %v672
      %v790 = vpack.c.b16 %v686, %v673
      %v791 = vpack.c.b16 %v687, %v674
      %v792 = vpack.c.b16 %v688, %v675
      %v793 = vpack.c.b16 %v689, %v676
      %v794 = vpack.c.b16 %v690, %v677
      %v795 = vpack.c.b16 %v704, %v691
      %v796 = vpack.c.b16 %v705, %v692
      %v797 = vpack.c.b16 %v706, %v693
      %v798 = vpack.c.b16 %v707, %v694
      %v799 = vpack.c.b16 %v708, %v695
      %v800 = vpack.c.b16 %v709, %v696
      %v801 = vpack.c.b16 %v710, %v697
      %v802 = vpack.c.b16 %v711, %v698
      %v803 = vpack.c.b16 %v712, %v699
      %v804 = vpack.c.b16 %v713, %v700
      %v805 = vpack.c.b16 %v714, %v701
      %v806 = vpack.c.b16 %v715, %v702
      %v807 = vpack.c.b16 %v716, %v703
      %v808 = vpack.c.b16 %v717, %v717
      %v809 = vpack.c.b16 %v718, %v718
      %v810 = vpack.c.b16 %v719, %v719
      %v811 = vpack.c.b16 %v720, %v720
      %v812 = vpack.c.b16 %v721, %v721
      %v813 = vpack.c.b16 %v722, %v722
      %v814 = vpack.c.b16 %v723, %v723
      %v815 = vpack.c.b16 %v724, %v724
      %v816 = vpack.c.b16 %v725, %v725
      %v817 = vpack.c.b16 %v726, %v726
      %v818 = vpack.c.b16 %v727, %v727
      %v819 = vpack.c.b16 %v728, %v728
      %v820 = vpack.c.b16 %v729, %v729
      %v1105 = vunpack.c.l.b16 %v263
      %v1106 = vunpack.c.l.b16 %v264
      %v1107 = vunpack.c.l.b16 %v265
      %v1108 = vunpack.c.l.b16 %v266
      %v1109 = vunpack.c.l.b16 %v267
      %v1110 = vunpack.c.l.b16 %v268
      %v1111 = vunpack.c.l.b16 %v269
      %v1112 = vunpack.c.l.b16 %v270
      %v1113 = vunpack.c.l.b16 %v271
      %v1114 = vunpack.c.l.b16 %v272
      %v1115 = vunpack.c.l.b16 %v273
      %v1116 = vunpack.c.l.b16 %v274
      %v1117 = vunpack.c.l.b16 %v275
      %v1118 = vunpack.c.l.b16 %v276
      %v1119 = vunpack.c.l.b16 %v277
      %v1120 = vunpack.c.l.b16 %v278
      %v1121 = vunpack.c.l.b16 %v279
      %v1122 = vunpack.c.l.b16 %v280
      %v1123 = vunpack.c.l.b16 %v281
      %v1124 = vunpack.c.l.b16 %v282
      %v1125 = vunpack.c.l.b16 %v283
      %v1126 = vunpack.c.l.b16 %v284
      %v1127 = vunpack.c.l.b16 %v285
      %v1128 = vunpack.c.l.b16 %v286
      %v1129 = vunpack.c.l.b16 %v287
      %v1130 = vunpack.c.l.b16 %v288
      %v1131 = vunpack.c.l.b16 %v289
      %v1132 = vunpack.c.l.b16 %v290
      %v1133 = vunpack.c.l.b16 %v291
      %v1134 = vunpack.c.l.b16 %v292
      %v1135 = vunpack.c.l.b16 %v293
      %v1136 = vunpack.c.l.b16 %v294
      %v1137 = vunpack.c.l.b16 %v295
      %v1138 = vunpack.c.l.b16 %v296
      %v1139 = vunpack.c.l.b16 %v297
      %v1140 = vunpack.c.l.b16 %v298
      %v1141 = vunpack.c.l.b16 %v299
      %v1142 = vunpack.c.l.b16 %v300
      %v1143 = vunpack.c.l.b16 %v301
      %v1144 = vunpack.c.l.b16 %v302
      %v1145 = vunpack.c.l.b16 %v303
      %v1146 = vunpack.c.l.b16 %v304
      %v1147 = vunpack.c.l.b16 %v305
      %v1148 = vunpack.c.l.b16 %v306
      %v1149 = vunpack.c.l.b16 %v307
      %v1150 = vunpack.c.l.b16 %v308
      %v1151 = vunpack.c.l.b16 %v309
      %v1152 = vunpack.c.l.b16 %v310
      %v1153 = vunpack.c.l.b16 %v311
      %v1154 = vunpack.c.l.b16 %v312
      %v1155 = vunpack.c.l.b16 %v313
      %v1156 = vunpack.c.l.b16 %v314
      %v1157 = vunpack.c.l.b16 %v315
      %v1158 = vunpack.c.l.b16 %v316
      %v1159 = vunpack.c.l.b16 %v317
      %v1160 = vunpack.c.l.b16 %v318
      %v1161 = vunpack.c.l.b16 %v319
      %v1162 = vunpack.c.l.b16 %v320
      %v1163 = vunpack.c.l.b16 %v321
      %v1164 = vunpack.c.l.b16 %v322
      %v1165 = vunpack.c.l.b16 %v323
      %v1166 = vunpack.c.l.b16 %v324
      %v1167 = vunpack.c.l.b16 %v325
      %v1168 = vunpack.c.l.b16 %v326
      %v1169 = vunpack.c.l.b16 %v327
      %v1170 = vunpack.c.l.b16 %v328
      %v1171 = vunpack.c.l.b16 %v329
      %v1172 = vunpack.c.l.b16 %v330
      %v1173 = vunpack.c.l.b16 %v331
      %v1174 = vunpack.c.l.b16 %v332
      %v1175 = vunpack.c.l.b16 %v333
      %v1176 = vunpack.c.l.b16 %v334
      %v1177 = vunpack.c.l.b16 %v335
      %v1178 = vunpack.c.l.b16 %v336
      %v1179 = vunpack.c.l.b16 %v337
      %v1180 = vunpack.c.l.b16 %v338
      %v1181 = vunpack.c.l.b16 %v339
      %v1182 = vunpack.c.l.b16 %v340
      %v1183 = vunpack.c.l.b16 %v341
      %v1184 = vunpack.c.l.b16 %v342
      %v1185 = vunpack.c.l.b16 %v343
      %v1186 = vunpack.c.l.b16 %v344
      %v1187 = vunpack.c.l.b16 %v345
      %v1188 = vunpack.c.l.b16 %v346
      %v1189 = vunpack.c.l.b16 %v347
      %v1190 = vunpack.c.l.b16 %v348
      %v1191 = vunpack.c.l.b16 %v349
      %v1192 = vunpack.c.l.b16 %v350
      %v1193 = vunpack.c.l.b16 %v351
      %v1194 = vunpack.c.l.b16 %v352
      %v1195 = vunpack.c.l.b16 %v353
      %v1196 = vunpack.c.l.b16 %v354
      %v1197 = vunpack.c.l.b16 %v355
      %v1198 = vunpack.c.l.b16 %v356
      %v1199 = vunpack.c.l.b16 %v357
      %v1200 = vunpack.c.l.b16 %v358
      %v1201 = vunpack.c.l.b16 %v359
      %v1202 = vunpack.c.l.b16 %v360
      %v1203 = vunpack.c.l.b16 %v361
      %v1204 = vunpack.c.l.b16 %v362
      %v1205 = vunpack.c.l.b16 %v363
      %v1206 = vunpack.c.l.b16 %v364
      %v1207 = vunpack.c.l.b16 %v365
      %v1208 = vunpack.c.l.b16 %v366
      %v1209 = vunpack.c.l.b16 %v367
      %v1210 = vunpack.c.l.b16 %v368
      %v1211 = vunpack.c.l.b16 %v369
      %v1212 = vunpack.c.l.b16 %v370
      %v1213 = vunpack.c.l.b16 %v371
      %v1214 = vunpack.c.l.b16 %v372
      %v1215 = vunpack.c.l.b16 %v373
      %v1216 = vunpack.c.l.b16 %v374
      %v1217 = vunpack.c.l.b16 %v375
      %v1218 = vunpack.c.l.b16 %v376
      %v1219 = vunpack.c.l.b16 %v377
      %v1220 = vunpack.c.l.b16 %v378
      %v1221 = vunpack.c.l.b16 %v379
      %v1222 = vunpack.c.l.b16 %v380
      %v1223 = vunpack.c.l.b16 %v381
      %v1224 = vunpack.c.l.b16 %v382
      %v1225 = vunpack.c.l.b16 %v383
      %v1226 = vunpack.c.l.b16 %v384
      %v1227 = vunpack.c.l.b16 %v385
      %v1228 = vunpack.c.l.b16 %v386
      %v1229 = vunpack.c.l.b16 %v387
      %v1230 = vunpack.c.l.b16 %v388
      %v1231 = vunpack.c.l.b16 %v389
      %v1232 = vunpack.c.l.b16 %v390
      %v1233 = vunpack.c.l.b16 %v391
      %v1234 = vunpack.c.l.b16 %v392
      %v1235 = vunpack.c.l.b16 %v393
      %v1236 = vunpack.c.l.b16 %v394
      %v1237 = vunpack.c.l.b16 %v395
      %v1238 = vunpack.c.l.b16 %v396
      %v1239 = vunpack.c.l.b16 %v397
      %v1240 = vunpack.c.l.b16 %v398
      %v1241 = vunpack.c.l.b16 %v399
      %v1242 = vunpack.c.l.b16 %v400
      %v1243 = vunpack.c.l.b16 %v401
      %v1244 = vunpack.c.l.b16 %v402
      %v1245 = vunpack.c.l.b16 %v403
      %v1246 = vunpack.c.l.b16 %v404
      %v1247 = vunpack.c.l.b16 %v405
      %v1248 = vunpack.c.l.b16 %v406
      %v1249 = vunpack.c.l.b16 %v407
      %v1250 = vunpack.c.l.b16 %v408
      %v1251 = vunpack.c.l.b16 %v409
      %v1252 = vunpack.c.l.b16 %v410
      %v1253 = vunpack.c.l.b16 %v411
      %v1254 = vunpack.c.l.b16 %v412
      %v1255 = vunpack.c.l.b16 %v413
      %v1256 = vunpack.c.l.b16 %v414
      %v1257 = vunpack.c.l.b16 %v415
      %v1258 = vunpack.c.l.b16 %v416
      %v1259 = vunpack.c.l.b16 %v417
      %v1260 = vunpack.c.l.b16 %v418
      %v1261 = vunpack.c.l.b16 %v419
      %v1262 = vunpack.c.l.b16 %v420
      %v1263 = vunpack.c.l.b16 %v421
      %v1264 = vunpack.c.l.b16 %v422
      %v1265 = vunpack.c.l.b16 %v423
      %v1266 = vunpack.c.l.b16 %v424
      %v1267 = vunpack.c.l.b16 %v425
      %v1268 = vunpack.c.l.b16 %v426
      %v1269 = vunpack.c.l.b16 %v427
      %v1270 = vunpack.c.l.b16 %v428
      %v1271 = vunpack.c.l.b16 %v429
      %v1272 = vunpack.c.l.b16 %v430
      %v1273 = vunpack.c.l.b16 %v431
      %v1274 = vunpack.c.l.b16 %v432
      %v1275 = vunpack.c.l.b16 %v433
      %v1276 = vunpack.c.l.b16 %v434
      %v1277 = vunpack.c.l.b16 %v435
      %v1278 = vunpack.c.l.b16 %v436
      %v1279 = vunpack.c.l.b16 %v437
      %v1280 = vunpack.c.l.b16 %v438
      %v1281 = vunpack.c.l.b16 %v439
      %v1282 = vunpack.c.l.b16 %v440
      %v1283 = vunpack.c.l.b16 %v441
      %v1284 = vunpack.c.l.b16 %v442
      %v1285 = vunpack.c.l.b16 %v443
      %v1286 = vunpack.c.l.b16 %v444
      %v1287 = vunpack.c.l.b16 %v445
      %v1288 = vunpack.c.l.b16 %v446
      %v1289 = vunpack.c.l.b16 %v447
      %v1290 = vunpack.c.l.b16 %v448
      %v1291 = vunpack.c.l.b16 %v449
      %v1292 = vunpack.c.l.b16 %v450
      %v1293 = vunpack.c.l.b16 %v451
      %v1294 = vunpack.c.l.b16 %v452
      %v1295 = vunpack.c.l.b16 %v453
      %v1296 = vunpack.c.l.b16 %v454
      %v1297 = vunpack.c.l.b16 %v455
      %v1298 = vunpack.c.l.b16 %v456
      %v1299 = vunpack.c.l.b16 %v457
      %v1300 = vunpack.c.l.b16 %v458
      %v1301 = vunpack.c.l.b16 %v459
      %v1302 = vunpack.c.l.b16 %v460
      %v1303 = vunpack.c.l.b16 %v461
      %v1304 = vunpack.c.l.b16 %v462
      %v1305 = vpack.c.b16 %v1106, %v1105
      %v1306 = vpack.c.b16 %v1108, %v1107
      %v1307 = vpack.c.b16 %v1110, %v1109
      %v1308 = vpack.c.b16 %v1112, %v1111
      %v1309 = vpack.c.b16 %v1114, %v1113
      %v1310 = vpack.c.b16 %v1116, %v1115
      %v1311 = vpack.c.b16 %v1118, %v1117
      %v1312 = vpack.c.b16 %v1120, %v1119
      %v1313 = vpack.c.b16 %v1122, %v1121
      %v1314 = vpack.c.b16 %v1124, %v1123
      %v1315 = vpack.c.b16 %v1126, %v1125
      %v1316 = vpack.c.b16 %v1128, %v1127
      %v1317 = vpack.c.b16 %v1130, %v1129
      %v1318 = vpack.c.b16 %v1132, %v1131
      %v1319 = vpack.c.b16 %v1134, %v1133
      %v1320 = vpack.c.b16 %v1136, %v1135
      %v1321 = vpack.c.b16 %v1138, %v1137
      %v1322 = vpack.c.b16 %v1140, %v1139
      %v1323 = vpack.c.b16 %v1142, %v1141
      %v1324 = vpack.c.b16 %v1144, %v1143
      %v1325 = vpack.c.b16 %v1146, %v1145
      %v1326 = vpack.c.b16 %v1148, %v1147
      %v1327 = vpack.c.b16 %v1150, %v1149
      %v1328 = vpack.c.b16 %v1152, %v1151
      %v1329 = vpack.c.b16 %v1154, %v1153
      %v1330 = vpack.c.b16 %v1156, %v1155
      %v1331 = vpack.c.b16 %v1158, %v1157
      %v1332 = vpack.c.b16 %v1160, %v1159
      %v1333 = vpack.c.b16 %v1162, %v1161
      %v1334 = vpack.c.b16 %v1164, %v1163
      %v1335 = vpack.c.b16 %v1166, %v1165
      %v1336 = vpack.c.b16 %v1168, %v1167
      %v1337 = vpack.c.b16 %v1170, %v1169
      %v1338 = vpack.c.b16 %v1172, %v1171
      %v1339 = vpack.c.b16 %v1174, %v1173
      %v1340 = vpack.c.b16 %v1176, %v1175
      %v1341 = vpack.c.b16 %v1178, %v1177
      %v1342 = vpack.c.b16 %v1180, %v1179
      %v1343 = vpack.c.b16 %v1182, %v1181
      %v1344 = vpack.c.b16 %v1184, %v1183
      %v1345 = vpack.c.b16 %v1186, %v1185
      %v1346 = vpack.c.b16 %v1188, %v1187
      %v1347 = vpack.c.b16 %v1190, %v1189
      %v1348 = vpack.c.b16 %v1192, %v1191
      %v1349 = vpack.c.b16 %v1194, %v1193
      %v1350 = vpack.c.b16 %v1196, %v1195
      %v1351 = vpack.c.b16 %v1198, %v1197
      %v1352 = vpack.c.b16 %v1200, %v1199
      %v1353 = vpack.c.b16 %v1202, %v1201
      %v1354 = vpack.c.b16 %v1204, %v1203
      %v1355 = vpack.c.b16 %v1206, %v1205
      %v1356 = vpack.c.b16 %v1208, %v1207
      %v1357 = vpack.c.b16 %v1210, %v1209
      %v1358 = vpack.c.b16 %v1212, %v1211
      %v1359 = vpack.c.b16 %v1214, %v1213
      %v1360 = vpack.c.b16 %v1216, %v1215
      %v1361 = vpack.c.b16 %v1218, %v1217
      %v1362 = vpack.c.b16 %v1220, %v1219
      %v1363 = vpack.c.b16 %v1222, %v1221
      %v1364 = vpack.c.b16 %v1224, %v1223
      %v1365 = vpack.c.b16 %v1226, %v1225
      %v1366 = vpack.c.b16 %v1228, %v1227
      %v1367 = vpack.c.b16 %v1230, %v1229
      %v1368 = vpack.c.b16 %v1232, %v1231
      %v1369 = vpack.c.b16 %v1234, %v1233
      %v1370 = vpack.c.b16 %v1236, %v1235
      %v1371 = vpack.c.b16 %v1238, %v1237
      %v1372 = vpack.c.b16 %v1240, %v1239
      %v1373 = vpack.c.b16 %v1242, %v1241
      %v1374 = vpack.c.b16 %v1244, %v1243
      %v1375 = vpack.c.b16 %v1246, %v1245
      %v1376 = vpack.c.b16 %v1248, %v1247
      %v1377 = vpack.c.b16 %v1250, %v1249
      %v1378 = vpack.c.b16 %v1252, %v1251
      %v1379 = vpack.c.b16 %v1254, %v1253
      %v1380 = vpack.c.b16 %v1256, %v1255
      %v1381 = vpack.c.b16 %v1258, %v1257
      %v1382 = vpack.c.b16 %v1260, %v1259
      %v1383 = vpack.c.b16 %v1262, %v1261
      %v1384 = vpack.c.b16 %v1264, %v1263
      %v1385 = vpack.c.b16 %v1266, %v1265
      %v1386 = vpack.c.b16 %v1268, %v1267
      %v1387 = vpack.c.b16 %v1270, %v1269
      %v1388 = vpack.c.b16 %v1272, %v1271
      %v1389 = vpack.c.b16 %v1274, %v1273
      %v1390 = vpack.c.b16 %v1276, %v1275
      %v1391 = vpack.c.b16 %v1278, %v1277
      %v1392 = vpack.c.b16 %v1280, %v1279
      %v1393 = vpack.c.b16 %v1282, %v1281
      %v1394 = vpack.c.b16 %v1284, %v1283
      %v1395 = vpack.c.b16 %v1286, %v1285
      %v1396 = vpack.c.b16 %v1288, %v1287
      %v1397 = vpack.c.b16 %v1290, %v1289
      %v1398 = vpack.c.b16 %v1292, %v1291
      %v1399 = vpack.c.b16 %v1294, %v1293
      %v1400 = vpack.c.b16 %v1296, %v1295
      %v1401 = vpack.c.b16 %v1298, %v1297
      %v1402 = vpack.c.b16 %v1300, %v1299
      %v1403 = vpack.c.b16 %v1302, %v1301
      %v1404 = vpack.c.b16 %v1304, %v1303
      %vm1505 = vcmask 523264
      %v1507 = vsel %vm1505, %v742, 0
      %v1510 = vsel %vm1505, %v755, 0
      %v1513 = vsel %vm1505, %v768, 0
      %v1516 = vsel %vm1505, %v781, 0
      %v1519 = vsel %vm1505, %v794, 0
      %v1522 = vsel %vm1505, %v807, 0
      %v1525 = vsel %vm1505, %v820, 0
      %1527 = vmatprep.subr.bf16.mxu0 0
      %1528 = vmatpush1.bf16.msra.mxu0 %v1305
      %1529 = vmatprep.subr.bf16.mxu0 0
      %1530 = vmatpush1.bf16.msra.mxu0 %v1306
      %1531 = vmatprep.subr.bf16.mxu0 0
      %1532 = vmatpush1.bf16.msra.mxu0 %v1307
      %1533 = vmatprep.subr.bf16.mxu0 0
      %1534 = vmatpush1.bf16.msra.mxu0 %v1308
      %1535 = vmatprep.subr.bf16.mxu0 0
      %1536 = vmatpush1.bf16.msra.mxu0 %v1309
      %1537 = vmatprep.subr.bf16.mxu0 0
      %1538 = vmatpush1.bf16.msra.mxu0 %v1310
      %1539 = vmatprep.subr.bf16.mxu0 0
      %1540 = vmatpush1.bf16.msra.mxu0 %v1311
      %1541 = vmatprep.subr.bf16.mxu0 0
      %1542 = vmatpush1.bf16.msra.mxu0 %v1312
      %1543 = vmatprep.subr.bf16.mxu0 0
      %1544 = vmatpush1.bf16.msra.mxu0 %v1313
      %1545 = vmatprep.subr.bf16.mxu0 0
      %1546 = vmatpush1.bf16.msra.mxu0 %v1314
      %1547 = vmatprep.subr.bf16.mxu0 0
      %1548 = vmatpush1.bf16.msra.mxu0 %v1315
      %1549 = vmatprep.subr.bf16.mxu0 0
      %1550 = vmatpush1.bf16.msra.mxu0 %v1316
      %1551 = vmatprep.subr.bf16.mxu0 0
      %1552 = vmatpush1.bf16.msra.mxu0 %v1317
      %1553 = vmatprep.subr.bf16.mxu0 0
      %1554 = vmatpush1.bf16.msra.mxu0 %v1318
      %1555 = vmatprep.subr.bf16.mxu0 0
      %1556 = vmatpush1.bf16.msra.mxu0 %v1319
      %1557 = vmatprep.subr.bf16.mxu0 0
      %1558 = vmatpush1.bf16.msra.mxu0 %v1320
      %1559 = vmatprep.mubr.bf16.mxu0 %v731
      %1560 = vmatmul.mubr.bf16.gmra.mrb[0].mxu0 %v730
      %v1561 = vpop.f32.mrb[0].mxu0
      %v1562 = vadd.f32 %v468, %v1561
      %v1563 = vpop.f32.mrb[0].mxu0
      %v1564 = vpop.f32.mrb[0].mxu0
      %v1565 = vadd.f32 %v468, %v1564
      %v1566 = vpop.f32.mrb[0].mxu0
      %1567 = vmatprep.mubr.bf16.mxu0 %v744
      %1568 = vmatmul.mubr.bf16.gmra.mrb[0].mxu0 %v743
      %v1569 = vpop.f32.mrb[0].mxu0
      %v1570 = vadd.f32 %v468, %v1569
      %v1571 = vpop.f32.mrb[0].mxu0
      %v1572 = vpop.f32.mrb[0].mxu0
      %v1573 = vadd.f32 %v468, %v1572
      %v1574 = vpop.f32.mrb[0].mxu0
      %1575 = vmatprep.mubr.bf16.mxu0 %v757
      %1576 = vmatmul.mubr.bf16.gmra.mrb[0].mxu0 %v756
      %v1577 = vpop.f32.mrb[0].mxu0
      %v1578 = vadd.f32 %v468, %v1577
      %v1579 = vpop.f32.mrb[0].mxu0
      %v1580 = vpop.f32.mrb[0].mxu0
      %v1581 = vadd.f32 %v468, %v1580
      %v1582 = vpop.f32.mrb[0].mxu0
      %1583 = vmatprep.mubr.bf16.mxu0 %v770
      %1584 = vmatmul.mubr.bf16.gmra.mrb[0].mxu0 %v769
      %v1585 = vpop.f32.mrb[0].mxu0
      %v1586 = vadd.f32 %v468, %v1585
      %v1587 = vpop.f32.mrb[0].mxu0
      %v1588 = vpop.f32.mrb[0].mxu0
      %v1589 = vadd.f32 %v468, %v1588
      %v1590 = vpop.f32.mrb[0].mxu0
      %1591 = vmatprep.mubr.bf16.mxu0 %v783
      %1592 = vmatmul.mubr.bf16.gmra.mrb[0].mxu0 %v782
      %v1593 = vpop.f32.mrb[0].mxu0
      %v1594 = vadd.f32 %v468, %v1593
      %v1595 = vpop.f32.mrb[0].mxu0
      %v1596 = vpop.f32.mrb[0].mxu0
      %v1597 = vadd.f32 %v468, %v1596
      %v1598 = vpop.f32.mrb[0].mxu0
      %1599 = vmatprep.mubr.bf16.mxu0 %v796
      %1600 = vmatmul.mubr.bf16.gmra.mrb[0].mxu0 %v795
      %v1601 = vpop.f32.mrb[0].mxu0
      %v1602 = vadd.f32 %v468, %v1601
      %v1603 = vpop.f32.mrb[0].mxu0
      %v1604 = vpop.f32.mrb[0].mxu0
      %v1605 = vadd.f32 %v468, %v1604
      %v1606 = vpop.f32.mrb[0].mxu0
      %1607 = vmatprep.mubr.bf16.mxu0 %v809
      %1608 = vmatmul.mubr.bf16.gmra.mrb[0].mxu0 %v808
      %v1609 = vpop.f32.mrb[0].mxu0
      %v1610 = vadd.f32 %v468, %v1609
      %v1611 = vpop.f32.mrb[0].mxu0
      %v1612 = vpop.f32.mrb[0].mxu0
      %v1613 = vpop.f32.mrb[0].mxu0
      %1614 = vdwg.mxu0
      %1615 = vmatprep.subr.bf16.mxu0 0
      %1616 = vmatpush1.bf16.msra.mxu0 %v1321
      %1617 = vmatprep.subr.bf16.mxu0 0
      %1618 = vmatpush1.bf16.msra.mxu0 %v1322
      %1619 = vmatprep.subr.bf16.mxu0 0
      %1620 = vmatpush1.bf16.msra.mxu0 %v1323
      %1621 = vmatprep.subr.bf16.mxu0 0
      %1622 = vmatpush1.bf16.msra.mxu0 %v1324
      %1623 = vmatprep.subr.bf16.mxu0 0
      %1624 = vmatpush1.bf16.msra.mxu0 %v1325
      %1625 = vmatprep.subr.bf16.mxu0 0
      %1626 = vmatpush1.bf16.msra.mxu0 %v1326
      %1627 = vmatprep.subr.bf16.mxu0 0
      %1628 = vmatpush1.bf16.msra.mxu0 %v1327
      %1629 = vmatprep.subr.bf16.mxu0 0
      %1630 = vmatpush1.bf16.msra.mxu0 %v1328
      %1631 = vmatprep.subr.bf16.mxu0 0
      %1632 = vmatpush1.bf16.msra.mxu0 %v1329
      %1633 = vmatprep.subr.bf16.mxu0 0
      %1634 = vmatpush1.bf16.msra.mxu0 %v1330
      %1635 = vmatprep.subr.bf16.mxu0 0
      %1636 = vmatpush1.bf16.msra.mxu0 %v1331
      %1637 = vmatprep.subr.bf16.mxu0 0
      %1638 = vmatpush1.bf16.msra.mxu0 %v1332
      %1639 = vmatprep.subr.bf16.mxu0 0
      %1640 = vmatpush1.bf16.msra.mxu0 %v1333
      %1641 = vmatprep.subr.bf16.mxu0 0
      %1642 = vmatpush1.bf16.msra.mxu0 %v1334
      %1643 = vmatprep.subr.bf16.mxu0 0
      %1644 = vmatpush1.bf16.msra.mxu0 %v1335
      %1645 = vmatprep.subr.bf16.mxu0 0
      %1646 = vmatpush1.bf16.msra.mxu0 %v1336
      %1647 = vmatprep.mubr.bf16.mxu0 %v733
      %1648 = vmatmul.mubr.bf16.gmra.mrb[0].mxu0 %v732
      %v1649 = vpop.f32.mrb[0].mxu0
      %v1650 = vadd.f32 %v1562, %v1649
      %v1651 = vpop.f32.mrb[0].mxu0
      %v1652 = vpop.f32.mrb[0].mxu0
      %v1653 = vadd.f32 %v1565, %v1652
      %v1654 = vpop.f32.mrb[0].mxu0
      %1655 = vmatprep.mubr.bf16.mxu0 %v746
      %1656 = vmatmul.mubr.bf16.gmra.mrb[0].mxu0 %v745
      %v1657 = vpop.f32.mrb[0].mxu0
      %v1658 = vadd.f32 %v1570, %v1657
      %v1659 = vpop.f32.mrb[0].mxu0
      %v1660 = vpop.f32.mrb[0].mxu0
      %v1661 = vadd.f32 %v1573, %v1660
      %v1662 = vpop.f32.mrb[0].mxu0
      %1663 = vmatprep.mubr.bf16.mxu0 %v759
      %1664 = vmatmul.mubr.bf16.gmra.mrb[0].mxu0 %v758
      %v1665 = vpop.f32.mrb[0].mxu0
      %v1666 = vadd.f32 %v1578, %v1665
      %v1667 = vpop.f32.mrb[0].mxu0
      %v1668 = vpop.f32.mrb[0].mxu0
      %v1669 = vadd.f32 %v1581, %v1668
      %v1670 = vpop.f32.mrb[0].mxu0
      %1671 = vmatprep.mubr.bf16.mxu0 %v772
      %1672 = vmatmul.mubr.bf16.gmra.mrb[0].mxu0 %v771
      %v1673 = vpop.f32.mrb[0].mxu0
      %v1674 = vadd.f32 %v1586, %v1673
      %v1675 = vpop.f32.mrb[0].mxu0
      %v1676 = vpop.f32.mrb[0].mxu0
      %v1677 = vadd.f32 %v1589, %v1676
      %v1678 = vpop.f32.mrb[0].mxu0
      %1679 = vmatprep.mubr.bf16.mxu0 %v785
      %1680 = vmatmul.mubr.bf16.gmra.mrb[0].mxu0 %v784
      %v1681 = vpop.f32.mrb[0].mxu0
      %v1682 = vadd.f32 %v1594, %v1681
      %v1683 = vpop.f32.mrb[0].mxu0
      %v1684 = vpop.f32.mrb[0].mxu0
      %v1685 = vadd.f32 %v1597, %v1684
      %v1686 = vpop.f32.mrb[0].mxu0
      %1687 = vmatprep.mubr.bf16.mxu0 %v798
      %1688 = vmatmul.mubr.bf16.gmra.mrb[0].mxu0 %v797
      %v1689 = vpop.f32.mrb[0].mxu0
      %v1690 = vadd.f32 %v1602, %v1689
      %v1691 = vpop.f32.mrb[0].mxu0
      %v1692 = vpop.f32.mrb[0].mxu0
      %v1693 = vadd.f32 %v1605, %v1692
      %v1694 = vpop.f32.mrb[0].mxu0
      %1695 = vmatprep.mubr.bf16.mxu0 %v811
      %1696 = vmatmul.mubr.bf16.gmra.mrb[0].mxu0 %v810
      %v1697 = vpop.f32.mrb[0].mxu0
      %v1698 = vadd.f32 %v1610, %v1697
      %v1699 = vpop.f32.mrb[0].mxu0
      %v1700 = vpop.f32.mrb[0].mxu0
      %v1701 = vpop.f32.mrb[0].mxu0
      %1702 = vdwg.mxu0
      %1703 = vmatprep.subr.bf16.mxu0 0
      %1704 = vmatpush1.bf16.msra.mxu0 %v1337
      %1705 = vmatprep.subr.bf16.mxu0 0
      %1706 = vmatpush1.bf16.msra.mxu0 %v1338
      %1707 = vmatprep.subr.bf16.mxu0 0
      %1708 = vmatpush1.bf16.msra.mxu0 %v1339
      %1709 = vmatprep.subr.bf16.mxu0 0
      %1710 = vmatpush1.bf16.msra.mxu0 %v1340
      %1711 = vmatprep.subr.bf16.mxu0 0
      %1712 = vmatpush1.bf16.msra.mxu0 %v1341
      %1713 = vmatprep.subr.bf16.mxu0 0
      %1714 = vmatpush1.bf16.msra.mxu0 %v1342
      %1715 = vmatprep.subr.bf16.mxu0 0
      %1716 = vmatpush1.bf16.msra.mxu0 %v1343
      %1717 = vmatprep.subr.bf16.mxu0 0
      %1718 = vmatpush1.bf16.msra.mxu0 %v1344
      %1719 = vmatprep.subr.bf16.mxu0 0
      %1720 = vmatpush1.bf16.msra.mxu0 %v1345
      %1721 = vmatprep.subr.bf16.mxu0 0
      %1722 = vmatpush1.bf16.msra.mxu0 %v1346
      %1723 = vmatprep.subr.bf16.mxu0 0
      %1724 = vmatpush1.bf16.msra.mxu0 %v1347
      %1725 = vmatprep.subr.bf16.mxu0 0
      %1726 = vmatpush1.bf16.msra.mxu0 %v1348
      %1727 = vmatprep.subr.bf16.mxu0 0
      %1728 = vmatpush1.bf16.msra.mxu0 %v1349
      %1729 = vmatprep.subr.bf16.mxu0 0
      %1730 = vmatpush1.bf16.msra.mxu0 %v1350
      %1731 = vmatprep.subr.bf16.mxu0 0
      %1732 = vmatpush1.bf16.msra.mxu0 %v1351
      %1733 = vmatprep.subr.bf16.mxu0 0
      %1734 = vmatpush1.bf16.msra.mxu0 %v1352
      %1735 = vmatprep.mubr.bf16.mxu0 %v735
      %1736 = vmatmul.mubr.bf16.gmra.mrb[0].mxu0 %v734
      %v1737 = vpop.f32.mrb[0].mxu0
      %v1738 = vadd.f32 %v1650, %v1737
      %v1739 = vpop.f32.mrb[0].mxu0
      %v1740 = vpop.f32.mrb[0].mxu0
      %v1741 = vadd.f32 %v1653, %v1740
      %v1742 = vpop.f32.mrb[0].mxu0
      %1743 = vmatprep.mubr.bf16.mxu0 %v748
      %1744 = vmatmul.mubr.bf16.gmra.mrb[0].mxu0 %v747
      %v1745 = vpop.f32.mrb[0].mxu0
      %v1746 = vadd.f32 %v1658, %v1745
      %v1747 = vpop.f32.mrb[0].mxu0
      %v1748 = vpop.f32.mrb[0].mxu0
      %v1749 = vadd.f32 %v1661, %v1748
      %v1750 = vpop.f32.mrb[0].mxu0
      %1751 = vmatprep.mubr.bf16.mxu0 %v761
      %1752 = vmatmul.mubr.bf16.gmra.mrb[0].mxu0 %v760
      %v1753 = vpop.f32.mrb[0].mxu0
      %v1754 = vadd.f32 %v1666, %v1753
      %v1755 = vpop.f32.mrb[0].mxu0
      %v1756 = vpop.f32.mrb[0].mxu0
      %v1757 = vadd.f32 %v1669, %v1756
      %v1758 = vpop.f32.mrb[0].mxu0
      %1759 = vmatprep.mubr.bf16.mxu0 %v774
      %1760 = vmatmul.mubr.bf16.gmra.mrb[0].mxu0 %v773
      %v1761 = vpop.f32.mrb[0].mxu0
      %v1762 = vadd.f32 %v1674, %v1761
      %v1763 = vpop.f32.mrb[0].mxu0
      %v1764 = vpop.f32.mrb[0].mxu0
      %v1765 = vadd.f32 %v1677, %v1764
      %v1766 = vpop.f32.mrb[0].mxu0
      %1767 = vmatprep.mubr.bf16.mxu0 %v787
      %1768 = vmatmul.mubr.bf16.gmra.mrb[0].mxu0 %v786
      %v1769 = vpop.f32.mrb[0].mxu0
      %v1770 = vadd.f32 %v1682, %v1769
      %v1771 = vpop.f32.mrb[0].mxu0
      %v1772 = vpop.f32.mrb[0].mxu0
      %v1773 = vadd.f32 %v1685, %v1772
      %v1774 = vpop.f32.mrb[0].mxu0
      %1775 = vmatprep.mubr.bf16.mxu0 %v800
      %1776 = vmatmul.mubr.bf16.gmra.mrb[0].mxu0 %v799
      %v1777 = vpop.f32.mrb[0].mxu0
      %v1778 = vadd.f32 %v1690, %v1777
      %v1779 = vpop.f32.mrb[0].mxu0
      %v1780 = vpop.f32.mrb[0].mxu0
      %v1781 = vadd.f32 %v1693, %v1780
      %v1782 = vpop.f32.mrb[0].mxu0
      %1783 = vmatprep.mubr.bf16.mxu0 %v813
      %1784 = vmatmul.mubr.bf16.gmra.mrb[0].mxu0 %v812
      %v1785 = vpop.f32.mrb[0].mxu0
      %v1786 = vadd.f32 %v1698, %v1785
      %v1787 = vpop.f32.mrb[0].mxu0
      %v1788 = vpop.f32.mrb[0].mxu0
      %v1789 = vpop.f32.mrb[0].mxu0
      %1790 = vdwg.mxu0
      %1791 = vmatprep.subr.bf16.mxu0 0
      %1792 = vmatpush1.bf16.msra.mxu0 %v1353
      %1793 = vmatprep.subr.bf16.mxu0 0
      %1794 = vmatpush1.bf16.msra.mxu0 %v1354
      %1795 = vmatprep.subr.bf16.mxu0 0
      %1796 = vmatpush1.bf16.msra.mxu0 %v1355
      %1797 = vmatprep.subr.bf16.mxu0 0
      %1798 = vmatpush1.bf16.msra.mxu0 %v1356
      %1799 = vmatprep.subr.bf16.mxu0 0
      %1800 = vmatpush1.bf16.msra.mxu0 %v1357
      %1801 = vmatprep.subr.bf16.mxu0 0
      %1802 = vmatpush1.bf16.msra.mxu0 %v1358
      %1803 = vmatprep.subr.bf16.mxu0 0
      %1804 = vmatpush1.bf16.msra.mxu0 %v1359
      %1805 = vmatprep.subr.bf16.mxu0 0
      %1806 = vmatpush1.bf16.msra.mxu0 %v1360
      %1807 = vmatprep.subr.bf16.mxu0 0
      %1808 = vmatpush1.bf16.msra.mxu0 %v1361
      %1809 = vmatprep.subr.bf16.mxu0 0
      %1810 = vmatpush1.bf16.msra.mxu0 %v1362
      %1811 = vmatprep.subr.bf16.mxu0 0
      %1812 = vmatpush1.bf16.msra.mxu0 %v1363
      %1813 = vmatprep.subr.bf16.mxu0 0
      %1814 = vmatpush1.bf16.msra.mxu0 %v1364
      %1815 = vmatprep.subr.bf16.mxu0 0
      %1816 = vmatpush1.bf16.msra.mxu0 %v1365
      %1817 = vmatprep.subr.bf16.mxu0 0
      %1818 = vmatpush1.bf16.msra.mxu0 %v1366
      %1819 = vmatprep.subr.bf16.mxu0 0
      %1820 = vmatpush1.bf16.msra.mxu0 %v1367
      %1821 = vmatprep.subr.bf16.mxu0 0
      %1822 = vmatpush1.bf16.msra.mxu0 %v1368
      %1823 = vmatprep.mubr.bf16.mxu0 %v737
      %1824 = vmatmul.mubr.bf16.gmra.mrb[0].mxu0 %v736
      %v1825 = vpop.f32.mrb[0].mxu0
      %v1826 = vadd.f32 %v1738, %v1825
      %v1827 = vpop.f32.mrb[0].mxu0
      %v1828 = vpop.f32.mrb[0].mxu0
      %v1829 = vadd.f32 %v1741, %v1828
      %v1830 = vpop.f32.mrb[0].mxu0
      %1831 = vmatprep.mubr.bf16.mxu0 %v750
      %1832 = vmatmul.mubr.bf16.gmra.mrb[0].mxu0 %v749
      %v1833 = vpop.f32.mrb[0].mxu0
      %v1834 = vadd.f32 %v1746, %v1833
      %v1835 = vpop.f32.mrb[0].mxu0
      %v1836 = vpop.f32.mrb[0].mxu0
      %v1837 = vadd.f32 %v1749, %v1836
      %v1838 = vpop.f32.mrb[0].mxu0
      %1839 = vmatprep.mubr.bf16.mxu0 %v763
      %1840 = vmatmul.mubr.bf16.gmra.mrb[0].mxu0 %v762
      %v1841 = vpop.f32.mrb[0].mxu0
      %v1842 = vadd.f32 %v1754, %v1841
      %v1843 = vpop.f32.mrb[0].mxu0
      %v1844 = vpop.f32.mrb[0].mxu0
      %v1845 = vadd.f32 %v1757, %v1844
      %v1846 = vpop.f32.mrb[0].mxu0
      %1847 = vmatprep.mubr.bf16.mxu0 %v776
      %1848 = vmatmul.mubr.bf16.gmra.mrb[0].mxu0 %v775
      %v1849 = vpop.f32.mrb[0].mxu0
      %v1850 = vadd.f32 %v1762, %v1849
      %v1851 = vpop.f32.mrb[0].mxu0
      %v1852 = vpop.f32.mrb[0].mxu0
      %v1853 = vadd.f32 %v1765, %v1852
      %v1854 = vpop.f32.mrb[0].mxu0
      %1855 = vmatprep.mubr.bf16.mxu0 %v789
      %1856 = vmatmul.mubr.bf16.gmra.mrb[0].mxu0 %v788
      %v1857 = vpop.f32.mrb[0].mxu0
      %v1858 = vadd.f32 %v1770, %v1857
      %v1859 = vpop.f32.mrb[0].mxu0
      %v1860 = vpop.f32.mrb[0].mxu0
      %v1861 = vadd.f32 %v1773, %v1860
      %v1862 = vpop.f32.mrb[0].mxu0
      %1863 = vmatprep.mubr.bf16.mxu0 %v802
      %1864 = vmatmul.mubr.bf16.gmra.mrb[0].mxu0 %v801
      %v1865 = vpop.f32.mrb[0].mxu0
      %v1866 = vadd.f32 %v1778, %v1865
      %v1867 = vpop.f32.mrb[0].mxu0
      %v1868 = vpop.f32.mrb[0].mxu0
      %v1869 = vadd.f32 %v1781, %v1868
      %v1870 = vpop.f32.mrb[0].mxu0
      %1871 = vmatprep.mubr.bf16.mxu0 %v815
      %1872 = vmatmul.mubr.bf16.gmra.mrb[0].mxu0 %v814
      %v1873 = vpop.f32.mrb[0].mxu0
      %v1874 = vadd.f32 %v1786, %v1873
      %v1875 = vpop.f32.mrb[0].mxu0
      %v1876 = vpop.f32.mrb[0].mxu0
      %v1877 = vpop.f32.mrb[0].mxu0
      %1878 = vdwg.mxu0
      %1879 = vmatprep.subr.bf16.mxu0 0
      %1880 = vmatpush1.bf16.msra.mxu0 %v1369
      %1881 = vmatprep.subr.bf16.mxu0 0
      %1882 = vmatpush1.bf16.msra.mxu0 %v1370
      %1883 = vmatprep.subr.bf16.mxu0 0
      %1884 = vmatpush1.bf16.msra.mxu0 %v1371
      %1885 = vmatprep.subr.bf16.mxu0 0
      %1886 = vmatpush1.bf16.msra.mxu0 %v1372
      %1887 = vmatprep.subr.bf16.mxu0 0
      %1888 = vmatpush1.bf16.msra.mxu0 %v1373
      %1889 = vmatprep.subr.bf16.mxu0 0
      %1890 = vmatpush1.bf16.msra.mxu0 %v1374
      %1891 = vmatprep.subr.bf16.mxu0 0
      %1892 = vmatpush1.bf16.msra.mxu0 %v1375
      %1893 = vmatprep.subr.bf16.mxu0 0
      %1894 = vmatpush1.bf16.msra.mxu0 %v1376
      %1895 = vmatprep.subr.bf16.mxu0 0
      %1896 = vmatpush1.bf16.msra.mxu0 %v1377
      %1897 = vmatprep.subr.bf16.mxu0 0
      %1898 = vmatpush1.bf16.msra.mxu0 %v1378
      %1899 = vmatprep.subr.bf16.mxu0 0
      %1900 = vmatpush1.bf16.msra.mxu0 %v1379
      %1901 = vmatprep.subr.bf16.mxu0 0
      %1902 = vmatpush1.bf16.msra.mxu0 %v1380
      %1903 = vmatprep.subr.bf16.mxu0 0
      %1904 = vmatpush1.bf16.msra.mxu0 %v1381
      %1905 = vmatprep.subr.bf16.mxu0 0
      %1906 = vmatpush1.bf16.msra.mxu0 %v1382
      %1907 = vmatprep.subr.bf16.mxu0 0
      %1908 = vmatpush1.bf16.msra.mxu0 %v1383
      %1909 = vmatprep.subr.bf16.mxu0 0
      %1910 = vmatpush1.bf16.msra.mxu0 %v1384
      %1911 = vmatprep.mubr.bf16.mxu0 %v739
      %1912 = vmatmul.mubr.bf16.gmra.mrb[0].mxu0 %v738
      %v1913 = vpop.f32.mrb[0].mxu0
      %v1914 = vadd.f32 %v1826, %v1913
      %v1915 = vpop.f32.mrb[0].mxu0
      %v1916 = vpop.f32.mrb[0].mxu0
      %v1917 = vadd.f32 %v1829, %v1916
      %v1918 = vpop.f32.mrb[0].mxu0
      %1919 = vmatprep.mubr.bf16.mxu0 %v752
      %1920 = vmatmul.mubr.bf16.gmra.mrb[0].mxu0 %v751
      %v1921 = vpop.f32.mrb[0].mxu0
      %v1922 = vadd.f32 %v1834, %v1921
      %v1923 = vpop.f32.mrb[0].mxu0
      %v1924 = vpop.f32.mrb[0].mxu0
      %v1925 = vadd.f32 %v1837, %v1924
      %v1926 = vpop.f32.mrb[0].mxu0
      %1927 = vmatprep.mubr.bf16.mxu0 %v765
      %1928 = vmatmul.mubr.bf16.gmra.mrb[0].mxu0 %v764
      %v1929 = vpop.f32.mrb[0].mxu0
      %v1930 = vadd.f32 %v1842, %v1929
      %v1931 = vpop.f32.mrb[0].mxu0
      %v1932 = vpop.f32.mrb[0].mxu0
      %v1933 = vadd.f32 %v1845, %v1932
      %v1934 = vpop.f32.mrb[0].mxu0
      %1935 = vmatprep.mubr.bf16.mxu0 %v778
      %1936 = vmatmul.mubr.bf16.gmra.mrb[0].mxu0 %v777
      %v1937 = vpop.f32.mrb[0].mxu0
      %v1938 = vadd.f32 %v1850, %v1937
      %v1939 = vpop.f32.mrb[0].mxu0
      %v1940 = vpop.f32.mrb[0].mxu0
      %v1941 = vadd.f32 %v1853, %v1940
      %v1942 = vpop.f32.mrb[0].mxu0
      %1943 = vmatprep.mubr.bf16.mxu0 %v791
      %1944 = vmatmul.mubr.bf16.gmra.mrb[0].mxu0 %v790
      %v1945 = vpop.f32.mrb[0].mxu0
      %v1946 = vadd.f32 %v1858, %v1945
      %v1947 = vpop.f32.mrb[0].mxu0
      %v1948 = vpop.f32.mrb[0].mxu0
      %v1949 = vadd.f32 %v1861, %v1948
      %v1950 = vpop.f32.mrb[0].mxu0
      %1951 = vmatprep.mubr.bf16.mxu0 %v804
      %1952 = vmatmul.mubr.bf16.gmra.mrb[0].mxu0 %v803
      %v1953 = vpop.f32.mrb[0].mxu0
      %v1954 = vadd.f32 %v1866, %v1953
      %v1955 = vpop.f32.mrb[0].mxu0
      %v1956 = vpop.f32.mrb[0].mxu0
      %v1957 = vadd.f32 %v1869, %v1956
      %v1958 = vpop.f32.mrb[0].mxu0
      %1959 = vmatprep.mubr.bf16.mxu0 %v817
      %1960 = vmatmul.mubr.bf16.gmra.mrb[0].mxu0 %v816
      %v1961 = vpop.f32.mrb[0].mxu0
      %v1962 = vadd.f32 %v1874, %v1961
      %v1963 = vpop.f32.mrb[0].mxu0
      %v1964 = vpop.f32.mrb[0].mxu0
      %v1965 = vpop.f32.mrb[0].mxu0
      %1966 = vdwg.mxu0
      %1967 = vmatprep.subr.bf16.mxu0 0
      %1968 = vmatpush1.bf16.msra.mxu0 %v1385
      %1969 = vmatprep.subr.bf16.mxu0 0
      %1970 = vmatpush1.bf16.msra.mxu0 %v1386
      %1971 = vmatprep.subr.bf16.mxu0 0
      %1972 = vmatpush1.bf16.msra.mxu0 %v1387
      %1973 = vmatprep.subr.bf16.mxu0 0
      %1974 = vmatpush1.bf16.msra.mxu0 %v1388
      %1975 = vmatprep.subr.bf16.mxu0 0
      %1976 = vmatpush1.bf16.msra.mxu0 %v1389
      %1977 = vmatprep.subr.bf16.mxu0 0
      %1978 = vmatpush1.bf16.msra.mxu0 %v1390
      %1979 = vmatprep.subr.bf16.mxu0 0
      %1980 = vmatpush1.bf16.msra.mxu0 %v1391
      %1981 = vmatprep.subr.bf16.mxu0 0
      %1982 = vmatpush1.bf16.msra.mxu0 %v1392
      %1983 = vmatprep.subr.bf16.mxu0 0
      %1984 = vmatpush1.bf16.msra.mxu0 %v1393
      %1985 = vmatprep.subr.bf16.mxu0 0
      %1986 = vmatpush1.bf16.msra.mxu0 %v1394
      %1987 = vmatprep.subr.bf16.mxu0 0
      %1988 = vmatpush1.bf16.msra.mxu0 %v1395
      %1989 = vmatprep.subr.bf16.mxu0 0
      %1990 = vmatpush1.bf16.msra.mxu0 %v1396
      %1991 = vmatprep.subr.bf16.mxu0 0
      %1992 = vmatpush1.bf16.msra.mxu0 %v1397
      %1993 = vmatprep.subr.bf16.mxu0 0
      %1994 = vmatpush1.bf16.msra.mxu0 %v1398
      %1995 = vmatprep.subr.bf16.mxu0 0
      %1996 = vmatpush1.bf16.msra.mxu0 %v1399
      %1997 = vmatprep.subr.bf16.mxu0 0
      %1998 = vmatpush1.bf16.msra.mxu0 %v1400
      %1999 = vmatprep.mubr.bf16.mxu0 %v741
      %2000 = vmatmul.mubr.bf16.gmra.mrb[0].mxu0 %v740
      %v2001 = vpop.f32.mrb[0].mxu0
      %v2002 = vadd.f32 %v1914, %v2001
      %v2003 = vpop.f32.mrb[0].mxu0
      %v2004 = vpop.f32.mrb[0].mxu0
      %v2005 = vadd.f32 %v1917, %v2004
      %v2006 = vpop.f32.mrb[0].mxu0
      %2007 = vmatprep.mubr.bf16.mxu0 %v754
      %2008 = vmatmul.mubr.bf16.gmra.mrb[0].mxu0 %v753
      %v2009 = vpop.f32.mrb[0].mxu0
      %v2010 = vadd.f32 %v1922, %v2009
      %v2011 = vpop.f32.mrb[0].mxu0
      %v2012 = vpop.f32.mrb[0].mxu0
      %v2013 = vadd.f32 %v1925, %v2012
      %v2014 = vpop.f32.mrb[0].mxu0
      %2015 = vmatprep.mubr.bf16.mxu0 %v767
      %2016 = vmatmul.mubr.bf16.gmra.mrb[0].mxu0 %v766
      %v2017 = vpop.f32.mrb[0].mxu0
      %v2018 = vadd.f32 %v1930, %v2017
      %v2019 = vpop.f32.mrb[0].mxu0
      %v2020 = vpop.f32.mrb[0].mxu0
      %v2021 = vadd.f32 %v1933, %v2020
      %v2022 = vpop.f32.mrb[0].mxu0
      %2023 = vmatprep.mubr.bf16.mxu0 %v780
      %2024 = vmatmul.mubr.bf16.gmra.mrb[0].mxu0 %v779
      %v2025 = vpop.f32.mrb[0].mxu0
      %v2026 = vadd.f32 %v1938, %v2025
      %v2027 = vpop.f32.mrb[0].mxu0
      %v2028 = vpop.f32.mrb[0].mxu0
      %v2029 = vadd.f32 %v1941, %v2028
      %v2030 = vpop.f32.mrb[0].mxu0
      %2031 = vmatprep.mubr.bf16.mxu0 %v793
      %2032 = vmatmul.mubr.bf16.gmra.mrb[0].mxu0 %v792
      %v2033 = vpop.f32.mrb[0].mxu0
      %v2034 = vadd.f32 %v1946, %v2033
      %v2035 = vpop.f32.mrb[0].mxu0
      %v2036 = vpop.f32.mrb[0].mxu0
      %v2037 = vadd.f32 %v1949, %v2036
      %v2038 = vpop.f32.mrb[0].mxu0
      %2039 = vmatprep.mubr.bf16.mxu0 %v806
      %2040 = vmatmul.mubr.bf16.gmra.mrb[0].mxu0 %v805
      %v2041 = vpop.f32.mrb[0].mxu0
      %v2042 = vadd.f32 %v1954, %v2041
      %v2043 = vpop.f32.mrb[0].mxu0
      %v2044 = vpop.f32.mrb[0].mxu0
      %v2045 = vadd.f32 %v1957, %v2044
      %v2046 = vpop.f32.mrb[0].mxu0
      %2047 = vmatprep.mubr.bf16.mxu0 %v819
      %2048 = vmatmul.mubr.bf16.gmra.mrb[0].mxu0 %v818
      %v2049 = vpop.f32.mrb[0].mxu0
      %v2050 = vadd.f32 %v1962, %v2049
      %v2051 = vpop.f32.mrb[0].mxu0
      %v2052 = vpop.f32.mrb[0].mxu0
      %v2053 = vpop.f32.mrb[0].mxu0
      %2054 = vdwg.mxu0
      %2055 = vmatprep.subr.bf16.mxu0 0
      %2056 = vmatpush1.bf16.msra.mxu0 %v1401
      %2057 = vmatprep.subr.bf16.mxu0 0
      %2058 = vmatpush1.bf16.msra.mxu0 %v1402
      %2059 = vmatprep.subr.bf16.mxu0 0
      %2060 = vmatpush1.bf16.msra.mxu0 %v1403
      %2061 = vmatprep.subr.bf16.mxu0 0
      %2062 = vmatpush1.bf16.msra.mxu0 %v1404
      %2063 = vmatprep.subr.bf16.mxu0 0
      %2064 = vmatpush1.bf16.msra.mxu0 0
      %2065 = vmatprep.subr.bf16.mxu0 0
      %2066 = vmatpush1.bf16.msra.mxu0 0
      %2067 = vmatprep.subr.bf16.mxu0 0
      %2068 = vmatpush1.bf16.msra.mxu0 0
      %2069 = vmatprep.subr.bf16.mxu0 0
      %2070 = vmatpush1.bf16.msra.mxu0 0
      %2071 = vmatprep.subr.bf16.mxu0 0
      %2072 = vmatpush1.bf16.msra.mxu0 0
      %2073 = vmatprep.subr.bf16.mxu0 0
      %2074 = vmatpush1.bf16.msra.mxu0 0
      %2075 = vmatprep.subr.bf16.mxu0 0
      %2076 = vmatpush1.bf16.msra.mxu0 0
      %2077 = vmatprep.subr.bf16.mxu0 0
      %2078 = vmatpush1.bf16.msra.mxu0 0
      %2079 = vmatprep.subr.bf16.mxu0 0
      %2080 = vmatpush1.bf16.msra.mxu0 0
      %2081 = vmatprep.subr.bf16.mxu0 0
      %2082 = vmatpush1.bf16.msra.mxu0 0
      %2083 = vmatprep.subr.bf16.mxu0 0
      %2084 = vmatpush1.bf16.msra.mxu0 0
      %2085 = vmatprep.subr.bf16.mxu0 0
      %2086 = vmatpush1.bf16.msra.mxu0 0
      %2087 = vmatprep.mubr.bf16.mxu0 0
      %2088 = vmatmul.mubr.bf16.gmra.mrb[0].mxu0 %v1507
      %v2089 = vpop.f32.mrb[0].mxu0
      %v2090 = vadd.f32 %v2002, %v2089
      %v2091 = vpop.f32.mrb[0].mxu0
      %v2092 = vpop.f32.mrb[0].mxu0
      %v2093 = vadd.f32 %v2005, %v2092
      %v2094 = vpop.f32.mrb[0].mxu0
      %2095 = vmatprep.mubr.bf16.mxu0 0
      %2096 = vmatmul.mubr.bf16.gmra.mrb[0].mxu0 %v1510
      %v2097 = vpop.f32.mrb[0].mxu0
      %v2098 = vadd.f32 %v2010, %v2097
      %v2099 = vpop.f32.mrb[0].mxu0
      %v2100 = vpop.f32.mrb[0].mxu0
      %v2101 = vadd.f32 %v2013, %v2100
      %v2102 = vpop.f32.mrb[0].mxu0
      %2103 = vmatprep.mubr.bf16.mxu0 0
      %2104 = vmatmul.mubr.bf16.gmra.mrb[0].mxu0 %v1513
      %v2105 = vpop.f32.mrb[0].mxu0
      %v2106 = vadd.f32 %v2018, %v2105
      %v2107 = vpop.f32.mrb[0].mxu0
      %v2108 = vpop.f32.mrb[0].mxu0
      %v2109 = vadd.f32 %v2021, %v2108
      %v2110 = vpop.f32.mrb[0].mxu0
      %2111 = vmatprep.mubr.bf16.mxu0 0
      %2112 = vmatmul.mubr.bf16.gmra.mrb[0].mxu0 %v1516
      %v2113 = vpop.f32.mrb[0].mxu0
      %v2114 = vadd.f32 %v2026, %v2113
      %v2115 = vpop.f32.mrb[0].mxu0
      %v2116 = vpop.f32.mrb[0].mxu0
      %v2117 = vadd.f32 %v2029, %v2116
      %v2118 = vpop.f32.mrb[0].mxu0
      %2119 = vmatprep.mubr.bf16.mxu0 0
      %2120 = vmatmul.mubr.bf16.gmra.mrb[0].mxu0 %v1519
      %v2121 = vpop.f32.mrb[0].mxu0
      %v2122 = vadd.f32 %v2034, %v2121
      %v2123 = vpop.f32.mrb[0].mxu0
      %v2124 = vpop.f32.mrb[0].mxu0
      %v2125 = vadd.f32 %v2037, %v2124
      %v2126 = vpop.f32.mrb[0].mxu0
      %2127 = vmatprep.mubr.bf16.mxu0 0
      %2128 = vmatmul.mubr.bf16.gmra.mrb[0].mxu0 %v1522
      %v2129 = vpop.f32.mrb[0].mxu0
      %v2130 = vadd.f32 %v2042, %v2129
      %v2131 = vpop.f32.mrb[0].mxu0
      %v2132 = vpop.f32.mrb[0].mxu0
      %v2133 = vadd.f32 %v2045, %v2132
      %v2134 = vpop.f32.mrb[0].mxu0
      %2135 = vmatprep.mubr.bf16.mxu0 0
      %2136 = vmatmul.mubr.bf16.gmra.mrb[0].mxu0 %v1525
      %v2137 = vpop.f32.mrb[0].mxu0
      %v2138 = vadd.f32 %v2050, %v2137
      %v2139 = vpop.f32.mrb[0].mxu0
      %v2140 = vpop.f32.mrb[0].mxu0
      %v2141 = vpop.f32.mrb[0].mxu0
      %2142 = vdwg.mxu0
      %v2143 = vmax.f32 %v2090, 0.0
      %v2144 = vmax.f32 %v2093, 0.0
      %v2145 = vmax.f32 %v2098, 0.0
      %v2146 = vmax.f32 %v2101, 0.0
      %v2147 = vmax.f32 %v2106, 0.0
      %v2148 = vmax.f32 %v2109, 0.0
      %v2149 = vmax.f32 %v2114, 0.0
      %v2150 = vmax.f32 %v2117, 0.0
      %v2151 = vmax.f32 %v2122, 0.0
      %v2152 = vmax.f32 %v2125, 0.0
      %v2153 = vmax.f32 %v2130, 0.0
      %v2154 = vmax.f32 %v2133, 0.0
      %v2155 = vmax.f32 %v2138, 0.0
      %v2156 = vpack.c.bf16 %v2144, %v2143
      %v2157 = vpack.c.bf16 %v2146, %v2145
      %v2158 = vpack.c.bf16 %v2148, %v2147
      %v2159 = vpack.c.bf16 %v2150, %v2149
      %v2160 = vpack.c.bf16 %v2152, %v2151
      %v2161 = vpack.c.bf16 %v2154, %v2153
      %v2162 = vpack.c.bf16 %v2155, %v2155
      %v2170 = vunpack.c.l.b16 %v2156
      %v2171 = vunpack.c.h.b16 %v2156
      %v2172 = vunpack.c.l.b16 %v2157
      %v2173 = vunpack.c.h.b16 %v2157
      %v2174 = vunpack.c.l.b16 %v2158
      %v2175 = vunpack.c.h.b16 %v2158
      %v2176 = vunpack.c.l.b16 %v2159
      %v2177 = vunpack.c.h.b16 %v2159
      %v2178 = vunpack.c.l.b16 %v2160
      %v2179 = vunpack.c.h.b16 %v2160
      %v2180 = vunpack.c.l.b16 %v2161
      %v2181 = vunpack.c.h.b16 %v2161
      %v2182 = vunpack.c.l.b16 %v2162
      %v2183 = vpack.c.b16 %v2170, %v2170
      %v2184 = vpack.c.b16 %v2171, %v2171
      %v2185 = vpack.c.b16 %v2172, %v2172
      %v2186 = vpack.c.b16 %v2173, %v2173
      %v2187 = vpack.c.b16 %v2174, %v2174
      %v2188 = vpack.c.b16 %v2175, %v2175
      %v2189 = vpack.c.b16 %v2176, %v2176
      %v2190 = vpack.c.b16 %v2177, %v2177
      %v2191 = vpack.c.b16 %v2178, %v2178
      %v2192 = vpack.c.b16 %v2179, %v2179
      %v2193 = vpack.c.b16 %v2180, %v2180
      %v2194 = vpack.c.b16 %v2181, %v2181
      %v2195 = vpack.c.b16 %v2182, %v2182
      %vm2209 = vcmask 519168
      %2210 = vst.msk [vmem:[%s170] sm:$0xf] %vm2209, %v2183
      %2211 = vst.msk [vmem:[%s170 + $0x4] sm:$0xf] %vm2209, %v2184
      %2212 = vst.msk [vmem:[%s170 + $0x8] sm:$0xf] %vm2209, %v2185
      %2213 = vst.msk [vmem:[%s170 + $0xc] sm:$0xf] %vm2209, %v2186
      %2214 = vst.msk [vmem:[%s170 + $0x10] sm:$0xf] %vm2209, %v2187
      %2215 = vst.msk [vmem:[%s170 + $0x14] sm:$0xf] %vm2209, %v2188
      %2216 = vst.msk [vmem:[%s170 + $0x18] sm:$0xf] %vm2209, %v2189
      %2217 = vst.msk [vmem:[%s170 + $0x1c] sm:$0xf] %vm2209, %v2190
      %2218 = vst.msk [vmem:[%s170 + $0x20] sm:$0xf] %vm2209, %v2191
      %2219 = vst.msk [vmem:[%s170 + $0x24] sm:$0xf] %vm2209, %v2192
      %2220 = vst.msk [vmem:[%s170 + $0x28] sm:$0xf] %vm2209, %v2193
      %2221 = vst.msk [vmem:[%s170 + $0x2c] sm:$0xf] %vm2209, %v2194
      %vm2222 = vcmask 517120
      %2223 = vst.msk [vmem:[%s170 + $0x30] sm:$0x3] %vm2222, %v2195
      %p2224 = scmp.lt.s32.totalorder %s14, 1
      %s2225 = scalar_select %p2224, %s14, 1
      %s2226 = smul.addr %s2225, 13
      %s2227 = smul.addr %s2226, 4
      %s2228 = scalar_lea.vmem %s3, %s2227
      // Predicated region
      $region33: #{convnet_forward.7} parent=31 // pred_check
        %p2229 = pneg %p100
      $region34: #{convnet_forward.7} parent=31 // pred_check_branch
        %2231 = sbr.rel (%p2229) target = $region36
      $region35: #{convnet_forward.7} parent=31 // pred_region
        _
      $region36: #{convnet_forward.7} parent=31 // pred_fallthru
        _
    $region32: #{convnet_forward.7} parent=5 // pred_fallthru
      _
    %p2232 = scmp.le.s32.totalorder 2, %s9
    // Predicated region
    $region37: #{convnet_forward.7} parent=5 // pred_check
      %p2233 = pneg %p2232
    $region38: #{convnet_forward.7} parent=5 // pred_check_branch
      %2235 = sbr.rel (%p2233) target = $region40
    $region39: #{convnet_forward.7} parent=5 // pred_region
      %s2236 = ssub.s32 %s9, 2
      // Predicated region
      $region41: #{convnet_forward.7} parent=39 // pred_check
        %p2237 = pneg %p106
      $region42: #{convnet_forward.7} parent=39 // pred_check_branch
        %2239 = sbr.rel (%p2237) target = $region44
      $region43: #{convnet_forward.7} parent=39 // pred_region
        %p2240 = scmp.lt.s32.totalorder %s15, 1
        %s2241 = scalar_select %p2240, %s15, 1
        %s2242 = smul.addr %s2241, 13
        %s2243 = smul.addr %s2242, 4
        %s2244 = scalar_lea.vmem %s3, %s2243
      $region44: #{convnet_forward.7} parent=39 // pred_fallthru
        _
    $region40: #{convnet_forward.7} parent=5 // pred_fallthru
      _
  $region6: #{convnet_forward.7} parent=0 // loop_footer
    %s13 = sadd.s32 1, %s9
  $region7: #{convnet_forward.7} parent=0 // loop_footer_branch
    %8 = sbr.rel target = $region3
  $region8: #{convnet_forward.7} parent=0 // loop_exit
    _

// kernel: convnet_forward.8
$region0: #{convnet_forward.8}
  #allocation0 [shape = 'u32[]', space=smem, size = 0x4, offset = 0x4, fixed_abs, tag = 'smem constant byte address 0x4 - core index']
  #allocation1 [shape = 'u32[144,128]{1,0:T(1,128)}', space=vmem, size = 0x12000, scoped, tag = 'internal scratch']
  %s0 = inlined_call_operand.vmem [shape: bf16[2,10,5,128], index: 0, kind: input, shape index: {}]
  %s1 = inlined_call_operand.vmem [shape: bf16[2,5,5,64], index: 1, kind: output, shape index: {}]
  %s2 = sld [smem:[#allocation0]]
  $region37: #{convnet_forward.8} parent=0
    _
  %s4 = ssub.s32 1, %s2
  %s5 = scalar_select 0, %s4, %s2
  loop: start=0, step=1, limit=4
  $region2: #{convnet_forward.8} parent=0 // loop_pre_header
    _
  $region3: #{convnet_forward.8} parent=0 // loop_header
    %s7 = sphi 0, %s11
    %p8 = scmp.ge.s32.totalorder %s7, 4
    %s17 = sphi 0, %s19
    %s20 = sphi 0, %s17
    %s21 = sphi 0, %s20
    %s37 = sphi 0, %s21
    %s43 = sphi 0, %s45
    %s46 = sphi 0, %s43
    %s47 = sphi 0, %s46
    %s63 = sphi 0, %s47
  $region4: #{convnet_forward.8} parent=0 // loop_header_branch
    %10 = sbr.rel (%p8) target = $region8
  $region5: #{convnet_forward.8} parent=0 // loop_body
    %s12 = ssub.s32 %s7, 1
    %s13 = ssub.s32 %s7, 2
    %s14 = sadd.s32 %s7, 1
    %s15 = ssub.s32 %s7, %s14
    %p16 = scmp.eq.s32.totalorder %s15, 0
    %s18 = sadd.s32 %s17, 1
    %s19 = scalar_select %p16, %s17, %s18
    %p22 = pneg %p16
    %p23 = scmp.eq.s32.totalorder %s7, 1
    %p24 = por %p22, %p23
    %p25 = scmp.ne.s32.totalorder %s17, %s20
    %p26 = scmp.eq.s32.totalorder %s7, 0
    %p27 = por %p25, %p26
    %p28 = scmp.ne.s32.totalorder %s17, %s20
    %p29 = scmp.eq.s32.totalorder %s12, 1
    %p30 = por %p28, %p29
    %p31 = scmp.ne.s32.totalorder %s20, %s21
    %p32 = scmp.eq.s32.totalorder %s12, 0
    %p33 = por %p31, %p32
    %p34 = scmp.ne.s32.totalorder %s20, %s21
    %p35 = scmp.eq.s32.totalorder %s13, 1
    %p36 = por %p34, %p35
    %p38 = scmp.ne.s32.totalorder %s21, %s37
    %p39 = scmp.eq.s32.totalorder %s13, 0
    %p40 = por %p38, %p39
    %s41 = ssub.s32 %s7, %s14
    %p42 = scmp.eq.s32.totalorder %s41, 0
    %s44 = sadd.s32 %s43, 1
    %s45 = scalar_select %p42, %s43, %s44
    %p48 = pneg %p42
    %p49 = scmp.eq.s32.totalorder %s7, 1
    %p50 = por %p48, %p49
    %p51 = scmp.ne.s32.totalorder %s43, %s46
    %p52 = scmp.eq.s32.totalorder %s7, 0
    %p53 = por %p51, %p52
    %p54 = scmp.ne.s32.totalorder %s43, %s46
    %p55 = scmp.eq.s32.totalorder %s12, 1
    %p56 = por %p54, %p55
    %p57 = scmp.ne.s32.totalorder %s46, %s47
    %p58 = scmp.eq.s32.totalorder %s12, 0
    %p59 = por %p57, %p58
    %p60 = scmp.ne.s32.totalorder %s46, %s47
    %p61 = scmp.eq.s32.totalorder %s13, 1
    %p62 = por %p60, %p61
    %p64 = scmp.ne.s32.totalorder %s47, %s63
    %p65 = scmp.eq.s32.totalorder %s13, 0
    %p66 = por %p64, %p65
    %p67 = scmp.le.s32.totalorder 1, %s7
    %p68 = scmp.lt.s32.totalorder %s7, 3
    %p69 = pnand %p67, %p68
    %p70 = pneg %p69
    // Predicated region
    $region9: #{convnet_forward.8} parent=5 // pred_check
      _
    $region10: #{convnet_forward.8} parent=5 // pred_check_branch
      %72 = sbr.rel (%p69) target = $region12
    $region11: #{convnet_forward.8} parent=5 // pred_region
      %s73 = ssub.s32 %s7, 1
    $region12: #{convnet_forward.8} parent=5 // pred_fallthru
      _
    %p74 = scmp.lt.s32.totalorder %s7, 2
    // Predicated region
    $region13: #{convnet_forward.8} parent=5 // pred_check
      %p75 = pneg %p74
    $region14: #{convnet_forward.8} parent=5 // pred_check_branch
      %77 = sbr.rel (%p75) target = $region16
    $region15: #{convnet_forward.8} parent=5 // pred_region
      // Predicated region
      $region17: #{convnet_forward.8} parent=15 // pred_check
        %p78 = pneg %p27
      $region18: #{convnet_forward.8} parent=15 // pred_check_branch
        %80 = sbr.rel (%p78) target = $region20
      $region19: #{convnet_forward.8} parent=15 // pred_region
        %p81 = scmp.lt.s32.totalorder %s7, 1
        %s82 = scalar_select %p81, %s7, 1
        %s83 = smul.addr %s82, 10
        %s84 = smul.addr %s83, 4
        %s85 = scalar_lea.vmem %s0, %s84
      $region20: #{convnet_forward.8} parent=15 // pred_fallthru
        _
    $region16: #{convnet_forward.8} parent=5 // pred_fallthru
      _
    %p86 = scmp.le.s32.totalorder 1, %s7
    %p87 = scmp.lt.s32.totalorder %s7, 3
    %p88 = pnand %p86, %p87
    %p89 = pneg %p88
    // Predicated region
    $region21: #{convnet_forward.8} parent=5 // pred_check
      _
    $region22: #{convnet_forward.8} parent=5 // pred_check_branch
      %91 = sbr.rel (%p88) target = $region24
    $region23: #{convnet_forward.8} parent=5 // pred_region
      %s92 = ssub.s32 %s7, 1
      %p93 = scmp.lt.s32.totalorder %s12, 1
      %s94 = scalar_select %p93, %s12, 1
      %s95 = smul.addr %s94, 10
      %s96 = smul.addr %s95, 4
      %s97 = scalar_lea.vmem %s0, %s96
      %p98 = pneg %p33
      %p99 = pneg %p30
      %p100 = pneg %p59
      %p101 = pneg %p56
      %p102 = scmp.lt.s32.totalorder %s12, 1
      %s103 = scalar_select %p102, %s12, 1
      %s104 = smul.addr %s103, 5
      %s105 = smul.addr %s104, 4
      %s106 = scalar_lea.vmem %s1, %s105
      %p107 = scmp.lt.s32.totalorder %s12, 1
      %s108 = scalar_select %p107, %s12, 1
      %s109 = smul.addr %s108, 10
      %s110 = smul.addr %s109, 4
      %s111 = scalar_lea.vmem %s0, %s110
      %p112 = scmp.lt.s32.totalorder %s12, 1
      %s113 = scalar_select %p112, %s12, 1
      %s114 = smul.addr %s113, 5
      %s115 = smul.addr %s114, 4
      %s116 = scalar_lea.vmem %s1, %s115
      %v117 = vld [vmem:[%s111] sm:$0x7]
      %v118 = vld [vmem:[%s111 + $0x4] sm:$0x7]
      %v119 = vld [vmem:[%s111 + $0x8] sm:$0x7]
      %v120 = vld [vmem:[%s111 + $0xc] sm:$0x7]
      %v121 = vld [vmem:[%s111 + $0x10] sm:$0x7]
      %v122 = vld [vmem:[%s111 + $0x14] sm:$0x7]
      %v123 = vld [vmem:[%s111 + $0x18] sm:$0x7]
      %v124 = vld [vmem:[%s111 + $0x1c] sm:$0x7]
      %v125 = vld [vmem:[%s111 + $0x20] sm:$0x7]
      %v126 = vld [vmem:[%s111 + $0x24] sm:$0x7]
      %v127 = vmax.bf16 %v117, %v118
      %v128 = vmax.bf16 %v119, %v120
      %v129 = vmax.bf16 %v121, %v122
      %v130 = vmax.bf16 %v123, %v124
      %v131 = vmax.bf16 %v125, %v126
      %137 = vrot.lane.b32.xlu0 %v127, 64
      %v138 = vpop.permute.xlu0 %137
      %139 = vrot.lane.b32.xlu0 %v128, 64
      %v140 = vpop.permute.xlu0 %139
      %141 = vrot.lane.b32.xlu0 %v129, 64
      %v142 = vpop.permute.xlu0 %141
      %143 = vrot.lane.b32.xlu0 %v130, 64
      %v144 = vpop.permute.xlu0 %143
      %145 = vrot.lane.b32.xlu0 %v131, 64
      %v146 = vpop.permute.xlu0 %145
      %v152 = vmax.bf16 %v127, %v138
      %v153 = vmax.bf16 %v128, %v140
      %v154 = vmax.bf16 %v129, %v142
      %v155 = vmax.bf16 %v130, %v144
      %v156 = vmax.bf16 %v131, %v146
      %vm157 = vcmask 518144
      %vm158 = vsmask.f32 2304
      %vm159 = vmand %vm157, %vm158
      %v160 = vld [vmem:[%s116] sm:$0x7]
      %v161 = vsel %vm159, %v152, %v160
      %162 = vst [vmem:[%s116] sm:$0x7] %v161
      %v163 = vld [vmem:[%s116 + $0x4] sm:$0x7]
      %v164 = vsel %vm159, %v153, %v163
      %165 = vst [vmem:[%s116 + $0x4] sm:$0x7] %v164
      %v166 = vld [vmem:[%s116 + $0x8] sm:$0x7]
      %v167 = vsel %vm159, %v154, %v166
      %168 = vst [vmem:[%s116 + $0x8] sm:$0x7] %v167
      %v169 = vld [vmem:[%s116 + $0xc] sm:$0x7]
      %v170 = vsel %vm159, %v155, %v169
      %171 = vst [vmem:[%s116 + $0xc] sm:$0x7] %v170
      %v172 = vld [vmem:[%s116 + $0x10] sm:$0x7]
      %v173 = vsel %vm159, %v156, %v172
      %174 = vst [vmem:[%s116 + $0x10] sm:$0x7] %v173
      %p175 = scmp.lt.s32.totalorder %s12, 1
      %s176 = scalar_select %p175, %s12, 1
      %s177 = smul.addr %s176, 5
      %s178 = smul.addr %s177, 4
      %s179 = scalar_lea.vmem %s1, %s178
      // Predicated region
      $region25: #{convnet_forward.8} parent=23 // pred_check
        %p180 = pneg %p56
      $region26: #{convnet_forward.8} parent=23 // pred_check_branch
        %182 = sbr.rel (%p180) target = $region28
      $region27: #{convnet_forward.8} parent=23 // pred_region
        _
      $region28: #{convnet_forward.8} parent=23 // pred_fallthru
        _
    $region24: #{convnet_forward.8} parent=5 // pred_fallthru
      _
    %p183 = scmp.le.s32.totalorder 2, %s7
    // Predicated region
    $region29: #{convnet_forward.8} parent=5 // pred_check
      %p184 = pneg %p183
    $region30: #{convnet_forward.8} parent=5 // pred_check_branch
      %186 = sbr.rel (%p184) target = $region32
    $region31: #{convnet_forward.8} parent=5 // pred_region
      %s187 = ssub.s32 %s7, 2
      // Predicated region
      $region33: #{convnet_forward.8} parent=31 // pred_check
        %p188 = pneg %p62
      $region34: #{convnet_forward.8} parent=31 // pred_check_branch
        %190 = sbr.rel (%p188) target = $region36
      $region35: #{convnet_forward.8} parent=31 // pred_region
        %p191 = scmp.lt.s32.totalorder %s13, 1
        %s192 = scalar_select %p191, %s13, 1
        %s193 = smul.addr %s192, 5
        %s194 = smul.addr %s193, 4
        %s195 = scalar_lea.vmem %s1, %s194
      $region36: #{convnet_forward.8} parent=31 // pred_fallthru
        _
    $region32: #{convnet_forward.8} parent=5 // pred_fallthru
      _
  $region6: #{convnet_forward.8} parent=0 // loop_footer
    %s11 = sadd.s32 1, %s7
  $region7: #{convnet_forward.8} parent=0 // loop_footer_branch
    %6 = sbr.rel target = $region3
  $region8: #{convnet_forward.8} parent=0 // loop_exit
    _

// kernel: convnet_forward.9
$region0: #{convnet_forward.9}
  #allocation0 [shape = 'u32[]', space=smem, size = 0x4, offset = 0x4, fixed_abs, tag = 'smem constant byte address 0x4 - core index']
  #allocation1 [shape = 'u32[144,128]{1,0:T(1,128)}', space=vmem, size = 0x12000, scoped, tag = 'internal scratch']
  %s0 = inlined_call_operand.vmem [shape: bf16[8,1600], index: 0, kind: input, shape index: {}]
  %s1 = inlined_call_operand.vmem [shape: bf16[1600,384], index: 1, kind: input, shape index: {}]
  %s2 = inlined_call_operand.vmem [shape: f32[1,384], index: 2, kind: input, shape index: {}]
  %s3 = inlined_call_operand.vmem [shape: bf16[384,256], index: 3, kind: input, shape index: {}]
  %s4 = inlined_call_operand.vmem [shape: f32[1,256], index: 4, kind: input, shape index: {}]
  %s5 = inlined_call_operand.vmem [shape: bf16[256,128], index: 5, kind: input, shape index: {}]
  %s6 = inlined_call_operand.vmem [shape: f32[1,128], index: 6, kind: input, shape index: {}]
  %s7 = inlined_call_operand.vmem [shape: f32[8,128], index: 7, kind: output, shape index: {}]
  %s8 = sld [smem:[#allocation0]]
  $region38: #{convnet_forward.9} parent=0
    _
  %s10 = ssub.s32 1, %s8
  %s11 = scalar_select 0, %s10, %s8
  // Predicated region
  $region2: #{convnet_forward.9} parent=0 // pred_check
    _
  $region3: #{convnet_forward.9} parent=0 // pred_check_branch
    %13 = sbr.rel (0) target = $region5
  $region4: #{convnet_forward.9} parent=0 // pred_region
    _
  $region5: #{convnet_forward.9} parent=0 // pred_fallthru
    _
  // Predicated region
  $region6: #{convnet_forward.9} parent=0 // pred_check
    _
  $region7: #{convnet_forward.9} parent=0 // pred_check_branch
    %15 = sbr.rel (0) target = $region9
  $region8: #{convnet_forward.9} parent=0 // pred_region
    _
  $region9: #{convnet_forward.9} parent=0 // pred_fallthru
    _
  // Predicated region
  $region10: #{convnet_forward.9} parent=0 // pred_check
    _
  $region11: #{convnet_forward.9} parent=0 // pred_check_branch
    %17 = sbr.rel (0) target = $region13
  $region12: #{convnet_forward.9} parent=0 // pred_region
    _
  $region13: #{convnet_forward.9} parent=0 // pred_fallthru
    _
  // Predicated region
  $region14: #{convnet_forward.9} parent=0 // pred_check
    _
  $region15: #{convnet_forward.9} parent=0 // pred_check_branch
    %19 = sbr.rel (0) target = $region17
  $region16: #{convnet_forward.9} parent=0 // pred_region
    _
  $region17: #{convnet_forward.9} parent=0 // pred_fallthru
    _
  // Predicated region
  $region18: #{convnet_forward.9} parent=0 // pred_check
    _
  $region19: #{convnet_forward.9} parent=0 // pred_check_branch
    %21 = sbr.rel (0) target = $region21
  $region20: #{convnet_forward.9} parent=0 // pred_region
    _
  $region21: #{convnet_forward.9} parent=0 // pred_fallthru
    _
  // Predicated region
  $region22: #{convnet_forward.9} parent=0 // pred_check
    _
  $region23: #{convnet_forward.9} parent=0 // pred_check_branch
    %23 = sbr.rel (0) target = $region25
  $region24: #{convnet_forward.9} parent=0 // pred_region
    _
  $region25: #{convnet_forward.9} parent=0 // pred_fallthru
    _
  // Predicated region
  $region26: #{convnet_forward.9} parent=0 // pred_check
    _
  $region27: #{convnet_forward.9} parent=0 // pred_check_branch
    %25 = sbr.rel (0) target = $region29
  $region28: #{convnet_forward.9} parent=0 // pred_region
    _
  $region29: #{convnet_forward.9} parent=0 // pred_fallthru
    _
  %v27 = vld [vmem:[%s0] sm:$0xff]
  %v28 = vld [vmem:[%s0 + $0x8] sm:$0xff]
  %v29 = vld [vmem:[%s0 + $0x10] sm:$0xff]
  %v30 = vld [vmem:[%s0 + $0x18] sm:$0xff]
  %v31 = vld [vmem:[%s0 + $0x20] sm:$0xff]
  %v32 = vld [vmem:[%s0 + $0x28] sm:$0xff]
  %v33 = vld [vmem:[%s0 + $0x30] sm:$0xf]
  %v34 = vld [vmem:[%s1] sm:$0xff]
  %v35 = vld [vmem:[%s1 + $0x8] sm:$0xf]
  %v36 = vld [vmem:[%s1 + $0xc] sm:$0xff]
  %v37 = vld [vmem:[%s1 + $0x14] sm:$0xf]
  %v38 = vld [vmem:[%s1 + $0x18] sm:$0xff]
  %v39 = vld [vmem:[%s1 + $0x20] sm:$0xf]
  %v40 = vld [vmem:[%s1 + $0x24] sm:$0xff]
  %v41 = vld [vmem:[%s1 + $0x2c] sm:$0xf]
  %v42 = vld [vmem:[%s1 + $0x30] sm:$0xff]
  %v43 = vld [vmem:[%s1 + $0x38] sm:$0xf]
  %v44 = vld [vmem:[%s1 + $0x3c] sm:$0xff]
  %v45 = vld [vmem:[%s1 + $0x44] sm:$0xf]
  %v46 = vld [vmem:[%s1 + $0x48] sm:$0xff]
  %v47 = vld [vmem:[%s1 + $0x50] sm:$0xf]
  %v48 = vld [vmem:[%s1 + $0x54] sm:$0xff]
  %v49 = vld [vmem:[%s1 + $0x5c] sm:$0xf]
  %v50 = vld [vmem:[%s1 + $0x60] sm:$0xff]
  %v51 = vld [vmem:[%s1 + $0x68] sm:$0xf]
  %v52 = vld [vmem:[%s1 + $0x6c] sm:$0xff]
  %v53 = vld [vmem:[%s1 + $0x74] sm:$0xf]
  %v54 = vld [vmem:[%s1 + $0x78] sm:$0xff]
  %v55 = vld [vmem:[%s1 + $0x80] sm:$0xf]
  %v56 = vld [vmem:[%s1 + $0x84] sm:$0xff]
  %v57 = vld [vmem:[%s1 + $0x8c] sm:$0xf]
  %v58 = vld [vmem:[%s1 + $0x90] sm:$0xff]
  %v59 = vld [vmem:[%s1 + $0x98] sm:$0xf]
  %v60 = vld [vmem:[%s1 + $0x9c] sm:$0xff]
  %v61 = vld [vmem:[%s1 + $0xa4] sm:$0xf]
  %v62 = vld [vmem:[%s1 + $0xa8] sm:$0xff]
  %v63 = vld [vmem:[%s1 + $0xb0] sm:$0xf]
  %v64 = vld [vmem:[%s1 + $0xb4] sm:$0xff]
  %v65 = vld [vmem:[%s1 + $0xbc] sm:$0xf]
  %v66 = vld [vmem:[%s1 + $0xc0] sm:$0xff]
  %v67 = vld [vmem:[%s1 + $0xc8] sm:$0xf]
  %v68 = vld [vmem:[%s1 + $0xcc] sm:$0xff]
  %v69 = vld [vmem:[%s1 + $0xd4] sm:$0xf]
  %v70 = vld [vmem:[%s1 + $0xd8] sm:$0xff]
  %v71 = vld [vmem:[%s1 + $0xe0] sm:$0xf]
  %v72 = vld [vmem:[%s1 + $0xe4] sm:$0xff]
  %v73 = vld [vmem:[%s1 + $0xec] sm:$0xf]
  %v74 = vld [vmem:[%s1 + $0xf0] sm:$0xff]
  %v75 = vld [vmem:[%s1 + $0xf8] sm:$0xf]
  %v76 = vld [vmem:[%s1 + $0xfc] sm:$0xff]
  %v77 = vld [vmem:[%s1 + $0x104] sm:$0xf]
  %v78 = vld [vmem:[%s1 + $0x108] sm:$0xff]
  %v79 = vld [vmem:[%s1 + $0x110] sm:$0xf]
  %v80 = vld [vmem:[%s1 + $0x114] sm:$0xff]
  %v81 = vld [vmem:[%s1 + $0x11c] sm:$0xf]
  %v82 = vld [vmem:[%s1 + $0x120] sm:$0xff]
  %v83 = vld [vmem:[%s1 + $0x128] sm:$0xf]
  %v84 = vld [vmem:[%s1 + $0x12c] sm:$0xff]
  %v85 = vld [vmem:[%s1 + $0x134] sm:$0xf]
  %v86 = vld [vmem:[%s1 + $0x138] sm:$0xff]
  %v87 = vld [vmem:[%s1 + $0x140] sm:$0xf]
  %v88 = vld [vmem:[%s1 + $0x144] sm:$0xff]
  %v89 = vld [vmem:[%s1 + $0x14c] sm:$0xf]
  %v90 = vld [vmem:[%s1 + $0x150] sm:$0xff]
  %v91 = vld [vmem:[%s1 + $0x158] sm:$0xf]
  %v92 = vld [vmem:[%s1 + $0x15c] sm:$0xff]
  %v93 = vld [vmem:[%s1 + $0x164] sm:$0xf]
  %v94 = vld [vmem:[%s1 + $0x168] sm:$0xff]
  %v95 = vld [vmem:[%s1 + $0x170] sm:$0xf]
  %v96 = vld [vmem:[%s1 + $0x174] sm:$0xff]
  %v97 = vld [vmem:[%s1 + $0x17c] sm:$0xf]
  %v98 = vld [vmem:[%s1 + $0x180] sm:$0xff]
  %v99 = vld [vmem:[%s1 + $0x188] sm:$0xf]
  %v100 = vld [vmem:[%s1 + $0x18c] sm:$0xff]
  %v101 = vld [vmem:[%s1 + $0x194] sm:$0xf]
  %v102 = vld [vmem:[%s1 + $0x198] sm:$0xff]
  %v103 = vld [vmem:[%s1 + $0x1a0] sm:$0xf]
  %v104 = vld [vmem:[%s1 + $0x1a4] sm:$0xff]
  %v105 = vld [vmem:[%s1 + $0x1ac] sm:$0xf]
  %v106 = vld [vmem:[%s1 + $0x1b0] sm:$0xff]
  %v107 = vld [vmem:[%s1 + $0x1b8] sm:$0xf]
  %v108 = vld [vmem:[%s1 + $0x1bc] sm:$0xff]
  %v109 = vld [vmem:[%s1 + $0x1c4] sm:$0xf]
  %v110 = vld [vmem:[%s1 + $0x1c8] sm:$0xff]
  %v111 = vld [vmem:[%s1 + $0x1d0] sm:$0xf]
  %v112 = vld [vmem:[%s1 + $0x1d4] sm:$0xff]
  %v113 = vld [vmem:[%s1 + $0x1dc] sm:$0xf]
  %v114 = vld [vmem:[%s1 + $0x1e0] sm:$0xff]
  %v115 = vld [vmem:[%s1 + $0x1e8] sm:$0xf]
  %v116 = vld [vmem:[%s1 + $0x1ec] sm:$0xff]
  %v117 = vld [vmem:[%s1 + $0x1f4] sm:$0xf]
  %v118 = vld [vmem:[%s1 + $0x1f8] sm:$0xff]
  %v119 = vld [vmem:[%s1 + $0x200] sm:$0xf]
  %v120 = vld [vmem:[%s1 + $0x204] sm:$0xff]
  %v121 = vld [vmem:[%s1 + $0x20c] sm:$0xf]
  %v122 = vld [vmem:[%s1 + $0x210] sm:$0xff]
  %v123 = vld [vmem:[%s1 + $0x218] sm:$0xf]
  %v124 = vld [vmem:[%s1 + $0x21c] sm:$0xff]
  %v125 = vld [vmem:[%s1 + $0x224] sm:$0xf]
  %v126 = vld [vmem:[%s1 + $0x228] sm:$0xff]
  %v127 = vld [vmem:[%s1 + $0x230] sm:$0xf]
  %v128 = vld [vmem:[%s1 + $0x234] sm:$0xff]
  %v129 = vld [vmem:[%s1 + $0x23c] sm:$0xf]
  %v130 = vld [vmem:[%s1 + $0x240] sm:$0xff]
  %v131 = vld [vmem:[%s1 + $0x248] sm:$0xf]
  %v132 = vld [vmem:[%s1 + $0x24c] sm:$0xff]
  %v133 = vld [vmem:[%s1 + $0x254] sm:$0xf]
  %v134 = vld [vmem:[%s1 + $0x258] sm:$0xff]
  %v135 = vld [vmem:[%s1 + $0x260] sm:$0xf]
  %v136 = vld [vmem:[%s1 + $0x264] sm:$0xff]
  %v137 = vld [vmem:[%s1 + $0x26c] sm:$0xf]
  %v138 = vld [vmem:[%s1 + $0x270] sm:$0xff]
  %v139 = vld [vmem:[%s1 + $0x278] sm:$0xf]
  %v140 = vld [vmem:[%s1 + $0x27c] sm:$0xff]
  %v141 = vld [vmem:[%s1 + $0x284] sm:$0xf]
  %v142 = vld [vmem:[%s1 + $0x288] sm:$0xff]
  %v143 = vld [vmem:[%s1 + $0x290] sm:$0xf]
  %v144 = vld [vmem:[%s1 + $0x294] sm:$0xff]
  %v145 = vld [vmem:[%s1 + $0x29c] sm:$0xf]
  %v146 = vld [vmem:[%s1 + $0x2a0] sm:$0xff]
  %v147 = vld [vmem:[%s1 + $0x2a8] sm:$0xf]
  %v148 = vld [vmem:[%s1 + $0x2ac] sm:$0xff]
  %v149 = vld [vmem:[%s1 + $0x2b4] sm:$0xf]
  %v150 = vld [vmem:[%s1 + $0x2b8] sm:$0xff]
  %v151 = vld [vmem:[%s1 + $0x2c0] sm:$0xf]
  %v152 = vld [vmem:[%s1 + $0x2c4] sm:$0xff]
  %v153 = vld [vmem:[%s1 + $0x2cc] sm:$0xf]
  %v154 = vld [vmem:[%s1 + $0x2d0] sm:$0xff]
  %v155 = vld [vmem:[%s1 + $0x2d8] sm:$0xf]
  %v156 = vld [vmem:[%s1 + $0x2dc] sm:$0xff]
  %v157 = vld [vmem:[%s1 + $0x2e4] sm:$0xf]
  %v158 = vld [vmem:[%s1 + $0x2e8] sm:$0xff]
  %v159 = vld [vmem:[%s1 + $0x2f0] sm:$0xf]
  %v160 = vld [vmem:[%s1 + $0x2f4] sm:$0xff]
  %v161 = vld [vmem:[%s1 + $0x2fc] sm:$0xf]
  %v162 = vld [vmem:[%s1 + $0x300] sm:$0xff]
  %v163 = vld [vmem:[%s1 + $0x308] sm:$0xf]
  %v164 = vld [vmem:[%s1 + $0x30c] sm:$0xff]
  %v165 = vld [vmem:[%s1 + $0x314] sm:$0xf]
  %v166 = vld [vmem:[%s1 + $0x318] sm:$0xff]
  %v167 = vld [vmem:[%s1 + $0x320] sm:$0xf]
  %v168 = vld [vmem:[%s1 + $0x324] sm:$0xff]
  %v169 = vld [vmem:[%s1 + $0x32c] sm:$0xf]
  %v170 = vld [vmem:[%s1 + $0x330] sm:$0xff]
  %v171 = vld [vmem:[%s1 + $0x338] sm:$0xf]
  %v172 = vld [vmem:[%s1 + $0x33c] sm:$0xff]
  %v173 = vld [vmem:[%s1 + $0x344] sm:$0xf]
  %v174 = vld [vmem:[%s1 + $0x348] sm:$0xff]
  %v175 = vld [vmem:[%s1 + $0x350] sm:$0xf]
  %v176 = vld [vmem:[%s1 + $0x354] sm:$0xff]
  %v177 = vld [vmem:[%s1 + $0x35c] sm:$0xf]
  %v178 = vld [vmem:[%s1 + $0x360] sm:$0xff]
  %v179 = vld [vmem:[%s1 + $0x368] sm:$0xf]
  %v180 = vld [vmem:[%s1 + $0x36c] sm:$0xff]
  %v181 = vld [vmem:[%s1 + $0x374] sm:$0xf]
  %v182 = vld [vmem:[%s1 + $0x378] sm:$0xff]
  %v183 = vld [vmem:[%s1 + $0x380] sm:$0xf]
  %v184 = vld [vmem:[%s1 + $0x384] sm:$0xff]
  %v185 = vld [vmem:[%s1 + $0x38c] sm:$0xf]
  %v186 = vld [vmem:[%s1 + $0x390] sm:$0xff]
  %v187 = vld [vmem:[%s1 + $0x398] sm:$0xf]
  %v188 = vld [vmem:[%s1 + $0x39c] sm:$0xff]
  %v189 = vld [vmem:[%s1 + $0x3a4] sm:$0xf]
  %v190 = vld [vmem:[%s1 + $0x3a8] sm:$0xff]
  %v191 = vld [vmem:[%s1 + $0x3b0] sm:$0xf]
  %v192 = vld [vmem:[%s1 + $0x3b4] sm:$0xff]
  %v193 = vld [vmem:[%s1 + $0x3bc] sm:$0xf]
  %v194 = vld [vmem:[%s1 + $0x3c0] sm:$0xff]
  %v195 = vld [vmem:[%s1 + $0x3c8] sm:$0xf]
  %v196 = vld [vmem:[%s1 + $0x3cc] sm:$0xff]
  %v197 = vld [vmem:[%s1 + $0x3d4] sm:$0xf]
  %v198 = vld [vmem:[%s1 + $0x3d8] sm:$0xff]
  %v199 = vld [vmem:[%s1 + $0x3e0] sm:$0xf]
  %v200 = vld [vmem:[%s1 + $0x3e4] sm:$0xff]
  %v201 = vld [vmem:[%s1 + $0x3ec] sm:$0xf]
  %v202 = vld [vmem:[%s1 + $0x3f0] sm:$0xff]
  %v203 = vld [vmem:[%s1 + $0x3f8] sm:$0xf]
  %v204 = vld [vmem:[%s1 + $0x3fc] sm:$0xff]
  %v205 = vld [vmem:[%s1 + $0x404] sm:$0xf]
  %v206 = vld [vmem:[%s1 + $0x408] sm:$0xff]
  %v207 = vld [vmem:[%s1 + $0x410] sm:$0xf]
  %v208 = vld [vmem:[%s1 + $0x414] sm:$0xff]
  %v209 = vld [vmem:[%s1 + $0x41c] sm:$0xf]
  %v210 = vld [vmem:[%s1 + $0x420] sm:$0xff]
  %v211 = vld [vmem:[%s1 + $0x428] sm:$0xf]
  %v212 = vld [vmem:[%s1 + $0x42c] sm:$0xff]
  %v213 = vld [vmem:[%s1 + $0x434] sm:$0xf]
  %v214 = vld [vmem:[%s1 + $0x438] sm:$0xff]
  %v215 = vld [vmem:[%s1 + $0x440] sm:$0xf]
  %v216 = vld [vmem:[%s1 + $0x444] sm:$0xff]
  %v217 = vld [vmem:[%s1 + $0x44c] sm:$0xf]
  %v218 = vld [vmem:[%s1 + $0x450] sm:$0xff]
  %v219 = vld [vmem:[%s1 + $0x458] sm:$0xf]
  %v220 = vld [vmem:[%s1 + $0x45c] sm:$0xff]
  %v221 = vld [vmem:[%s1 + $0x464] sm:$0xf]
  %v222 = vld [vmem:[%s1 + $0x468] sm:$0xff]
  %v223 = vld [vmem:[%s1 + $0x470] sm:$0xf]
  %v224 = vld [vmem:[%s1 + $0x474] sm:$0xff]
  %v225 = vld [vmem:[%s1 + $0x47c] sm:$0xf]
  %v226 = vld [vmem:[%s1 + $0x480] sm:$0xff]
  %v227 = vld [vmem:[%s1 + $0x488] sm:$0xf]
  %v228 = vld [vmem:[%s1 + $0x48c] sm:$0xff]
  %v229 = vld [vmem:[%s1 + $0x494] sm:$0xf]
  %v230 = vld [vmem:[%s1 + $0x498] sm:$0xff]
  %v231 = vld [vmem:[%s1 + $0x4a0] sm:$0xf]
  %v232 = vld [vmem:[%s1 + $0x4a4] sm:$0xff]
  %v233 = vld [vmem:[%s1 + $0x4ac] sm:$0xf]
  %v234 = vld [vmem:[%s1 + $0x4b0] sm:$0xff]
  %v235 = vld [vmem:[%s1 + $0x4b8] sm:$0xf]
  %v236 = vld [vmem:[%s1 + $0x4bc] sm:$0xff]
  %v237 = vld [vmem:[%s1 + $0x4c4] sm:$0xf]
  %v238 = vld [vmem:[%s1 + $0x4c8] sm:$0xff]
  %v239 = vld [vmem:[%s1 + $0x4d0] sm:$0xf]
  %v240 = vld [vmem:[%s1 + $0x4d4] sm:$0xff]
  %v241 = vld [vmem:[%s1 + $0x4dc] sm:$0xf]
  %v242 = vld [vmem:[%s1 + $0x4e0] sm:$0xff]
  %v243 = vld [vmem:[%s1 + $0x4e8] sm:$0xf]
  %v244 = vld [vmem:[%s1 + $0x4ec] sm:$0xff]
  %v245 = vld [vmem:[%s1 + $0x4f4] sm:$0xf]
  %v246 = vld [vmem:[%s1 + $0x4f8] sm:$0xff]
  %v247 = vld [vmem:[%s1 + $0x500] sm:$0xf]
  %v248 = vld [vmem:[%s1 + $0x504] sm:$0xff]
  %v249 = vld [vmem:[%s1 + $0x50c] sm:$0xf]
  %v250 = vld [vmem:[%s1 + $0x510] sm:$0xff]
  %v251 = vld [vmem:[%s1 + $0x518] sm:$0xf]
  %v252 = vld [vmem:[%s1 + $0x51c] sm:$0xff]
  %v253 = vld [vmem:[%s1 + $0x524] sm:$0xf]
  %v254 = vld [vmem:[%s1 + $0x528] sm:$0xff]
  %v255 = vld [vmem:[%s1 + $0x530] sm:$0xf]
  %v256 = vld [vmem:[%s1 + $0x534] sm:$0xff]
  %v257 = vld [vmem:[%s1 + $0x53c] sm:$0xf]
  %v258 = vld [vmem:[%s1 + $0x540] sm:$0xff]
  %v259 = vld [vmem:[%s1 + $0x548] sm:$0xf]
  %v260 = vld [vmem:[%s1 + $0x54c] sm:$0xff]
  %v261 = vld [vmem:[%s1 + $0x554] sm:$0xf]
  %v262 = vld [vmem:[%s1 + $0x558] sm:$0xff]
  %v263 = vld [vmem:[%s1 + $0x560] sm:$0xf]
  %v264 = vld [vmem:[%s1 + $0x564] sm:$0xff]
  %v265 = vld [vmem:[%s1 + $0x56c] sm:$0xf]
  %v266 = vld [vmem:[%s1 + $0x570] sm:$0xff]
  %v267 = vld [vmem:[%s1 + $0x578] sm:$0xf]
  %v268 = vld [vmem:[%s1 + $0x57c] sm:$0xff]
  %v269 = vld [vmem:[%s1 + $0x584] sm:$0xf]
  %v270 = vld [vmem:[%s1 + $0x588] sm:$0xff]
  %v271 = vld [vmem:[%s1 + $0x590] sm:$0xf]
  %v272 = vld [vmem:[%s1 + $0x594] sm:$0xff]
  %v273 = vld [vmem:[%s1 + $0x59c] sm:$0xf]
  %v274 = vld [vmem:[%s1 + $0x5a0] sm:$0xff]
  %v275 = vld [vmem:[%s1 + $0x5a8] sm:$0xf]
  %v276 = vld [vmem:[%s1 + $0x5ac] sm:$0xff]
  %v277 = vld [vmem:[%s1 + $0x5b4] sm:$0xf]
  %v278 = vld [vmem:[%s1 + $0x5b8] sm:$0xff]
  %v279 = vld [vmem:[%s1 + $0x5c0] sm:$0xf]
  %v280 = vld [vmem:[%s1 + $0x5c4] sm:$0xff]
  %v281 = vld [vmem:[%s1 + $0x5cc] sm:$0xf]
  %v282 = vld [vmem:[%s1 + $0x5d0] sm:$0xff]
  %v283 = vld [vmem:[%s1 + $0x5d8] sm:$0xf]
  %v284 = vld [vmem:[%s1 + $0x5dc] sm:$0xff]
  %v285 = vld [vmem:[%s1 + $0x5e4] sm:$0xf]
  %v286 = vld [vmem:[%s1 + $0x5e8] sm:$0xff]
  %v287 = vld [vmem:[%s1 + $0x5f0] sm:$0xf]
  %v288 = vld [vmem:[%s1 + $0x5f4] sm:$0xff]
  %v289 = vld [vmem:[%s1 + $0x5fc] sm:$0xf]
  %v290 = vld [vmem:[%s1 + $0x600] sm:$0xff]
  %v291 = vld [vmem:[%s1 + $0x608] sm:$0xf]
  %v292 = vld [vmem:[%s1 + $0x60c] sm:$0xff]
  %v293 = vld [vmem:[%s1 + $0x614] sm:$0xf]
  %v294 = vld [vmem:[%s1 + $0x618] sm:$0xff]
  %v295 = vld [vmem:[%s1 + $0x620] sm:$0xf]
  %v296 = vld [vmem:[%s1 + $0x624] sm:$0xff]
  %v297 = vld [vmem:[%s1 + $0x62c] sm:$0xf]
  %v298 = vld [vmem:[%s1 + $0x630] sm:$0xff]
  %v299 = vld [vmem:[%s1 + $0x638] sm:$0xf]
  %v300 = vld [vmem:[%s1 + $0x63c] sm:$0xff]
  %v301 = vld [vmem:[%s1 + $0x644] sm:$0xf]
  %v302 = vld [vmem:[%s1 + $0x648] sm:$0xff]
  %v303 = vld [vmem:[%s1 + $0x650] sm:$0xf]
  %v304 = vld [vmem:[%s1 + $0x654] sm:$0xff]
  %v305 = vld [vmem:[%s1 + $0x65c] sm:$0xf]
  %v306 = vld [vmem:[%s1 + $0x660] sm:$0xff]
  %v307 = vld [vmem:[%s1 + $0x668] sm:$0xf]
  %v308 = vld [vmem:[%s1 + $0x66c] sm:$0xff]
  %v309 = vld [vmem:[%s1 + $0x674] sm:$0xf]
  %v310 = vld [vmem:[%s1 + $0x678] sm:$0xff]
  %v311 = vld [vmem:[%s1 + $0x680] sm:$0xf]
  %v312 = vld [vmem:[%s1 + $0x684] sm:$0xff]
  %v313 = vld [vmem:[%s1 + $0x68c] sm:$0xf]
  %v314 = vld [vmem:[%s1 + $0x690] sm:$0xff]
  %v315 = vld [vmem:[%s1 + $0x698] sm:$0xf]
  %v316 = vld [vmem:[%s1 + $0x69c] sm:$0xff]
  %v317 = vld [vmem:[%s1 + $0x6a4] sm:$0xf]
  %v318 = vld [vmem:[%s1 + $0x6a8] sm:$0xff]
  %v319 = vld [vmem:[%s1 + $0x6b0] sm:$0xf]
  %v320 = vld [vmem:[%s1 + $0x6b4] sm:$0xff]
  %v321 = vld [vmem:[%s1 + $0x6bc] sm:$0xf]
  %v322 = vld [vmem:[%s1 + $0x6c0] sm:$0xff]
  %v323 = vld [vmem:[%s1 + $0x6c8] sm:$0xf]
  %v324 = vld [vmem:[%s1 + $0x6cc] sm:$0xff]
  %v325 = vld [vmem:[%s1 + $0x6d4] sm:$0xf]
  %v326 = vld [vmem:[%s1 + $0x6d8] sm:$0xff]
  %v327 = vld [vmem:[%s1 + $0x6e0] sm:$0xf]
  %v328 = vld [vmem:[%s1 + $0x6e4] sm:$0xff]
  %v329 = vld [vmem:[%s1 + $0x6ec] sm:$0xf]
  %v330 = vld [vmem:[%s1 + $0x6f0] sm:$0xff]
  %v331 = vld [vmem:[%s1 + $0x6f8] sm:$0xf]
  %v332 = vld [vmem:[%s1 + $0x6fc] sm:$0xff]
  %v333 = vld [vmem:[%s1 + $0x704] sm:$0xf]
  %v334 = vld [vmem:[%s1 + $0x708] sm:$0xff]
  %v335 = vld [vmem:[%s1 + $0x710] sm:$0xf]
  %v336 = vld [vmem:[%s1 + $0x714] sm:$0xff]
  %v337 = vld [vmem:[%s1 + $0x71c] sm:$0xf]
  %v338 = vld [vmem:[%s1 + $0x720] sm:$0xff]
  %v339 = vld [vmem:[%s1 + $0x728] sm:$0xf]
  %v340 = vld [vmem:[%s1 + $0x72c] sm:$0xff]
  %v341 = vld [vmem:[%s1 + $0x734] sm:$0xf]
  %v342 = vld [vmem:[%s1 + $0x738] sm:$0xff]
  %v343 = vld [vmem:[%s1 + $0x740] sm:$0xf]
  %v344 = vld [vmem:[%s1 + $0x744] sm:$0xff]
  %v345 = vld [vmem:[%s1 + $0x74c] sm:$0xf]
  %v346 = vld [vmem:[%s1 + $0x750] sm:$0xff]
  %v347 = vld [vmem:[%s1 + $0x758] sm:$0xf]
  %v348 = vld [vmem:[%s1 + $0x75c] sm:$0xff]
  %v349 = vld [vmem:[%s1 + $0x764] sm:$0xf]
  %v350 = vld [vmem:[%s1 + $0x768] sm:$0xff]
  %v351 = vld [vmem:[%s1 + $0x770] sm:$0xf]
  %v352 = vld [vmem:[%s1 + $0x774] sm:$0xff]
  %v353 = vld [vmem:[%s1 + $0x77c] sm:$0xf]
  %v354 = vld [vmem:[%s1 + $0x780] sm:$0xff]
  %v355 = vld [vmem:[%s1 + $0x788] sm:$0xf]
  %v356 = vld [vmem:[%s1 + $0x78c] sm:$0xff]
  %v357 = vld [vmem:[%s1 + $0x794] sm:$0xf]
  %v358 = vld [vmem:[%s1 + $0x798] sm:$0xff]
  %v359 = vld [vmem:[%s1 + $0x7a0] sm:$0xf]
  %v360 = vld [vmem:[%s1 + $0x7a4] sm:$0xff]
  %v361 = vld [vmem:[%s1 + $0x7ac] sm:$0xf]
  %v362 = vld [vmem:[%s1 + $0x7b0] sm:$0xff]
  %v363 = vld [vmem:[%s1 + $0x7b8] sm:$0xf]
  %v364 = vld [vmem:[%s1 + $0x7bc] sm:$0xff]
  %v365 = vld [vmem:[%s1 + $0x7c4] sm:$0xf]
  %v366 = vld [vmem:[%s1 + $0x7c8] sm:$0xff]
  %v367 = vld [vmem:[%s1 + $0x7d0] sm:$0xf]
  %v368 = vld [vmem:[%s1 + $0x7d4] sm:$0xff]
  %v369 = vld [vmem:[%s1 + $0x7dc] sm:$0xf]
  %v370 = vld [vmem:[%s1 + $0x7e0] sm:$0xff]
  %v371 = vld [vmem:[%s1 + $0x7e8] sm:$0xf]
  %v372 = vld [vmem:[%s1 + $0x7ec] sm:$0xff]
  %v373 = vld [vmem:[%s1 + $0x7f4] sm:$0xf]
  %v374 = vld [vmem:[%s1 + $0x7f8] sm:$0xff]
  %v375 = vld [vmem:[%s1 + $0x800] sm:$0xf]
  %v376 = vld [vmem:[%s1 + $0x804] sm:$0xff]
  %v377 = vld [vmem:[%s1 + $0x80c] sm:$0xf]
  %v378 = vld [vmem:[%s1 + $0x810] sm:$0xff]
  %v379 = vld [vmem:[%s1 + $0x818] sm:$0xf]
  %v380 = vld [vmem:[%s1 + $0x81c] sm:$0xff]
  %v381 = vld [vmem:[%s1 + $0x824] sm:$0xf]
  %v382 = vld [vmem:[%s1 + $0x828] sm:$0xff]
  %v383 = vld [vmem:[%s1 + $0x830] sm:$0xf]
  %v384 = vld [vmem:[%s1 + $0x834] sm:$0xff]
  %v385 = vld [vmem:[%s1 + $0x83c] sm:$0xf]
  %v386 = vld [vmem:[%s1 + $0x840] sm:$0xff]
  %v387 = vld [vmem:[%s1 + $0x848] sm:$0xf]
  %v388 = vld [vmem:[%s1 + $0x84c] sm:$0xff]
  %v389 = vld [vmem:[%s1 + $0x854] sm:$0xf]
  %v390 = vld [vmem:[%s1 + $0x858] sm:$0xff]
  %v391 = vld [vmem:[%s1 + $0x860] sm:$0xf]
  %v392 = vld [vmem:[%s1 + $0x864] sm:$0xff]
  %v393 = vld [vmem:[%s1 + $0x86c] sm:$0xf]
  %v394 = vld [vmem:[%s1 + $0x870] sm:$0xff]
  %v395 = vld [vmem:[%s1 + $0x878] sm:$0xf]
  %v396 = vld [vmem:[%s1 + $0x87c] sm:$0xff]
  %v397 = vld [vmem:[%s1 + $0x884] sm:$0xf]
  %v398 = vld [vmem:[%s1 + $0x888] sm:$0xff]
  %v399 = vld [vmem:[%s1 + $0x890] sm:$0xf]
  %v400 = vld [vmem:[%s1 + $0x894] sm:$0xff]
  %v401 = vld [vmem:[%s1 + $0x89c] sm:$0xf]
  %v402 = vld [vmem:[%s1 + $0x8a0] sm:$0xff]
  %v403 = vld [vmem:[%s1 + $0x8a8] sm:$0xf]
  %v404 = vld [vmem:[%s1 + $0x8ac] sm:$0xff]
  %v405 = vld [vmem:[%s1 + $0x8b4] sm:$0xf]
  %v406 = vld [vmem:[%s1 + $0x8b8] sm:$0xff]
  %v407 = vld [vmem:[%s1 + $0x8c0] sm:$0xf]
  %v408 = vld [vmem:[%s1 + $0x8c4] sm:$0xff]
  %v409 = vld [vmem:[%s1 + $0x8cc] sm:$0xf]
  %v410 = vld [vmem:[%s1 + $0x8d0] sm:$0xff]
  %v411 = vld [vmem:[%s1 + $0x8d8] sm:$0xf]
  %v412 = vld [vmem:[%s1 + $0x8dc] sm:$0xff]
  %v413 = vld [vmem:[%s1 + $0x8e4] sm:$0xf]
  %v414 = vld [vmem:[%s1 + $0x8e8] sm:$0xff]
  %v415 = vld [vmem:[%s1 + $0x8f0] sm:$0xf]
  %v416 = vld [vmem:[%s1 + $0x8f4] sm:$0xff]
  %v417 = vld [vmem:[%s1 + $0x8fc] sm:$0xf]
  %v418 = vld [vmem:[%s1 + $0x900] sm:$0xff]
  %v419 = vld [vmem:[%s1 + $0x908] sm:$0xf]
  %v420 = vld [vmem:[%s1 + $0x90c] sm:$0xff]
  %v421 = vld [vmem:[%s1 + $0x914] sm:$0xf]
  %v422 = vld [vmem:[%s1 + $0x918] sm:$0xff]
  %v423 = vld [vmem:[%s1 + $0x920] sm:$0xf]
  %v424 = vld [vmem:[%s1 + $0x924] sm:$0xff]
  %v425 = vld [vmem:[%s1 + $0x92c] sm:$0xf]
  %v426 = vld [vmem:[%s1 + $0x930] sm:$0xff]
  %v427 = vld [vmem:[%s1 + $0x938] sm:$0xf]
  %v428 = vld [vmem:[%s1 + $0x93c] sm:$0xff]
  %v429 = vld [vmem:[%s1 + $0x944] sm:$0xf]
  %v430 = vld [vmem:[%s1 + $0x948] sm:$0xff]
  %v431 = vld [vmem:[%s1 + $0x950] sm:$0xf]
  %v432 = vld [vmem:[%s1 + $0x954] sm:$0xff]
  %v433 = vld [vmem:[%s1 + $0x95c] sm:$0xf]
  %v434 = vld [vmem:[%s2] sm:$0x7]
  %v436 = vlaneseq
  %v437 = vshrl.u32 %v436, 7
  %v438 = vsub.s32 0, %v437
  %v439 = vrot.slane %v434, %v438
  %v440 = vlaneseq
  %v441 = vshrl.u32 %v440, 7
  %v442 = vsub.s32 1, %v441
  %v443 = vrot.slane %v434, %v442
  %v444 = vlaneseq
  %v445 = vshrl.u32 %v444, 7
  %v446 = vsub.s32 2, %v445
  %v447 = vrot.slane %v434, %v446
  %v458 = vunpack.c.l.b16 %v27
  %v459 = vunpack.c.h.b16 %v27
  %v460 = vunpack.c.l.b16 %v28
  %v461 = vunpack.c.h.b16 %v28
  %v462 = vunpack.c.l.b16 %v29
  %v463 = vunpack.c.h.b16 %v29
  %v464 = vunpack.c.l.b16 %v30
  %v465 = vunpack.c.h.b16 %v30
  %v466 = vunpack.c.l.b16 %v31
  %v467 = vunpack.c.h.b16 %v31
  %v468 = vunpack.c.l.b16 %v32
  %v469 = vunpack.c.h.b16 %v32
  %v470 = vunpack.c.l.b16 %v33
  %v471 = vpack.c.b16 %v458, %v458
  %v472 = vpack.c.b16 %v459, %v459
  %v473 = vpack.c.b16 %v460, %v460
  %v474 = vpack.c.b16 %v461, %v461
  %v475 = vpack.c.b16 %v462, %v462
  %v476 = vpack.c.b16 %v463, %v463
  %v477 = vpack.c.b16 %v464, %v464
  %v478 = vpack.c.b16 %v465, %v465
  %v479 = vpack.c.b16 %v466, %v466
  %v480 = vpack.c.b16 %v467, %v467
  %v481 = vpack.c.b16 %v468, %v468
  %v482 = vpack.c.b16 %v469, %v469
  %v483 = vpack.c.b16 %v470, %v470
  %v896 = vunpack.c.l.b16 %v34
  %v897 = vunpack.c.h.b16 %v34
  %v898 = vunpack.c.l.b16 %v35
  %v899 = vunpack.c.l.b16 %v36
  %v900 = vunpack.c.h.b16 %v36
  %v901 = vunpack.c.l.b16 %v37
  %v902 = vunpack.c.l.b16 %v38
  %v903 = vunpack.c.h.b16 %v38
  %v904 = vunpack.c.l.b16 %v39
  %v905 = vunpack.c.l.b16 %v40
  %v906 = vunpack.c.h.b16 %v40
  %v907 = vunpack.c.l.b16 %v41
  %v908 = vunpack.c.l.b16 %v42
  %v909 = vunpack.c.h.b16 %v42
  %v910 = vunpack.c.l.b16 %v43
  %v911 = vunpack.c.l.b16 %v44
  %v912 = vunpack.c.h.b16 %v44
  %v913 = vunpack.c.l.b16 %v45
  %v914 = vunpack.c.l.b16 %v46
  %v915 = vunpack.c.h.b16 %v46
  %v916 = vunpack.c.l.b16 %v47
  %v917 = vunpack.c.l.b16 %v48
  %v918 = vunpack.c.h.b16 %v48
  %v919 = vunpack.c.l.b16 %v49
  %v920 = vunpack.c.l.b16 %v50
  %v921 = vunpack.c.h.b16 %v50
  %v922 = vunpack.c.l.b16 %v51
  %v923 = vunpack.c.l.b16 %v52
  %v924 = vunpack.c.h.b16 %v52
  %v925 = vunpack.c.l.b16 %v53
  %v926 = vunpack.c.l.b16 %v54
  %v927 = vunpack.c.h.b16 %v54
  %v928 = vunpack.c.l.b16 %v55
  %v929 = vunpack.c.l.b16 %v56
  %v930 = vunpack.c.h.b16 %v56
  %v931 = vunpack.c.l.b16 %v57
  %v932 = vunpack.c.l.b16 %v58
  %v933 = vunpack.c.h.b16 %v58
  %v934 = vunpack.c.l.b16 %v59
  %v935 = vunpack.c.l.b16 %v60
  %v936 = vunpack.c.h.b16 %v60
  %v937 = vunpack.c.l.b16 %v61
  %v938 = vunpack.c.l.b16 %v62
  %v939 = vunpack.c.h.b16 %v62
  %v940 = vunpack.c.l.b16 %v63
  %v941 = vunpack.c.l.b16 %v64
  %v942 = vunpack.c.h.b16 %v64
  %v943 = vunpack.c.l.b16 %v65
  %v944 = vunpack.c.l.b16 %v66
  %v945 = vunpack.c.h.b16 %v66
  %v946 = vunpack.c.l.b16 %v67
  %v947 = vunpack.c.l.b16 %v68
  %v948 = vunpack.c.h.b16 %v68
  %v949 = vunpack.c.l.b16 %v69
  %v950 = vunpack.c.l.b16 %v70
  %v951 = vunpack.c.h.b16 %v70
  %v952 = vunpack.c.l.b16 %v71
  %v953 = vunpack.c.l.b16 %v72
  %v954 = vunpack.c.h.b16 %v72
  %v955 = vunpack.c.l.b16 %v73
  %v956 = vunpack.c.l.b16 %v74
  %v957 = vunpack.c.h.b16 %v74
  %v958 = vunpack.c.l.b16 %v75
  %v959 = vunpack.c.l.b16 %v76
  %v960 = vunpack.c.h.b16 %v76
  %v961 = vunpack.c.l.b16 %v77
  %v962 = vunpack.c.l.b16 %v78
  %v963 = vunpack.c.h.b16 %v78
  %v964 = vunpack.c.l.b16 %v79
  %v965 = vunpack.c.l.b16 %v80
  %v966 = vunpack.c.h.b16 %v80
  %v967 = vunpack.c.l.b16 %v81
  %v968 = vunpack.c.l.b16 %v82
  %v969 = vunpack.c.h.b16 %v82
  %v970 = vunpack.c.l.b16 %v83
  %v971 = vunpack.c.l.b16 %v84
  %v972 = vunpack.c.h.b16 %v84
  %v973 = vunpack.c.l.b16 %v85
  %v974 = vunpack.c.l.b16 %v86
  %v975 = vunpack.c.h.b16 %v86
  %v976 = vunpack.c.l.b16 %v87
  %v977 = vunpack.c.l.b16 %v88
  %v978 = vunpack.c.h.b16 %v88
  %v979 = vunpack.c.l.b16 %v89
  %v980 = vunpack.c.l.b16 %v90
  %v981 = vunpack.c.h.b16 %v90
  %v982 = vunpack.c.l.b16 %v91
  %v983 = vunpack.c.l.b16 %v92
  %v984 = vunpack.c.h.b16 %v92
  %v985 = vunpack.c.l.b16 %v93
  %v986 = vunpack.c.l.b16 %v94
  %v987 = vunpack.c.h.b16 %v94
  %v988 = vunpack.c.l.b16 %v95
  %v989 = vunpack.c.l.b16 %v96
  %v990 = vunpack.c.h.b16 %v96
  %v991 = vunpack.c.l.b16 %v97
  %v992 = vunpack.c.l.b16 %v98
  %v993 = vunpack.c.h.b16 %v98
  %v994 = vunpack.c.l.b16 %v99
  %v995 = vunpack.c.l.b16 %v100
  %v996 = vunpack.c.h.b16 %v100
  %v997 = vunpack.c.l.b16 %v101
  %v998 = vunpack.c.l.b16 %v102
  %v999 = vunpack.c.h.b16 %v102
  %v1000 = vunpack.c.l.b16 %v103
  %v1001 = vunpack.c.l.b16 %v104
  %v1002 = vunpack.c.h.b16 %v104
  %v1003 = vunpack.c.l.b16 %v105
  %v1004 = vunpack.c.l.b16 %v106
  %v1005 = vunpack.c.h.b16 %v106
  %v1006 = vunpack.c.l.b16 %v107
  %v1007 = vunpack.c.l.b16 %v108
  %v1008 = vunpack.c.h.b16 %v108
  %v1009 = vunpack.c.l.b16 %v109
  %v1010 = vunpack.c.l.b16 %v110
  %v1011 = vunpack.c.h.b16 %v110
  %v1012 = vunpack.c.l.b16 %v111
  %v1013 = vunpack.c.l.b16 %v112
  %v1014 = vunpack.c.h.b16 %v112
  %v1015 = vunpack.c.l.b16 %v113
  %v1016 = vunpack.c.l.b16 %v114
  %v1017 = vunpack.c.h.b16 %v114
  %v1018 = vunpack.c.l.b16 %v115
  %v1019 = vunpack.c.l.b16 %v116
  %v1020 = vunpack.c.h.b16 %v116
  %v1021 = vunpack.c.l.b16 %v117
  %v1022 = vunpack.c.l.b16 %v118
  %v1023 = vunpack.c.h.b16 %v118
  %v1024 = vunpack.c.l.b16 %v119
  %v1025 = vunpack.c.l.b16 %v120
  %v1026 = vunpack.c.h.b16 %v120
  %v1027 = vunpack.c.l.b16 %v121
  %v1028 = vunpack.c.l.b16 %v122
  %v1029 = vunpack.c.h.b16 %v122
  %v1030 = vunpack.c.l.b16 %v123
  %v1031 = vunpack.c.l.b16 %v124
  %v1032 = vunpack.c.h.b16 %v124
  %v1033 = vunpack.c.l.b16 %v125
  %v1034 = vunpack.c.l.b16 %v126
  %v1035 = vunpack.c.h.b16 %v126
  %v1036 = vunpack.c.l.b16 %v127
  %v1037 = vunpack.c.l.b16 %v128
  %v1038 = vunpack.c.h.b16 %v128
  %v1039 = vunpack.c.l.b16 %v129
  %v1040 = vunpack.c.l.b16 %v130
  %v1041 = vunpack.c.h.b16 %v130
  %v1042 = vunpack.c.l.b16 %v131
  %v1043 = vunpack.c.l.b16 %v132
  %v1044 = vunpack.c.h.b16 %v132
  %v1045 = vunpack.c.l.b16 %v133
  %v1046 = vunpack.c.l.b16 %v134
  %v1047 = vunpack.c.h.b16 %v134
  %v1048 = vunpack.c.l.b16 %v135
  %v1049 = vunpack.c.l.b16 %v136
  %v1050 = vunpack.c.h.b16 %v136
  %v1051 = vunpack.c.l.b16 %v137
  %v1052 = vunpack.c.l.b16 %v138
  %v1053 = vunpack.c.h.b16 %v138
  %v1054 = vunpack.c.l.b16 %v139
  %v1055 = vunpack.c.l.b16 %v140
  %v1056 = vunpack.c.h.b16 %v140
  %v1057 = vunpack.c.l.b16 %v141
  %v1058 = vunpack.c.l.b16 %v142
  %v1059 = vunpack.c.h.b16 %v142
  %v1060 = vunpack.c.l.b16 %v143
  %v1061 = vunpack.c.l.b16 %v144
  %v1062 = vunpack.c.h.b16 %v144
  %v1063 = vunpack.c.l.b16 %v145
  %v1064 = vunpack.c.l.b16 %v146
  %v1065 = vunpack.c.h.b16 %v146
  %v1066 = vunpack.c.l.b16 %v147
  %v1067 = vunpack.c.l.b16 %v148
  %v1068 = vunpack.c.h.b16 %v148
  %v1069 = vunpack.c.l.b16 %v149
  %v1070 = vunpack.c.l.b16 %v150
  %v1071 = vunpack.c.h.b16 %v150
  %v1072 = vunpack.c.l.b16 %v151
  %v1073 = vunpack.c.l.b16 %v152
  %v1074 = vunpack.c.h.b16 %v152
  %v1075 = vunpack.c.l.b16 %v153
  %v1076 = vunpack.c.l.b16 %v154
  %v1077 = vunpack.c.h.b16 %v154
  %v1078 = vunpack.c.l.b16 %v155
  %v1079 = vunpack.c.l.b16 %v156
  %v1080 = vunpack.c.h.b16 %v156
  %v1081 = vunpack.c.l.b16 %v157
  %v1082 = vunpack.c.l.b16 %v158
  %v1083 = vunpack.c.h.b16 %v158
  %v1084 = vunpack.c.l.b16 %v159
  %v1085 = vunpack.c.l.b16 %v160
  %v1086 = vunpack.c.h.b16 %v160
  %v1087 = vunpack.c.l.b16 %v161
  %v1088 = vunpack.c.l.b16 %v162
  %v1089 = vunpack.c.h.b16 %v162
  %v1090 = vunpack.c.l.b16 %v163
  %v1091 = vunpack.c.l.b16 %v164
  %v1092 = vunpack.c.h.b16 %v164
  %v1093 = vunpack.c.l.b16 %v165
  %v1094 = vunpack.c.l.b16 %v166
  %v1095 = vunpack.c.h.b16 %v166
  %v1096 = vunpack.c.l.b16 %v167
  %v1097 = vunpack.c.l.b16 %v168
  %v1098 = vunpack.c.h.b16 %v168
  %v1099 = vunpack.c.l.b16 %v169
  %v1100 = vunpack.c.l.b16 %v170
  %v1101 = vunpack.c.h.b16 %v170
  %v1102 = vunpack.c.l.b16 %v171
  %v1103 = vunpack.c.l.b16 %v172
  %v1104 = vunpack.c.h.b16 %v172
  %v1105 = vunpack.c.l.b16 %v173
  %v1106 = vunpack.c.l.b16 %v174
  %v1107 = vunpack.c.h.b16 %v174
  %v1108 = vunpack.c.l.b16 %v175
  %v1109 = vunpack.c.l.b16 %v176
  %v1110 = vunpack.c.h.b16 %v176
  %v1111 = vunpack.c.l.b16 %v177
  %v1112 = vunpack.c.l.b16 %v178
  %v1113 = vunpack.c.h.b16 %v178
  %v1114 = vunpack.c.l.b16 %v179
  %v1115 = vunpack.c.l.b16 %v180
  %v1116 = vunpack.c.h.b16 %v180
  %v1117 = vunpack.c.l.b16 %v181
  %v1118 = vunpack.c.l.b16 %v182
  %v1119 = vunpack.c.h.b16 %v182
  %v1120 = vunpack.c.l.b16 %v183
  %v1121 = vunpack.c.l.b16 %v184
  %v1122 = vunpack.c.h.b16 %v184
  %v1123 = vunpack.c.l.b16 %v185
  %v1124 = vunpack.c.l.b16 %v186
  %v1125 = vunpack.c.h.b16 %v186
  %v1126 = vunpack.c.l.b16 %v187
  %v1127 = vunpack.c.l.b16 %v188
  %v1128 = vunpack.c.h.b16 %v188
  %v1129 = vunpack.c.l.b16 %v189
  %v1130 = vunpack.c.l.b16 %v190
  %v1131 = vunpack.c.h.b16 %v190
  %v1132 = vunpack.c.l.b16 %v191
  %v1133 = vunpack.c.l.b16 %v192
  %v1134 = vunpack.c.h.b16 %v192
  %v1135 = vunpack.c.l.b16 %v193
  %v1136 = vunpack.c.l.b16 %v194
  %v1137 = vunpack.c.h.b16 %v194
  %v1138 = vunpack.c.l.b16 %v195
  %v1139 = vunpack.c.l.b16 %v196
  %v1140 = vunpack.c.h.b16 %v196
  %v1141 = vunpack.c.l.b16 %v197
  %v1142 = vunpack.c.l.b16 %v198
  %v1143 = vunpack.c.h.b16 %v198
  %v1144 = vunpack.c.l.b16 %v199
  %v1145 = vunpack.c.l.b16 %v200
  %v1146 = vunpack.c.h.b16 %v200
  %v1147 = vunpack.c.l.b16 %v201
  %v1148 = vunpack.c.l.b16 %v202
  %v1149 = vunpack.c.h.b16 %v202
  %v1150 = vunpack.c.l.b16 %v203
  %v1151 = vunpack.c.l.b16 %v204
  %v1152 = vunpack.c.h.b16 %v204
  %v1153 = vunpack.c.l.b16 %v205
  %v1154 = vunpack.c.l.b16 %v206
  %v1155 = vunpack.c.h.b16 %v206
  %v1156 = vunpack.c.l.b16 %v207
  %v1157 = vunpack.c.l.b16 %v208
  %v1158 = vunpack.c.h.b16 %v208
  %v1159 = vunpack.c.l.b16 %v209
  %v1160 = vunpack.c.l.b16 %v210
  %v1161 = vunpack.c.h.b16 %v210
  %v1162 = vunpack.c.l.b16 %v211
  %v1163 = vunpack.c.l.b16 %v212
  %v1164 = vunpack.c.h.b16 %v212
  %v1165 = vunpack.c.l.b16 %v213
  %v1166 = vunpack.c.l.b16 %v214
  %v1167 = vunpack.c.h.b16 %v214
  %v1168 = vunpack.c.l.b16 %v215
  %v1169 = vunpack.c.l.b16 %v216
  %v1170 = vunpack.c.h.b16 %v216
  %v1171 = vunpack.c.l.b16 %v217
  %v1172 = vunpack.c.l.b16 %v218
  %v1173 = vunpack.c.h.b16 %v218
  %v1174 = vunpack.c.l.b16 %v219
  %v1175 = vunpack.c.l.b16 %v220
  %v1176 = vunpack.c.h.b16 %v220
  %v1177 = vunpack.c.l.b16 %v221
  %v1178 = vunpack.c.l.b16 %v222
  %v1179 = vunpack.c.h.b16 %v222
  %v1180 = vunpack.c.l.b16 %v223
  %v1181 = vunpack.c.l.b16 %v224
  %v1182 = vunpack.c.h.b16 %v224
  %v1183 = vunpack.c.l.b16 %v225
  %v1184 = vunpack.c.l.b16 %v226
  %v1185 = vunpack.c.h.b16 %v226
  %v1186 = vunpack.c.l.b16 %v227
  %v1187 = vunpack.c.l.b16 %v228
  %v1188 = vunpack.c.h.b16 %v228
  %v1189 = vunpack.c.l.b16 %v229
  %v1190 = vunpack.c.l.b16 %v230
  %v1191 = vunpack.c.h.b16 %v230
  %v1192 = vunpack.c.l.b16 %v231
  %v1193 = vunpack.c.l.b16 %v232
  %v1194 = vunpack.c.h.b16 %v232
  %v1195 = vunpack.c.l.b16 %v233
  %v1196 = vunpack.c.l.b16 %v234
  %v1197 = vunpack.c.h.b16 %v234
  %v1198 = vunpack.c.l.b16 %v235
  %v1199 = vunpack.c.l.b16 %v236
  %v1200 = vunpack.c.h.b16 %v236
  %v1201 = vunpack.c.l.b16 %v237
  %v1202 = vunpack.c.l.b16 %v238
  %v1203 = vunpack.c.h.b16 %v238
  %v1204 = vunpack.c.l.b16 %v239
  %v1205 = vunpack.c.l.b16 %v240
  %v1206 = vunpack.c.h.b16 %v240
  %v1207 = vunpack.c.l.b16 %v241
  %v1208 = vunpack.c.l.b16 %v242
  %v1209 = vunpack.c.h.b16 %v242
  %v1210 = vunpack.c.l.b16 %v243
  %v1211 = vunpack.c.l.b16 %v244
  %v1212 = vunpack.c.h.b16 %v244
  %v1213 = vunpack.c.l.b16 %v245
  %v1214 = vunpack.c.l.b16 %v246
  %v1215 = vunpack.c.h.b16 %v246
  %v1216 = vunpack.c.l.b16 %v247
  %v1217 = vunpack.c.l.b16 %v248
  %v1218 = vunpack.c.h.b16 %v248
  %v1219 = vunpack.c.l.b16 %v249
  %v1220 = vunpack.c.l.b16 %v250
  %v1221 = vunpack.c.h.b16 %v250
  %v1222 = vunpack.c.l.b16 %v251
  %v1223 = vunpack.c.l.b16 %v252
  %v1224 = vunpack.c.h.b16 %v252
  %v1225 = vunpack.c.l.b16 %v253
  %v1226 = vunpack.c.l.b16 %v254
  %v1227 = vunpack.c.h.b16 %v254
  %v1228 = vunpack.c.l.b16 %v255
  %v1229 = vunpack.c.l.b16 %v256
  %v1230 = vunpack.c.h.b16 %v256
  %v1231 = vunpack.c.l.b16 %v257
  %v1232 = vunpack.c.l.b16 %v258
  %v1233 = vunpack.c.h.b16 %v258
  %v1234 = vunpack.c.l.b16 %v259
  %v1235 = vunpack.c.l.b16 %v260
  %v1236 = vunpack.c.h.b16 %v260
  %v1237 = vunpack.c.l.b16 %v261
  %v1238 = vunpack.c.l.b16 %v262
  %v1239 = vunpack.c.h.b16 %v262
  %v1240 = vunpack.c.l.b16 %v263
  %v1241 = vunpack.c.l.b16 %v264
  %v1242 = vunpack.c.h.b16 %v264
  %v1243 = vunpack.c.l.b16 %v265
  %v1244 = vunpack.c.l.b16 %v266
  %v1245 = vunpack.c.h.b16 %v266
  %v1246 = vunpack.c.l.b16 %v267
  %v1247 = vunpack.c.l.b16 %v268
  %v1248 = vunpack.c.h.b16 %v268
  %v1249 = vunpack.c.l.b16 %v269
  %v1250 = vunpack.c.l.b16 %v270
  %v1251 = vunpack.c.h.b16 %v270
  %v1252 = vunpack.c.l.b16 %v271
  %v1253 = vunpack.c.l.b16 %v272
  %v1254 = vunpack.c.h.b16 %v272
  %v1255 = vunpack.c.l.b16 %v273
  %v1256 = vunpack.c.l.b16 %v274
  %v1257 = vunpack.c.h.b16 %v274
  %v1258 = vunpack.c.l.b16 %v275
  %v1259 = vunpack.c.l.b16 %v276
  %v1260 = vunpack.c.h.b16 %v276
  %v1261 = vunpack.c.l.b16 %v277
  %v1262 = vunpack.c.l.b16 %v278
  %v1263 = vunpack.c.h.b16 %v278
  %v1264 = vunpack.c.l.b16 %v279
  %v1265 = vunpack.c.l.b16 %v280
  %v1266 = vunpack.c.h.b16 %v280
  %v1267 = vunpack.c.l.b16 %v281
  %v1268 = vunpack.c.l.b16 %v282
  %v1269 = vunpack.c.h.b16 %v282
  %v1270 = vunpack.c.l.b16 %v283
  %v1271 = vunpack.c.l.b16 %v284
  %v1272 = vunpack.c.h.b16 %v284
  %v1273 = vunpack.c.l.b16 %v285
  %v1274 = vunpack.c.l.b16 %v286
  %v1275 = vunpack.c.h.b16 %v286
  %v1276 = vunpack.c.l.b16 %v287
  %v1277 = vunpack.c.l.b16 %v288
  %v1278 = vunpack.c.h.b16 %v288
  %v1279 = vunpack.c.l.b16 %v289
  %v1280 = vunpack.c.l.b16 %v290
  %v1281 = vunpack.c.h.b16 %v290
  %v1282 = vunpack.c.l.b16 %v291
  %v1283 = vunpack.c.l.b16 %v292
  %v1284 = vunpack.c.h.b16 %v292
  %v1285 = vunpack.c.l.b16 %v293
  %v1286 = vunpack.c.l.b16 %v294
  %v1287 = vunpack.c.h.b16 %v294
  %v1288 = vunpack.c.l.b16 %v295
  %v1289 = vunpack.c.l.b16 %v296
  %v1290 = vunpack.c.h.b16 %v296
  %v1291 = vunpack.c.l.b16 %v297
  %v1292 = vunpack.c.l.b16 %v298
  %v1293 = vunpack.c.h.b16 %v298
  %v1294 = vunpack.c.l.b16 %v299
  %v1295 = vunpack.c.l.b16 %v300
  %v1296 = vunpack.c.h.b16 %v300
  %v1297 = vunpack.c.l.b16 %v301
  %v1298 = vunpack.c.l.b16 %v302
  %v1299 = vunpack.c.h.b16 %v302
  %v1300 = vunpack.c.l.b16 %v303
  %v1301 = vunpack.c.l.b16 %v304
  %v1302 = vunpack.c.h.b16 %v304
  %v1303 = vunpack.c.l.b16 %v305
  %v1304 = vunpack.c.l.b16 %v306
  %v1305 = vunpack.c.h.b16 %v306
  %v1306 = vunpack.c.l.b16 %v307
  %v1307 = vunpack.c.l.b16 %v308
  %v1308 = vunpack.c.h.b16 %v308
  %v1309 = vunpack.c.l.b16 %v309
  %v1310 = vunpack.c.l.b16 %v310
  %v1311 = vunpack.c.h.b16 %v310
  %v1312 = vunpack.c.l.b16 %v311
  %v1313 = vunpack.c.l.b16 %v312
  %v1314 = vunpack.c.h.b16 %v312
  %v1315 = vunpack.c.l.b16 %v313
  %v1316 = vunpack.c.l.b16 %v314
  %v1317 = vunpack.c.h.b16 %v314
  %v1318 = vunpack.c.l.b16 %v315
  %v1319 = vunpack.c.l.b16 %v316
  %v1320 = vunpack.c.h.b16 %v316
  %v1321 = vunpack.c.l.b16 %v317
  %v1322 = vunpack.c.l.b16 %v318
  %v1323 = vunpack.c.h.b16 %v318
  %v1324 = vunpack.c.l.b16 %v319
  %v1325 = vunpack.c.l.b16 %v320
  %v1326 = vunpack.c.h.b16 %v320
  %v1327 = vunpack.c.l.b16 %v321
  %v1328 = vunpack.c.l.b16 %v322
  %v1329 = vunpack.c.h.b16 %v322
  %v1330 = vunpack.c.l.b16 %v323
  %v1331 = vunpack.c.l.b16 %v324
  %v1332 = vunpack.c.h.b16 %v324
  %v1333 = vunpack.c.l.b16 %v325
  %v1334 = vunpack.c.l.b16 %v326
  %v1335 = vunpack.c.h.b16 %v326
  %v1336 = vunpack.c.l.b16 %v327
  %v1337 = vunpack.c.l.b16 %v328
  %v1338 = vunpack.c.h.b16 %v328
  %v1339 = vunpack.c.l.b16 %v329
  %v1340 = vunpack.c.l.b16 %v330
  %v1341 = vunpack.c.h.b16 %v330
  %v1342 = vunpack.c.l.b16 %v331
  %v1343 = vunpack.c.l.b16 %v332
  %v1344 = vunpack.c.h.b16 %v332
  %v1345 = vunpack.c.l.b16 %v333
  %v1346 = vunpack.c.l.b16 %v334
  %v1347 = vunpack.c.h.b16 %v334
  %v1348 = vunpack.c.l.b16 %v335
  %v1349 = vunpack.c.l.b16 %v336
  %v1350 = vunpack.c.h.b16 %v336
  %v1351 = vunpack.c.l.b16 %v337
  %v1352 = vunpack.c.l.b16 %v338
  %v1353 = vunpack.c.h.b16 %v338
  %v1354 = vunpack.c.l.b16 %v339
  %v1355 = vunpack.c.l.b16 %v340
  %v1356 = vunpack.c.h.b16 %v340
  %v1357 = vunpack.c.l.b16 %v341
  %v1358 = vunpack.c.l.b16 %v342
  %v1359 = vunpack.c.h.b16 %v342
  %v1360 = vunpack.c.l.b16 %v343
  %v1361 = vunpack.c.l.b16 %v344
  %v1362 = vunpack.c.h.b16 %v344
  %v1363 = vunpack.c.l.b16 %v345
  %v1364 = vunpack.c.l.b16 %v346
  %v1365 = vunpack.c.h.b16 %v346
  %v1366 = vunpack.c.l.b16 %v347
  %v1367 = vunpack.c.l.b16 %v348
  %v1368 = vunpack.c.h.b16 %v348
  %v1369 = vunpack.c.l.b16 %v349
  %v1370 = vunpack.c.l.b16 %v350
  %v1371 = vunpack.c.h.b16 %v350
  %v1372 = vunpack.c.l.b16 %v351
  %v1373 = vunpack.c.l.b16 %v352
  %v1374 = vunpack.c.h.b16 %v352
  %v1375 = vunpack.c.l.b16 %v353
  %v1376 = vunpack.c.l.b16 %v354
  %v1377 = vunpack.c.h.b16 %v354
  %v1378 = vunpack.c.l.b16 %v355
  %v1379 = vunpack.c.l.b16 %v356
  %v1380 = vunpack.c.h.b16 %v356
  %v1381 = vunpack.c.l.b16 %v357
  %v1382 = vunpack.c.l.b16 %v358
  %v1383 = vunpack.c.h.b16 %v358
  %v1384 = vunpack.c.l.b16 %v359
  %v1385 = vunpack.c.l.b16 %v360
  %v1386 = vunpack.c.h.b16 %v360
  %v1387 = vunpack.c.l.b16 %v361
  %v1388 = vunpack.c.l.b16 %v362
  %v1389 = vunpack.c.h.b16 %v362
  %v1390 = vunpack.c.l.b16 %v363
  %v1391 = vunpack.c.l.b16 %v364
  %v1392 = vunpack.c.h.b16 %v364
  %v1393 = vunpack.c.l.b16 %v365
  %v1394 = vunpack.c.l.b16 %v366
  %v1395 = vunpack.c.h.b16 %v366
  %v1396 = vunpack.c.l.b16 %v367
  %v1397 = vunpack.c.l.b16 %v368
  %v1398 = vunpack.c.h.b16 %v368
  %v1399 = vunpack.c.l.b16 %v369
  %v1400 = vunpack.c.l.b16 %v370
  %v1401 = vunpack.c.h.b16 %v370
  %v1402 = vunpack.c.l.b16 %v371
  %v1403 = vunpack.c.l.b16 %v372
  %v1404 = vunpack.c.h.b16 %v372
  %v1405 = vunpack.c.l.b16 %v373
  %v1406 = vunpack.c.l.b16 %v374
  %v1407 = vunpack.c.h.b16 %v374
  %v1408 = vunpack.c.l.b16 %v375
  %v1409 = vunpack.c.l.b16 %v376
  %v1410 = vunpack.c.h.b16 %v376
  %v1411 = vunpack.c.l.b16 %v377
  %v1412 = vunpack.c.l.b16 %v378
  %v1413 = vunpack.c.h.b16 %v378
  %v1414 = vunpack.c.l.b16 %v379
  %v1415 = vunpack.c.l.b16 %v380
  %v1416 = vunpack.c.h.b16 %v380
  %v1417 = vunpack.c.l.b16 %v381
  %v1418 = vunpack.c.l.b16 %v382
  %v1419 = vunpack.c.h.b16 %v382
  %v1420 = vunpack.c.l.b16 %v383
  %v1421 = vunpack.c.l.b16 %v384
  %v1422 = vunpack.c.h.b16 %v384
  %v1423 = vunpack.c.l.b16 %v385
  %v1424 = vunpack.c.l.b16 %v386
  %v1425 = vunpack.c.h.b16 %v386
  %v1426 = vunpack.c.l.b16 %v387
  %v1427 = vunpack.c.l.b16 %v388
  %v1428 = vunpack.c.h.b16 %v388
  %v1429 = vunpack.c.l.b16 %v389
  %v1430 = vunpack.c.l.b16 %v390
  %v1431 = vunpack.c.h.b16 %v390
  %v1432 = vunpack.c.l.b16 %v391
  %v1433 = vunpack.c.l.b16 %v392
  %v1434 = vunpack.c.h.b16 %v392
  %v1435 = vunpack.c.l.b16 %v393
  %v1436 = vunpack.c.l.b16 %v394
  %v1437 = vunpack.c.h.b16 %v394
  %v1438 = vunpack.c.l.b16 %v395
  %v1439 = vunpack.c.l.b16 %v396
  %v1440 = vunpack.c.h.b16 %v396
  %v1441 = vunpack.c.l.b16 %v397
  %v1442 = vunpack.c.l.b16 %v398
  %v1443 = vunpack.c.h.b16 %v398
  %v1444 = vunpack.c.l.b16 %v399
  %v1445 = vunpack.c.l.b16 %v400
  %v1446 = vunpack.c.h.b16 %v400
  %v1447 = vunpack.c.l.b16 %v401
  %v1448 = vunpack.c.l.b16 %v402
  %v1449 = vunpack.c.h.b16 %v402
  %v1450 = vunpack.c.l.b16 %v403
  %v1451 = vunpack.c.l.b16 %v404
  %v1452 = vunpack.c.h.b16 %v404
  %v1453 = vunpack.c.l.b16 %v405
  %v1454 = vunpack.c.l.b16 %v406
  %v1455 = vunpack.c.h.b16 %v406
  %v1456 = vunpack.c.l.b16 %v407
  %v1457 = vunpack.c.l.b16 %v408
  %v1458 = vunpack.c.h.b16 %v408
  %v1459 = vunpack.c.l.b16 %v409
  %v1460 = vunpack.c.l.b16 %v410
  %v1461 = vunpack.c.h.b16 %v410
  %v1462 = vunpack.c.l.b16 %v411
  %v1463 = vunpack.c.l.b16 %v412
  %v1464 = vunpack.c.h.b16 %v412
  %v1465 = vunpack.c.l.b16 %v413
  %v1466 = vunpack.c.l.b16 %v414
  %v1467 = vunpack.c.h.b16 %v414
  %v1468 = vunpack.c.l.b16 %v415
  %v1469 = vunpack.c.l.b16 %v416
  %v1470 = vunpack.c.h.b16 %v416
  %v1471 = vunpack.c.l.b16 %v417
  %v1472 = vunpack.c.l.b16 %v418
  %v1473 = vunpack.c.h.b16 %v418
  %v1474 = vunpack.c.l.b16 %v419
  %v1475 = vunpack.c.l.b16 %v420
  %v1476 = vunpack.c.h.b16 %v420
  %v1477 = vunpack.c.l.b16 %v421
  %v1478 = vunpack.c.l.b16 %v422
  %v1479 = vunpack.c.h.b16 %v422
  %v1480 = vunpack.c.l.b16 %v423
  %v1481 = vunpack.c.l.b16 %v424
  %v1482 = vunpack.c.h.b16 %v424
  %v1483 = vunpack.c.l.b16 %v425
  %v1484 = vunpack.c.l.b16 %v426
  %v1485 = vunpack.c.h.b16 %v426
  %v1486 = vunpack.c.l.b16 %v427
  %v1487 = vunpack.c.l.b16 %v428
  %v1488 = vunpack.c.h.b16 %v428
  %v1489 = vunpack.c.l.b16 %v429
  %v1490 = vunpack.c.l.b16 %v430
  %v1491 = vunpack.c.h.b16 %v430
  %v1492 = vunpack.c.l.b16 %v431
  %v1493 = vunpack.c.l.b16 %v432
  %v1494 = vunpack.c.h.b16 %v432
  %v1495 = vunpack.c.l.b16 %v433
  %v1496 = vpack.c.b16 %v899, %v896
  %v1497 = vpack.c.b16 %v900, %v897
  %v1498 = vpack.c.b16 %v901, %v898
  %v1499 = vpack.c.b16 %v905, %v902
  %v1500 = vpack.c.b16 %v906, %v903
  %v1501 = vpack.c.b16 %v907, %v904
  %v1502 = vpack.c.b16 %v911, %v908
  %v1503 = vpack.c.b16 %v912, %v909
  %v1504 = vpack.c.b16 %v913, %v910
  %v1505 = vpack.c.b16 %v917, %v914
  %v1506 = vpack.c.b16 %v918, %v915
  %v1507 = vpack.c.b16 %v919, %v916
  %v1508 = vpack.c.b16 %v923, %v920
  %v1509 = vpack.c.b16 %v924, %v921
  %v1510 = vpack.c.b16 %v925, %v922
  %v1511 = vpack.c.b16 %v929, %v926
  %v1512 = vpack.c.b16 %v930, %v927
  %v1513 = vpack.c.b16 %v931, %v928
  %v1514 = vpack.c.b16 %v935, %v932
  %v1515 = vpack.c.b16 %v936, %v933
  %v1516 = vpack.c.b16 %v937, %v934
  %v1517 = vpack.c.b16 %v941, %v938
  %v1518 = vpack.c.b16 %v942, %v939
  %v1519 = vpack.c.b16 %v943, %v940
  %v1520 = vpack.c.b16 %v947, %v944
  %v1521 = vpack.c.b16 %v948, %v945
  %v1522 = vpack.c.b16 %v949, %v946
  %v1523 = vpack.c.b16 %v953, %v950
  %v1524 = vpack.c.b16 %v954, %v951
  %v1525 = vpack.c.b16 %v955, %v952
  %v1526 = vpack.c.b16 %v959, %v956
  %v1527 = vpack.c.b16 %v960, %v957
  %v1528 = vpack.c.b16 %v961, %v958
  %v1529 = vpack.c.b16 %v965, %v962
  %v1530 = vpack.c.b16 %v966, %v963
  %v1531 = vpack.c.b16 %v967, %v964
  %v1532 = vpack.c.b16 %v971, %v968
  %v1533 = vpack.c.b16 %v972, %v969
  %v1534 = vpack.c.b16 %v973, %v970
  %v1535 = vpack.c.b16 %v977, %v974
  %v1536 = vpack.c.b16 %v978, %v975
  %v1537 = vpack.c.b16 %v979, %v976
  %v1538 = vpack.c.b16 %v983, %v980
  %v1539 = vpack.c.b16 %v984, %v981
  %v1540 = vpack.c.b16 %v985, %v982
  %v1541 = vpack.c.b16 %v989, %v986
  %v1542 = vpack.c.b16 %v990, %v987
  %v1543 = vpack.c.b16 %v991, %v988
  %v1544 = vpack.c.b16 %v995, %v992
  %v1545 = vpack.c.b16 %v996, %v993
  %v1546 = vpack.c.b16 %v997, %v994
  %v1547 = vpack.c.b16 %v1001, %v998
  %v1548 = vpack.c.b16 %v1002, %v999
  %v1549 = vpack.c.b16 %v1003, %v1000
  %v1550 = vpack.c.b16 %v1007, %v1004
  %v1551 = vpack.c.b16 %v1008, %v1005
  %v1552 = vpack.c.b16 %v1009, %v1006
  %v1553 = vpack.c.b16 %v1013, %v1010
  %v1554 = vpack.c.b16 %v1014, %v1011
  %v1555 = vpack.c.b16 %v1015, %v1012
  %v1556 = vpack.c.b16 %v1019, %v1016
  %v1557 = vpack.c.b16 %v1020, %v1017
  %v1558 = vpack.c.b16 %v1021, %v1018
  %v1559 = vpack.c.b16 %v1025, %v1022
  %v1560 = vpack.c.b16 %v1026, %v1023
  %v1561 = vpack.c.b16 %v1027, %v1024
  %v1562 = vpack.c.b16 %v1031, %v1028
  %v1563 = vpack.c.b16 %v1032, %v1029
  %v1564 = vpack.c.b16 %v1033, %v1030
  %v1565 = vpack.c.b16 %v1037, %v1034
  %v1566 = vpack.c.b16 %v1038, %v1035
  %v1567 = vpack.c.b16 %v1039, %v1036
  %v1568 = vpack.c.b16 %v1043, %v1040
  %v1569 = vpack.c.b16 %v1044, %v1041
  %v1570 = vpack.c.b16 %v1045, %v1042
  %v1571 = vpack.c.b16 %v1049, %v1046
  %v1572 = vpack.c.b16 %v1050, %v1047
  %v1573 = vpack.c.b16 %v1051, %v1048
  %v1574 = vpack.c.b16 %v1055, %v1052
  %v1575 = vpack.c.b16 %v1056, %v1053
  %v1576 = vpack.c.b16 %v1057, %v1054
  %v1577 = vpack.c.b16 %v1061, %v1058
  %v1578 = vpack.c.b16 %v1062, %v1059
  %v1579 = vpack.c.b16 %v1063, %v1060
  %v1580 = vpack.c.b16 %v1067, %v1064
  %v1581 = vpack.c.b16 %v1068, %v1065
  %v1582 = vpack.c.b16 %v1069, %v1066
  %v1583 = vpack.c.b16 %v1073, %v1070
  %v1584 = vpack.c.b16 %v1074, %v1071
  %v1585 = vpack.c.b16 %v1075, %v1072
  %v1586 = vpack.c.b16 %v1079, %v1076
  %v1587 = vpack.c.b16 %v1080, %v1077
  %v1588 = vpack.c.b16 %v1081, %v1078
  %v1589 = vpack.c.b16 %v1085, %v1082
  %v1590 = vpack.c.b16 %v1086, %v1083
  %v1591 = vpack.c.b16 %v1087, %v1084
  %v1592 = vpack.c.b16 %v1091, %v1088
  %v1593 = vpack.c.b16 %v1092, %v1089
  %v1594 = vpack.c.b16 %v1093, %v1090
  %v1595 = vpack.c.b16 %v1097, %v1094
  %v1596 = vpack.c.b16 %v1098, %v1095
  %v1597 = vpack.c.b16 %v1099, %v1096
  %v1598 = vpack.c.b16 %v1103, %v1100
  %v1599 = vpack.c.b16 %v1104, %v1101
  %v1600 = vpack.c.b16 %v1105, %v1102
  %v1601 = vpack.c.b16 %v1109, %v1106
  %v1602 = vpack.c.b16 %v1110, %v1107
  %v1603 = vpack.c.b16 %v1111, %v1108
  %v1604 = vpack.c.b16 %v1115, %v1112
  %v1605 = vpack.c.b16 %v1116, %v1113
  %v1606 = vpack.c.b16 %v1117, %v1114
  %v1607 = vpack.c.b16 %v1121, %v1118
  %v1608 = vpack.c.b16 %v1122, %v1119
  %v1609 = vpack.c.b16 %v1123, %v1120
  %v1610 = vpack.c.b16 %v1127, %v1124
  %v1611 = vpack.c.b16 %v1128, %v1125
  %v1612 = vpack.c.b16 %v1129, %v1126
  %v1613 = vpack.c.b16 %v1133, %v1130
  %v1614 = vpack.c.b16 %v1134, %v1131
  %v1615 = vpack.c.b16 %v1135, %v1132
  %v1616 = vpack.c.b16 %v1139, %v1136
  %v1617 = vpack.c.b16 %v1140, %v1137
  %v1618 = vpack.c.b16 %v1141, %v1138
  %v1619 = vpack.c.b16 %v1145, %v1142
  %v1620 = vpack.c.b16 %v1146, %v1143
  %v1621 = vpack.c.b16 %v1147, %v1144
  %v1622 = vpack.c.b16 %v1151, %v1148
  %v1623 = vpack.c.b16 %v1152, %v1149
  %v1624 = vpack.c.b16 %v1153, %v1150
  %v1625 = vpack.c.b16 %v1157, %v1154
  %v1626 = vpack.c.b16 %v1158, %v1155
  %v1627 = vpack.c.b16 %v1159, %v1156
  %v1628 = vpack.c.b16 %v1163, %v1160
  %v1629 = vpack.c.b16 %v1164, %v1161
  %v1630 = vpack.c.b16 %v1165, %v1162
  %v1631 = vpack.c.b16 %v1169, %v1166
  %v1632 = vpack.c.b16 %v1170, %v1167
  %v1633 = vpack.c.b16 %v1171, %v1168
  %v1634 = vpack.c.b16 %v1175, %v1172
  %v1635 = vpack.c.b16 %v1176, %v1173
  %v1636 = vpack.c.b16 %v1177, %v1174
  %v1637 = vpack.c.b16 %v1181, %v1178
  %v1638 = vpack.c.b16 %v1182, %v1179
  %v1639 = vpack.c.b16 %v1183, %v1180
  %v1640 = vpack.c.b16 %v1187, %v1184
  %v1641 = vpack.c.b16 %v1188, %v1185
  %v1642 = vpack.c.b16 %v1189, %v1186
  %v1643 = vpack.c.b16 %v1193, %v1190
  %v1644 = vpack.c.b16 %v1194, %v1191
  %v1645 = vpack.c.b16 %v1195, %v1192
  %v1646 = vpack.c.b16 %v1199, %v1196
  %v1647 = vpack.c.b16 %v1200, %v1197
  %v1648 = vpack.c.b16 %v1201, %v1198
  %v1649 = vpack.c.b16 %v1205, %v1202
  %v1650 = vpack.c.b16 %v1206, %v1203
  %v1651 = vpack.c.b16 %v1207, %v1204
  %v1652 = vpack.c.b16 %v1211, %v1208
  %v1653 = vpack.c.b16 %v1212, %v1209
  %v1654 = vpack.c.b16 %v1213, %v1210
  %v1655 = vpack.c.b16 %v1217, %v1214
  %v1656 = vpack.c.b16 %v1218, %v1215
  %v1657 = vpack.c.b16 %v1219, %v1216
  %v1658 = vpack.c.b16 %v1223, %v1220
  %v1659 = vpack.c.b16 %v1224, %v1221
  %v1660 = vpack.c.b16 %v1225, %v1222
  %v1661 = vpack.c.b16 %v1229, %v1226
  %v1662 = vpack.c.b16 %v1230, %v1227
  %v1663 = vpack.c.b16 %v1231, %v1228
  %v1664 = vpack.c.b16 %v1235, %v1232
  %v1665 = vpack.c.b16 %v1236, %v1233
  %v1666 = vpack.c.b16 %v1237, %v1234
  %v1667 = vpack.c.b16 %v1241, %v1238
  %v1668 = vpack.c.b16 %v1242, %v1239
  %v1669 = vpack.c.b16 %v1243, %v1240
  %v1670 = vpack.c.b16 %v1247, %v1244
  %v1671 = vpack.c.b16 %v1248, %v1245
  %v1672 = vpack.c.b16 %v1249, %v1246
  %v1673 = vpack.c.b16 %v1253, %v1250
  %v1674 = vpack.c.b16 %v1254, %v1251
  %v1675 = vpack.c.b16 %v1255, %v1252
  %v1676 = vpack.c.b16 %v1259, %v1256
  %v1677 = vpack.c.b16 %v1260, %v1257
  %v1678 = vpack.c.b16 %v1261, %v1258
  %v1679 = vpack.c.b16 %v1265, %v1262
  %v1680 = vpack.c.b16 %v1266, %v1263
  %v1681 = vpack.c.b16 %v1267, %v1264
  %v1682 = vpack.c.b16 %v1271, %v1268
  %v1683 = vpack.c.b16 %v1272, %v1269
  %v1684 = vpack.c.b16 %v1273, %v1270
  %v1685 = vpack.c.b16 %v1277, %v1274
  %v1686 = vpack.c.b16 %v1278, %v1275
  %v1687 = vpack.c.b16 %v1279, %v1276
  %v1688 = vpack.c.b16 %v1283, %v1280
  %v1689 = vpack.c.b16 %v1284, %v1281
  %v1690 = vpack.c.b16 %v1285, %v1282
  %v1691 = vpack.c.b16 %v1289, %v1286
  %v1692 = vpack.c.b16 %v1290, %v1287
  %v1693 = vpack.c.b16 %v1291, %v1288
  %v1694 = vpack.c.b16 %v1295, %v1292
  %v1695 = vpack.c.b16 %v1296, %v1293
  %v1696 = vpack.c.b16 %v1297, %v1294
  %v1697 = vpack.c.b16 %v1301, %v1298
  %v1698 = vpack.c.b16 %v1302, %v1299
  %v1699 = vpack.c.b16 %v1303, %v1300
  %v1700 = vpack.c.b16 %v1307, %v1304
  %v1701 = vpack.c.b16 %v1308, %v1305
  %v1702 = vpack.c.b16 %v1309, %v1306
  %v1703 = vpack.c.b16 %v1313, %v1310
  %v1704 = vpack.c.b16 %v1314, %v1311
  %v1705 = vpack.c.b16 %v1315, %v1312
  %v1706 = vpack.c.b16 %v1319, %v1316
  %v1707 = vpack.c.b16 %v1320, %v1317
  %v1708 = vpack.c.b16 %v1321, %v1318
  %v1709 = vpack.c.b16 %v1325, %v1322
  %v1710 = vpack.c.b16 %v1326, %v1323
  %v1711 = vpack.c.b16 %v1327, %v1324
  %v1712 = vpack.c.b16 %v1331, %v1328
  %v1713 = vpack.c.b16 %v1332, %v1329
  %v1714 = vpack.c.b16 %v1333, %v1330
  %v1715 = vpack.c.b16 %v1337, %v1334
  %v1716 = vpack.c.b16 %v1338, %v1335
  %v1717 = vpack.c.b16 %v1339, %v1336
  %v1718 = vpack.c.b16 %v1343, %v1340
  %v1719 = vpack.c.b16 %v1344, %v1341
  %v1720 = vpack.c.b16 %v1345, %v1342
  %v1721 = vpack.c.b16 %v1349, %v1346
  %v1722 = vpack.c.b16 %v1350, %v1347
  %v1723 = vpack.c.b16 %v1351, %v1348
  %v1724 = vpack.c.b16 %v1355, %v1352
  %v1725 = vpack.c.b16 %v1356, %v1353
  %v1726 = vpack.c.b16 %v1357, %v1354
  %v1727 = vpack.c.b16 %v1361, %v1358
  %v1728 = vpack.c.b16 %v1362, %v1359
  %v1729 = vpack.c.b16 %v1363, %v1360
  %v1730 = vpack.c.b16 %v1367, %v1364
  %v1731 = vpack.c.b16 %v1368, %v1365
  %v1732 = vpack.c.b16 %v1369, %v1366
  %v1733 = vpack.c.b16 %v1373, %v1370
  %v1734 = vpack.c.b16 %v1374, %v1371
  %v1735 = vpack.c.b16 %v1375, %v1372
  %v1736 = vpack.c.b16 %v1379, %v1376
  %v1737 = vpack.c.b16 %v1380, %v1377
  %v1738 = vpack.c.b16 %v1381, %v1378
  %v1739 = vpack.c.b16 %v1385, %v1382
  %v1740 = vpack.c.b16 %v1386, %v1383
  %v1741 = vpack.c.b16 %v1387, %v1384
  %v1742 = vpack.c.b16 %v1391, %v1388
  %v1743 = vpack.c.b16 %v1392, %v1389
  %v1744 = vpack.c.b16 %v1393, %v1390
  %v1745 = vpack.c.b16 %v1397, %v1394
  %v1746 = vpack.c.b16 %v1398, %v1395
  %v1747 = vpack.c.b16 %v1399, %v1396
  %v1748 = vpack.c.b16 %v1403, %v1400
  %v1749 = vpack.c.b16 %v1404, %v1401
  %v1750 = vpack.c.b16 %v1405, %v1402
  %v1751 = vpack.c.b16 %v1409, %v1406
  %v1752 = vpack.c.b16 %v1410, %v1407
  %v1753 = vpack.c.b16 %v1411, %v1408
  %v1754 = vpack.c.b16 %v1415, %v1412
  %v1755 = vpack.c.b16 %v1416, %v1413
  %v1756 = vpack.c.b16 %v1417, %v1414
  %v1757 = vpack.c.b16 %v1421, %v1418
  %v1758 = vpack.c.b16 %v1422, %v1419
  %v1759 = vpack.c.b16 %v1423, %v1420
  %v1760 = vpack.c.b16 %v1427, %v1424
  %v1761 = vpack.c.b16 %v1428, %v1425
  %v1762 = vpack.c.b16 %v1429, %v1426
  %v1763 = vpack.c.b16 %v1433, %v1430
  %v1764 = vpack.c.b16 %v1434, %v1431
  %v1765 = vpack.c.b16 %v1435, %v1432
  %v1766 = vpack.c.b16 %v1439, %v1436
  %v1767 = vpack.c.b16 %v1440, %v1437
  %v1768 = vpack.c.b16 %v1441, %v1438
  %v1769 = vpack.c.b16 %v1445, %v1442
  %v1770 = vpack.c.b16 %v1446, %v1443
  %v1771 = vpack.c.b16 %v1447, %v1444
  %v1772 = vpack.c.b16 %v1451, %v1448
  %v1773 = vpack.c.b16 %v1452, %v1449
  %v1774 = vpack.c.b16 %v1453, %v1450
  %v1775 = vpack.c.b16 %v1457, %v1454
  %v1776 = vpack.c.b16 %v1458, %v1455
  %v1777 = vpack.c.b16 %v1459, %v1456
  %v1778 = vpack.c.b16 %v1463, %v1460
  %v1779 = vpack.c.b16 %v1464, %v1461
  %v1780 = vpack.c.b16 %v1465, %v1462
  %v1781 = vpack.c.b16 %v1469, %v1466
  %v1782 = vpack.c.b16 %v1470, %v1467
  %v1783 = vpack.c.b16 %v1471, %v1468
  %v1784 = vpack.c.b16 %v1475, %v1472
  %v1785 = vpack.c.b16 %v1476, %v1473
  %v1786 = vpack.c.b16 %v1477, %v1474
  %v1787 = vpack.c.b16 %v1481, %v1478
  %v1788 = vpack.c.b16 %v1482, %v1479
  %v1789 = vpack.c.b16 %v1483, %v1480
  %v1790 = vpack.c.b16 %v1487, %v1484
  %v1791 = vpack.c.b16 %v1488, %v1485
  %v1792 = vpack.c.b16 %v1489, %v1486
  %v1793 = vpack.c.b16 %v1493, %v1490
  %v1794 = vpack.c.b16 %v1494, %v1491
  %v1795 = vpack.c.b16 %v1495, %v1492
  %vm2096 = vcmask 523264
  %v2098 = vsel %vm2096, %v483, 0
  %2100 = vmatprep.subr.bf16.mxu0 %v1497
  %2101 = vmatpush1.bf16.msra.mxu0 %v1496
  %2102 = vmatprep.subr.bf16.mxu0 %v1500
  %2103 = vmatpush1.bf16.msra.mxu0 %v1499
  %2104 = vmatprep.subr.bf16.mxu0 %v1503
  %2105 = vmatpush1.bf16.msra.mxu0 %v1502
  %2106 = vmatprep.subr.bf16.mxu0 %v1506
  %2107 = vmatpush1.bf16.msra.mxu0 %v1505
  %2108 = vmatprep.subr.bf16.mxu0 %v1509
  %2109 = vmatpush1.bf16.msra.mxu0 %v1508
  %2110 = vmatprep.subr.bf16.mxu0 %v1512
  %2111 = vmatpush1.bf16.msra.mxu0 %v1511
  %2112 = vmatprep.subr.bf16.mxu0 %v1515
  %2113 = vmatpush1.bf16.msra.mxu0 %v1514
  %2114 = vmatprep.subr.bf16.mxu0 %v1518
  %2115 = vmatpush1.bf16.msra.mxu0 %v1517
  %2116 = vmatprep.subr.bf16.mxu0 %v1521
  %2117 = vmatpush1.bf16.msra.mxu0 %v1520
  %2118 = vmatprep.subr.bf16.mxu0 %v1524
  %2119 = vmatpush1.bf16.msra.mxu0 %v1523
  %2120 = vmatprep.subr.bf16.mxu0 %v1527
  %2121 = vmatpush1.bf16.msra.mxu0 %v1526
  %2122 = vmatprep.subr.bf16.mxu0 %v1530
  %2123 = vmatpush1.bf16.msra.mxu0 %v1529
  %2124 = vmatprep.subr.bf16.mxu0 %v1533
  %2125 = vmatpush1.bf16.msra.mxu0 %v1532
  %2126 = vmatprep.subr.bf16.mxu0 %v1536
  %2127 = vmatpush1.bf16.msra.mxu0 %v1535
  %2128 = vmatprep.subr.bf16.mxu0 %v1539
  %2129 = vmatpush1.bf16.msra.mxu0 %v1538
  %2130 = vmatprep.subr.bf16.mxu0 %v1542
  %2131 = vmatpush1.bf16.msra.mxu0 %v1541
  %2132 = vmatprep.mubr.bf16.mxu0 %v472
  %2133 = vmatmul.mubr.bf16.gmra.mrb[0].mxu0 %v471
  %v2134 = vpop.f32.mrb[0].mxu0
  %v2135 = vadd.f32 %v439, %v2134
  %v2136 = vpop.f32.mrb[0].mxu0
  %v2137 = vadd.f32 %v443, %v2136
  %v2138 = vpop.f32.mrb[0].mxu0
  %v2139 = vpop.f32.mrb[0].mxu0
  %2140 = vdwg.mxu0
  %2141 = vmatprep.subr.bf16.mxu0 %v1545
  %2142 = vmatpush1.bf16.msra.mxu0 %v1544
  %2143 = vmatprep.subr.bf16.mxu0 %v1548
  %2144 = vmatpush1.bf16.msra.mxu0 %v1547
  %2145 = vmatprep.subr.bf16.mxu0 %v1551
  %2146 = vmatpush1.bf16.msra.mxu0 %v1550
  %2147 = vmatprep.subr.bf16.mxu0 %v1554
  %2148 = vmatpush1.bf16.msra.mxu0 %v1553
  %2149 = vmatprep.subr.bf16.mxu0 %v1557
  %2150 = vmatpush1.bf16.msra.mxu0 %v1556
  %2151 = vmatprep.subr.bf16.mxu0 %v1560
  %2152 = vmatpush1.bf16.msra.mxu0 %v1559
  %2153 = vmatprep.subr.bf16.mxu0 %v1563
  %2154 = vmatpush1.bf16.msra.mxu0 %v1562
  %2155 = vmatprep.subr.bf16.mxu0 %v1566
  %2156 = vmatpush1.bf16.msra.mxu0 %v1565
  %2157 = vmatprep.subr.bf16.mxu0 %v1569
  %2158 = vmatpush1.bf16.msra.mxu0 %v1568
  %2159 = vmatprep.subr.bf16.mxu0 %v1572
  %2160 = vmatpush1.bf16.msra.mxu0 %v1571
  %2161 = vmatprep.subr.bf16.mxu0 %v1575
  %2162 = vmatpush1.bf16.msra.mxu0 %v1574
  %2163 = vmatprep.subr.bf16.mxu0 %v1578
  %2164 = vmatpush1.bf16.msra.mxu0 %v1577
  %2165 = vmatprep.subr.bf16.mxu0 %v1581
  %2166 = vmatpush1.bf16.msra.mxu0 %v1580
  %2167 = vmatprep.subr.bf16.mxu0 %v1584
  %2168 = vmatpush1.bf16.msra.mxu0 %v1583
  %2169 = vmatprep.subr.bf16.mxu0 %v1587
  %2170 = vmatpush1.bf16.msra.mxu0 %v1586
  %2171 = vmatprep.subr.bf16.mxu0 %v1590
  %2172 = vmatpush1.bf16.msra.mxu0 %v1589
  %2173 = vmatprep.mubr.bf16.mxu0 %v474
  %2174 = vmatmul.mubr.bf16.gmra.mrb[0].mxu0 %v473
  %v2175 = vpop.f32.mrb[0].mxu0
  %v2176 = vadd.f32 %v2135, %v2175
  %v2177 = vpop.f32.mrb[0].mxu0
  %v2178 = vadd.f32 %v2137, %v2177
  %v2179 = vpop.f32.mrb[0].mxu0
  %v2180 = vpop.f32.mrb[0].mxu0
  %2181 = vdwg.mxu0
  %2182 = vmatprep.subr.bf16.mxu0 %v1593
  %2183 = vmatpush1.bf16.msra.mxu0 %v1592
  %2184 = vmatprep.subr.bf16.mxu0 %v1596
  %2185 = vmatpush1.bf16.msra.mxu0 %v1595
  %2186 = vmatprep.subr.bf16.mxu0 %v1599
  %2187 = vmatpush1.bf16.msra.mxu0 %v1598
  %2188 = vmatprep.subr.bf16.mxu0 %v1602
  %2189 = vmatpush1.bf16.msra.mxu0 %v1601
  %2190 = vmatprep.subr.bf16.mxu0 %v1605
  %2191 = vmatpush1.bf16.msra.mxu0 %v1604
  %2192 = vmatprep.subr.bf16.mxu0 %v1608
  %2193 = vmatpush1.bf16.msra.mxu0 %v1607
  %2194 = vmatprep.subr.bf16.mxu0 %v1611
  %2195 = vmatpush1.bf16.msra.mxu0 %v1610
  %2196 = vmatprep.subr.bf16.mxu0 %v1614
  %2197 = vmatpush1.bf16.msra.mxu0 %v1613
  %2198 = vmatprep.subr.bf16.mxu0 %v1617
  %2199 = vmatpush1.bf16.msra.mxu0 %v1616
  %2200 = vmatprep.subr.bf16.mxu0 %v1620
  %2201 = vmatpush1.bf16.msra.mxu0 %v1619
  %2202 = vmatprep.subr.bf16.mxu0 %v1623
  %2203 = vmatpush1.bf16.msra.mxu0 %v1622
  %2204 = vmatprep.subr.bf16.mxu0 %v1626
  %2205 = vmatpush1.bf16.msra.mxu0 %v1625
  %2206 = vmatprep.subr.bf16.mxu0 %v1629
  %2207 = vmatpush1.bf16.msra.mxu0 %v1628
  %2208 = vmatprep.subr.bf16.mxu0 %v1632
  %2209 = vmatpush1.bf16.msra.mxu0 %v1631
  %2210 = vmatprep.subr.bf16.mxu0 %v1635
  %2211 = vmatpush1.bf16.msra.mxu0 %v1634
  %2212 = vmatprep.subr.bf16.mxu0 %v1638
  %2213 = vmatpush1.bf16.msra.mxu0 %v1637
  %2214 = vmatprep.mubr.bf16.mxu0 %v476
  %2215 = vmatmul.mubr.bf16.gmra.mrb[0].mxu0 %v475
  %v2216 = vpop.f32.mrb[0].mxu0
  %v2217 = vadd.f32 %v2176, %v2216
  %v2218 = vpop.f32.mrb[0].mxu0
  %v2219 = vadd.f32 %v2178, %v2218
  %v2220 = vpop.f32.mrb[0].mxu0
  %v2221 = vpop.f32.mrb[0].mxu0
  %2222 = vdwg.mxu0
  %2223 = vmatprep.subr.bf16.mxu0 %v1641
  %2224 = vmatpush1.bf16.msra.mxu0 %v1640
  %2225 = vmatprep.subr.bf16.mxu0 %v1644
  %2226 = vmatpush1.bf16.msra.mxu0 %v1643
  %2227 = vmatprep.subr.bf16.mxu0 %v1647
  %2228 = vmatpush1.bf16.msra.mxu0 %v1646
  %2229 = vmatprep.subr.bf16.mxu0 %v1650
  %2230 = vmatpush1.bf16.msra.mxu0 %v1649
  %2231 = vmatprep.subr.bf16.mxu0 %v1653
  %2232 = vmatpush1.bf16.msra.mxu0 %v1652
  %2233 = vmatprep.subr.bf16.mxu0 %v1656
  %2234 = vmatpush1.bf16.msra.mxu0 %v1655
  %2235 = vmatprep.subr.bf16.mxu0 %v1659
  %2236 = vmatpush1.bf16.msra.mxu0 %v1658
  %2237 = vmatprep.subr.bf16.mxu0 %v1662
  %2238 = vmatpush1.bf16.msra.mxu0 %v1661
  %2239 = vmatprep.subr.bf16.mxu0 %v1665
  %2240 = vmatpush1.bf16.msra.mxu0 %v1664
  %2241 = vmatprep.subr.bf16.mxu0 %v1668
  %2242 = vmatpush1.bf16.msra.mxu0 %v1667
  %2243 = vmatprep.subr.bf16.mxu0 %v1671
  %2244 = vmatpush1.bf16.msra.mxu0 %v1670
  %2245 = vmatprep.subr.bf16.mxu0 %v1674
  %2246 = vmatpush1.bf16.msra.mxu0 %v1673
  %2247 = vmatprep.subr.bf16.mxu0 %v1677
  %2248 = vmatpush1.bf16.msra.mxu0 %v1676
  %2249 = vmatprep.subr.bf16.mxu0 %v1680
  %2250 = vmatpush1.bf16.msra.mxu0 %v1679
  %2251 = vmatprep.subr.bf16.mxu0 %v1683
  %2252 = vmatpush1.bf16.msra.mxu0 %v1682
  %2253 = vmatprep.subr.bf16.mxu0 %v1686
  %2254 = vmatpush1.bf16.msra.mxu0 %v1685
  %2255 = vmatprep.mubr.bf16.mxu0 %v478
  %2256 = vmatmul.mubr.bf16.gmra.mrb[0].mxu0 %v477
  %v2257 = vpop.f32.mrb[0].mxu0
  %v2258 = vadd.f32 %v2217, %v2257
  %v2259 = vpop.f32.mrb[0].mxu0
  %v2260 = vadd.f32 %v2219, %v2259
  %v2261 = vpop.f32.mrb[0].mxu0
  %v2262 = vpop.f32.mrb[0].mxu0
  %2263 = vdwg.mxu0
  %2264 = vmatprep.subr.bf16.mxu0 %v1689
  %2265 = vmatpush1.bf16.msra.mxu0 %v1688
  %2266 = vmatprep.subr.bf16.mxu0 %v1692
  %2267 = vmatpush1.bf16.msra.mxu0 %v1691
  %2268 = vmatprep.subr.bf16.mxu0 %v1695
  %2269 = vmatpush1.bf16.msra.mxu0 %v1694
  %2270 = vmatprep.subr.bf16.mxu0 %v1698
  %2271 = vmatpush1.bf16.msra.mxu0 %v1697
  %2272 = vmatprep.subr.bf16.mxu0 %v1701
  %2273 = vmatpush1.bf16.msra.mxu0 %v1700
  %2274 = vmatprep.subr.bf16.mxu0 %v1704
  %2275 = vmatpush1.bf16.msra.mxu0 %v1703
  %2276 = vmatprep.subr.bf16.mxu0 %v1707
  %2277 = vmatpush1.bf16.msra.mxu0 %v1706
  %2278 = vmatprep.subr.bf16.mxu0 %v1710
  %2279 = vmatpush1.bf16.msra.mxu0 %v1709
  %2280 = vmatprep.subr.bf16.mxu0 %v1713
  %2281 = vmatpush1.bf16.msra.mxu0 %v1712
  %2282 = vmatprep.subr.bf16.mxu0 %v1716
  %2283 = vmatpush1.bf16.msra.mxu0 %v1715
  %2284 = vmatprep.subr.bf16.mxu0 %v1719
  %2285 = vmatpush1.bf16.msra.mxu0 %v1718
  %2286 = vmatprep.subr.bf16.mxu0 %v1722
  %2287 = vmatpush1.bf16.msra.mxu0 %v1721
  %2288 = vmatprep.subr.bf16.mxu0 %v1725
  %2289 = vmatpush1.bf16.msra.mxu0 %v1724
  %2290 = vmatprep.subr.bf16.mxu0 %v1728
  %2291 = vmatpush1.bf16.msra.mxu0 %v1727
  %2292 = vmatprep.subr.bf16.mxu0 %v1731
  %2293 = vmatpush1.bf16.msra.mxu0 %v1730
  %2294 = vmatprep.subr.bf16.mxu0 %v1734
  %2295 = vmatpush1.bf16.msra.mxu0 %v1733
  %2296 = vmatprep.mubr.bf16.mxu0 %v480
  %2297 = vmatmul.mubr.bf16.gmra.mrb[0].mxu0 %v479
  %v2298 = vpop.f32.mrb[0].mxu0
  %v2299 = vadd.f32 %v2258, %v2298
  %v2300 = vpop.f32.mrb[0].mxu0
  %v2301 = vadd.f32 %v2260, %v2300
  %v2302 = vpop.f32.mrb[0].mxu0
  %v2303 = vpop.f32.mrb[0].mxu0
  %2304 = vdwg.mxu0
  %2305 = vmatprep.subr.bf16.mxu0 %v1737
  %2306 = vmatpush1.bf16.msra.mxu0 %v1736
  %2307 = vmatprep.subr.bf16.mxu0 %v1740
  %2308 = vmatpush1.bf16.msra.mxu0 %v1739
  %2309 = vmatprep.subr.bf16.mxu0 %v1743
  %2310 = vmatpush1.bf16.msra.mxu0 %v1742
  %2311 = vmatprep.subr.bf16.mxu0 %v1746
  %2312 = vmatpush1.bf16.msra.mxu0 %v1745
  %2313 = vmatprep.subr.bf16.mxu0 %v1749
  %2314 = vmatpush1.bf16.msra.mxu0 %v1748
  %2315 = vmatprep.subr.bf16.mxu0 %v1752
  %2316 = vmatpush1.bf16.msra.mxu0 %v1751
  %2317 = vmatprep.subr.bf16.mxu0 %v1755
  %2318 = vmatpush1.bf16.msra.mxu0 %v1754
  %2319 = vmatprep.subr.bf16.mxu0 %v1758
  %2320 = vmatpush1.bf16.msra.mxu0 %v1757
  %2321 = vmatprep.subr.bf16.mxu0 %v1761
  %2322 = vmatpush1.bf16.msra.mxu0 %v1760
  %2323 = vmatprep.subr.bf16.mxu0 %v1764
  %2324 = vmatpush1.bf16.msra.mxu0 %v1763
  %2325 = vmatprep.subr.bf16.mxu0 %v1767
  %2326 = vmatpush1.bf16.msra.mxu0 %v1766
  %2327 = vmatprep.subr.bf16.mxu0 %v1770
  %2328 = vmatpush1.bf16.msra.mxu0 %v1769
  %2329 = vmatprep.subr.bf16.mxu0 %v1773
  %2330 = vmatpush1.bf16.msra.mxu0 %v1772
  %2331 = vmatprep.subr.bf16.mxu0 %v1776
  %2332 = vmatpush1.bf16.msra.mxu0 %v1775
  %2333 = vmatprep.subr.bf16.mxu0 %v1779
  %2334 = vmatpush1.bf16.msra.mxu0 %v1778
  %2335 = vmatprep.subr.bf16.mxu0 %v1782
  %2336 = vmatpush1.bf16.msra.mxu0 %v1781
  %2337 = vmatprep.mubr.bf16.mxu0 %v482
  %2338 = vmatmul.mubr.bf16.gmra.mrb[0].mxu0 %v481
  %v2339 = vpop.f32.mrb[0].mxu0
  %v2340 = vadd.f32 %v2299, %v2339
  %v2341 = vpop.f32.mrb[0].mxu0
  %v2342 = vadd.f32 %v2301, %v2341
  %v2343 = vpop.f32.mrb[0].mxu0
  %v2344 = vpop.f32.mrb[0].mxu0
  %2345 = vdwg.mxu0
  %2346 = vmatprep.subr.bf16.mxu0 %v1785
  %2347 = vmatpush1.bf16.msra.mxu0 %v1784
  %2348 = vmatprep.subr.bf16.mxu0 %v1788
  %2349 = vmatpush1.bf16.msra.mxu0 %v1787
  %2350 = vmatprep.subr.bf16.mxu0 %v1791
  %2351 = vmatpush1.bf16.msra.mxu0 %v1790
  %2352 = vmatprep.subr.bf16.mxu0 %v1794
  %2353 = vmatpush1.bf16.msra.mxu0 %v1793
  %2354 = vmatprep.subr.bf16.mxu0 0
  %2355 = vmatpush1.bf16.msra.mxu0 0
  %2356 = vmatprep.subr.bf16.mxu0 0
  %2357 = vmatpush1.bf16.msra.mxu0 0
  %2358 = vmatprep.subr.bf16.mxu0 0
  %2359 = vmatpush1.bf16.msra.mxu0 0
  %2360 = vmatprep.subr.bf16.mxu0 0
  %2361 = vmatpush1.bf16.msra.mxu0 0
  %2362 = vmatprep.subr.bf16.mxu0 0
  %2363 = vmatpush1.bf16.msra.mxu0 0
  %2364 = vmatprep.subr.bf16.mxu0 0
  %2365 = vmatpush1.bf16.msra.mxu0 0
  %2366 = vmatprep.subr.bf16.mxu0 0
  %2367 = vmatpush1.bf16.msra.mxu0 0
  %2368 = vmatprep.subr.bf16.mxu0 0
  %2369 = vmatpush1.bf16.msra.mxu0 0
  %2370 = vmatprep.subr.bf16.mxu0 0
  %2371 = vmatpush1.bf16.msra.mxu0 0
  %2372 = vmatprep.subr.bf16.mxu0 0
  %2373 = vmatpush1.bf16.msra.mxu0 0
  %2374 = vmatprep.subr.bf16.mxu0 0
  %2375 = vmatpush1.bf16.msra.mxu0 0
  %2376 = vmatprep.subr.bf16.mxu0 0
  %2377 = vmatpush1.bf16.msra.mxu0 0
  %2378 = vmatprep.mubr.bf16.mxu0 0
  %2379 = vmatmul.mubr.bf16.gmra.mrb[0].mxu0 %v2098
  %v2380 = vpop.f32.mrb[0].mxu0
  %v2381 = vadd.f32 %v2340, %v2380
  %v2382 = vpop.f32.mrb[0].mxu0
  %v2383 = vadd.f32 %v2342, %v2382
  %v2384 = vpop.f32.mrb[0].mxu0
  %v2385 = vpop.f32.mrb[0].mxu0
  %2386 = vdwg.mxu0
  %2387 = vmatprep.subr.bf16.mxu0 0
  %2388 = vmatpush1.bf16.msra.mxu0 %v1498
  %2389 = vmatprep.subr.bf16.mxu0 0
  %2390 = vmatpush1.bf16.msra.mxu0 %v1501
  %2391 = vmatprep.subr.bf16.mxu0 0
  %2392 = vmatpush1.bf16.msra.mxu0 %v1504
  %2393 = vmatprep.subr.bf16.mxu0 0
  %2394 = vmatpush1.bf16.msra.mxu0 %v1507
  %2395 = vmatprep.subr.bf16.mxu0 0
  %2396 = vmatpush1.bf16.msra.mxu0 %v1510
  %2397 = vmatprep.subr.bf16.mxu0 0
  %2398 = vmatpush1.bf16.msra.mxu0 %v1513
  %2399 = vmatprep.subr.bf16.mxu0 0
  %2400 = vmatpush1.bf16.msra.mxu0 %v1516
  %2401 = vmatprep.subr.bf16.mxu0 0
  %2402 = vmatpush1.bf16.msra.mxu0 %v1519
  %2403 = vmatprep.subr.bf16.mxu0 0
  %2404 = vmatpush1.bf16.msra.mxu0 %v1522
  %2405 = vmatprep.subr.bf16.mxu0 0
  %2406 = vmatpush1.bf16.msra.mxu0 %v1525
  %2407 = vmatprep.subr.bf16.mxu0 0
  %2408 = vmatpush1.bf16.msra.mxu0 %v1528
  %2409 = vmatprep.subr.bf16.mxu0 0
  %2410 = vmatpush1.bf16.msra.mxu0 %v1531
  %2411 = vmatprep.subr.bf16.mxu0 0
  %2412 = vmatpush1.bf16.msra.mxu0 %v1534
  %2413 = vmatprep.subr.bf16.mxu0 0
  %2414 = vmatpush1.bf16.msra.mxu0 %v1537
  %2415 = vmatprep.subr.bf16.mxu0 0
  %2416 = vmatpush1.bf16.msra.mxu0 %v1540
  %2417 = vmatprep.subr.bf16.mxu0 0
  %2418 = vmatpush1.bf16.msra.mxu0 %v1543
  %2419 = vmatprep.mubr.bf16.mxu0 %v472
  %2420 = vmatmul.mubr.bf16.gmra.mrb[0].mxu0 %v471
  %v2421 = vpop.f32.mrb[0].mxu0
  %v2422 = vadd.f32 %v447, %v2421
  %v2423 = vpop.f32.mrb[0].mxu0
  %v2424 = vpop.f32.mrb[0].mxu0
  %v2425 = vpop.f32.mrb[0].mxu0
  %2426 = vdwg.mxu0
  %2427 = vmatprep.subr.bf16.mxu0 0
  %2428 = vmatpush1.bf16.msra.mxu0 %v1546
  %2429 = vmatprep.subr.bf16.mxu0 0
  %2430 = vmatpush1.bf16.msra.mxu0 %v1549
  %2431 = vmatprep.subr.bf16.mxu0 0
  %2432 = vmatpush1.bf16.msra.mxu0 %v1552
  %2433 = vmatprep.subr.bf16.mxu0 0
  %2434 = vmatpush1.bf16.msra.mxu0 %v1555
  %2435 = vmatprep.subr.bf16.mxu0 0
  %2436 = vmatpush1.bf16.msra.mxu0 %v1558
  %2437 = vmatprep.subr.bf16.mxu0 0
  %2438 = vmatpush1.bf16.msra.mxu0 %v1561
  %2439 = vmatprep.subr.bf16.mxu0 0
  %2440 = vmatpush1.bf16.msra.mxu0 %v1564
  %2441 = vmatprep.subr.bf16.mxu0 0
  %2442 = vmatpush1.bf16.msra.mxu0 %v1567
  %2443 = vmatprep.subr.bf16.mxu0 0
  %2444 = vmatpush1.bf16.msra.mxu0 %v1570
  %2445 = vmatprep.subr.bf16.mxu0 0
  %2446 = vmatpush1.bf16.msra.mxu0 %v1573
  %2447 = vmatprep.subr.bf16.mxu0 0
  %2448 = vmatpush1.bf16.msra.mxu0 %v1576
  %2449 = vmatprep.subr.bf16.mxu0 0
  %2450 = vmatpush1.bf16.msra.mxu0 %v1579
  %2451 = vmatprep.subr.bf16.mxu0 0
  %2452 = vmatpush1.bf16.msra.mxu0 %v1582
  %2453 = vmatprep.subr.bf16.mxu0 0
  %2454 = vmatpush1.bf16.msra.mxu0 %v1585
  %2455 = vmatprep.subr.bf16.mxu0 0
  %2456 = vmatpush1.bf16.msra.mxu0 %v1588
  %2457 = vmatprep.subr.bf16.mxu0 0
  %2458 = vmatpush1.bf16.msra.mxu0 %v1591
  %2459 = vmatprep.mubr.bf16.mxu0 %v474
  %2460 = vmatmul.mubr.bf16.gmra.mrb[0].mxu0 %v473
  %v2461 = vpop.f32.mrb[0].mxu0
  %v2462 = vadd.f32 %v2422, %v2461
  %v2463 = vpop.f32.mrb[0].mxu0
  %v2464 = vpop.f32.mrb[0].mxu0
  %v2465 = vpop.f32.mrb[0].mxu0
  %2466 = vdwg.mxu0
  %2467 = vmatprep.subr.bf16.mxu0 0
  %2468 = vmatpush1.bf16.msra.mxu0 %v1594
  %2469 = vmatprep.subr.bf16.mxu0 0
  %2470 = vmatpush1.bf16.msra.mxu0 %v1597
  %2471 = vmatprep.subr.bf16.mxu0 0
  %2472 = vmatpush1.bf16.msra.mxu0 %v1600
  %2473 = vmatprep.subr.bf16.mxu0 0
  %2474 = vmatpush1.bf16.msra.mxu0 %v1603
  %2475 = vmatprep.subr.bf16.mxu0 0
  %2476 = vmatpush1.bf16.msra.mxu0 %v1606
  %2477 = vmatprep.subr.bf16.mxu0 0
  %2478 = vmatpush1.bf16.msra.mxu0 %v1609
  %2479 = vmatprep.subr.bf16.mxu0 0
  %2480 = vmatpush1.bf16.msra.mxu0 %v1612
  %2481 = vmatprep.subr.bf16.mxu0 0
  %2482 = vmatpush1.bf16.msra.mxu0 %v1615
  %2483 = vmatprep.subr.bf16.mxu0 0
  %2484 = vmatpush1.bf16.msra.mxu0 %v1618
  %2485 = vmatprep.subr.bf16.mxu0 0
  %2486 = vmatpush1.bf16.msra.mxu0 %v1621
  %2487 = vmatprep.subr.bf16.mxu0 0
  %2488 = vmatpush1.bf16.msra.mxu0 %v1624
  %2489 = vmatprep.subr.bf16.mxu0 0
  %2490 = vmatpush1.bf16.msra.mxu0 %v1627
  %2491 = vmatprep.subr.bf16.mxu0 0
  %2492 = vmatpush1.bf16.msra.mxu0 %v1630
  %2493 = vmatprep.subr.bf16.mxu0 0
  %2494 = vmatpush1.bf16.msra.mxu0 %v1633
  %2495 = vmatprep.subr.bf16.mxu0 0
  %2496 = vmatpush1.bf16.msra.mxu0 %v1636
  %2497 = vmatprep.subr.bf16.mxu0 0
  %2498 = vmatpush1.bf16.msra.mxu0 %v1639
  %2499 = vmatprep.mubr.bf16.mxu0 %v476
  %2500 = vmatmul.mubr.bf16.gmra.mrb[0].mxu0 %v475
  %v2501 = vpop.f32.mrb[0].mxu0
  %v2502 = vadd.f32 %v2462, %v2501
  %v2503 = vpop.f32.mrb[0].mxu0
  %v2504 = vpop.f32.mrb[0].mxu0
  %v2505 = vpop.f32.mrb[0].mxu0
  %2506 = vdwg.mxu0
  %2507 = vmatprep.subr.bf16.mxu0 0
  %2508 = vmatpush1.bf16.msra.mxu0 %v1642
  %2509 = vmatprep.subr.bf16.mxu0 0
  %2510 = vmatpush1.bf16.msra.mxu0 %v1645
  %2511 = vmatprep.subr.bf16.mxu0 0
  %2512 = vmatpush1.bf16.msra.mxu0 %v1648
  %2513 = vmatprep.subr.bf16.mxu0 0
  %2514 = vmatpush1.bf16.msra.mxu0 %v1651
  %2515 = vmatprep.subr.bf16.mxu0 0
  %2516 = vmatpush1.bf16.msra.mxu0 %v1654
  %2517 = vmatprep.subr.bf16.mxu0 0
  %2518 = vmatpush1.bf16.msra.mxu0 %v1657
  %2519 = vmatprep.subr.bf16.mxu0 0
  %2520 = vmatpush1.bf16.msra.mxu0 %v1660
  %2521 = vmatprep.subr.bf16.mxu0 0
  %2522 = vmatpush1.bf16.msra.mxu0 %v1663
  %2523 = vmatprep.subr.bf16.mxu0 0
  %2524 = vmatpush1.bf16.msra.mxu0 %v1666
  %2525 = vmatprep.subr.bf16.mxu0 0
  %2526 = vmatpush1.bf16.msra.mxu0 %v1669
  %2527 = vmatprep.subr.bf16.mxu0 0
  %2528 = vmatpush1.bf16.msra.mxu0 %v1672
  %2529 = vmatprep.subr.bf16.mxu0 0
  %2530 = vmatpush1.bf16.msra.mxu0 %v1675
  %2531 = vmatprep.subr.bf16.mxu0 0
  %2532 = vmatpush1.bf16.msra.mxu0 %v1678
  %2533 = vmatprep.subr.bf16.mxu0 0
  %2534 = vmatpush1.bf16.msra.mxu0 %v1681
  %2535 = vmatprep.subr.bf16.mxu0 0
  %2536 = vmatpush1.bf16.msra.mxu0 %v1684
  %2537 = vmatprep.subr.bf16.mxu0 0
  %2538 = vmatpush1.bf16.msra.mxu0 %v1687
  %2539 = vmatprep.mubr.bf16.mxu0 %v478
  %2540 = vmatmul.mubr.bf16.gmra.mrb[0].mxu0 %v477
  %v2541 = vpop.f32.mrb[0].mxu0
  %v2542 = vadd.f32 %v2502, %v2541
  %v2543 = vpop.f32.mrb[0].mxu0
  %v2544 = vpop.f32.mrb[0].mxu0
  %v2545 = vpop.f32.mrb[0].mxu0
  %2546 = vdwg.mxu0
  %2547 = vmatprep.subr.bf16.mxu0 0
  %2548 = vmatpush1.bf16.msra.mxu0 %v1690
  %2549 = vmatprep.subr.bf16.mxu0 0
  %2550 = vmatpush1.bf16.msra.mxu0 %v1693
  %2551 = vmatprep.subr.bf16.mxu0 0
  %2552 = vmatpush1.bf16.msra.mxu0 %v1696
  %2553 = vmatprep.subr.bf16.mxu0 0
  %2554 = vmatpush1.bf16.msra.mxu0 %v1699
  %2555 = vmatprep.subr.bf16.mxu0 0
  %2556 = vmatpush1.bf16.msra.mxu0 %v1702
  %2557 = vmatprep.subr.bf16.mxu0 0
  %2558 = vmatpush1.bf16.msra.mxu0 %v1705
  %2559 = vmatprep.subr.bf16.mxu0 0
  %2560 = vmatpush1.bf16.msra.mxu0 %v1708
  %2561 = vmatprep.subr.bf16.mxu0 0
  %2562 = vmatpush1.bf16.msra.mxu0 %v1711
  %2563 = vmatprep.subr.bf16.mxu0 0
  %2564 = vmatpush1.bf16.msra.mxu0 %v1714
  %2565 = vmatprep.subr.bf16.mxu0 0
  %2566 = vmatpush1.bf16.msra.mxu0 %v1717
  %2567 = vmatprep.subr.bf16.mxu0 0
  %2568 = vmatpush1.bf16.msra.mxu0 %v1720
  %2569 = vmatprep.subr.bf16.mxu0 0
  %2570 = vmatpush1.bf16.msra.mxu0 %v1723
  %2571 = vmatprep.subr.bf16.mxu0 0
  %2572 = vmatpush1.bf16.msra.mxu0 %v1726
  %2573 = vmatprep.subr.bf16.mxu0 0
  %2574 = vmatpush1.bf16.msra.mxu0 %v1729
  %2575 = vmatprep.subr.bf16.mxu0 0
  %2576 = vmatpush1.bf16.msra.mxu0 %v1732
  %2577 = vmatprep.subr.bf16.mxu0 0
  %2578 = vmatpush1.bf16.msra.mxu0 %v1735
  %2579 = vmatprep.mubr.bf16.mxu0 %v480
  %2580 = vmatmul.mubr.bf16.gmra.mrb[0].mxu0 %v479
  %v2581 = vpop.f32.mrb[0].mxu0
  %v2582 = vadd.f32 %v2542, %v2581
  %v2583 = vpop.f32.mrb[0].mxu0
  %v2584 = vpop.f32.mrb[0].mxu0
  %v2585 = vpop.f32.mrb[0].mxu0
  %2586 = vdwg.mxu0
  %2587 = vmatprep.subr.bf16.mxu0 0
  %2588 = vmatpush1.bf16.msra.mxu0 %v1738
  %2589 = vmatprep.subr.bf16.mxu0 0
  %2590 = vmatpush1.bf16.msra.mxu0 %v1741
  %2591 = vmatprep.subr.bf16.mxu0 0
  %2592 = vmatpush1.bf16.msra.mxu0 %v1744
  %2593 = vmatprep.subr.bf16.mxu0 0
  %2594 = vmatpush1.bf16.msra.mxu0 %v1747
  %2595 = vmatprep.subr.bf16.mxu0 0
  %2596 = vmatpush1.bf16.msra.mxu0 %v1750
  %2597 = vmatprep.subr.bf16.mxu0 0
  %2598 = vmatpush1.bf16.msra.mxu0 %v1753
  %2599 = vmatprep.subr.bf16.mxu0 0
  %2600 = vmatpush1.bf16.msra.mxu0 %v1756
  %2601 = vmatprep.subr.bf16.mxu0 0
  %2602 = vmatpush1.bf16.msra.mxu0 %v1759
  %2603 = vmatprep.subr.bf16.mxu0 0
  %2604 = vmatpush1.bf16.msra.mxu0 %v1762
  %2605 = vmatprep.subr.bf16.mxu0 0
  %2606 = vmatpush1.bf16.msra.mxu0 %v1765
  %2607 = vmatprep.subr.bf16.mxu0 0
  %2608 = vmatpush1.bf16.msra.mxu0 %v1768
  %2609 = vmatprep.subr.bf16.mxu0 0
  %2610 = vmatpush1.bf16.msra.mxu0 %v1771
  %2611 = vmatprep.subr.bf16.mxu0 0
  %2612 = vmatpush1.bf16.msra.mxu0 %v1774
  %2613 = vmatprep.subr.bf16.mxu0 0
  %2614 = vmatpush1.bf16.msra.mxu0 %v1777
  %2615 = vmatprep.subr.bf16.mxu0 0
  %2616 = vmatpush1.bf16.msra.mxu0 %v1780
  %2617 = vmatprep.subr.bf16.mxu0 0
  %2618 = vmatpush1.bf16.msra.mxu0 %v1783
  %2619 = vmatprep.mubr.bf16.mxu0 %v482
  %2620 = vmatmul.mubr.bf16.gmra.mrb[0].mxu0 %v481
  %v2621 = vpop.f32.mrb[0].mxu0
  %v2622 = vadd.f32 %v2582, %v2621
  %v2623 = vpop.f32.mrb[0].mxu0
  %v2624 = vpop.f32.mrb[0].mxu0
  %v2625 = vpop.f32.mrb[0].mxu0
  %2626 = vdwg.mxu0
  %2627 = vmatprep.subr.bf16.mxu0 0
  %2628 = vmatpush1.bf16.msra.mxu0 %v1786
  %2629 = vmatprep.subr.bf16.mxu0 0
  %2630 = vmatpush1.bf16.msra.mxu0 %v1789
  %2631 = vmatprep.subr.bf16.mxu0 0
  %2632 = vmatpush1.bf16.msra.mxu0 %v1792
  %2633 = vmatprep.subr.bf16.mxu0 0
  %2634 = vmatpush1.bf16.msra.mxu0 %v1795
  %2635 = vmatprep.subr.bf16.mxu0 0
  %2636 = vmatpush1.bf16.msra.mxu0 0
  %2637 = vmatprep.subr.bf16.mxu0 0
  %2638 = vmatpush1.bf16.msra.mxu0 0
  %2639 = vmatprep.subr.bf16.mxu0 0
  %2640 = vmatpush1.bf16.msra.mxu0 0
  %2641 = vmatprep.subr.bf16.mxu0 0
  %2642 = vmatpush1.bf16.msra.mxu0 0
  %2643 = vmatprep.subr.bf16.mxu0 0
  %2644 = vmatpush1.bf16.msra.mxu0 0
  %2645 = vmatprep.subr.bf16.mxu0 0
  %2646 = vmatpush1.bf16.msra.mxu0 0
  %2647 = vmatprep.subr.bf16.mxu0 0
  %2648 = vmatpush1.bf16.msra.mxu0 0
  %2649 = vmatprep.subr.bf16.mxu0 0
  %2650 = vmatpush1.bf16.msra.mxu0 0
  %2651 = vmatprep.subr.bf16.mxu0 0
  %2652 = vmatpush1.bf16.msra.mxu0 0
  %2653 = vmatprep.subr.bf16.mxu0 0
  %2654 = vmatpush1.bf16.msra.mxu0 0
  %2655 = vmatprep.subr.bf16.mxu0 0
  %2656 = vmatpush1.bf16.msra.mxu0 0
  %2657 = vmatprep.subr.bf16.mxu0 0
  %2658 = vmatpush1.bf16.msra.mxu0 0
  %2659 = vmatprep.mubr.bf16.mxu0 0
  %2660 = vmatmul.mubr.bf16.gmra.mrb[0].mxu0 %v2098
  %v2661 = vpop.f32.mrb[0].mxu0
  %v2662 = vadd.f32 %v2622, %v2661
  %v2663 = vpop.f32.mrb[0].mxu0
  %v2664 = vpop.f32.mrb[0].mxu0
  %v2665 = vpop.f32.mrb[0].mxu0
  %2666 = vdwg.mxu0
  %v2667 = vmax.f32 %v2381, 0.0
  %v2668 = vmax.f32 %v2383, 0.0
  %v2669 = vmax.f32 %v2662, 0.0
  %v2670 = vpack.c.bf16 %v2667, %v2667
  %v2671 = vpack.c.bf16 %v2668, %v2668
  %v2672 = vpack.c.bf16 %v2669, %v2669
  %v2673 = vld [vmem:[%s3] sm:$0xff]
  %v2674 = vld [vmem:[%s3 + $0x8] sm:$0xff]
  %v2675 = vld [vmem:[%s3 + $0x10] sm:$0xff]
  %v2676 = vld [vmem:[%s3 + $0x18] sm:$0xff]
  %v2677 = vld [vmem:[%s3 + $0x20] sm:$0xff]
  %v2678 = vld [vmem:[%s3 + $0x28] sm:$0xff]
  %v2679 = vld [vmem:[%s3 + $0x30] sm:$0xff]
  %v2680 = vld [vmem:[%s3 + $0x38] sm:$0xff]
  %v2681 = vld [vmem:[%s3 + $0x40] sm:$0xff]
  %v2682 = vld [vmem:[%s3 + $0x48] sm:$0xff]
  %v2683 = vld [vmem:[%s3 + $0x50] sm:$0xff]
  %v2684 = vld [vmem:[%s3 + $0x58] sm:$0xff]
  %v2685 = vld [vmem:[%s3 + $0x60] sm:$0xff]
  %v2686 = vld [vmem:[%s3 + $0x68] sm:$0xff]
  %v2687 = vld [vmem:[%s3 + $0x70] sm:$0xff]
  %v2688 = vld [vmem:[%s3 + $0x78] sm:$0xff]
  %v2689 = vld [vmem:[%s3 + $0x80] sm:$0xff]
  %v2690 = vld [vmem:[%s3 + $0x88] sm:$0xff]
  %v2691 = vld [vmem:[%s3 + $0x90] sm:$0xff]
  %v2692 = vld [vmem:[%s3 + $0x98] sm:$0xff]
  %v2693 = vld [vmem:[%s3 + $0xa0] sm:$0xff]
  %v2694 = vld [vmem:[%s3 + $0xa8] sm:$0xff]
  %v2695 = vld [vmem:[%s3 + $0xb0] sm:$0xff]
  %v2696 = vld [vmem:[%s3 + $0xb8] sm:$0xff]
  %v2697 = vld [vmem:[%s3 + $0xc0] sm:$0xff]
  %v2698 = vld [vmem:[%s3 + $0xc8] sm:$0xff]
  %v2699 = vld [vmem:[%s3 + $0xd0] sm:$0xff]
  %v2700 = vld [vmem:[%s3 + $0xd8] sm:$0xff]
  %v2701 = vld [vmem:[%s3 + $0xe0] sm:$0xff]
  %v2702 = vld [vmem:[%s3 + $0xe8] sm:$0xff]
  %v2703 = vld [vmem:[%s3 + $0xf0] sm:$0xff]
  %v2704 = vld [vmem:[%s3 + $0xf8] sm:$0xff]
  %v2705 = vld [vmem:[%s3 + $0x100] sm:$0xff]
  %v2706 = vld [vmem:[%s3 + $0x108] sm:$0xff]
  %v2707 = vld [vmem:[%s3 + $0x110] sm:$0xff]
  %v2708 = vld [vmem:[%s3 + $0x118] sm:$0xff]
  %v2709 = vld [vmem:[%s3 + $0x120] sm:$0xff]
  %v2710 = vld [vmem:[%s3 + $0x128] sm:$0xff]
  %v2711 = vld [vmem:[%s3 + $0x130] sm:$0xff]
  %v2712 = vld [vmem:[%s3 + $0x138] sm:$0xff]
  %v2713 = vld [vmem:[%s3 + $0x140] sm:$0xff]
  %v2714 = vld [vmem:[%s3 + $0x148] sm:$0xff]
  %v2715 = vld [vmem:[%s3 + $0x150] sm:$0xff]
  %v2716 = vld [vmem:[%s3 + $0x158] sm:$0xff]
  %v2717 = vld [vmem:[%s3 + $0x160] sm:$0xff]
  %v2718 = vld [vmem:[%s3 + $0x168] sm:$0xff]
  %v2719 = vld [vmem:[%s3 + $0x170] sm:$0xff]
  %v2720 = vld [vmem:[%s3 + $0x178] sm:$0xff]
  %v2721 = vld [vmem:[%s4] sm:$0x3]
  %v2723 = vlaneseq
  %v2724 = vshrl.u32 %v2723, 7
  %v2725 = vsub.s32 0, %v2724
  %v2726 = vrot.slane %v2721, %v2725
  %v2727 = vlaneseq
  %v2728 = vshrl.u32 %v2727, 7
  %v2729 = vsub.s32 1, %v2728
  %v2730 = vrot.slane %v2721, %v2729
  %v2781 = vunpack.c.l.b16 %v2673
  %v2782 = vunpack.c.h.b16 %v2673
  %v2783 = vunpack.c.l.b16 %v2674
  %v2784 = vunpack.c.h.b16 %v2674
  %v2785 = vunpack.c.l.b16 %v2675
  %v2786 = vunpack.c.h.b16 %v2675
  %v2787 = vunpack.c.l.b16 %v2676
  %v2788 = vunpack.c.h.b16 %v2676
  %v2789 = vunpack.c.l.b16 %v2677
  %v2790 = vunpack.c.h.b16 %v2677
  %v2791 = vunpack.c.l.b16 %v2678
  %v2792 = vunpack.c.h.b16 %v2678
  %v2793 = vunpack.c.l.b16 %v2679
  %v2794 = vunpack.c.h.b16 %v2679
  %v2795 = vunpack.c.l.b16 %v2680
  %v2796 = vunpack.c.h.b16 %v2680
  %v2797 = vunpack.c.l.b16 %v2681
  %v2798 = vunpack.c.h.b16 %v2681
  %v2799 = vunpack.c.l.b16 %v2682
  %v2800 = vunpack.c.h.b16 %v2682
  %v2801 = vunpack.c.l.b16 %v2683
  %v2802 = vunpack.c.h.b16 %v2683
  %v2803 = vunpack.c.l.b16 %v2684
  %v2804 = vunpack.c.h.b16 %v2684
  %v2805 = vunpack.c.l.b16 %v2685
  %v2806 = vunpack.c.h.b16 %v2685
  %v2807 = vunpack.c.l.b16 %v2686
  %v2808 = vunpack.c.h.b16 %v2686
  %v2809 = vunpack.c.l.b16 %v2687
  %v2810 = vunpack.c.h.b16 %v2687
  %v2811 = vunpack.c.l.b16 %v2688
  %v2812 = vunpack.c.h.b16 %v2688
  %v2813 = vunpack.c.l.b16 %v2689
  %v2814 = vunpack.c.h.b16 %v2689
  %v2815 = vunpack.c.l.b16 %v2690
  %v2816 = vunpack.c.h.b16 %v2690
  %v2817 = vunpack.c.l.b16 %v2691
  %v2818 = vunpack.c.h.b16 %v2691
  %v2819 = vunpack.c.l.b16 %v2692
  %v2820 = vunpack.c.h.b16 %v2692
  %v2821 = vunpack.c.l.b16 %v2693
  %v2822 = vunpack.c.h.b16 %v2693
  %v2823 = vunpack.c.l.b16 %v2694
  %v2824 = vunpack.c.h.b16 %v2694
  %v2825 = vunpack.c.l.b16 %v2695
  %v2826 = vunpack.c.h.b16 %v2695
  %v2827 = vunpack.c.l.b16 %v2696
  %v2828 = vunpack.c.h.b16 %v2696
  %v2829 = vunpack.c.l.b16 %v2697
  %v2830 = vunpack.c.h.b16 %v2697
  %v2831 = vunpack.c.l.b16 %v2698
  %v2832 = vunpack.c.h.b16 %v2698
  %v2833 = vunpack.c.l.b16 %v2699
  %v2834 = vunpack.c.h.b16 %v2699
  %v2835 = vunpack.c.l.b16 %v2700
  %v2836 = vunpack.c.h.b16 %v2700
  %v2837 = vunpack.c.l.b16 %v2701
  %v2838 = vunpack.c.h.b16 %v2701
  %v2839 = vunpack.c.l.b16 %v2702
  %v2840 = vunpack.c.h.b16 %v2702
  %v2841 = vunpack.c.l.b16 %v2703
  %v2842 = vunpack.c.h.b16 %v2703
  %v2843 = vunpack.c.l.b16 %v2704
  %v2844 = vunpack.c.h.b16 %v2704
  %v2845 = vunpack.c.l.b16 %v2705
  %v2846 = vunpack.c.h.b16 %v2705
  %v2847 = vunpack.c.l.b16 %v2706
  %v2848 = vunpack.c.h.b16 %v2706
  %v2849 = vunpack.c.l.b16 %v2707
  %v2850 = vunpack.c.h.b16 %v2707
  %v2851 = vunpack.c.l.b16 %v2708
  %v2852 = vunpack.c.h.b16 %v2708
  %v2853 = vunpack.c.l.b16 %v2709
  %v2854 = vunpack.c.h.b16 %v2709
  %v2855 = vunpack.c.l.b16 %v2710
  %v2856 = vunpack.c.h.b16 %v2710
  %v2857 = vunpack.c.l.b16 %v2711
  %v2858 = vunpack.c.h.b16 %v2711
  %v2859 = vunpack.c.l.b16 %v2712
  %v2860 = vunpack.c.h.b16 %v2712
  %v2861 = vunpack.c.l.b16 %v2713
  %v2862 = vunpack.c.h.b16 %v2713
  %v2863 = vunpack.c.l.b16 %v2714
  %v2864 = vunpack.c.h.b16 %v2714
  %v2865 = vunpack.c.l.b16 %v2715
  %v2866 = vunpack.c.h.b16 %v2715
  %v2867 = vunpack.c.l.b16 %v2716
  %v2868 = vunpack.c.h.b16 %v2716
  %v2869 = vunpack.c.l.b16 %v2717
  %v2870 = vunpack.c.h.b16 %v2717
  %v2871 = vunpack.c.l.b16 %v2718
  %v2872 = vunpack.c.h.b16 %v2718
  %v2873 = vunpack.c.l.b16 %v2719
  %v2874 = vunpack.c.h.b16 %v2719
  %v2875 = vunpack.c.l.b16 %v2720
  %v2876 = vunpack.c.h.b16 %v2720
  %v2877 = vpack.c.b16 %v2783, %v2781
  %v2878 = vpack.c.b16 %v2784, %v2782
  %v2879 = vpack.c.b16 %v2787, %v2785
  %v2880 = vpack.c.b16 %v2788, %v2786
  %v2881 = vpack.c.b16 %v2791, %v2789
  %v2882 = vpack.c.b16 %v2792, %v2790
  %v2883 = vpack.c.b16 %v2795, %v2793
  %v2884 = vpack.c.b16 %v2796, %v2794
  %v2885 = vpack.c.b16 %v2799, %v2797
  %v2886 = vpack.c.b16 %v2800, %v2798
  %v2887 = vpack.c.b16 %v2803, %v2801
  %v2888 = vpack.c.b16 %v2804, %v2802
  %v2889 = vpack.c.b16 %v2807, %v2805
  %v2890 = vpack.c.b16 %v2808, %v2806
  %v2891 = vpack.c.b16 %v2811, %v2809
  %v2892 = vpack.c.b16 %v2812, %v2810
  %v2893 = vpack.c.b16 %v2815, %v2813
  %v2894 = vpack.c.b16 %v2816, %v2814
  %v2895 = vpack.c.b16 %v2819, %v2817
  %v2896 = vpack.c.b16 %v2820, %v2818
  %v2897 = vpack.c.b16 %v2823, %v2821
  %v2898 = vpack.c.b16 %v2824, %v2822
  %v2899 = vpack.c.b16 %v2827, %v2825
  %v2900 = vpack.c.b16 %v2828, %v2826
  %v2901 = vpack.c.b16 %v2831, %v2829
  %v2902 = vpack.c.b16 %v2832, %v2830
  %v2903 = vpack.c.b16 %v2835, %v2833
  %v2904 = vpack.c.b16 %v2836, %v2834
  %v2905 = vpack.c.b16 %v2839, %v2837
  %v2906 = vpack.c.b16 %v2840, %v2838
  %v2907 = vpack.c.b16 %v2843, %v2841
  %v2908 = vpack.c.b16 %v2844, %v2842
  %v2909 = vpack.c.b16 %v2847, %v2845
  %v2910 = vpack.c.b16 %v2848, %v2846
  %v2911 = vpack.c.b16 %v2851, %v2849
  %v2912 = vpack.c.b16 %v2852, %v2850
  %v2913 = vpack.c.b16 %v2855, %v2853
  %v2914 = vpack.c.b16 %v2856, %v2854
  %v2915 = vpack.c.b16 %v2859, %v2857
  %v2916 = vpack.c.b16 %v2860, %v2858
  %v2917 = vpack.c.b16 %v2863, %v2861
  %v2918 = vpack.c.b16 %v2864, %v2862
  %v2919 = vpack.c.b16 %v2867, %v2865
  %v2920 = vpack.c.b16 %v2868, %v2866
  %v2921 = vpack.c.b16 %v2871, %v2869
  %v2922 = vpack.c.b16 %v2872, %v2870
  %v2923 = vpack.c.b16 %v2875, %v2873
  %v2924 = vpack.c.b16 %v2876, %v2874
  %2973 = vmatprep.subr.bf16.mxu0 %v2878
  %2974 = vmatpush1.bf16.msra.mxu0 %v2877
  %2975 = vmatprep.subr.bf16.mxu0 %v2880
  %2976 = vmatpush1.bf16.msra.mxu0 %v2879
  %2977 = vmatprep.subr.bf16.mxu0 %v2882
  %2978 = vmatpush1.bf16.msra.mxu0 %v2881
  %2979 = vmatprep.subr.bf16.mxu0 %v2884
  %2980 = vmatpush1.bf16.msra.mxu0 %v2883
  %2981 = vmatprep.subr.bf16.mxu0 %v2886
  %2982 = vmatpush1.bf16.msra.mxu0 %v2885
  %2983 = vmatprep.subr.bf16.mxu0 %v2888
  %2984 = vmatpush1.bf16.msra.mxu0 %v2887
  %2985 = vmatprep.subr.bf16.mxu0 %v2890
  %2986 = vmatpush1.bf16.msra.mxu0 %v2889
  %2987 = vmatprep.subr.bf16.mxu0 %v2892
  %2988 = vmatpush1.bf16.msra.mxu0 %v2891
  %2989 = vmatprep.subr.bf16.mxu0 %v2894
  %2990 = vmatpush1.bf16.msra.mxu0 %v2893
  %2991 = vmatprep.subr.bf16.mxu0 %v2896
  %2992 = vmatpush1.bf16.msra.mxu0 %v2895
  %2993 = vmatprep.subr.bf16.mxu0 %v2898
  %2994 = vmatpush1.bf16.msra.mxu0 %v2897
  %2995 = vmatprep.subr.bf16.mxu0 %v2900
  %2996 = vmatpush1.bf16.msra.mxu0 %v2899
  %2997 = vmatprep.subr.bf16.mxu0 %v2902
  %2998 = vmatpush1.bf16.msra.mxu0 %v2901
  %2999 = vmatprep.subr.bf16.mxu0 %v2904
  %3000 = vmatpush1.bf16.msra.mxu0 %v2903
  %3001 = vmatprep.subr.bf16.mxu0 %v2906
  %3002 = vmatpush1.bf16.msra.mxu0 %v2905
  %3003 = vmatprep.subr.bf16.mxu0 %v2908
  %3004 = vmatpush1.bf16.msra.mxu0 %v2907
  %3005 = vmatprep.mubr.bf16.mxu0 %v2671
  %3006 = vmatmul.mubr.bf16.gmra.mrb[0].mxu0 %v2670
  %v3007 = vpop.f32.mrb[0].mxu0
  %v3008 = vadd.f32 %v2726, %v3007
  %v3009 = vpop.f32.mrb[0].mxu0
  %v3010 = vadd.f32 %v2730, %v3009
  %v3011 = vpop.f32.mrb[0].mxu0
  %v3012 = vpop.f32.mrb[0].mxu0
  %3013 = vdwg.mxu0
  %3014 = vmatprep.subr.bf16.mxu0 %v2910
  %3015 = vmatpush1.bf16.msra.mxu0 %v2909
  %3016 = vmatprep.subr.bf16.mxu0 %v2912
  %3017 = vmatpush1.bf16.msra.mxu0 %v2911
  %3018 = vmatprep.subr.bf16.mxu0 %v2914
  %3019 = vmatpush1.bf16.msra.mxu0 %v2913
  %3020 = vmatprep.subr.bf16.mxu0 %v2916
  %3021 = vmatpush1.bf16.msra.mxu0 %v2915
  %3022 = vmatprep.subr.bf16.mxu0 %v2918
  %3023 = vmatpush1.bf16.msra.mxu0 %v2917
  %3024 = vmatprep.subr.bf16.mxu0 %v2920
  %3025 = vmatpush1.bf16.msra.mxu0 %v2919
  %3026 = vmatprep.subr.bf16.mxu0 %v2922
  %3027 = vmatpush1.bf16.msra.mxu0 %v2921
  %3028 = vmatprep.subr.bf16.mxu0 %v2924
  %3029 = vmatpush1.bf16.msra.mxu0 %v2923
  %3030 = vmatprep.subr.bf16.mxu0 0
  %3031 = vmatpush1.bf16.msra.mxu0 0
  %3032 = vmatprep.subr.bf16.mxu0 0
  %3033 = vmatpush1.bf16.msra.mxu0 0
  %3034 = vmatprep.subr.bf16.mxu0 0
  %3035 = vmatpush1.bf16.msra.mxu0 0
  %3036 = vmatprep.subr.bf16.mxu0 0
  %3037 = vmatpush1.bf16.msra.mxu0 0
  %3038 = vmatprep.subr.bf16.mxu0 0
  %3039 = vmatpush1.bf16.msra.mxu0 0
  %3040 = vmatprep.subr.bf16.mxu0 0
  %3041 = vmatpush1.bf16.msra.mxu0 0
  %3042 = vmatprep.subr.bf16.mxu0 0
  %3043 = vmatpush1.bf16.msra.mxu0 0
  %3044 = vmatprep.subr.bf16.mxu0 0
  %3045 = vmatpush1.bf16.msra.mxu0 0
  %3046 = vmatprep.mubr.bf16.mxu0 0
  %3047 = vmatmul.mubr.bf16.gmra.mrb[0].mxu0 %v2672
  %v3048 = vpop.f32.mrb[0].mxu0
  %v3049 = vadd.f32 %v3008, %v3048
  %v3050 = vpop.f32.mrb[0].mxu0
  %v3051 = vadd.f32 %v3010, %v3050
  %v3052 = vpop.f32.mrb[0].mxu0
  %v3053 = vpop.f32.mrb[0].mxu0
  %3054 = vdwg.mxu0
  %v3055 = vmax.f32 %v3049, 0.0
  %v3056 = vmax.f32 %v3051, 0.0
  %v3057 = vpack.c.bf16 %v3055, %v3055
  %v3058 = vpack.c.bf16 %v3056, %v3056
  %v3059 = vld [vmem:[%s5] sm:$0xf]
  %v3060 = vld [vmem:[%s5 + $0x4] sm:$0xf]
  %v3061 = vld [vmem:[%s5 + $0x8] sm:$0xf]
  %v3062 = vld [vmem:[%s5 + $0xc] sm:$0xf]
  %v3063 = vld [vmem:[%s5 + $0x10] sm:$0xf]
  %v3064 = vld [vmem:[%s5 + $0x14] sm:$0xf]
  %v3065 = vld [vmem:[%s5 + $0x18] sm:$0xf]
  %v3066 = vld [vmem:[%s5 + $0x1c] sm:$0xf]
  %v3067 = vld [vmem:[%s5 + $0x20] sm:$0xf]
  %v3068 = vld [vmem:[%s5 + $0x24] sm:$0xf]
  %v3069 = vld [vmem:[%s5 + $0x28] sm:$0xf]
  %v3070 = vld [vmem:[%s5 + $0x2c] sm:$0xf]
  %v3071 = vld [vmem:[%s5 + $0x30] sm:$0xf]
  %v3072 = vld [vmem:[%s5 + $0x34] sm:$0xf]
  %v3073 = vld [vmem:[%s5 + $0x38] sm:$0xf]
  %v3074 = vld [vmem:[%s5 + $0x3c] sm:$0xf]
  %v3075 = vld [vmem:[%s5 + $0x40] sm:$0xf]
  %v3076 = vld [vmem:[%s5 + $0x44] sm:$0xf]
  %v3077 = vld [vmem:[%s5 + $0x48] sm:$0xf]
  %v3078 = vld [vmem:[%s5 + $0x4c] sm:$0xf]
  %v3079 = vld [vmem:[%s5 + $0x50] sm:$0xf]
  %v3080 = vld [vmem:[%s5 + $0x54] sm:$0xf]
  %v3081 = vld [vmem:[%s5 + $0x58] sm:$0xf]
  %v3082 = vld [vmem:[%s5 + $0x5c] sm:$0xf]
  %v3083 = vld [vmem:[%s5 + $0x60] sm:$0xf]
  %v3084 = vld [vmem:[%s5 + $0x64] sm:$0xf]
  %v3085 = vld [vmem:[%s5 + $0x68] sm:$0xf]
  %v3086 = vld [vmem:[%s5 + $0x6c] sm:$0xf]
  %v3087 = vld [vmem:[%s5 + $0x70] sm:$0xf]
  %v3088 = vld [vmem:[%s5 + $0x74] sm:$0xf]
  %v3089 = vld [vmem:[%s5 + $0x78] sm:$0xf]
  %v3090 = vld [vmem:[%s5 + $0x7c] sm:$0xf]
  %v3091 = vld [vmem:[%s6] sm:$0x1]
  %v3093 = vlaneseq
  %v3094 = vshrl.u32 %v3093, 7
  %v3095 = vsub.s32 0, %v3094
  %v3096 = vrot.slane %v3091, %v3095
  %v3130 = vunpack.c.l.b16 %v3059
  %v3131 = vunpack.c.l.b16 %v3060
  %v3132 = vunpack.c.l.b16 %v3061
  %v3133 = vunpack.c.l.b16 %v3062
  %v3134 = vunpack.c.l.b16 %v3063
  %v3135 = vunpack.c.l.b16 %v3064
  %v3136 = vunpack.c.l.b16 %v3065
  %v3137 = vunpack.c.l.b16 %v3066
  %v3138 = vunpack.c.l.b16 %v3067
  %v3139 = vunpack.c.l.b16 %v3068
  %v3140 = vunpack.c.l.b16 %v3069
  %v3141 = vunpack.c.l.b16 %v3070
  %v3142 = vunpack.c.l.b16 %v3071
  %v3143 = vunpack.c.l.b16 %v3072
  %v3144 = vunpack.c.l.b16 %v3073
  %v3145 = vunpack.c.l.b16 %v3074
  %v3146 = vunpack.c.l.b16 %v3075
  %v3147 = vunpack.c.l.b16 %v3076
  %v3148 = vunpack.c.l.b16 %v3077
  %v3149 = vunpack.c.l.b16 %v3078
  %v3150 = vunpack.c.l.b16 %v3079
  %v3151 = vunpack.c.l.b16 %v3080
  %v3152 = vunpack.c.l.b16 %v3081
  %v3153 = vunpack.c.l.b16 %v3082
  %v3154 = vunpack.c.l.b16 %v3083
  %v3155 = vunpack.c.l.b16 %v3084
  %v3156 = vunpack.c.l.b16 %v3085
  %v3157 = vunpack.c.l.b16 %v3086
  %v3158 = vunpack.c.l.b16 %v3087
  %v3159 = vunpack.c.l.b16 %v3088
  %v3160 = vunpack.c.l.b16 %v3089
  %v3161 = vunpack.c.l.b16 %v3090
  %v3162 = vpack.c.b16 %v3131, %v3130
  %v3163 = vpack.c.b16 %v3133, %v3132
  %v3164 = vpack.c.b16 %v3135, %v3134
  %v3165 = vpack.c.b16 %v3137, %v3136
  %v3166 = vpack.c.b16 %v3139, %v3138
  %v3167 = vpack.c.b16 %v3141, %v3140
  %v3168 = vpack.c.b16 %v3143, %v3142
  %v3169 = vpack.c.b16 %v3145, %v3144
  %v3170 = vpack.c.b16 %v3147, %v3146
  %v3171 = vpack.c.b16 %v3149, %v3148
  %v3172 = vpack.c.b16 %v3151, %v3150
  %v3173 = vpack.c.b16 %v3153, %v3152
  %v3174 = vpack.c.b16 %v3155, %v3154
  %v3175 = vpack.c.b16 %v3157, %v3156
  %v3176 = vpack.c.b16 %v3159, %v3158
  %v3177 = vpack.c.b16 %v3161, %v3160
  %3194 = vmatprep.subr.bf16.mxu0 0
  %3195 = vmatpush1.bf16.msra.mxu0 %v3162
  %3196 = vmatprep.subr.bf16.mxu0 0
  %3197 = vmatpush1.bf16.msra.mxu0 %v3163
  %3198 = vmatprep.subr.bf16.mxu0 0
  %3199 = vmatpush1.bf16.msra.mxu0 %v3164
  %3200 = vmatprep.subr.bf16.mxu0 0
  %3201 = vmatpush1.bf16.msra.mxu0 %v3165
  %3202 = vmatprep.subr.bf16.mxu0 0
  %3203 = vmatpush1.bf16.msra.mxu0 %v3166
  %3204 = vmatprep.subr.bf16.mxu0 0
  %3205 = vmatpush1.bf16.msra.mxu0 %v3167
  %3206 = vmatprep.subr.bf16.mxu0 0
  %3207 = vmatpush1.bf16.msra.mxu0 %v3168
  %3208 = vmatprep.subr.bf16.mxu0 0
  %3209 = vmatpush1.bf16.msra.mxu0 %v3169
  %3210 = vmatprep.subr.bf16.mxu0 0
  %3211 = vmatpush1.bf16.msra.mxu0 %v3170
  %3212 = vmatprep.subr.bf16.mxu0 0
  %3213 = vmatpush1.bf16.msra.mxu0 %v3171
  %3214 = vmatprep.subr.bf16.mxu0 0
  %3215 = vmatpush1.bf16.msra.mxu0 %v3172
  %3216 = vmatprep.subr.bf16.mxu0 0
  %3217 = vmatpush1.bf16.msra.mxu0 %v3173
  %3218 = vmatprep.subr.bf16.mxu0 0
  %3219 = vmatpush1.bf16.msra.mxu0 %v3174
  %3220 = vmatprep.subr.bf16.mxu0 0
  %3221 = vmatpush1.bf16.msra.mxu0 %v3175
  %3222 = vmatprep.subr.bf16.mxu0 0
  %3223 = vmatpush1.bf16.msra.mxu0 %v3176
  %3224 = vmatprep.subr.bf16.mxu0 0
  %3225 = vmatpush1.bf16.msra.mxu0 %v3177
  %3226 = vmatprep.mubr.bf16.mxu0 %v3058
  %3227 = vmatmul.mubr.bf16.gmra.mrb[0].mxu0 %v3057
  %v3228 = vpop.f32.mrb[0].mxu0
  %v3229 = vadd.f32 %v3096, %v3228
  %v3230 = vpop.f32.mrb[0].mxu0
  %v3231 = vpop.f32.mrb[0].mxu0
  %v3232 = vpop.f32.mrb[0].mxu0
  %3233 = vdwg.mxu0
  %3234 = vst [vmem:[%s7] sm:$0xff] %v3229
  // Predicated region
  $region30: #{convnet_forward.9} parent=0 // pred_check
    _
  $region31: #{convnet_forward.9} parent=0 // pred_check_branch
    %3236 = sbr.rel (0) target = $region33
  $region32: #{convnet_forward.9} parent=0 // pred_region
    _
  $region33: #{convnet_forward.9} parent=0 // pred_fallthru
    _
  // Predicated region
  $region34: #{convnet_forward.9} parent=0 // pred_check
    _
  $region35: #{convnet_forward.9} parent=0 // pred_check_branch
    %3238 = sbr.rel (0) target = $region37
  $region36: #{convnet_forward.9} parent=0 // pred_region
    _
  $region37: #{convnet_forward.9} parent=0 // pred_fallthru
    _

</llo_original>
